<compile_context>
chip_gen: v7x
topology: tpu7x:2x2x1
jax: 0.10.0
libtpu: 0.0.40
codegen_flags: <defaults>
</compile_context>

<pallas_src>
import functools

import jax
import jax.numpy as jnp
from jax.experimental import pallas as pl
from jax.experimental.pallas import tpu as pltpu

EPS = 1e-5


def fused_conv_bn_relu_conv_kernel(x_ref, w1_ref, gamma_ref, beta_ref, w2_ref,
                                   o_ref, ybuf_ref, *, H, W, Wp, base):
    # x_ref:     [Cin, M]   f32   (free reshape of NCHW, M = H*W, N = 1)
    # w1_ref:    [Cin, C1]  bf16
    # gamma/beta:[1, C1]    f32
    # w2_ref:    [9, C1, Cout] bf16   (tap = kh*3 + kw)
    # o_ref:     [H*Wp, Cout]  f32    (image-padded row layout; wrapper slices)
    # ybuf_ref:  [RB, C1]   bf16   VMEM scratch, zero image-padded buffer
    M = H * W

    # ---- stage 1: 1x1 conv on the MXU, transposed-LHS (contract Cin) ---------
    xb = x_ref[...].astype(jnp.bfloat16)          # cast in-kernel: no XLA pre-pass
    z = jax.lax.dot_general(
        xb, w1_ref[...],
        dimension_numbers=(((0,), (0,)), ((), ())),   # [Cin,M] x [Cin,C1] -> [M,C1]
        preferred_element_type=jnp.float32)

    # ---- BatchNorm (training-mode batch stats, biased variance) + ReLU -------
    inv_m = 1.0 / float(M)
    mean = jnp.sum(z, axis=0, keepdims=True) * inv_m
    zc = z - mean                                    # two-pass (shifted) variance
    var = jnp.sum(zc * zc, axis=0, keepdims=True) * inv_m
    scale = jax.lax.rsqrt(var + EPS) * gamma_ref[...]
    y = jnp.maximum(zc * scale + beta_ref[...], 0.0).astype(jnp.bfloat16)

    # ---- scatter y into the zero image-padded buffer --------------------------
    # Whole-buffer zero is only ~34 bf16 vreg stores (halo rows are scattered,
    # so a halo-only zero would cost more ops than it saves).
    ybuf_ref[...] = jnp.zeros_like(ybuf_ref)
    for h in range(H):
        r0 = base + (h + 1) * Wp + 1                 # 16-aligned when Wp % 16 == 0
        ybuf_ref[r0:r0 + W, :] = y[h * W:(h + 1) * W, :]

    # ---- stage 2: 3x3 conv (pad=1) as 9 shifted matmuls, no masks ------------
    out_rows = o_ref.shape[0]                        # H * Wp
    o0 = base + Wp                                   # buffer row of output row 0
    for kh in range(3):
        for kw in range(3):
            start = o0 + (kh - 1) * Wp + (kw - 1)    # static shift, always in-bounds
            patch = ybuf_ref[start:start + out_rows, :]          # [out_rows, C1] bf16
            prod = jnp.dot(patch, w2_ref[kh * 3 + kw],
                           preferred_element_type=jnp.float32)   # [out_rows, Cout]
            if kh == 0 and kw == 0:
                o_ref[...] = prod
            else:
                o_ref[...] += prod                   # accumulate in VMEM, no reg carry


def prepare_params(w1_oihw, gamma, beta, w2_oihw):
    """One-time layout/cast of the weights into kernel layouts (call once)."""
    C1, Cin = w1_oihw.shape[0], w1_oihw.shape[1]
    Cout = w2_oihw.shape[0]
    w1_k = jnp.transpose(w1_oihw[:, :, 0, 0], (1, 0)).astype(jnp.bfloat16)   # [Cin, C1]
    w2_k = jnp.transpose(w2_oihw, (2, 3, 1, 0)).reshape(9, C1, Cout).astype(jnp.bfloat16)
    gamma_k = gamma.reshape(1, C1).astype(jnp.float32)
    beta_k = beta.reshape(1, C1).astype(jnp.float32)
    return w1_k, gamma_k, beta_k, w2_k


@jax.jit
def forward(x_nchw, w1_k, gamma_k, beta_k, w2_k):
    N, Cin, H, W = x_nchw.shape
    C1 = w1_k.shape[1]
    Cout = w2_k.shape[2]
    assert N == 1, "module is specified with batch size 1 (see TODO above)"
    M = H * W

    Wp = ((W + 2 + 7) // 8) * 8            # padded image width (14 -> 16)
    base = (-(Wp + 1)) % 16                # makes interior row starts 16-aligned
    if base == 0:
        base = 16
    assert base >= 1
    out_rows = H * Wp
    RB = ((base + (H + 2) * Wp + 1 + 15) // 16) * 16   # scratch rows (272 here)

    x_cm = x_nchw.reshape(Cin, M)          # free reshape of NCHW (no transpose)

    kernel = functools.partial(fused_conv_bn_relu_conv_kernel,
                               H=H, W=W, Wp=Wp, base=base)

    out_pad = pl.pallas_call(
        kernel,
        out_shape=jax.ShapeDtypeStruct((out_rows, Cout), jnp.float32),
        grid=(1,),   # BN batch stats need the whole batch in one block at this size
        in_specs=[
            pl.BlockSpec((Cin, M), lambda i: (0, 0)),
            pl.BlockSpec((Cin, C1), lambda i: (0, 0)),
            pl.BlockSpec((1, C1), lambda i: (0, 0)),
            pl.BlockSpec((1, C1), lambda i: (0, 0)),
            pl.BlockSpec((9, C1, Cout), lambda i: (0, 0, 0)),
        ],
        out_specs=pl.BlockSpec((out_rows, Cout), lambda i: (0, 0)),
        scratch_shapes=[pltpu.VMEM((RB, C1), jnp.bfloat16)],
        compiler_params=pltpu.CompilerParams(
            dimension_semantics=("arbitrary",)),
    )(x_cm, w1_k, gamma_k, beta_k, w2_k)

    # output row r = h*Wp + (w+1); columns 0 and W+1.. of each Wp-block are halo garbage
    out_hwc = out_pad.reshape(H, Wp, Cout)[:, 1:1 + W, :]          # [H, W, Cout]
    return jnp.transpose(out_hwc, (2, 0, 1))[None]                  # [1, Cout, H, W]


def reference(x, w1, gamma, beta, w2):
    # pure-JAX f32 reference matching the PyTorch forward (BN in training mode)
    z = jax.lax.conv_general_dilated(
        x, w1, (1, 1), 'VALID',
        dimension_numbers=('NCHW', 'OIHW', 'NCHW'),
        precision=jax.lax.Precision.HIGHEST)
    mean = jnp.mean(z, axis=(0, 2, 3), keepdims=True)
    var = jnp.mean((z - mean) ** 2, axis=(0, 2, 3), keepdims=True)
    y = (z - mean) / jnp.sqrt(var + EPS)
    y = y * gamma.reshape(1, -1, 1, 1) + beta.reshape(1, -1, 1, 1)
    y = jnp.maximum(y, 0.0)
    return jax.lax.conv_general_dilated(
        y, w2, (1, 1), ((1, 1), (1, 1)),
        dimension_numbers=('NCHW', 'OIHW', 'NCHW'),
        precision=jax.lax.Precision.HIGHEST)


if __name__ == "__main__":
    key = jax.random.PRNGKey(0)
    kx, k1, kg, kb, k2 = jax.random.split(key, 5)

    N, Cin, H, W = 1, 816, 14, 14
    C1, Cout = 192, 48

    x = jax.random.normal(kx, (N, Cin, H, W), dtype=jnp.float32)
    w1 = jax.random.normal(k1, (C1, Cin, 1, 1), dtype=jnp.float32) * 0.03
    gamma = 1.0 + 0.1 * jax.random.normal(kg, (C1,), dtype=jnp.float32)
    beta = 0.1 * jax.random.normal(kb, (C1,), dtype=jnp.float32)
    w2 = jax.random.normal(k2, (Cout, C1, 3, 3), dtype=jnp.float32) * 0.05

    # one-time weight layout/cast, outside the jitted per-call path
    params = prepare_params(w1, gamma, beta, w2)

    out = jax.block_until_ready(forward(x, *params))
    ref = jax.block_until_ready(reference(x, w1, gamma, beta, w2))

    assert out.shape == (N, Cout, H, W), out.shape
    # bf16 MXU inputs with f32 accumulation -> slightly looser tolerance than f32
    assert jnp.allclose(out, ref, rtol=2e-2, atol=3e-2), (
        float(jnp.max(jnp.abs(out - ref))))
    print("KERNEL_OK")
</pallas_src>

<mosaic_0001>
module attributes {stable_mosaic.version = 11 : i64} {
  func.func @fused_conv_bn_relu_conv_kernel(%arg0: i32, %arg1: memref<816x196xf32, #tpu.memory_space<vmem>>, %arg2: memref<816x192xbf16, #tpu.memory_space<vmem>>, %arg3: memref<1x192xf32, #tpu.memory_space<vmem>>, %arg4: memref<1x192xf32, #tpu.memory_space<vmem>>, %arg5: memref<9x192x48xbf16, #tpu.memory_space<vmem>>, %arg6: memref<224x48xf32, #tpu.memory_space<vmem>>, %arg7: memref<272x192xbf16, #tpu.memory_space<vmem>>) attributes {dimension_semantics = [#tpu.dimension_semantics<arbitrary>], iteration_bounds = array<i64: 1>, scalar_prefetch = 0 : i64, scratch_operands = 1 : i64, tpu.core_type = #tpu.core_type<tc>, window_params = [{pipeline_mode = #tpu.pipeline_mode<synchronous>, transform_indices = @transform_0, window_bounds = array<i64: 816, 196>}, {pipeline_mode = #tpu.pipeline_mode<synchronous>, transform_indices = @transform_1, window_bounds = array<i64: 816, 192>}, {pipeline_mode = #tpu.pipeline_mode<synchronous>, transform_indices = @transform_2, window_bounds = array<i64: 1, 192>}, {pipeline_mode = #tpu.pipeline_mode<synchronous>, transform_indices = @transform_3, window_bounds = array<i64: 1, 192>}, {pipeline_mode = #tpu.pipeline_mode<synchronous>, transform_indices = @transform_4, window_bounds = array<i64: 9, 192, 48>}, {pipeline_mode = #tpu.pipeline_mode<synchronous>, transform_indices = @transform_5, window_bounds = array<i64: 224, 48>}]} {
    %c0 = arith.constant 0 : index
    %c0_0 = arith.constant 0 : index
    %0 = vector.load %arg1[%c0, %c0_0] : memref<816x196xf32, #tpu.memory_space<vmem>>, vector<816x196xf32>
    %1 = arith.truncf %0 : vector<816x196xf32> to vector<816x196xbf16>
    %c0_1 = arith.constant 0 : index
    %c0_2 = arith.constant 0 : index
    %2 = vector.load %arg2[%c0_1, %c0_2] : memref<816x192xbf16, #tpu.memory_space<vmem>>, vector<816x192xbf16>
    %cst = arith.constant dense<0.000000e+00> : vector<196x192xf32>
    %3 = tpu.matmul %1, %2, %cst {dimension_numbers = #tpu.dot_dimension_numbers<[0], [0], [1], [1], [0, 1, 1, 1], [], []>} : vector<816x196xbf16>, vector<816x192xbf16>, vector<196x192xf32> -> vector<196x192xf32>
    %cst_3 = arith.constant dense<0.000000e+00> : vector<192xf32>
    %4 = vector.multi_reduction <add>, %3, %cst_3 [0] : vector<196x192xf32> to vector<192xf32>
    %5 = vector.shape_cast %4 : vector<192xf32> to vector<1x192xf32>
    %cst_4 = arith.constant 0.00510204071 : f32
    %6 = vector.broadcast %cst_4 : f32 to vector<1x192xf32>
    %7 = arith.mulf %5, %6 : vector<1x192xf32>
    %8 = vector.broadcast %7 : vector<1x192xf32> to vector<196x192xf32>
    %9 = arith.subf %3, %8 : vector<196x192xf32>
    %10 = arith.mulf %9, %9 : vector<196x192xf32>
    %cst_5 = arith.constant dense<0.000000e+00> : vector<192xf32>
    %11 = vector.multi_reduction <add>, %10, %cst_5 [0] : vector<196x192xf32> to vector<192xf32>
    %12 = vector.shape_cast %11 : vector<192xf32> to vector<1x192xf32>
    %cst_6 = arith.constant 0.00510204071 : f32
    %13 = vector.broadcast %cst_6 : f32 to vector<1x192xf32>
    %14 = arith.mulf %12, %13 : vector<1x192xf32>
    %cst_7 = arith.constant 9.99999974E-6 : f32
    %15 = vector.broadcast %cst_7 : f32 to vector<1x192xf32>
    %16 = arith.addf %14, %15 : vector<1x192xf32>
    %17 = math.rsqrt %16 : vector<1x192xf32>
    %c0_8 = arith.constant 0 : index
    %c0_9 = arith.constant 0 : index
    %18 = vector.load %arg3[%c0_8, %c0_9] : memref<1x192xf32, #tpu.memory_space<vmem>>, vector<1x192xf32>
    %19 = arith.mulf %17, %18 : vector<1x192xf32>
    %20 = vector.broadcast %19 : vector<1x192xf32> to vector<196x192xf32>
    %21 = arith.mulf %9, %20 : vector<196x192xf32>
    %c0_10 = arith.constant 0 : index
    %c0_11 = arith.constant 0 : index
    %22 = vector.load %arg4[%c0_10, %c0_11] : memref<1x192xf32, #tpu.memory_space<vmem>>, vector<1x192xf32>
    %23 = vector.broadcast %22 : vector<1x192xf32> to vector<196x192xf32>
    %24 = arith.addf %21, %23 : vector<196x192xf32>
    %cst_12 = arith.constant 0.000000e+00 : f32
    %25 = vector.broadcast %cst_12 : f32 to vector<196x192xf32>
    %26 = arith.maximumf %24, %25 : vector<196x192xf32>
    %27 = arith.truncf %26 : vector<196x192xf32> to vector<196x192xbf16>
    %cst_13 = arith.constant 0.000000e+00 : bf16
    %28 = vector.broadcast %cst_13 : bf16 to vector<272x192xbf16>
    %c0_14 = arith.constant 0 : index
    %c0_15 = arith.constant 0 : index
    %29 = vector.load %arg7[%c0_14, %c0_15] : memref<272x192xbf16, #tpu.memory_space<vmem>>, vector<272x192xbf16>
    tpu.vector_store %arg7[%c0_14, %c0_15], %28 {strides = array<i32>} : memref<272x192xbf16, #tpu.memory_space<vmem>>, vector<272x192xbf16>,
    %30 = vector.extract_strided_slice %27 {offsets = [0, 0], sizes = [14, 192], strides = [1, 1]} : vector<196x192xbf16> to vector<14x192xbf16>
    %c32 = arith.constant 32 : index
    %c0_16 = arith.constant 0 : index
    %31 = vector.load %arg7[%c32, %c0_16] : memref<272x192xbf16, #tpu.memory_space<vmem>>, vector<14x192xbf16>
    tpu.vector_store %arg7[%c32, %c0_16], %30 {strides = array<i32>} : memref<272x192xbf16, #tpu.memory_space<vmem>>, vector<14x192xbf16>,
    %32 = vector.extract_strided_slice %27 {offsets = [14, 0], sizes = [14, 192], strides = [1, 1]} : vector<196x192xbf16> to vector<14x192xbf16>
    %c48 = arith.constant 48 : index
    %c0_17 = arith.constant 0 : index
    %33 = vector.load %arg7[%c48, %c0_17] : memref<272x192xbf16, #tpu.memory_space<vmem>>, vector<14x192xbf16>
    tpu.vector_store %arg7[%c48, %c0_17], %32 {strides = array<i32>} : memref<272x192xbf16, #tpu.memory_space<vmem>>, vector<14x192xbf16>,
    %34 = vector.extract_strided_slice %27 {offsets = [28, 0], sizes = [14, 192], strides = [1, 1]} : vector<196x192xbf16> to vector<14x192xbf16>
    %c64 = arith.constant 64 : index
    %c0_18 = arith.constant 0 : index
    %35 = vector.load %arg7[%c64, %c0_18] : memref<272x192xbf16, #tpu.memory_space<vmem>>, vector<14x192xbf16>
    tpu.vector_store %arg7[%c64, %c0_18], %34 {strides = array<i32>} : memref<272x192xbf16, #tpu.memory_space<vmem>>, vector<14x192xbf16>,
    %36 = vector.extract_strided_slice %27 {offsets = [42, 0], sizes = [14, 192], strides = [1, 1]} : vector<196x192xbf16> to vector<14x192xbf16>
    %c80 = arith.constant 80 : index
    %c0_19 = arith.constant 0 : index
    %37 = vector.load %arg7[%c80, %c0_19] : memref<272x192xbf16, #tpu.memory_space<vmem>>, vector<14x192xbf16>
    tpu.vector_store %arg7[%c80, %c0_19], %36 {strides = array<i32>} : memref<272x192xbf16, #tpu.memory_space<vmem>>, vector<14x192xbf16>,
    %38 = vector.extract_strided_slice %27 {offsets = [56, 0], sizes = [14, 192], strides = [1, 1]} : vector<196x192xbf16> to vector<14x192xbf16>
    %c96 = arith.constant 96 : index
    %c0_20 = arith.constant 0 : index
    %39 = vector.load %arg7[%c96, %c0_20] : memref<272x192xbf16, #tpu.memory_space<vmem>>, vector<14x192xbf16>
    tpu.vector_store %arg7[%c96, %c0_20], %38 {strides = array<i32>} : memref<272x192xbf16, #tpu.memory_space<vmem>>, vector<14x192xbf16>,
    %40 = vector.extract_strided_slice %27 {offsets = [70, 0], sizes = [14, 192], strides = [1, 1]} : vector<196x192xbf16> to vector<14x192xbf16>
    %c112 = arith.constant 112 : index
    %c0_21 = arith.constant 0 : index
    %41 = vector.load %arg7[%c112, %c0_21] : memref<272x192xbf16, #tpu.memory_space<vmem>>, vector<14x192xbf16>
    tpu.vector_store %arg7[%c112, %c0_21], %40 {strides = array<i32>} : memref<272x192xbf16, #tpu.memory_space<vmem>>, vector<14x192xbf16>,
    %42 = vector.extract_strided_slice %27 {offsets = [84, 0], sizes = [14, 192], strides = [1, 1]} : vector<196x192xbf16> to vector<14x192xbf16>
    %c128 = arith.constant 128 : index
    %c0_22 = arith.constant 0 : index
    %43 = vector.load %arg7[%c128, %c0_22] : memref<272x192xbf16, #tpu.memory_space<vmem>>, vector<14x192xbf16>
    tpu.vector_store %arg7[%c128, %c0_22], %42 {strides = array<i32>} : memref<272x192xbf16, #tpu.memory_space<vmem>>, vector<14x192xbf16>,
    %44 = vector.extract_strided_slice %27 {offsets = [98, 0], sizes = [14, 192], strides = [1, 1]} : vector<196x192xbf16> to vector<14x192xbf16>
    %c144 = arith.constant 144 : index
    %c0_23 = arith.constant 0 : index
    %45 = vector.load %arg7[%c144, %c0_23] : memref<272x192xbf16, #tpu.memory_space<vmem>>, vector<14x192xbf16>
    tpu.vector_store %arg7[%c144, %c0_23], %44 {strides = array<i32>} : memref<272x192xbf16, #tpu.memory_space<vmem>>, vector<14x192xbf16>,
    %46 = vector.extract_strided_slice %27 {offsets = [112, 0], sizes = [14, 192], strides = [1, 1]} : vector<196x192xbf16> to vector<14x192xbf16>
    %c160 = arith.constant 160 : index
    %c0_24 = arith.constant 0 : index
    %47 = vector.load %arg7[%c160, %c0_24] : memref<272x192xbf16, #tpu.memory_space<vmem>>, vector<14x192xbf16>
    tpu.vector_store %arg7[%c160, %c0_24], %46 {strides = array<i32>} : memref<272x192xbf16, #tpu.memory_space<vmem>>, vector<14x192xbf16>,
    %48 = vector.extract_strided_slice %27 {offsets = [126, 0], sizes = [14, 192], strides = [1, 1]} : vector<196x192xbf16> to vector<14x192xbf16>
    %c176 = arith.constant 176 : index
    %c0_25 = arith.constant 0 : index
    %49 = vector.load %arg7[%c176, %c0_25] : memref<272x192xbf16, #tpu.memory_space<vmem>>, vector<14x192xbf16>
    tpu.vector_store %arg7[%c176, %c0_25], %48 {strides = array<i32>} : memref<272x192xbf16, #tpu.memory_space<vmem>>, vector<14x192xbf16>,
    %50 = vector.extract_strided_slice %27 {offsets = [140, 0], sizes = [14, 192], strides = [1, 1]} : vector<196x192xbf16> to vector<14x192xbf16>
    %c192 = arith.constant 192 : index
    %c0_26 = arith.constant 0 : index
    %51 = vector.load %arg7[%c192, %c0_26] : memref<272x192xbf16, #tpu.memory_space<vmem>>, vector<14x192xbf16>
    tpu.vector_store %arg7[%c192, %c0_26], %50 {strides = array<i32>} : memref<272x192xbf16, #tpu.memory_space<vmem>>, vector<14x192xbf16>,
    %52 = vector.extract_strided_slice %27 {offsets = [154, 0], sizes = [14, 192], strides = [1, 1]} : vector<196x192xbf16> to vector<14x192xbf16>
    %c208 = arith.constant 208 : index
    %c0_27 = arith.constant 0 : index
    %53 = vector.load %arg7[%c208, %c0_27] : memref<272x192xbf16, #tpu.memory_space<vmem>>, vector<14x192xbf16>
    tpu.vector_store %arg7[%c208, %c0_27], %52 {strides = array<i32>} : memref<272x192xbf16, #tpu.memory_space<vmem>>, vector<14x192xbf16>,
    %54 = vector.extract_strided_slice %27 {offsets = [168, 0], sizes = [14, 192], strides = [1, 1]} : vector<196x192xbf16> to vector<14x192xbf16>
    %c224 = arith.constant 224 : index
    %c0_28 = arith.constant 0 : index
    %55 = vector.load %arg7[%c224, %c0_28] : memref<272x192xbf16, #tpu.memory_space<vmem>>, vector<14x192xbf16>
    tpu.vector_store %arg7[%c224, %c0_28], %54 {strides = array<i32>} : memref<272x192xbf16, #tpu.memory_space<vmem>>, vector<14x192xbf16>,
    %56 = vector.extract_strided_slice %27 {offsets = [182, 0], sizes = [14, 192], strides = [1, 1]} : vector<196x192xbf16> to vector<14x192xbf16>
    %c240 = arith.constant 240 : index
    %c0_29 = arith.constant 0 : index
    %57 = vector.load %arg7[%c240, %c0_29] : memref<272x192xbf16, #tpu.memory_space<vmem>>, vector<14x192xbf16>
    tpu.vector_store %arg7[%c240, %c0_29], %56 {strides = array<i32>} : memref<272x192xbf16, #tpu.memory_space<vmem>>, vector<14x192xbf16>,
    %c14 = arith.constant 14 : index
    %c0_30 = arith.constant 0 : index
    %58 = vector.load %arg7[%c14, %c0_30] : memref<272x192xbf16, #tpu.memory_space<vmem>>, vector<224x192xbf16>
    %c0_31 = arith.constant 0 : index
    %c0_32 = arith.constant 0 : index
    %c0_33 = arith.constant 0 : index
    %59 = vector.load %arg5[%c0_31, %c0_32, %c0_33] : memref<9x192x48xbf16, #tpu.memory_space<vmem>>, vector<1x192x48xbf16>
    %60 = vector.shape_cast %59 : vector<1x192x48xbf16> to vector<192x48xbf16>
    %cst_34 = arith.constant dense<0.000000e+00> : vector<224x48xf32>
    %61 = tpu.matmul %58, %60, %cst_34 {dimension_numbers = #tpu.dot_dimension_numbers<[1], [0], [0], [1], [0, 0, 1, 1], [], []>} : vector<224x192xbf16>, vector<192x48xbf16>, vector<224x48xf32> -> vector<224x48xf32>
    %c0_35 = arith.constant 0 : index
    %c0_36 = arith.constant 0 : index
    %62 = vector.load %arg6[%c0_35, %c0_36] : memref<224x48xf32, #tpu.memory_space<vmem>>, vector<224x48xf32>
    tpu.vector_store %arg6[%c0_35, %c0_36], %61 {strides = array<i32>} : memref<224x48xf32, #tpu.memory_space<vmem>>, vector<224x48xf32>,
    %c15 = arith.constant 15 : index
    %c0_37 = arith.constant 0 : index
    %63 = vector.load %arg7[%c15, %c0_37] : memref<272x192xbf16, #tpu.memory_space<vmem>>, vector<224x192xbf16>
    %c1 = arith.constant 1 : index
    %c0_38 = arith.constant 0 : index
    %c0_39 = arith.constant 0 : index
    %64 = vector.load %arg5[%c1, %c0_38, %c0_39] : memref<9x192x48xbf16, #tpu.memory_space<vmem>>, vector<1x192x48xbf16>
    %65 = vector.shape_cast %64 : vector<1x192x48xbf16> to vector<192x48xbf16>
    %cst_40 = arith.constant dense<0.000000e+00> : vector<224x48xf32>
    %66 = tpu.matmul %63, %65, %cst_40 {dimension_numbers = #tpu.dot_dimension_numbers<[1], [0], [0], [1], [0, 0, 1, 1], [], []>} : vector<224x192xbf16>, vector<192x48xbf16>, vector<224x48xf32> -> vector<224x48xf32>
    %c0_41 = arith.constant 0 : index
    %c0_42 = arith.constant 0 : index
    %67 = vector.load %arg6[%c0_41, %c0_42] : memref<224x48xf32, #tpu.memory_space<vmem>>, vector<224x48xf32>
    %68 = arith.addf %67, %66 : vector<224x48xf32>
    %c0_43 = arith.constant 0 : index
    %c0_44 = arith.constant 0 : index
    %69 = vector.load %arg6[%c0_43, %c0_44] : memref<224x48xf32, #tpu.memory_space<vmem>>, vector<224x48xf32>
    tpu.vector_store %arg6[%c0_43, %c0_44], %68 {strides = array<i32>} : memref<224x48xf32, #tpu.memory_space<vmem>>, vector<224x48xf32>,
    %c16 = arith.constant 16 : index
    %c0_45 = arith.constant 0 : index
    %70 = vector.load %arg7[%c16, %c0_45] : memref<272x192xbf16, #tpu.memory_space<vmem>>, vector<224x192xbf16>
    %c2 = arith.constant 2 : index
    %c0_46 = arith.constant 0 : index
    %c0_47 = arith.constant 0 : index
    %71 = vector.load %arg5[%c2, %c0_46, %c0_47] : memref<9x192x48xbf16, #tpu.memory_space<vmem>>, vector<1x192x48xbf16>
    %72 = vector.shape_cast %71 : vector<1x192x48xbf16> to vector<192x48xbf16>
    %cst_48 = arith.constant dense<0.000000e+00> : vector<224x48xf32>
    %73 = tpu.matmul %70, %72, %cst_48 {dimension_numbers = #tpu.dot_dimension_numbers<[1], [0], [0], [1], [0, 0, 1, 1], [], []>} : vector<224x192xbf16>, vector<192x48xbf16>, vector<224x48xf32> -> vector<224x48xf32>
    %c0_49 = arith.constant 0 : index
    %c0_50 = arith.constant 0 : index
    %74 = vector.load %arg6[%c0_49, %c0_50] : memref<224x48xf32, #tpu.memory_space<vmem>>, vector<224x48xf32>
    %75 = arith.addf %74, %73 : vector<224x48xf32>
    %c0_51 = arith.constant 0 : index
    %c0_52 = arith.constant 0 : index
    %76 = vector.load %arg6[%c0_51, %c0_52] : memref<224x48xf32, #tpu.memory_space<vmem>>, vector<224x48xf32>
    tpu.vector_store %arg6[%c0_51, %c0_52], %75 {strides = array<i32>} : memref<224x48xf32, #tpu.memory_space<vmem>>, vector<224x48xf32>,
    %c30 = arith.constant 30 : index
    %c0_53 = arith.constant 0 : index
    %77 = vector.load %arg7[%c30, %c0_53] : memref<272x192xbf16, #tpu.memory_space<vmem>>, vector<224x192xbf16>
    %c3 = arith.constant 3 : index
    %c0_54 = arith.constant 0 : index
    %c0_55 = arith.constant 0 : index
    %78 = vector.load %arg5[%c3, %c0_54, %c0_55] : memref<9x192x48xbf16, #tpu.memory_space<vmem>>, vector<1x192x48xbf16>
    %79 = vector.shape_cast %78 : vector<1x192x48xbf16> to vector<192x48xbf16>
    %cst_56 = arith.constant dense<0.000000e+00> : vector<224x48xf32>
    %80 = tpu.matmul %77, %79, %cst_56 {dimension_numbers = #tpu.dot_dimension_numbers<[1], [0], [0], [1], [0, 0, 1, 1], [], []>} : vector<224x192xbf16>, vector<192x48xbf16>, vector<224x48xf32> -> vector<224x48xf32>
    %c0_57 = arith.constant 0 : index
    %c0_58 = arith.constant 0 : index
    %81 = vector.load %arg6[%c0_57, %c0_58] : memref<224x48xf32, #tpu.memory_space<vmem>>, vector<224x48xf32>
    %82 = arith.addf %81, %80 : vector<224x48xf32>
    %c0_59 = arith.constant 0 : index
    %c0_60 = arith.constant 0 : index
    %83 = vector.load %arg6[%c0_59, %c0_60] : memref<224x48xf32, #tpu.memory_space<vmem>>, vector<224x48xf32>
    tpu.vector_store %arg6[%c0_59, %c0_60], %82 {strides = array<i32>} : memref<224x48xf32, #tpu.memory_space<vmem>>, vector<224x48xf32>,
    %c31 = arith.constant 31 : index
    %c0_61 = arith.constant 0 : index
    %84 = vector.load %arg7[%c31, %c0_61] : memref<272x192xbf16, #tpu.memory_space<vmem>>, vector<224x192xbf16>
    %c4 = arith.constant 4 : index
    %c0_62 = arith.constant 0 : index
    %c0_63 = arith.constant 0 : index
    %85 = vector.load %arg5[%c4, %c0_62, %c0_63] : memref<9x192x48xbf16, #tpu.memory_space<vmem>>, vector<1x192x48xbf16>
    %86 = vector.shape_cast %85 : vector<1x192x48xbf16> to vector<192x48xbf16>
    %cst_64 = arith.constant dense<0.000000e+00> : vector<224x48xf32>
    %87 = tpu.matmul %84, %86, %cst_64 {dimension_numbers = #tpu.dot_dimension_numbers<[1], [0], [0], [1], [0, 0, 1, 1], [], []>} : vector<224x192xbf16>, vector<192x48xbf16>, vector<224x48xf32> -> vector<224x48xf32>
    %c0_65 = arith.constant 0 : index
    %c0_66 = arith.constant 0 : index
    %88 = vector.load %arg6[%c0_65, %c0_66] : memref<224x48xf32, #tpu.memory_space<vmem>>, vector<224x48xf32>
    %89 = arith.addf %88, %87 : vector<224x48xf32>
    %c0_67 = arith.constant 0 : index
    %c0_68 = arith.constant 0 : index
    %90 = vector.load %arg6[%c0_67, %c0_68] : memref<224x48xf32, #tpu.memory_space<vmem>>, vector<224x48xf32>
    tpu.vector_store %arg6[%c0_67, %c0_68], %89 {strides = array<i32>} : memref<224x48xf32, #tpu.memory_space<vmem>>, vector<224x48xf32>,
    %c32_69 = arith.constant 32 : index
    %c0_70 = arith.constant 0 : index
    %91 = vector.load %arg7[%c32_69, %c0_70] : memref<272x192xbf16, #tpu.memory_space<vmem>>, vector<224x192xbf16>
    %c5 = arith.constant 5 : index
    %c0_71 = arith.constant 0 : index
    %c0_72 = arith.constant 0 : index
    %92 = vector.load %arg5[%c5, %c0_71, %c0_72] : memref<9x192x48xbf16, #tpu.memory_space<vmem>>, vector<1x192x48xbf16>
    %93 = vector.shape_cast %92 : vector<1x192x48xbf16> to vector<192x48xbf16>
    %cst_73 = arith.constant dense<0.000000e+00> : vector<224x48xf32>
    %94 = tpu.matmul %91, %93, %cst_73 {dimension_numbers = #tpu.dot_dimension_numbers<[1], [0], [0], [1], [0, 0, 1, 1], [], []>} : vector<224x192xbf16>, vector<192x48xbf16>, vector<224x48xf32> -> vector<224x48xf32>
    %c0_74 = arith.constant 0 : index
    %c0_75 = arith.constant 0 : index
    %95 = vector.load %arg6[%c0_74, %c0_75] : memref<224x48xf32, #tpu.memory_space<vmem>>, vector<224x48xf32>
    %96 = arith.addf %95, %94 : vector<224x48xf32>
    %c0_76 = arith.constant 0 : index
    %c0_77 = arith.constant 0 : index
    %97 = vector.load %arg6[%c0_76, %c0_77] : memref<224x48xf32, #tpu.memory_space<vmem>>, vector<224x48xf32>
    tpu.vector_store %arg6[%c0_76, %c0_77], %96 {strides = array<i32>} : memref<224x48xf32, #tpu.memory_space<vmem>>, vector<224x48xf32>,
    %c46 = arith.constant 46 : index
    %c0_78 = arith.constant 0 : index
    %98 = vector.load %arg7[%c46, %c0_78] : memref<272x192xbf16, #tpu.memory_space<vmem>>, vector<224x192xbf16>
    %c6 = arith.constant 6 : index
    %c0_79 = arith.constant 0 : index
    %c0_80 = arith.constant 0 : index
    %99 = vector.load %arg5[%c6, %c0_79, %c0_80] : memref<9x192x48xbf16, #tpu.memory_space<vmem>>, vector<1x192x48xbf16>
    %100 = vector.shape_cast %99 : vector<1x192x48xbf16> to vector<192x48xbf16>
    %cst_81 = arith.constant dense<0.000000e+00> : vector<224x48xf32>
    %101 = tpu.matmul %98, %100, %cst_81 {dimension_numbers = #tpu.dot_dimension_numbers<[1], [0], [0], [1], [0, 0, 1, 1], [], []>} : vector<224x192xbf16>, vector<192x48xbf16>, vector<224x48xf32> -> vector<224x48xf32>
    %c0_82 = arith.constant 0 : index
    %c0_83 = arith.constant 0 : index
    %102 = vector.load %arg6[%c0_82, %c0_83] : memref<224x48xf32, #tpu.memory_space<vmem>>, vector<224x48xf32>
    %103 = arith.addf %102, %101 : vector<224x48xf32>
    %c0_84 = arith.constant 0 : index
    %c0_85 = arith.constant 0 : index
    %104 = vector.load %arg6[%c0_84, %c0_85] : memref<224x48xf32, #tpu.memory_space<vmem>>, vector<224x48xf32>
    tpu.vector_store %arg6[%c0_84, %c0_85], %103 {strides = array<i32>} : memref<224x48xf32, #tpu.memory_space<vmem>>, vector<224x48xf32>,
    %c47 = arith.constant 47 : index
    %c0_86 = arith.constant 0 : index
    %105 = vector.load %arg7[%c47, %c0_86] : memref<272x192xbf16, #tpu.memory_space<vmem>>, vector<224x192xbf16>
    %c7 = arith.constant 7 : index
    %c0_87 = arith.constant 0 : index
    %c0_88 = arith.constant 0 : index
    %106 = vector.load %arg5[%c7, %c0_87, %c0_88] : memref<9x192x48xbf16, #tpu.memory_space<vmem>>, vector<1x192x48xbf16>
    %107 = vector.shape_cast %106 : vector<1x192x48xbf16> to vector<192x48xbf16>
    %cst_89 = arith.constant dense<0.000000e+00> : vector<224x48xf32>
    %108 = tpu.matmul %105, %107, %cst_89 {dimension_numbers = #tpu.dot_dimension_numbers<[1], [0], [0], [1], [0, 0, 1, 1], [], []>} : vector<224x192xbf16>, vector<192x48xbf16>, vector<224x48xf32> -> vector<224x48xf32>
    %c0_90 = arith.constant 0 : index
    %c0_91 = arith.constant 0 : index
    %109 = vector.load %arg6[%c0_90, %c0_91] : memref<224x48xf32, #tpu.memory_space<vmem>>, vector<224x48xf32>
    %110 = arith.addf %109, %108 : vector<224x48xf32>
    %c0_92 = arith.constant 0 : index
    %c0_93 = arith.constant 0 : index
    %111 = vector.load %arg6[%c0_92, %c0_93] : memref<224x48xf32, #tpu.memory_space<vmem>>, vector<224x48xf32>
    tpu.vector_store %arg6[%c0_92, %c0_93], %110 {strides = array<i32>} : memref<224x48xf32, #tpu.memory_space<vmem>>, vector<224x48xf32>,
    %c48_94 = arith.constant 48 : index
    %c0_95 = arith.constant 0 : index
    %112 = vector.load %arg7[%c48_94, %c0_95] : memref<272x192xbf16, #tpu.memory_space<vmem>>, vector<224x192xbf16>
    %c8 = arith.constant 8 : index
    %c0_96 = arith.constant 0 : index
    %c0_97 = arith.constant 0 : index
    %113 = vector.load %arg5[%c8, %c0_96, %c0_97] : memref<9x192x48xbf16, #tpu.memory_space<vmem>>, vector<1x192x48xbf16>
    %114 = vector.shape_cast %113 : vector<1x192x48xbf16> to vector<192x48xbf16>
    %cst_98 = arith.constant dense<0.000000e+00> : vector<224x48xf32>
    %115 = tpu.matmul %112, %114, %cst_98 {dimension_numbers = #tpu.dot_dimension_numbers<[1], [0], [0], [1], [0, 0, 1, 1], [], []>} : vector<224x192xbf16>, vector<192x48xbf16>, vector<224x48xf32> -> vector<224x48xf32>
    %c0_99 = arith.constant 0 : index
    %c0_100 = arith.constant 0 : index
    %116 = vector.load %arg6[%c0_99, %c0_100] : memref<224x48xf32, #tpu.memory_space<vmem>>, vector<224x48xf32>
    %117 = arith.addf %116, %115 : vector<224x48xf32>
    %c0_101 = arith.constant 0 : index
    %c0_102 = arith.constant 0 : index
    %118 = vector.load %arg6[%c0_101, %c0_102] : memref<224x48xf32, #tpu.memory_space<vmem>>, vector<224x48xf32>
    tpu.vector_store %arg6[%c0_101, %c0_102], %117 {strides = array<i32>} : memref<224x48xf32, #tpu.memory_space<vmem>>, vector<224x48xf32>,
    return
  }
  func.func @transform_0(%arg0: i32) -> (i32, i32) {
    %c0_i32 = arith.constant 0 : i32
    %c0_i32_0 = arith.constant 0 : i32
    %c0_i32_1 = arith.constant 0 : i32
    return %c0_i32, %c0_i32_0 : i32, i32
  }
  func.func @transform_1(%arg0: i32) -> (i32, i32) {
    %c0_i32 = arith.constant 0 : i32
    %c0_i32_0 = arith.constant 0 : i32
    %c0_i32_1 = arith.constant 0 : i32
    return %c0_i32, %c0_i32_0 : i32, i32
  }
  func.func @transform_2(%arg0: i32) -> (i32, i32) {
    %c0_i32 = arith.constant 0 : i32
    %c0_i32_0 = arith.constant 0 : i32
    %c0_i32_1 = arith.constant 0 : i32
    return %c0_i32, %c0_i32_0 : i32, i32
  }
  func.func @transform_3(%arg0: i32) -> (i32, i32) {
    %c0_i32 = arith.constant 0 : i32
    %c0_i32_0 = arith.constant 0 : i32
    %c0_i32_1 = arith.constant 0 : i32
    return %c0_i32, %c0_i32_0 : i32, i32
  }
  func.func @transform_4(%arg0: i32) -> (i32, i32, i32) {
    %c0_i32 = arith.constant 0 : i32
    %c0_i32_0 = arith.constant 0 : i32
    %c0_i32_1 = arith.constant 0 : i32
    %c0_i32_2 = arith.constant 0 : i32
    return %c0_i32, %c0_i32_0, %c0_i32_1 : i32, i32, i32
  }
  func.func @transform_5(%arg0: i32) -> (i32, i32) {
    %c0_i32 = arith.constant 0 : i32
    %c0_i32_0 = arith.constant 0 : i32
    %c0_i32_1 = arith.constant 0 : i32
    return %c0_i32, %c0_i32_0 : i32, i32
  }
}

</mosaic_0001>

<llo_original>
// kernel: forward.1
$region0: #{forward.1}
  #allocation0 [shape = 'u32[]', space=smem, size = 0x4, offset = 0x4, fixed_abs, tag = 'smem constant byte address 0x4 - core index']
  #allocation1 [shape = 'u32[144,128]{1,0:T(1,128)}', space=vmem, size = 0x12000, scoped, tag = 'internal scratch']
  #allocation2 [shape = 'bf16[272,192]{1,0:T(16,128)(2,1)}', space=vmem, size = 0x22000, scoped, tag = 'scratch operand']
  %s0 = inlined_call_operand.vmem [shape: f32[816,196], index: 0, kind: input, shape index: {}]
  %s1 = inlined_call_operand.vmem [shape: bf16[816,192], index: 1, kind: input, shape index: {}]
  %s2 = inlined_call_operand.vmem [shape: f32[1,192], index: 2, kind: input, shape index: {}]
  %s3 = inlined_call_operand.vmem [shape: f32[1,192], index: 3, kind: input, shape index: {}]
  %s4 = inlined_call_operand.vmem [shape: bf16[9,192,48], index: 4, kind: input, shape index: {}]
  %s5 = inlined_call_operand.vmem [shape: f32[224,48], index: 5, kind: output, shape index: {}]
  %s6 = sld [smem:[#allocation0]]
  $region30: #{forward.1} parent=0
    _
  %s8 = ssub.s32 1, %s6
  %s9 = scalar_select 0, %s8, %s6
  // Predicated region
  $region2: #{forward.1} parent=0 // pred_check
    _
  $region3: #{forward.1} parent=0 // pred_check_branch
    %11 = sbr.rel (0) target = $region5
  $region4: #{forward.1} parent=0 // pred_region
    _
  $region5: #{forward.1} parent=0 // pred_fallthru
    _
  // Predicated region
  $region6: #{forward.1} parent=0 // pred_check
    _
  $region7: #{forward.1} parent=0 // pred_check_branch
    %13 = sbr.rel (0) target = $region9
  $region8: #{forward.1} parent=0 // pred_region
    _
  $region9: #{forward.1} parent=0 // pred_fallthru
    _
  // Predicated region
  $region10: #{forward.1} parent=0 // pred_check
    _
  $region11: #{forward.1} parent=0 // pred_check_branch
    %15 = sbr.rel (0) target = $region13
  $region12: #{forward.1} parent=0 // pred_region
    _
  $region13: #{forward.1} parent=0 // pred_fallthru
    _
  // Predicated region
  $region14: #{forward.1} parent=0 // pred_check
    _
  $region15: #{forward.1} parent=0 // pred_check_branch
    %17 = sbr.rel (0) target = $region17
  $region16: #{forward.1} parent=0 // pred_region
    _
  $region17: #{forward.1} parent=0 // pred_fallthru
    _
  // Predicated region
  $region18: #{forward.1} parent=0 // pred_check
    _
  $region19: #{forward.1} parent=0 // pred_check_branch
    %19 = sbr.rel (0) target = $region21
  $region20: #{forward.1} parent=0 // pred_region
    _
  $region21: #{forward.1} parent=0 // pred_fallthru
    _
  %v21 = vld [vmem:[%s0] sm:$0xff]
  %v22 = vld [vmem:[%s0 + $0x8] sm:$0xff]
  %v23 = vld [vmem:[%s0 + $0x10] sm:$0xff]
  %v24 = vld [vmem:[%s0 + $0x18] sm:$0xff]
  %v25 = vld [vmem:[%s0 + $0x20] sm:$0xff]
  %v26 = vld [vmem:[%s0 + $0x28] sm:$0xff]
  %v27 = vld [vmem:[%s0 + $0x30] sm:$0xff]
  %v28 = vld [vmem:[%s0 + $0x38] sm:$0xff]
  %v29 = vld [vmem:[%s0 + $0x40] sm:$0xff]
  %v30 = vld [vmem:[%s0 + $0x48] sm:$0xff]
  %v31 = vld [vmem:[%s0 + $0x50] sm:$0xff]
  %v32 = vld [vmem:[%s0 + $0x58] sm:$0xff]
  %v33 = vld [vmem:[%s0 + $0x60] sm:$0xff]
  %v34 = vld [vmem:[%s0 + $0x68] sm:$0xff]
  %v35 = vld [vmem:[%s0 + $0x70] sm:$0xff]
  %v36 = vld [vmem:[%s0 + $0x78] sm:$0xff]
  %v37 = vld [vmem:[%s0 + $0x80] sm:$0xff]
  %v38 = vld [vmem:[%s0 + $0x88] sm:$0xff]
  %v39 = vld [vmem:[%s0 + $0x90] sm:$0xff]
  %v40 = vld [vmem:[%s0 + $0x98] sm:$0xff]
  %v41 = vld [vmem:[%s0 + $0xa0] sm:$0xff]
  %v42 = vld [vmem:[%s0 + $0xa8] sm:$0xff]
  %v43 = vld [vmem:[%s0 + $0xb0] sm:$0xff]
  %v44 = vld [vmem:[%s0 + $0xb8] sm:$0xff]
  %v45 = vld [vmem:[%s0 + $0xc0] sm:$0xff]
  %v46 = vld [vmem:[%s0 + $0xc8] sm:$0xff]
  %v47 = vld [vmem:[%s0 + $0xd0] sm:$0xff]
  %v48 = vld [vmem:[%s0 + $0xd8] sm:$0xff]
  %v49 = vld [vmem:[%s0 + $0xe0] sm:$0xff]
  %v50 = vld [vmem:[%s0 + $0xe8] sm:$0xff]
  %v51 = vld [vmem:[%s0 + $0xf0] sm:$0xff]
  %v52 = vld [vmem:[%s0 + $0xf8] sm:$0xff]
  %v53 = vld [vmem:[%s0 + $0x100] sm:$0xff]
  %v54 = vld [vmem:[%s0 + $0x108] sm:$0xff]
  %v55 = vld [vmem:[%s0 + $0x110] sm:$0xff]
  %v56 = vld [vmem:[%s0 + $0x118] sm:$0xff]
  %v57 = vld [vmem:[%s0 + $0x120] sm:$0xff]
  %v58 = vld [vmem:[%s0 + $0x128] sm:$0xff]
  %v59 = vld [vmem:[%s0 + $0x130] sm:$0xff]
  %v60 = vld [vmem:[%s0 + $0x138] sm:$0xff]
  %v61 = vld [vmem:[%s0 + $0x140] sm:$0xff]
  %v62 = vld [vmem:[%s0 + $0x148] sm:$0xff]
  %v63 = vld [vmem:[%s0 + $0x150] sm:$0xff]
  %v64 = vld [vmem:[%s0 + $0x158] sm:$0xff]
  %v65 = vld [vmem:[%s0 + $0x160] sm:$0xff]
  %v66 = vld [vmem:[%s0 + $0x168] sm:$0xff]
  %v67 = vld [vmem:[%s0 + $0x170] sm:$0xff]
  %v68 = vld [vmem:[%s0 + $0x178] sm:$0xff]
  %v69 = vld [vmem:[%s0 + $0x180] sm:$0xff]
  %v70 = vld [vmem:[%s0 + $0x188] sm:$0xff]
  %v71 = vld [vmem:[%s0 + $0x190] sm:$0xff]
  %v72 = vld [vmem:[%s0 + $0x198] sm:$0xff]
  %v73 = vld [vmem:[%s0 + $0x1a0] sm:$0xff]
  %v74 = vld [vmem:[%s0 + $0x1a8] sm:$0xff]
  %v75 = vld [vmem:[%s0 + $0x1b0] sm:$0xff]
  %v76 = vld [vmem:[%s0 + $0x1b8] sm:$0xff]
  %v77 = vld [vmem:[%s0 + $0x1c0] sm:$0xff]
  %v78 = vld [vmem:[%s0 + $0x1c8] sm:$0xff]
  %v79 = vld [vmem:[%s0 + $0x1d0] sm:$0xff]
  %v80 = vld [vmem:[%s0 + $0x1d8] sm:$0xff]
  %v81 = vld [vmem:[%s0 + $0x1e0] sm:$0xff]
  %v82 = vld [vmem:[%s0 + $0x1e8] sm:$0xff]
  %v83 = vld [vmem:[%s0 + $0x1f0] sm:$0xff]
  %v84 = vld [vmem:[%s0 + $0x1f8] sm:$0xff]
  %v85 = vld [vmem:[%s0 + $0x200] sm:$0xff]
  %v86 = vld [vmem:[%s0 + $0x208] sm:$0xff]
  %v87 = vld [vmem:[%s0 + $0x210] sm:$0xff]
  %v88 = vld [vmem:[%s0 + $0x218] sm:$0xff]
  %v89 = vld [vmem:[%s0 + $0x220] sm:$0xff]
  %v90 = vld [vmem:[%s0 + $0x228] sm:$0xff]
  %v91 = vld [vmem:[%s0 + $0x230] sm:$0xff]
  %v92 = vld [vmem:[%s0 + $0x238] sm:$0xff]
  %v93 = vld [vmem:[%s0 + $0x240] sm:$0xff]
  %v94 = vld [vmem:[%s0 + $0x248] sm:$0xff]
  %v95 = vld [vmem:[%s0 + $0x250] sm:$0xff]
  %v96 = vld [vmem:[%s0 + $0x258] sm:$0xff]
  %v97 = vld [vmem:[%s0 + $0x260] sm:$0xff]
  %v98 = vld [vmem:[%s0 + $0x268] sm:$0xff]
  %v99 = vld [vmem:[%s0 + $0x270] sm:$0xff]
  %v100 = vld [vmem:[%s0 + $0x278] sm:$0xff]
  %v101 = vld [vmem:[%s0 + $0x280] sm:$0xff]
  %v102 = vld [vmem:[%s0 + $0x288] sm:$0xff]
  %v103 = vld [vmem:[%s0 + $0x290] sm:$0xff]
  %v104 = vld [vmem:[%s0 + $0x298] sm:$0xff]
  %v105 = vld [vmem:[%s0 + $0x2a0] sm:$0xff]
  %v106 = vld [vmem:[%s0 + $0x2a8] sm:$0xff]
  %v107 = vld [vmem:[%s0 + $0x2b0] sm:$0xff]
  %v108 = vld [vmem:[%s0 + $0x2b8] sm:$0xff]
  %v109 = vld [vmem:[%s0 + $0x2c0] sm:$0xff]
  %v110 = vld [vmem:[%s0 + $0x2c8] sm:$0xff]
  %v111 = vld [vmem:[%s0 + $0x2d0] sm:$0xff]
  %v112 = vld [vmem:[%s0 + $0x2d8] sm:$0xff]
  %v113 = vld [vmem:[%s0 + $0x2e0] sm:$0xff]
  %v114 = vld [vmem:[%s0 + $0x2e8] sm:$0xff]
  %v115 = vld [vmem:[%s0 + $0x2f0] sm:$0xff]
  %v116 = vld [vmem:[%s0 + $0x2f8] sm:$0xff]
  %v117 = vld [vmem:[%s0 + $0x300] sm:$0xff]
  %v118 = vld [vmem:[%s0 + $0x308] sm:$0xff]
  %v119 = vld [vmem:[%s0 + $0x310] sm:$0xff]
  %v120 = vld [vmem:[%s0 + $0x318] sm:$0xff]
  %v121 = vld [vmem:[%s0 + $0x320] sm:$0xff]
  %v122 = vld [vmem:[%s0 + $0x328] sm:$0xff]
  %v123 = vld [vmem:[%s0 + $0x330] sm:$0xff]
  %v124 = vld [vmem:[%s0 + $0x338] sm:$0xff]
  %v125 = vld [vmem:[%s0 + $0x340] sm:$0xff]
  %v126 = vld [vmem:[%s0 + $0x348] sm:$0xff]
  %v127 = vld [vmem:[%s0 + $0x350] sm:$0xff]
  %v128 = vld [vmem:[%s0 + $0x358] sm:$0xff]
  %v129 = vld [vmem:[%s0 + $0x360] sm:$0xff]
  %v130 = vld [vmem:[%s0 + $0x368] sm:$0xff]
  %v131 = vld [vmem:[%s0 + $0x370] sm:$0xff]
  %v132 = vld [vmem:[%s0 + $0x378] sm:$0xff]
  %v133 = vld [vmem:[%s0 + $0x380] sm:$0xff]
  %v134 = vld [vmem:[%s0 + $0x388] sm:$0xff]
  %v135 = vld [vmem:[%s0 + $0x390] sm:$0xff]
  %v136 = vld [vmem:[%s0 + $0x398] sm:$0xff]
  %v137 = vld [vmem:[%s0 + $0x3a0] sm:$0xff]
  %v138 = vld [vmem:[%s0 + $0x3a8] sm:$0xff]
  %v139 = vld [vmem:[%s0 + $0x3b0] sm:$0xff]
  %v140 = vld [vmem:[%s0 + $0x3b8] sm:$0xff]
  %v141 = vld [vmem:[%s0 + $0x3c0] sm:$0xff]
  %v142 = vld [vmem:[%s0 + $0x3c8] sm:$0xff]
  %v143 = vld [vmem:[%s0 + $0x3d0] sm:$0xff]
  %v144 = vld [vmem:[%s0 + $0x3d8] sm:$0xff]
  %v145 = vld [vmem:[%s0 + $0x3e0] sm:$0xff]
  %v146 = vld [vmem:[%s0 + $0x3e8] sm:$0xff]
  %v147 = vld [vmem:[%s0 + $0x3f0] sm:$0xff]
  %v148 = vld [vmem:[%s0 + $0x3f8] sm:$0xff]
  %v149 = vld [vmem:[%s0 + $0x400] sm:$0xff]
  %v150 = vld [vmem:[%s0 + $0x408] sm:$0xff]
  %v151 = vld [vmem:[%s0 + $0x410] sm:$0xff]
  %v152 = vld [vmem:[%s0 + $0x418] sm:$0xff]
  %v153 = vld [vmem:[%s0 + $0x420] sm:$0xff]
  %v154 = vld [vmem:[%s0 + $0x428] sm:$0xff]
  %v155 = vld [vmem:[%s0 + $0x430] sm:$0xff]
  %v156 = vld [vmem:[%s0 + $0x438] sm:$0xff]
  %v157 = vld [vmem:[%s0 + $0x440] sm:$0xff]
  %v158 = vld [vmem:[%s0 + $0x448] sm:$0xff]
  %v159 = vld [vmem:[%s0 + $0x450] sm:$0xff]
  %v160 = vld [vmem:[%s0 + $0x458] sm:$0xff]
  %v161 = vld [vmem:[%s0 + $0x460] sm:$0xff]
  %v162 = vld [vmem:[%s0 + $0x468] sm:$0xff]
  %v163 = vld [vmem:[%s0 + $0x470] sm:$0xff]
  %v164 = vld [vmem:[%s0 + $0x478] sm:$0xff]
  %v165 = vld [vmem:[%s0 + $0x480] sm:$0xff]
  %v166 = vld [vmem:[%s0 + $0x488] sm:$0xff]
  %v167 = vld [vmem:[%s0 + $0x490] sm:$0xff]
  %v168 = vld [vmem:[%s0 + $0x498] sm:$0xff]
  %v169 = vld [vmem:[%s0 + $0x4a0] sm:$0xff]
  %v170 = vld [vmem:[%s0 + $0x4a8] sm:$0xff]
  %v171 = vld [vmem:[%s0 + $0x4b0] sm:$0xff]
  %v172 = vld [vmem:[%s0 + $0x4b8] sm:$0xff]
  %v173 = vld [vmem:[%s0 + $0x4c0] sm:$0xff]
  %v174 = vld [vmem:[%s0 + $0x4c8] sm:$0xff]
  %v175 = vld [vmem:[%s0 + $0x4d0] sm:$0xff]
  %v176 = vld [vmem:[%s0 + $0x4d8] sm:$0xff]
  %v177 = vld [vmem:[%s0 + $0x4e0] sm:$0xff]
  %v178 = vld [vmem:[%s0 + $0x4e8] sm:$0xff]
  %v179 = vld [vmem:[%s0 + $0x4f0] sm:$0xff]
  %v180 = vld [vmem:[%s0 + $0x4f8] sm:$0xff]
  %v181 = vld [vmem:[%s0 + $0x500] sm:$0xff]
  %v182 = vld [vmem:[%s0 + $0x508] sm:$0xff]
  %v183 = vld [vmem:[%s0 + $0x510] sm:$0xff]
  %v184 = vld [vmem:[%s0 + $0x518] sm:$0xff]
  %v185 = vld [vmem:[%s0 + $0x520] sm:$0xff]
  %v186 = vld [vmem:[%s0 + $0x528] sm:$0xff]
  %v187 = vld [vmem:[%s0 + $0x530] sm:$0xff]
  %v188 = vld [vmem:[%s0 + $0x538] sm:$0xff]
  %v189 = vld [vmem:[%s0 + $0x540] sm:$0xff]
  %v190 = vld [vmem:[%s0 + $0x548] sm:$0xff]
  %v191 = vld [vmem:[%s0 + $0x550] sm:$0xff]
  %v192 = vld [vmem:[%s0 + $0x558] sm:$0xff]
  %v193 = vld [vmem:[%s0 + $0x560] sm:$0xff]
  %v194 = vld [vmem:[%s0 + $0x568] sm:$0xff]
  %v195 = vld [vmem:[%s0 + $0x570] sm:$0xff]
  %v196 = vld [vmem:[%s0 + $0x578] sm:$0xff]
  %v197 = vld [vmem:[%s0 + $0x580] sm:$0xff]
  %v198 = vld [vmem:[%s0 + $0x588] sm:$0xff]
  %v199 = vld [vmem:[%s0 + $0x590] sm:$0xff]
  %v200 = vld [vmem:[%s0 + $0x598] sm:$0xff]
  %v201 = vld [vmem:[%s0 + $0x5a0] sm:$0xff]
  %v202 = vld [vmem:[%s0 + $0x5a8] sm:$0xff]
  %v203 = vld [vmem:[%s0 + $0x5b0] sm:$0xff]
  %v204 = vld [vmem:[%s0 + $0x5b8] sm:$0xff]
  %v205 = vld [vmem:[%s0 + $0x5c0] sm:$0xff]
  %v206 = vld [vmem:[%s0 + $0x5c8] sm:$0xff]
  %v207 = vld [vmem:[%s0 + $0x5d0] sm:$0xff]
  %v208 = vld [vmem:[%s0 + $0x5d8] sm:$0xff]
  %v209 = vld [vmem:[%s0 + $0x5e0] sm:$0xff]
  %v210 = vld [vmem:[%s0 + $0x5e8] sm:$0xff]
  %v211 = vld [vmem:[%s0 + $0x5f0] sm:$0xff]
  %v212 = vld [vmem:[%s0 + $0x5f8] sm:$0xff]
  %v213 = vld [vmem:[%s0 + $0x600] sm:$0xff]
  %v214 = vld [vmem:[%s0 + $0x608] sm:$0xff]
  %v215 = vld [vmem:[%s0 + $0x610] sm:$0xff]
  %v216 = vld [vmem:[%s0 + $0x618] sm:$0xff]
  %v217 = vld [vmem:[%s0 + $0x620] sm:$0xff]
  %v218 = vld [vmem:[%s0 + $0x628] sm:$0xff]
  %v219 = vld [vmem:[%s0 + $0x630] sm:$0xff]
  %v220 = vld [vmem:[%s0 + $0x638] sm:$0xff]
  %v221 = vld [vmem:[%s0 + $0x640] sm:$0xff]
  %v222 = vld [vmem:[%s0 + $0x648] sm:$0xff]
  %v223 = vld [vmem:[%s0 + $0x650] sm:$0xff]
  %v224 = vld [vmem:[%s0 + $0x658] sm:$0xff]
  %v225 = vpack.c.bf16 %v23, %v21
  %v226 = vpack.c.bf16 %v24, %v22
  %v227 = vpack.c.bf16 %v27, %v25
  %v228 = vpack.c.bf16 %v28, %v26
  %v229 = vpack.c.bf16 %v31, %v29
  %v230 = vpack.c.bf16 %v32, %v30
  %v231 = vpack.c.bf16 %v35, %v33
  %v232 = vpack.c.bf16 %v36, %v34
  %v233 = vpack.c.bf16 %v39, %v37
  %v234 = vpack.c.bf16 %v40, %v38
  %v235 = vpack.c.bf16 %v43, %v41
  %v236 = vpack.c.bf16 %v44, %v42
  %v237 = vpack.c.bf16 %v47, %v45
  %v238 = vpack.c.bf16 %v48, %v46
  %v239 = vpack.c.bf16 %v51, %v49
  %v240 = vpack.c.bf16 %v52, %v50
  %v241 = vpack.c.bf16 %v55, %v53
  %v242 = vpack.c.bf16 %v56, %v54
  %v243 = vpack.c.bf16 %v59, %v57
  %v244 = vpack.c.bf16 %v60, %v58
  %v245 = vpack.c.bf16 %v63, %v61
  %v246 = vpack.c.bf16 %v64, %v62
  %v247 = vpack.c.bf16 %v67, %v65
  %v248 = vpack.c.bf16 %v68, %v66
  %v249 = vpack.c.bf16 %v71, %v69
  %v250 = vpack.c.bf16 %v72, %v70
  %v251 = vpack.c.bf16 %v75, %v73
  %v252 = vpack.c.bf16 %v76, %v74
  %v253 = vpack.c.bf16 %v79, %v77
  %v254 = vpack.c.bf16 %v80, %v78
  %v255 = vpack.c.bf16 %v83, %v81
  %v256 = vpack.c.bf16 %v84, %v82
  %v257 = vpack.c.bf16 %v87, %v85
  %v258 = vpack.c.bf16 %v88, %v86
  %v259 = vpack.c.bf16 %v91, %v89
  %v260 = vpack.c.bf16 %v92, %v90
  %v261 = vpack.c.bf16 %v95, %v93
  %v262 = vpack.c.bf16 %v96, %v94
  %v263 = vpack.c.bf16 %v99, %v97
  %v264 = vpack.c.bf16 %v100, %v98
  %v265 = vpack.c.bf16 %v103, %v101
  %v266 = vpack.c.bf16 %v104, %v102
  %v267 = vpack.c.bf16 %v107, %v105
  %v268 = vpack.c.bf16 %v108, %v106
  %v269 = vpack.c.bf16 %v111, %v109
  %v270 = vpack.c.bf16 %v112, %v110
  %v271 = vpack.c.bf16 %v115, %v113
  %v272 = vpack.c.bf16 %v116, %v114
  %v273 = vpack.c.bf16 %v119, %v117
  %v274 = vpack.c.bf16 %v120, %v118
  %v275 = vpack.c.bf16 %v123, %v121
  %v276 = vpack.c.bf16 %v124, %v122
  %v277 = vpack.c.bf16 %v127, %v125
  %v278 = vpack.c.bf16 %v128, %v126
  %v279 = vpack.c.bf16 %v131, %v129
  %v280 = vpack.c.bf16 %v132, %v130
  %v281 = vpack.c.bf16 %v135, %v133
  %v282 = vpack.c.bf16 %v136, %v134
  %v283 = vpack.c.bf16 %v139, %v137
  %v284 = vpack.c.bf16 %v140, %v138
  %v285 = vpack.c.bf16 %v143, %v141
  %v286 = vpack.c.bf16 %v144, %v142
  %v287 = vpack.c.bf16 %v147, %v145
  %v288 = vpack.c.bf16 %v148, %v146
  %v289 = vpack.c.bf16 %v151, %v149
  %v290 = vpack.c.bf16 %v152, %v150
  %v291 = vpack.c.bf16 %v155, %v153
  %v292 = vpack.c.bf16 %v156, %v154
  %v293 = vpack.c.bf16 %v159, %v157
  %v294 = vpack.c.bf16 %v160, %v158
  %v295 = vpack.c.bf16 %v163, %v161
  %v296 = vpack.c.bf16 %v164, %v162
  %v297 = vpack.c.bf16 %v167, %v165
  %v298 = vpack.c.bf16 %v168, %v166
  %v299 = vpack.c.bf16 %v171, %v169
  %v300 = vpack.c.bf16 %v172, %v170
  %v301 = vpack.c.bf16 %v175, %v173
  %v302 = vpack.c.bf16 %v176, %v174
  %v303 = vpack.c.bf16 %v179, %v177
  %v304 = vpack.c.bf16 %v180, %v178
  %v305 = vpack.c.bf16 %v183, %v181
  %v306 = vpack.c.bf16 %v184, %v182
  %v307 = vpack.c.bf16 %v187, %v185
  %v308 = vpack.c.bf16 %v188, %v186
  %v309 = vpack.c.bf16 %v191, %v189
  %v310 = vpack.c.bf16 %v192, %v190
  %v311 = vpack.c.bf16 %v195, %v193
  %v312 = vpack.c.bf16 %v196, %v194
  %v313 = vpack.c.bf16 %v199, %v197
  %v314 = vpack.c.bf16 %v200, %v198
  %v315 = vpack.c.bf16 %v203, %v201
  %v316 = vpack.c.bf16 %v204, %v202
  %v317 = vpack.c.bf16 %v207, %v205
  %v318 = vpack.c.bf16 %v208, %v206
  %v319 = vpack.c.bf16 %v211, %v209
  %v320 = vpack.c.bf16 %v212, %v210
  %v321 = vpack.c.bf16 %v215, %v213
  %v322 = vpack.c.bf16 %v216, %v214
  %v323 = vpack.c.bf16 %v219, %v217
  %v324 = vpack.c.bf16 %v220, %v218
  %v325 = vpack.c.bf16 %v223, %v221
  %v326 = vpack.c.bf16 %v224, %v222
  %v327 = vld [vmem:[%s1] sm:$0xff]
  %v328 = vld [vmem:[%s1 + $0x8] sm:$0xff]
  %v329 = vld [vmem:[%s1 + $0x10] sm:$0xff]
  %v330 = vld [vmem:[%s1 + $0x18] sm:$0xff]
  %v331 = vld [vmem:[%s1 + $0x20] sm:$0xff]
  %v332 = vld [vmem:[%s1 + $0x28] sm:$0xff]
  %v333 = vld [vmem:[%s1 + $0x30] sm:$0xff]
  %v334 = vld [vmem:[%s1 + $0x38] sm:$0xff]
  %v335 = vld [vmem:[%s1 + $0x40] sm:$0xff]
  %v336 = vld [vmem:[%s1 + $0x48] sm:$0xff]
  %v337 = vld [vmem:[%s1 + $0x50] sm:$0xff]
  %v338 = vld [vmem:[%s1 + $0x58] sm:$0xff]
  %v339 = vld [vmem:[%s1 + $0x60] sm:$0xff]
  %v340 = vld [vmem:[%s1 + $0x68] sm:$0xff]
  %v341 = vld [vmem:[%s1 + $0x70] sm:$0xff]
  %v342 = vld [vmem:[%s1 + $0x78] sm:$0xff]
  %v343 = vld [vmem:[%s1 + $0x80] sm:$0xff]
  %v344 = vld [vmem:[%s1 + $0x88] sm:$0xff]
  %v345 = vld [vmem:[%s1 + $0x90] sm:$0xff]
  %v346 = vld [vmem:[%s1 + $0x98] sm:$0xff]
  %v347 = vld [vmem:[%s1 + $0xa0] sm:$0xff]
  %v348 = vld [vmem:[%s1 + $0xa8] sm:$0xff]
  %v349 = vld [vmem:[%s1 + $0xb0] sm:$0xff]
  %v350 = vld [vmem:[%s1 + $0xb8] sm:$0xff]
  %v351 = vld [vmem:[%s1 + $0xc0] sm:$0xff]
  %v352 = vld [vmem:[%s1 + $0xc8] sm:$0xff]
  %v353 = vld [vmem:[%s1 + $0xd0] sm:$0xff]
  %v354 = vld [vmem:[%s1 + $0xd8] sm:$0xff]
  %v355 = vld [vmem:[%s1 + $0xe0] sm:$0xff]
  %v356 = vld [vmem:[%s1 + $0xe8] sm:$0xff]
  %v357 = vld [vmem:[%s1 + $0xf0] sm:$0xff]
  %v358 = vld [vmem:[%s1 + $0xf8] sm:$0xff]
  %v359 = vld [vmem:[%s1 + $0x100] sm:$0xff]
  %v360 = vld [vmem:[%s1 + $0x108] sm:$0xff]
  %v361 = vld [vmem:[%s1 + $0x110] sm:$0xff]
  %v362 = vld [vmem:[%s1 + $0x118] sm:$0xff]
  %v363 = vld [vmem:[%s1 + $0x120] sm:$0xff]
  %v364 = vld [vmem:[%s1 + $0x128] sm:$0xff]
  %v365 = vld [vmem:[%s1 + $0x130] sm:$0xff]
  %v366 = vld [vmem:[%s1 + $0x138] sm:$0xff]
  %v367 = vld [vmem:[%s1 + $0x140] sm:$0xff]
  %v368 = vld [vmem:[%s1 + $0x148] sm:$0xff]
  %v369 = vld [vmem:[%s1 + $0x150] sm:$0xff]
  %v370 = vld [vmem:[%s1 + $0x158] sm:$0xff]
  %v371 = vld [vmem:[%s1 + $0x160] sm:$0xff]
  %v372 = vld [vmem:[%s1 + $0x168] sm:$0xff]
  %v373 = vld [vmem:[%s1 + $0x170] sm:$0xff]
  %v374 = vld [vmem:[%s1 + $0x178] sm:$0xff]
  %v375 = vld [vmem:[%s1 + $0x180] sm:$0xff]
  %v376 = vld [vmem:[%s1 + $0x188] sm:$0xff]
  %v377 = vld [vmem:[%s1 + $0x190] sm:$0xff]
  %v378 = vld [vmem:[%s1 + $0x198] sm:$0xff]
  %v379 = vld [vmem:[%s1 + $0x1a0] sm:$0xff]
  %v380 = vld [vmem:[%s1 + $0x1a8] sm:$0xff]
  %v381 = vld [vmem:[%s1 + $0x1b0] sm:$0xff]
  %v382 = vld [vmem:[%s1 + $0x1b8] sm:$0xff]
  %v383 = vld [vmem:[%s1 + $0x1c0] sm:$0xff]
  %v384 = vld [vmem:[%s1 + $0x1c8] sm:$0xff]
  %v385 = vld [vmem:[%s1 + $0x1d0] sm:$0xff]
  %v386 = vld [vmem:[%s1 + $0x1d8] sm:$0xff]
  %v387 = vld [vmem:[%s1 + $0x1e0] sm:$0xff]
  %v388 = vld [vmem:[%s1 + $0x1e8] sm:$0xff]
  %v389 = vld [vmem:[%s1 + $0x1f0] sm:$0xff]
  %v390 = vld [vmem:[%s1 + $0x1f8] sm:$0xff]
  %v391 = vld [vmem:[%s1 + $0x200] sm:$0xff]
  %v392 = vld [vmem:[%s1 + $0x208] sm:$0xff]
  %v393 = vld [vmem:[%s1 + $0x210] sm:$0xff]
  %v394 = vld [vmem:[%s1 + $0x218] sm:$0xff]
  %v395 = vld [vmem:[%s1 + $0x220] sm:$0xff]
  %v396 = vld [vmem:[%s1 + $0x228] sm:$0xff]
  %v397 = vld [vmem:[%s1 + $0x230] sm:$0xff]
  %v398 = vld [vmem:[%s1 + $0x238] sm:$0xff]
  %v399 = vld [vmem:[%s1 + $0x240] sm:$0xff]
  %v400 = vld [vmem:[%s1 + $0x248] sm:$0xff]
  %v401 = vld [vmem:[%s1 + $0x250] sm:$0xff]
  %v402 = vld [vmem:[%s1 + $0x258] sm:$0xff]
  %v403 = vld [vmem:[%s1 + $0x260] sm:$0xff]
  %v404 = vld [vmem:[%s1 + $0x268] sm:$0xff]
  %v405 = vld [vmem:[%s1 + $0x270] sm:$0xff]
  %v406 = vld [vmem:[%s1 + $0x278] sm:$0xff]
  %v407 = vld [vmem:[%s1 + $0x280] sm:$0xff]
  %v408 = vld [vmem:[%s1 + $0x288] sm:$0xff]
  %v409 = vld [vmem:[%s1 + $0x290] sm:$0xff]
  %v410 = vld [vmem:[%s1 + $0x298] sm:$0xff]
  %v411 = vld [vmem:[%s1 + $0x2a0] sm:$0xff]
  %v412 = vld [vmem:[%s1 + $0x2a8] sm:$0xff]
  %v413 = vld [vmem:[%s1 + $0x2b0] sm:$0xff]
  %v414 = vld [vmem:[%s1 + $0x2b8] sm:$0xff]
  %v415 = vld [vmem:[%s1 + $0x2c0] sm:$0xff]
  %v416 = vld [vmem:[%s1 + $0x2c8] sm:$0xff]
  %v417 = vld [vmem:[%s1 + $0x2d0] sm:$0xff]
  %v418 = vld [vmem:[%s1 + $0x2d8] sm:$0xff]
  %v419 = vld [vmem:[%s1 + $0x2e0] sm:$0xff]
  %v420 = vld [vmem:[%s1 + $0x2e8] sm:$0xff]
  %v421 = vld [vmem:[%s1 + $0x2f0] sm:$0xff]
  %v422 = vld [vmem:[%s1 + $0x2f8] sm:$0xff]
  %v423 = vld [vmem:[%s1 + $0x300] sm:$0xff]
  %v424 = vld [vmem:[%s1 + $0x308] sm:$0xff]
  %v425 = vld [vmem:[%s1 + $0x310] sm:$0xff]
  %v426 = vld [vmem:[%s1 + $0x318] sm:$0xff]
  %v427 = vld [vmem:[%s1 + $0x320] sm:$0xff]
  %v428 = vld [vmem:[%s1 + $0x328] sm:$0xff]
  %429 = vxpose.xlu0.c.b16.start [1/8] %v225, 128
  %430 = vxpose.xlu0.c.b16.cont [2/8] %v227, 128
  %431 = vxpose.xlu0.c.b16.cont [3/8] %v229, 128
  %432 = vxpose.xlu0.c.b16.cont [4/8] %v231, 128
  %433 = vxpose.xlu0.c.b16.cont [5/8] %v233, 128
  %434 = vxpose.xlu0.c.b16.cont [6/8] %v235, 128
  %435 = vxpose.xlu0.c.b16.cont [7/8] %v237, 128
  %436 = vxpose.xlu0.c.b16.end [8/8] %v239, 128
  %v437 = vpop.trf.xlu0
  %v438 = vpop.trf.xlu0
  %v439 = vpop.trf.xlu0
  %v440 = vpop.trf.xlu0
  %v441 = vpop.trf.xlu0
  %v442 = vpop.trf.xlu0
  %v443 = vpop.trf.xlu0
  %v444 = vpop.trf.xlu0
  %445 = vxpose.xlu0.c.b16.start [1/8] %v226, 128
  %446 = vxpose.xlu0.c.b16.cont [2/8] %v228, 128
  %447 = vxpose.xlu0.c.b16.cont [3/8] %v230, 128
  %448 = vxpose.xlu0.c.b16.cont [4/8] %v232, 128
  %449 = vxpose.xlu0.c.b16.cont [5/8] %v234, 128
  %450 = vxpose.xlu0.c.b16.cont [6/8] %v236, 128
  %451 = vxpose.xlu0.c.b16.cont [7/8] %v238, 128
  %452 = vxpose.xlu0.c.b16.end [8/8] %v240, 128
  %v453 = vpop.trf.xlu0
  %v454 = vpop.trf.xlu0
  %v455 = vpop.trf.xlu0
  %v456 = vpop.trf.xlu0
  %v457 = vpop.trf.xlu0
  %v458 = vpop.trf.xlu0
  %v459 = vpop.trf.xlu0
  %v460 = vpop.trf.xlu0
  %461 = vxpose.xlu0.c.b16.start [1/8] %v241, 128
  %462 = vxpose.xlu0.c.b16.cont [2/8] %v243, 128
  %463 = vxpose.xlu0.c.b16.cont [3/8] %v245, 128
  %464 = vxpose.xlu0.c.b16.cont [4/8] %v247, 128
  %465 = vxpose.xlu0.c.b16.cont [5/8] %v249, 128
  %466 = vxpose.xlu0.c.b16.cont [6/8] %v251, 128
  %467 = vxpose.xlu0.c.b16.cont [7/8] %v253, 128
  %468 = vxpose.xlu0.c.b16.end [8/8] %v255, 128
  %v469 = vpop.trf.xlu0
  %v470 = vpop.trf.xlu0
  %v471 = vpop.trf.xlu0
  %v472 = vpop.trf.xlu0
  %v473 = vpop.trf.xlu0
  %v474 = vpop.trf.xlu0
  %v475 = vpop.trf.xlu0
  %v476 = vpop.trf.xlu0
  %477 = vxpose.xlu0.c.b16.start [1/8] %v242, 128
  %478 = vxpose.xlu0.c.b16.cont [2/8] %v244, 128
  %479 = vxpose.xlu0.c.b16.cont [3/8] %v246, 128
  %480 = vxpose.xlu0.c.b16.cont [4/8] %v248, 128
  %481 = vxpose.xlu0.c.b16.cont [5/8] %v250, 128
  %482 = vxpose.xlu0.c.b16.cont [6/8] %v252, 128
  %483 = vxpose.xlu0.c.b16.cont [7/8] %v254, 128
  %484 = vxpose.xlu0.c.b16.end [8/8] %v256, 128
  %v485 = vpop.trf.xlu0
  %v486 = vpop.trf.xlu0
  %v487 = vpop.trf.xlu0
  %v488 = vpop.trf.xlu0
  %v489 = vpop.trf.xlu0
  %v490 = vpop.trf.xlu0
  %v491 = vpop.trf.xlu0
  %v492 = vpop.trf.xlu0
  %493 = vxpose.xlu0.c.b16.start [1/8] %v257, 128
  %494 = vxpose.xlu0.c.b16.cont [2/8] %v259, 128
  %495 = vxpose.xlu0.c.b16.cont [3/8] %v261, 128
  %496 = vxpose.xlu0.c.b16.cont [4/8] %v263, 128
  %497 = vxpose.xlu0.c.b16.cont [5/8] %v265, 128
  %498 = vxpose.xlu0.c.b16.cont [6/8] %v267, 128
  %499 = vxpose.xlu0.c.b16.cont [7/8] %v269, 128
  %500 = vxpose.xlu0.c.b16.end [8/8] %v271, 128
  %v501 = vpop.trf.xlu0
  %v502 = vpop.trf.xlu0
  %v503 = vpop.trf.xlu0
  %v504 = vpop.trf.xlu0
  %v505 = vpop.trf.xlu0
  %v506 = vpop.trf.xlu0
  %v507 = vpop.trf.xlu0
  %v508 = vpop.trf.xlu0
  %509 = vxpose.xlu0.c.b16.start [1/8] %v258, 128
  %510 = vxpose.xlu0.c.b16.cont [2/8] %v260, 128
  %511 = vxpose.xlu0.c.b16.cont [3/8] %v262, 128
  %512 = vxpose.xlu0.c.b16.cont [4/8] %v264, 128
  %513 = vxpose.xlu0.c.b16.cont [5/8] %v266, 128
  %514 = vxpose.xlu0.c.b16.cont [6/8] %v268, 128
  %515 = vxpose.xlu0.c.b16.cont [7/8] %v270, 128
  %516 = vxpose.xlu0.c.b16.end [8/8] %v272, 128
  %v517 = vpop.trf.xlu0
  %v518 = vpop.trf.xlu0
  %v519 = vpop.trf.xlu0
  %v520 = vpop.trf.xlu0
  %v521 = vpop.trf.xlu0
  %v522 = vpop.trf.xlu0
  %v523 = vpop.trf.xlu0
  %v524 = vpop.trf.xlu0
  %525 = vxpose.xlu0.c.b16.start [1/8] %v273, 128
  %526 = vxpose.xlu0.c.b16.cont [2/8] %v275, 128
  %527 = vxpose.xlu0.c.b16.cont [3/8] %v277, 128
  %528 = vxpose.xlu0.c.b16.cont [4/8] %v279, 128
  %529 = vxpose.xlu0.c.b16.cont [5/8] %v281, 128
  %530 = vxpose.xlu0.c.b16.cont [6/8] %v283, 128
  %531 = vxpose.xlu0.c.b16.cont [7/8] %v285, 128
  %532 = vxpose.xlu0.c.b16.end [8/8] %v287, 128
  %v533 = vpop.trf.xlu0
  %v534 = vpop.trf.xlu0
  %v535 = vpop.trf.xlu0
  %v536 = vpop.trf.xlu0
  %v537 = vpop.trf.xlu0
  %v538 = vpop.trf.xlu0
  %v539 = vpop.trf.xlu0
  %v540 = vpop.trf.xlu0
  %541 = vxpose.xlu0.c.b16.start [1/8] %v274, 128
  %542 = vxpose.xlu0.c.b16.cont [2/8] %v276, 128
  %543 = vxpose.xlu0.c.b16.cont [3/8] %v278, 128
  %544 = vxpose.xlu0.c.b16.cont [4/8] %v280, 128
  %545 = vxpose.xlu0.c.b16.cont [5/8] %v282, 128
  %546 = vxpose.xlu0.c.b16.cont [6/8] %v284, 128
  %547 = vxpose.xlu0.c.b16.cont [7/8] %v286, 128
  %548 = vxpose.xlu0.c.b16.end [8/8] %v288, 128
  %v549 = vpop.trf.xlu0
  %v550 = vpop.trf.xlu0
  %v551 = vpop.trf.xlu0
  %v552 = vpop.trf.xlu0
  %v553 = vpop.trf.xlu0
  %v554 = vpop.trf.xlu0
  %v555 = vpop.trf.xlu0
  %v556 = vpop.trf.xlu0
  %557 = vxpose.xlu0.c.b16.start [1/8] %v289, 128
  %558 = vxpose.xlu0.c.b16.cont [2/8] %v291, 128
  %559 = vxpose.xlu0.c.b16.cont [3/8] %v293, 128
  %560 = vxpose.xlu0.c.b16.cont [4/8] %v295, 128
  %561 = vxpose.xlu0.c.b16.cont [5/8] %v297, 128
  %562 = vxpose.xlu0.c.b16.cont [6/8] %v299, 128
  %563 = vxpose.xlu0.c.b16.cont [7/8] %v301, 128
  %564 = vxpose.xlu0.c.b16.end [8/8] %v303, 128
  %v565 = vpop.trf.xlu0
  %v566 = vpop.trf.xlu0
  %v567 = vpop.trf.xlu0
  %v568 = vpop.trf.xlu0
  %v569 = vpop.trf.xlu0
  %v570 = vpop.trf.xlu0
  %v571 = vpop.trf.xlu0
  %v572 = vpop.trf.xlu0
  %573 = vxpose.xlu0.c.b16.start [1/8] %v290, 128
  %574 = vxpose.xlu0.c.b16.cont [2/8] %v292, 128
  %575 = vxpose.xlu0.c.b16.cont [3/8] %v294, 128
  %576 = vxpose.xlu0.c.b16.cont [4/8] %v296, 128
  %577 = vxpose.xlu0.c.b16.cont [5/8] %v298, 128
  %578 = vxpose.xlu0.c.b16.cont [6/8] %v300, 128
  %579 = vxpose.xlu0.c.b16.cont [7/8] %v302, 128
  %580 = vxpose.xlu0.c.b16.end [8/8] %v304, 128
  %v581 = vpop.trf.xlu0
  %v582 = vpop.trf.xlu0
  %v583 = vpop.trf.xlu0
  %v584 = vpop.trf.xlu0
  %v585 = vpop.trf.xlu0
  %v586 = vpop.trf.xlu0
  %v587 = vpop.trf.xlu0
  %v588 = vpop.trf.xlu0
  %589 = vxpose.xlu0.c.b16.start [1/8] %v305, 128
  %590 = vxpose.xlu0.c.b16.cont [2/8] %v307, 128
  %591 = vxpose.xlu0.c.b16.cont [3/8] %v309, 128
  %592 = vxpose.xlu0.c.b16.cont [4/8] %v311, 128
  %593 = vxpose.xlu0.c.b16.cont [5/8] %v313, 128
  %594 = vxpose.xlu0.c.b16.cont [6/8] %v315, 128
  %595 = vxpose.xlu0.c.b16.cont [7/8] %v317, 128
  %596 = vxpose.xlu0.c.b16.end [8/8] %v319, 128
  %v597 = vpop.trf.xlu0
  %v598 = vpop.trf.xlu0
  %v599 = vpop.trf.xlu0
  %v600 = vpop.trf.xlu0
  %v601 = vpop.trf.xlu0
  %v602 = vpop.trf.xlu0
  %v603 = vpop.trf.xlu0
  %v604 = vpop.trf.xlu0
  %605 = vxpose.xlu0.c.b16.start [1/8] %v306, 128
  %606 = vxpose.xlu0.c.b16.cont [2/8] %v308, 128
  %607 = vxpose.xlu0.c.b16.cont [3/8] %v310, 128
  %608 = vxpose.xlu0.c.b16.cont [4/8] %v312, 128
  %609 = vxpose.xlu0.c.b16.cont [5/8] %v314, 128
  %610 = vxpose.xlu0.c.b16.cont [6/8] %v316, 128
  %611 = vxpose.xlu0.c.b16.cont [7/8] %v318, 128
  %612 = vxpose.xlu0.c.b16.end [8/8] %v320, 128
  %v613 = vpop.trf.xlu0
  %v614 = vpop.trf.xlu0
  %v615 = vpop.trf.xlu0
  %v616 = vpop.trf.xlu0
  %v617 = vpop.trf.xlu0
  %v618 = vpop.trf.xlu0
  %v619 = vpop.trf.xlu0
  %v620 = vpop.trf.xlu0
  %621 = vxpose.xlu0.c.b16.start [1/8] %v321, 128
  %622 = vxpose.xlu0.c.b16.cont [2/8] %v323, 128
  %623 = vxpose.xlu0.c.b16.cont [3/8] %v325, 128
  %624 = vxpose.xlu0.c.b16.cont [4/8] 0, 128
  %625 = vxpose.xlu0.c.b16.cont [5/8] 0, 128
  %626 = vxpose.xlu0.c.b16.cont [6/8] 0, 128
  %627 = vxpose.xlu0.c.b16.cont [7/8] 0, 128
  %628 = vxpose.xlu0.c.b16.end [8/8] 0, 128
  %v629 = vpop.trf.xlu0
  %v630 = vpop.trf.xlu0
  %v631 = vpop.trf.xlu0
  %v632 = vpop.trf.xlu0
  %v633 = vpop.trf.xlu0
  %v634 = vpop.trf.xlu0
  %v635 = vpop.trf.xlu0
  %v636 = vpop.trf.xlu0
  %637 = vxpose.xlu0.c.b16.start [1/8] %v322, 128
  %638 = vxpose.xlu0.c.b16.cont [2/8] %v324, 128
  %639 = vxpose.xlu0.c.b16.cont [3/8] %v326, 128
  %640 = vxpose.xlu0.c.b16.cont [4/8] 0, 128
  %641 = vxpose.xlu0.c.b16.cont [5/8] 0, 128
  %642 = vxpose.xlu0.c.b16.cont [6/8] 0, 128
  %643 = vxpose.xlu0.c.b16.cont [7/8] 0, 128
  %644 = vxpose.xlu0.c.b16.end [8/8] 0, 128
  %v645 = vpop.trf.xlu0
  %v646 = vpop.trf.xlu0
  %v647 = vpop.trf.xlu0
  %v648 = vpop.trf.xlu0
  %v649 = vpop.trf.xlu0
  %v650 = vpop.trf.xlu0
  %v651 = vpop.trf.xlu0
  %v652 = vpop.trf.xlu0
  %v755 = vunpack.c.l.b16 %v327
  %v756 = vunpack.c.h.b16 %v327
  %v757 = vunpack.c.l.b16 %v328
  %v758 = vunpack.c.h.b16 %v328
  %v759 = vunpack.c.l.b16 %v329
  %v760 = vunpack.c.h.b16 %v329
  %v761 = vunpack.c.l.b16 %v330
  %v762 = vunpack.c.h.b16 %v330
  %v763 = vunpack.c.l.b16 %v331
  %v764 = vunpack.c.h.b16 %v331
  %v765 = vunpack.c.l.b16 %v332
  %v766 = vunpack.c.h.b16 %v332
  %v767 = vunpack.c.l.b16 %v333
  %v768 = vunpack.c.h.b16 %v333
  %v769 = vunpack.c.l.b16 %v334
  %v770 = vunpack.c.h.b16 %v334
  %v771 = vunpack.c.l.b16 %v335
  %v772 = vunpack.c.h.b16 %v335
  %v773 = vunpack.c.l.b16 %v336
  %v774 = vunpack.c.h.b16 %v336
  %v775 = vunpack.c.l.b16 %v337
  %v776 = vunpack.c.h.b16 %v337
  %v777 = vunpack.c.l.b16 %v338
  %v778 = vunpack.c.h.b16 %v338
  %v779 = vunpack.c.l.b16 %v339
  %v780 = vunpack.c.h.b16 %v339
  %v781 = vunpack.c.l.b16 %v340
  %v782 = vunpack.c.h.b16 %v340
  %v783 = vunpack.c.l.b16 %v341
  %v784 = vunpack.c.h.b16 %v341
  %v785 = vunpack.c.l.b16 %v342
  %v786 = vunpack.c.h.b16 %v342
  %v787 = vunpack.c.l.b16 %v343
  %v788 = vunpack.c.h.b16 %v343
  %v789 = vunpack.c.l.b16 %v344
  %v790 = vunpack.c.h.b16 %v344
  %v791 = vunpack.c.l.b16 %v345
  %v792 = vunpack.c.h.b16 %v345
  %v793 = vunpack.c.l.b16 %v346
  %v794 = vunpack.c.h.b16 %v346
  %v795 = vunpack.c.l.b16 %v347
  %v796 = vunpack.c.h.b16 %v347
  %v797 = vunpack.c.l.b16 %v348
  %v798 = vunpack.c.h.b16 %v348
  %v799 = vunpack.c.l.b16 %v349
  %v800 = vunpack.c.h.b16 %v349
  %v801 = vunpack.c.l.b16 %v350
  %v802 = vunpack.c.h.b16 %v350
  %v803 = vunpack.c.l.b16 %v351
  %v804 = vunpack.c.h.b16 %v351
  %v805 = vunpack.c.l.b16 %v352
  %v806 = vunpack.c.h.b16 %v352
  %v807 = vunpack.c.l.b16 %v353
  %v808 = vunpack.c.h.b16 %v353
  %v809 = vunpack.c.l.b16 %v354
  %v810 = vunpack.c.h.b16 %v354
  %v811 = vunpack.c.l.b16 %v355
  %v812 = vunpack.c.h.b16 %v355
  %v813 = vunpack.c.l.b16 %v356
  %v814 = vunpack.c.h.b16 %v356
  %v815 = vunpack.c.l.b16 %v357
  %v816 = vunpack.c.h.b16 %v357
  %v817 = vunpack.c.l.b16 %v358
  %v818 = vunpack.c.h.b16 %v358
  %v819 = vunpack.c.l.b16 %v359
  %v820 = vunpack.c.h.b16 %v359
  %v821 = vunpack.c.l.b16 %v360
  %v822 = vunpack.c.h.b16 %v360
  %v823 = vunpack.c.l.b16 %v361
  %v824 = vunpack.c.h.b16 %v361
  %v825 = vunpack.c.l.b16 %v362
  %v826 = vunpack.c.h.b16 %v362
  %v827 = vunpack.c.l.b16 %v363
  %v828 = vunpack.c.h.b16 %v363
  %v829 = vunpack.c.l.b16 %v364
  %v830 = vunpack.c.h.b16 %v364
  %v831 = vunpack.c.l.b16 %v365
  %v832 = vunpack.c.h.b16 %v365
  %v833 = vunpack.c.l.b16 %v366
  %v834 = vunpack.c.h.b16 %v366
  %v835 = vunpack.c.l.b16 %v367
  %v836 = vunpack.c.h.b16 %v367
  %v837 = vunpack.c.l.b16 %v368
  %v838 = vunpack.c.h.b16 %v368
  %v839 = vunpack.c.l.b16 %v369
  %v840 = vunpack.c.h.b16 %v369
  %v841 = vunpack.c.l.b16 %v370
  %v842 = vunpack.c.h.b16 %v370
  %v843 = vunpack.c.l.b16 %v371
  %v844 = vunpack.c.h.b16 %v371
  %v845 = vunpack.c.l.b16 %v372
  %v846 = vunpack.c.h.b16 %v372
  %v847 = vunpack.c.l.b16 %v373
  %v848 = vunpack.c.h.b16 %v373
  %v849 = vunpack.c.l.b16 %v374
  %v850 = vunpack.c.h.b16 %v374
  %v851 = vunpack.c.l.b16 %v375
  %v852 = vunpack.c.h.b16 %v375
  %v853 = vunpack.c.l.b16 %v376
  %v854 = vunpack.c.h.b16 %v376
  %v855 = vunpack.c.l.b16 %v377
  %v856 = vunpack.c.h.b16 %v377
  %v857 = vunpack.c.l.b16 %v378
  %v858 = vunpack.c.h.b16 %v378
  %v859 = vunpack.c.l.b16 %v379
  %v860 = vunpack.c.h.b16 %v379
  %v861 = vunpack.c.l.b16 %v380
  %v862 = vunpack.c.h.b16 %v380
  %v863 = vunpack.c.l.b16 %v381
  %v864 = vunpack.c.h.b16 %v381
  %v865 = vunpack.c.l.b16 %v382
  %v866 = vunpack.c.h.b16 %v382
  %v867 = vunpack.c.l.b16 %v383
  %v868 = vunpack.c.h.b16 %v383
  %v869 = vunpack.c.l.b16 %v384
  %v870 = vunpack.c.h.b16 %v384
  %v871 = vunpack.c.l.b16 %v385
  %v872 = vunpack.c.h.b16 %v385
  %v873 = vunpack.c.l.b16 %v386
  %v874 = vunpack.c.h.b16 %v386
  %v875 = vunpack.c.l.b16 %v387
  %v876 = vunpack.c.h.b16 %v387
  %v877 = vunpack.c.l.b16 %v388
  %v878 = vunpack.c.h.b16 %v388
  %v879 = vunpack.c.l.b16 %v389
  %v880 = vunpack.c.h.b16 %v389
  %v881 = vunpack.c.l.b16 %v390
  %v882 = vunpack.c.h.b16 %v390
  %v883 = vunpack.c.l.b16 %v391
  %v884 = vunpack.c.h.b16 %v391
  %v885 = vunpack.c.l.b16 %v392
  %v886 = vunpack.c.h.b16 %v392
  %v887 = vunpack.c.l.b16 %v393
  %v888 = vunpack.c.h.b16 %v393
  %v889 = vunpack.c.l.b16 %v394
  %v890 = vunpack.c.h.b16 %v394
  %v891 = vunpack.c.l.b16 %v395
  %v892 = vunpack.c.h.b16 %v395
  %v893 = vunpack.c.l.b16 %v396
  %v894 = vunpack.c.h.b16 %v396
  %v895 = vunpack.c.l.b16 %v397
  %v896 = vunpack.c.h.b16 %v397
  %v897 = vunpack.c.l.b16 %v398
  %v898 = vunpack.c.h.b16 %v398
  %v899 = vunpack.c.l.b16 %v399
  %v900 = vunpack.c.h.b16 %v399
  %v901 = vunpack.c.l.b16 %v400
  %v902 = vunpack.c.h.b16 %v400
  %v903 = vunpack.c.l.b16 %v401
  %v904 = vunpack.c.h.b16 %v401
  %v905 = vunpack.c.l.b16 %v402
  %v906 = vunpack.c.h.b16 %v402
  %v907 = vunpack.c.l.b16 %v403
  %v908 = vunpack.c.h.b16 %v403
  %v909 = vunpack.c.l.b16 %v404
  %v910 = vunpack.c.h.b16 %v404
  %v911 = vunpack.c.l.b16 %v405
  %v912 = vunpack.c.h.b16 %v405
  %v913 = vunpack.c.l.b16 %v406
  %v914 = vunpack.c.h.b16 %v406
  %v915 = vunpack.c.l.b16 %v407
  %v916 = vunpack.c.h.b16 %v407
  %v917 = vunpack.c.l.b16 %v408
  %v918 = vunpack.c.h.b16 %v408
  %v919 = vunpack.c.l.b16 %v409
  %v920 = vunpack.c.h.b16 %v409
  %v921 = vunpack.c.l.b16 %v410
  %v922 = vunpack.c.h.b16 %v410
  %v923 = vunpack.c.l.b16 %v411
  %v924 = vunpack.c.h.b16 %v411
  %v925 = vunpack.c.l.b16 %v412
  %v926 = vunpack.c.h.b16 %v412
  %v927 = vunpack.c.l.b16 %v413
  %v928 = vunpack.c.h.b16 %v413
  %v929 = vunpack.c.l.b16 %v414
  %v930 = vunpack.c.h.b16 %v414
  %v931 = vunpack.c.l.b16 %v415
  %v932 = vunpack.c.h.b16 %v415
  %v933 = vunpack.c.l.b16 %v416
  %v934 = vunpack.c.h.b16 %v416
  %v935 = vunpack.c.l.b16 %v417
  %v936 = vunpack.c.h.b16 %v417
  %v937 = vunpack.c.l.b16 %v418
  %v938 = vunpack.c.h.b16 %v418
  %v939 = vunpack.c.l.b16 %v419
  %v940 = vunpack.c.h.b16 %v419
  %v941 = vunpack.c.l.b16 %v420
  %v942 = vunpack.c.h.b16 %v420
  %v943 = vunpack.c.l.b16 %v421
  %v944 = vunpack.c.h.b16 %v421
  %v945 = vunpack.c.l.b16 %v422
  %v946 = vunpack.c.h.b16 %v422
  %v947 = vunpack.c.l.b16 %v423
  %v948 = vunpack.c.h.b16 %v423
  %v949 = vunpack.c.l.b16 %v424
  %v950 = vunpack.c.h.b16 %v424
  %v951 = vunpack.c.l.b16 %v425
  %v952 = vunpack.c.h.b16 %v425
  %v953 = vunpack.c.l.b16 %v426
  %v954 = vunpack.c.h.b16 %v426
  %v955 = vunpack.c.l.b16 %v427
  %v956 = vunpack.c.h.b16 %v427
  %v957 = vunpack.c.l.b16 %v428
  %v958 = vunpack.c.h.b16 %v428
  %v959 = vpack.c.b16 %v757, %v755
  %v960 = vpack.c.b16 %v758, %v756
  %v961 = vpack.c.b16 %v761, %v759
  %v962 = vpack.c.b16 %v762, %v760
  %v963 = vpack.c.b16 %v765, %v763
  %v964 = vpack.c.b16 %v766, %v764
  %v965 = vpack.c.b16 %v769, %v767
  %v966 = vpack.c.b16 %v770, %v768
  %v967 = vpack.c.b16 %v773, %v771
  %v968 = vpack.c.b16 %v774, %v772
  %v969 = vpack.c.b16 %v777, %v775
  %v970 = vpack.c.b16 %v778, %v776
  %v971 = vpack.c.b16 %v781, %v779
  %v972 = vpack.c.b16 %v782, %v780
  %v973 = vpack.c.b16 %v785, %v783
  %v974 = vpack.c.b16 %v786, %v784
  %v975 = vpack.c.b16 %v789, %v787
  %v976 = vpack.c.b16 %v790, %v788
  %v977 = vpack.c.b16 %v793, %v791
  %v978 = vpack.c.b16 %v794, %v792
  %v979 = vpack.c.b16 %v797, %v795
  %v980 = vpack.c.b16 %v798, %v796
  %v981 = vpack.c.b16 %v801, %v799
  %v982 = vpack.c.b16 %v802, %v800
  %v983 = vpack.c.b16 %v805, %v803
  %v984 = vpack.c.b16 %v806, %v804
  %v985 = vpack.c.b16 %v809, %v807
  %v986 = vpack.c.b16 %v810, %v808
  %v987 = vpack.c.b16 %v813, %v811
  %v988 = vpack.c.b16 %v814, %v812
  %v989 = vpack.c.b16 %v817, %v815
  %v990 = vpack.c.b16 %v818, %v816
  %v991 = vpack.c.b16 %v821, %v819
  %v992 = vpack.c.b16 %v822, %v820
  %v993 = vpack.c.b16 %v825, %v823
  %v994 = vpack.c.b16 %v826, %v824
  %v995 = vpack.c.b16 %v829, %v827
  %v996 = vpack.c.b16 %v830, %v828
  %v997 = vpack.c.b16 %v833, %v831
  %v998 = vpack.c.b16 %v834, %v832
  %v999 = vpack.c.b16 %v837, %v835
  %v1000 = vpack.c.b16 %v838, %v836
  %v1001 = vpack.c.b16 %v841, %v839
  %v1002 = vpack.c.b16 %v842, %v840
  %v1003 = vpack.c.b16 %v845, %v843
  %v1004 = vpack.c.b16 %v846, %v844
  %v1005 = vpack.c.b16 %v849, %v847
  %v1006 = vpack.c.b16 %v850, %v848
  %v1007 = vpack.c.b16 %v853, %v851
  %v1008 = vpack.c.b16 %v854, %v852
  %v1009 = vpack.c.b16 %v857, %v855
  %v1010 = vpack.c.b16 %v858, %v856
  %v1011 = vpack.c.b16 %v861, %v859
  %v1012 = vpack.c.b16 %v862, %v860
  %v1013 = vpack.c.b16 %v865, %v863
  %v1014 = vpack.c.b16 %v866, %v864
  %v1015 = vpack.c.b16 %v869, %v867
  %v1016 = vpack.c.b16 %v870, %v868
  %v1017 = vpack.c.b16 %v873, %v871
  %v1018 = vpack.c.b16 %v874, %v872
  %v1019 = vpack.c.b16 %v877, %v875
  %v1020 = vpack.c.b16 %v878, %v876
  %v1021 = vpack.c.b16 %v881, %v879
  %v1022 = vpack.c.b16 %v882, %v880
  %v1023 = vpack.c.b16 %v885, %v883
  %v1024 = vpack.c.b16 %v886, %v884
  %v1025 = vpack.c.b16 %v889, %v887
  %v1026 = vpack.c.b16 %v890, %v888
  %v1027 = vpack.c.b16 %v893, %v891
  %v1028 = vpack.c.b16 %v894, %v892
  %v1029 = vpack.c.b16 %v897, %v895
  %v1030 = vpack.c.b16 %v898, %v896
  %v1031 = vpack.c.b16 %v901, %v899
  %v1032 = vpack.c.b16 %v902, %v900
  %v1033 = vpack.c.b16 %v905, %v903
  %v1034 = vpack.c.b16 %v906, %v904
  %v1035 = vpack.c.b16 %v909, %v907
  %v1036 = vpack.c.b16 %v910, %v908
  %v1037 = vpack.c.b16 %v913, %v911
  %v1038 = vpack.c.b16 %v914, %v912
  %v1039 = vpack.c.b16 %v917, %v915
  %v1040 = vpack.c.b16 %v918, %v916
  %v1041 = vpack.c.b16 %v921, %v919
  %v1042 = vpack.c.b16 %v922, %v920
  %v1043 = vpack.c.b16 %v925, %v923
  %v1044 = vpack.c.b16 %v926, %v924
  %v1045 = vpack.c.b16 %v929, %v927
  %v1046 = vpack.c.b16 %v930, %v928
  %v1047 = vpack.c.b16 %v933, %v931
  %v1048 = vpack.c.b16 %v934, %v932
  %v1049 = vpack.c.b16 %v937, %v935
  %v1050 = vpack.c.b16 %v938, %v936
  %v1051 = vpack.c.b16 %v941, %v939
  %v1052 = vpack.c.b16 %v942, %v940
  %v1053 = vpack.c.b16 %v945, %v943
  %v1054 = vpack.c.b16 %v946, %v944
  %v1055 = vpack.c.b16 %v949, %v947
  %v1056 = vpack.c.b16 %v950, %v948
  %v1057 = vpack.c.b16 %v953, %v951
  %v1058 = vpack.c.b16 %v954, %v952
  %v1059 = vpack.c.b16 %v957, %v955
  %v1060 = vpack.c.b16 %v958, %v956
  %vm1163 = vcmask 392192
  %v1165 = vsel %vm1163, %v629, 0
  %v1168 = vsel %vm1163, %v630, 0
  %v1171 = vsel %vm1163, %v631, 0
  %v1174 = vsel %vm1163, %v632, 0
  %v1177 = vsel %vm1163, %v633, 0
  %v1180 = vsel %vm1163, %v634, 0
  %v1183 = vsel %vm1163, %v635, 0
  %v1186 = vsel %vm1163, %v636, 0
  %v1189 = vsel %vm1163, %v645, 0
  %v1192 = vsel %vm1163, %v646, 0
  %v1195 = vsel %vm1163, %v647, 0
  %v1198 = vsel %vm1163, %v648, 0
  %v1201 = vsel %vm1163, %v649, 0
  %1203 = vmatprep.subr.bf16.mxu0 %v960
  %1204 = vmatpush1.bf16.msra.mxu0 %v959
  %1205 = vmatprep.subr.bf16.mxu0 %v962
  %1206 = vmatpush1.bf16.msra.mxu0 %v961
  %1207 = vmatprep.subr.bf16.mxu0 %v964
  %1208 = vmatpush1.bf16.msra.mxu0 %v963
  %1209 = vmatprep.subr.bf16.mxu0 %v966
  %1210 = vmatpush1.bf16.msra.mxu0 %v965
  %1211 = vmatprep.subr.bf16.mxu0 %v968
  %1212 = vmatpush1.bf16.msra.mxu0 %v967
  %1213 = vmatprep.subr.bf16.mxu0 %v970
  %1214 = vmatpush1.bf16.msra.mxu0 %v969
  %1215 = vmatprep.subr.bf16.mxu0 %v972
  %1216 = vmatpush1.bf16.msra.mxu0 %v971
  %1217 = vmatprep.subr.bf16.mxu0 %v974
  %1218 = vmatpush1.bf16.msra.mxu0 %v973
  %1219 = vmatprep.subr.bf16.mxu0 %v976
  %1220 = vmatpush1.bf16.msra.mxu0 %v975
  %1221 = vmatprep.subr.bf16.mxu0 %v978
  %1222 = vmatpush1.bf16.msra.mxu0 %v977
  %1223 = vmatprep.subr.bf16.mxu0 %v980
  %1224 = vmatpush1.bf16.msra.mxu0 %v979
  %1225 = vmatprep.subr.bf16.mxu0 %v982
  %1226 = vmatpush1.bf16.msra.mxu0 %v981
  %1227 = vmatprep.subr.bf16.mxu0 %v984
  %1228 = vmatpush1.bf16.msra.mxu0 %v983
  %1229 = vmatprep.subr.bf16.mxu0 %v986
  %1230 = vmatpush1.bf16.msra.mxu0 %v985
  %1231 = vmatprep.subr.bf16.mxu0 %v988
  %1232 = vmatpush1.bf16.msra.mxu0 %v987
  %1233 = vmatprep.subr.bf16.mxu0 %v990
  %1234 = vmatpush1.bf16.msra.mxu0 %v989
  %1235 = vmatprep.mubr.bf16.mxu0 %v469
  %1236 = vmatmul.mubr.bf16.gmra.mrb[0].mxu0 %v437
  %v1237 = vpop.f32.mrb[0].mxu0
  %v1238 = vadd.f32 0.0, %v1237
  %v1239 = vpop.f32.mrb[0].mxu0
  %v1240 = vadd.f32 0.0, %v1239
  %v1241 = vpop.f32.mrb[0].mxu0
  %v1242 = vadd.f32 0.0, %v1241
  %v1243 = vpop.f32.mrb[0].mxu0
  %v1244 = vadd.f32 0.0, %v1243
  %1245 = vmatprep.mubr.bf16.mxu0 %v470
  %1246 = vmatmul.mubr.bf16.gmra.mrb[0].mxu0 %v438
  %v1247 = vpop.f32.mrb[0].mxu0
  %v1248 = vadd.f32 0.0, %v1247
  %v1249 = vpop.f32.mrb[0].mxu0
  %v1250 = vadd.f32 0.0, %v1249
  %v1251 = vpop.f32.mrb[0].mxu0
  %v1252 = vadd.f32 0.0, %v1251
  %v1253 = vpop.f32.mrb[0].mxu0
  %v1254 = vadd.f32 0.0, %v1253
  %1255 = vmatprep.mubr.bf16.mxu0 %v471
  %1256 = vmatmul.mubr.bf16.gmra.mrb[0].mxu0 %v439
  %v1257 = vpop.f32.mrb[0].mxu0
  %v1258 = vadd.f32 0.0, %v1257
  %v1259 = vpop.f32.mrb[0].mxu0
  %v1260 = vadd.f32 0.0, %v1259
  %v1261 = vpop.f32.mrb[0].mxu0
  %v1262 = vadd.f32 0.0, %v1261
  %v1263 = vpop.f32.mrb[0].mxu0
  %v1264 = vadd.f32 0.0, %v1263
  %1265 = vmatprep.mubr.bf16.mxu0 %v472
  %1266 = vmatmul.mubr.bf16.gmra.mrb[0].mxu0 %v440
  %v1267 = vpop.f32.mrb[0].mxu0
  %v1268 = vadd.f32 0.0, %v1267
  %v1269 = vpop.f32.mrb[0].mxu0
  %v1270 = vadd.f32 0.0, %v1269
  %v1271 = vpop.f32.mrb[0].mxu0
  %v1272 = vadd.f32 0.0, %v1271
  %v1273 = vpop.f32.mrb[0].mxu0
  %v1274 = vadd.f32 0.0, %v1273
  %1275 = vmatprep.mubr.bf16.mxu0 %v473
  %1276 = vmatmul.mubr.bf16.gmra.mrb[0].mxu0 %v441
  %v1277 = vpop.f32.mrb[0].mxu0
  %v1278 = vadd.f32 0.0, %v1277
  %v1279 = vpop.f32.mrb[0].mxu0
  %v1280 = vadd.f32 0.0, %v1279
  %v1281 = vpop.f32.mrb[0].mxu0
  %v1282 = vadd.f32 0.0, %v1281
  %v1283 = vpop.f32.mrb[0].mxu0
  %v1284 = vadd.f32 0.0, %v1283
  %1285 = vmatprep.mubr.bf16.mxu0 %v474
  %1286 = vmatmul.mubr.bf16.gmra.mrb[0].mxu0 %v442
  %v1287 = vpop.f32.mrb[0].mxu0
  %v1288 = vadd.f32 0.0, %v1287
  %v1289 = vpop.f32.mrb[0].mxu0
  %v1290 = vadd.f32 0.0, %v1289
  %v1291 = vpop.f32.mrb[0].mxu0
  %v1292 = vadd.f32 0.0, %v1291
  %v1293 = vpop.f32.mrb[0].mxu0
  %v1294 = vadd.f32 0.0, %v1293
  %1295 = vmatprep.mubr.bf16.mxu0 %v475
  %1296 = vmatmul.mubr.bf16.gmra.mrb[0].mxu0 %v443
  %v1297 = vpop.f32.mrb[0].mxu0
  %v1298 = vadd.f32 0.0, %v1297
  %v1299 = vpop.f32.mrb[0].mxu0
  %v1300 = vadd.f32 0.0, %v1299
  %v1301 = vpop.f32.mrb[0].mxu0
  %v1302 = vadd.f32 0.0, %v1301
  %v1303 = vpop.f32.mrb[0].mxu0
  %v1304 = vadd.f32 0.0, %v1303
  %1305 = vmatprep.mubr.bf16.mxu0 %v476
  %1306 = vmatmul.mubr.bf16.gmra.mrb[0].mxu0 %v444
  %v1307 = vpop.f32.mrb[0].mxu0
  %v1308 = vadd.f32 0.0, %v1307
  %v1309 = vpop.f32.mrb[0].mxu0
  %v1310 = vadd.f32 0.0, %v1309
  %v1311 = vpop.f32.mrb[0].mxu0
  %v1312 = vadd.f32 0.0, %v1311
  %v1313 = vpop.f32.mrb[0].mxu0
  %v1314 = vadd.f32 0.0, %v1313
  %1315 = vmatprep.mubr.bf16.mxu0 %v485
  %1316 = vmatmul.mubr.bf16.gmra.mrb[0].mxu0 %v453
  %v1317 = vpop.f32.mrb[0].mxu0
  %v1318 = vadd.f32 0.0, %v1317
  %v1319 = vpop.f32.mrb[0].mxu0
  %v1320 = vadd.f32 0.0, %v1319
  %v1321 = vpop.f32.mrb[0].mxu0
  %v1322 = vadd.f32 0.0, %v1321
  %v1323 = vpop.f32.mrb[0].mxu0
  %v1324 = vadd.f32 0.0, %v1323
  %1325 = vmatprep.mubr.bf16.mxu0 %v486
  %1326 = vmatmul.mubr.bf16.gmra.mrb[0].mxu0 %v454
  %v1327 = vpop.f32.mrb[0].mxu0
  %v1328 = vadd.f32 0.0, %v1327
  %v1329 = vpop.f32.mrb[0].mxu0
  %v1330 = vadd.f32 0.0, %v1329
  %v1331 = vpop.f32.mrb[0].mxu0
  %v1332 = vadd.f32 0.0, %v1331
  %v1333 = vpop.f32.mrb[0].mxu0
  %v1334 = vadd.f32 0.0, %v1333
  %1335 = vmatprep.mubr.bf16.mxu0 %v487
  %1336 = vmatmul.mubr.bf16.gmra.mrb[0].mxu0 %v455
  %v1337 = vpop.f32.mrb[0].mxu0
  %v1338 = vadd.f32 0.0, %v1337
  %v1339 = vpop.f32.mrb[0].mxu0
  %v1340 = vadd.f32 0.0, %v1339
  %v1341 = vpop.f32.mrb[0].mxu0
  %v1342 = vadd.f32 0.0, %v1341
  %v1343 = vpop.f32.mrb[0].mxu0
  %v1344 = vadd.f32 0.0, %v1343
  %1345 = vmatprep.mubr.bf16.mxu0 %v488
  %1346 = vmatmul.mubr.bf16.gmra.mrb[0].mxu0 %v456
  %v1347 = vpop.f32.mrb[0].mxu0
  %v1348 = vadd.f32 0.0, %v1347
  %v1349 = vpop.f32.mrb[0].mxu0
  %v1350 = vadd.f32 0.0, %v1349
  %v1351 = vpop.f32.mrb[0].mxu0
  %v1352 = vadd.f32 0.0, %v1351
  %v1353 = vpop.f32.mrb[0].mxu0
  %v1354 = vadd.f32 0.0, %v1353
  %1355 = vmatprep.mubr.bf16.mxu0 %v489
  %1356 = vmatmul.mubr.bf16.gmra.mrb[0].mxu0 %v457
  %v1357 = vpop.f32.mrb[0].mxu0
  %v1358 = vadd.f32 0.0, %v1357
  %v1359 = vpop.f32.mrb[0].mxu0
  %v1360 = vadd.f32 0.0, %v1359
  %v1361 = vpop.f32.mrb[0].mxu0
  %v1362 = vpop.f32.mrb[0].mxu0
  %1363 = vdwg.mxu0
  %1364 = vmatprep.subr.bf16.mxu0 %v992
  %1365 = vmatpush1.bf16.msra.mxu0 %v991
  %1366 = vmatprep.subr.bf16.mxu0 %v994
  %1367 = vmatpush1.bf16.msra.mxu0 %v993
  %1368 = vmatprep.subr.bf16.mxu0 %v996
  %1369 = vmatpush1.bf16.msra.mxu0 %v995
  %1370 = vmatprep.subr.bf16.mxu0 %v998
  %1371 = vmatpush1.bf16.msra.mxu0 %v997
  %1372 = vmatprep.subr.bf16.mxu0 %v1000
  %1373 = vmatpush1.bf16.msra.mxu0 %v999
  %1374 = vmatprep.subr.bf16.mxu0 %v1002
  %1375 = vmatpush1.bf16.msra.mxu0 %v1001
  %1376 = vmatprep.subr.bf16.mxu0 %v1004
  %1377 = vmatpush1.bf16.msra.mxu0 %v1003
  %1378 = vmatprep.subr.bf16.mxu0 %v1006
  %1379 = vmatpush1.bf16.msra.mxu0 %v1005
  %1380 = vmatprep.subr.bf16.mxu0 %v1008
  %1381 = vmatpush1.bf16.msra.mxu0 %v1007
  %1382 = vmatprep.subr.bf16.mxu0 %v1010
  %1383 = vmatpush1.bf16.msra.mxu0 %v1009
  %1384 = vmatprep.subr.bf16.mxu0 %v1012
  %1385 = vmatpush1.bf16.msra.mxu0 %v1011
  %1386 = vmatprep.subr.bf16.mxu0 %v1014
  %1387 = vmatpush1.bf16.msra.mxu0 %v1013
  %1388 = vmatprep.subr.bf16.mxu0 %v1016
  %1389 = vmatpush1.bf16.msra.mxu0 %v1015
  %1390 = vmatprep.subr.bf16.mxu0 %v1018
  %1391 = vmatpush1.bf16.msra.mxu0 %v1017
  %1392 = vmatprep.subr.bf16.mxu0 %v1020
  %1393 = vmatpush1.bf16.msra.mxu0 %v1019
  %1394 = vmatprep.subr.bf16.mxu0 %v1022
  %1395 = vmatpush1.bf16.msra.mxu0 %v1021
  %1396 = vmatprep.mubr.bf16.mxu0 %v533
  %1397 = vmatmul.mubr.bf16.gmra.mrb[0].mxu0 %v501
  %v1398 = vpop.f32.mrb[0].mxu0
  %v1399 = vadd.f32 %v1238, %v1398
  %v1400 = vpop.f32.mrb[0].mxu0
  %v1401 = vadd.f32 %v1240, %v1400
  %v1402 = vpop.f32.mrb[0].mxu0
  %v1403 = vadd.f32 %v1242, %v1402
  %v1404 = vpop.f32.mrb[0].mxu0
  %v1405 = vadd.f32 %v1244, %v1404
  %1406 = vmatprep.mubr.bf16.mxu0 %v534
  %1407 = vmatmul.mubr.bf16.gmra.mrb[0].mxu0 %v502
  %v1408 = vpop.f32.mrb[0].mxu0
  %v1409 = vadd.f32 %v1248, %v1408
  %v1410 = vpop.f32.mrb[0].mxu0
  %v1411 = vadd.f32 %v1250, %v1410
  %v1412 = vpop.f32.mrb[0].mxu0
  %v1413 = vadd.f32 %v1252, %v1412
  %v1414 = vpop.f32.mrb[0].mxu0
  %v1415 = vadd.f32 %v1254, %v1414
  %1416 = vmatprep.mubr.bf16.mxu0 %v535
  %1417 = vmatmul.mubr.bf16.gmra.mrb[0].mxu0 %v503
  %v1418 = vpop.f32.mrb[0].mxu0
  %v1419 = vadd.f32 %v1258, %v1418
  %v1420 = vpop.f32.mrb[0].mxu0
  %v1421 = vadd.f32 %v1260, %v1420
  %v1422 = vpop.f32.mrb[0].mxu0
  %v1423 = vadd.f32 %v1262, %v1422
  %v1424 = vpop.f32.mrb[0].mxu0
  %v1425 = vadd.f32 %v1264, %v1424
  %1426 = vmatprep.mubr.bf16.mxu0 %v536
  %1427 = vmatmul.mubr.bf16.gmra.mrb[0].mxu0 %v504
  %v1428 = vpop.f32.mrb[0].mxu0
  %v1429 = vadd.f32 %v1268, %v1428
  %v1430 = vpop.f32.mrb[0].mxu0
  %v1431 = vadd.f32 %v1270, %v1430
  %v1432 = vpop.f32.mrb[0].mxu0
  %v1433 = vadd.f32 %v1272, %v1432
  %v1434 = vpop.f32.mrb[0].mxu0
  %v1435 = vadd.f32 %v1274, %v1434
  %1436 = vmatprep.mubr.bf16.mxu0 %v537
  %1437 = vmatmul.mubr.bf16.gmra.mrb[0].mxu0 %v505
  %v1438 = vpop.f32.mrb[0].mxu0
  %v1439 = vadd.f32 %v1278, %v1438
  %v1440 = vpop.f32.mrb[0].mxu0
  %v1441 = vadd.f32 %v1280, %v1440
  %v1442 = vpop.f32.mrb[0].mxu0
  %v1443 = vadd.f32 %v1282, %v1442
  %v1444 = vpop.f32.mrb[0].mxu0
  %v1445 = vadd.f32 %v1284, %v1444
  %1446 = vmatprep.mubr.bf16.mxu0 %v538
  %1447 = vmatmul.mubr.bf16.gmra.mrb[0].mxu0 %v506
  %v1448 = vpop.f32.mrb[0].mxu0
  %v1449 = vadd.f32 %v1288, %v1448
  %v1450 = vpop.f32.mrb[0].mxu0
  %v1451 = vadd.f32 %v1290, %v1450
  %v1452 = vpop.f32.mrb[0].mxu0
  %v1453 = vadd.f32 %v1292, %v1452
  %v1454 = vpop.f32.mrb[0].mxu0
  %v1455 = vadd.f32 %v1294, %v1454
  %1456 = vmatprep.mubr.bf16.mxu0 %v539
  %1457 = vmatmul.mubr.bf16.gmra.mrb[0].mxu0 %v507
  %v1458 = vpop.f32.mrb[0].mxu0
  %v1459 = vadd.f32 %v1298, %v1458
  %v1460 = vpop.f32.mrb[0].mxu0
  %v1461 = vadd.f32 %v1300, %v1460
  %v1462 = vpop.f32.mrb[0].mxu0
  %v1463 = vadd.f32 %v1302, %v1462
  %v1464 = vpop.f32.mrb[0].mxu0
  %v1465 = vadd.f32 %v1304, %v1464
  %1466 = vmatprep.mubr.bf16.mxu0 %v540
  %1467 = vmatmul.mubr.bf16.gmra.mrb[0].mxu0 %v508
  %v1468 = vpop.f32.mrb[0].mxu0
  %v1469 = vadd.f32 %v1308, %v1468
  %v1470 = vpop.f32.mrb[0].mxu0
  %v1471 = vadd.f32 %v1310, %v1470
  %v1472 = vpop.f32.mrb[0].mxu0
  %v1473 = vadd.f32 %v1312, %v1472
  %v1474 = vpop.f32.mrb[0].mxu0
  %v1475 = vadd.f32 %v1314, %v1474
  %1476 = vmatprep.mubr.bf16.mxu0 %v549
  %1477 = vmatmul.mubr.bf16.gmra.mrb[0].mxu0 %v517
  %v1478 = vpop.f32.mrb[0].mxu0
  %v1479 = vadd.f32 %v1318, %v1478
  %v1480 = vpop.f32.mrb[0].mxu0
  %v1481 = vadd.f32 %v1320, %v1480
  %v1482 = vpop.f32.mrb[0].mxu0
  %v1483 = vadd.f32 %v1322, %v1482
  %v1484 = vpop.f32.mrb[0].mxu0
  %v1485 = vadd.f32 %v1324, %v1484
  %1486 = vmatprep.mubr.bf16.mxu0 %v550
  %1487 = vmatmul.mubr.bf16.gmra.mrb[0].mxu0 %v518
  %v1488 = vpop.f32.mrb[0].mxu0
  %v1489 = vadd.f32 %v1328, %v1488
  %v1490 = vpop.f32.mrb[0].mxu0
  %v1491 = vadd.f32 %v1330, %v1490
  %v1492 = vpop.f32.mrb[0].mxu0
  %v1493 = vadd.f32 %v1332, %v1492
  %v1494 = vpop.f32.mrb[0].mxu0
  %v1495 = vadd.f32 %v1334, %v1494
  %1496 = vmatprep.mubr.bf16.mxu0 %v551
  %1497 = vmatmul.mubr.bf16.gmra.mrb[0].mxu0 %v519
  %v1498 = vpop.f32.mrb[0].mxu0
  %v1499 = vadd.f32 %v1338, %v1498
  %v1500 = vpop.f32.mrb[0].mxu0
  %v1501 = vadd.f32 %v1340, %v1500
  %v1502 = vpop.f32.mrb[0].mxu0
  %v1503 = vadd.f32 %v1342, %v1502
  %v1504 = vpop.f32.mrb[0].mxu0
  %v1505 = vadd.f32 %v1344, %v1504
  %1506 = vmatprep.mubr.bf16.mxu0 %v552
  %1507 = vmatmul.mubr.bf16.gmra.mrb[0].mxu0 %v520
  %v1508 = vpop.f32.mrb[0].mxu0
  %v1509 = vadd.f32 %v1348, %v1508
  %v1510 = vpop.f32.mrb[0].mxu0
  %v1511 = vadd.f32 %v1350, %v1510
  %v1512 = vpop.f32.mrb[0].mxu0
  %v1513 = vadd.f32 %v1352, %v1512
  %v1514 = vpop.f32.mrb[0].mxu0
  %v1515 = vadd.f32 %v1354, %v1514
  %1516 = vmatprep.mubr.bf16.mxu0 %v553
  %1517 = vmatmul.mubr.bf16.gmra.mrb[0].mxu0 %v521
  %v1518 = vpop.f32.mrb[0].mxu0
  %v1519 = vadd.f32 %v1358, %v1518
  %v1520 = vpop.f32.mrb[0].mxu0
  %v1521 = vadd.f32 %v1360, %v1520
  %v1522 = vpop.f32.mrb[0].mxu0
  %v1523 = vpop.f32.mrb[0].mxu0
  %1524 = vdwg.mxu0
  %1525 = vmatprep.subr.bf16.mxu0 %v1024
  %1526 = vmatpush1.bf16.msra.mxu0 %v1023
  %1527 = vmatprep.subr.bf16.mxu0 %v1026
  %1528 = vmatpush1.bf16.msra.mxu0 %v1025
  %1529 = vmatprep.subr.bf16.mxu0 %v1028
  %1530 = vmatpush1.bf16.msra.mxu0 %v1027
  %1531 = vmatprep.subr.bf16.mxu0 %v1030
  %1532 = vmatpush1.bf16.msra.mxu0 %v1029
  %1533 = vmatprep.subr.bf16.mxu0 %v1032
  %1534 = vmatpush1.bf16.msra.mxu0 %v1031
  %1535 = vmatprep.subr.bf16.mxu0 %v1034
  %1536 = vmatpush1.bf16.msra.mxu0 %v1033
  %1537 = vmatprep.subr.bf16.mxu0 %v1036
  %1538 = vmatpush1.bf16.msra.mxu0 %v1035
  %1539 = vmatprep.subr.bf16.mxu0 %v1038
  %1540 = vmatpush1.bf16.msra.mxu0 %v1037
  %1541 = vmatprep.subr.bf16.mxu0 %v1040
  %1542 = vmatpush1.bf16.msra.mxu0 %v1039
  %1543 = vmatprep.subr.bf16.mxu0 %v1042
  %1544 = vmatpush1.bf16.msra.mxu0 %v1041
  %1545 = vmatprep.subr.bf16.mxu0 %v1044
  %1546 = vmatpush1.bf16.msra.mxu0 %v1043
  %1547 = vmatprep.subr.bf16.mxu0 %v1046
  %1548 = vmatpush1.bf16.msra.mxu0 %v1045
  %1549 = vmatprep.subr.bf16.mxu0 %v1048
  %1550 = vmatpush1.bf16.msra.mxu0 %v1047
  %1551 = vmatprep.subr.bf16.mxu0 %v1050
  %1552 = vmatpush1.bf16.msra.mxu0 %v1049
  %1553 = vmatprep.subr.bf16.mxu0 %v1052
  %1554 = vmatpush1.bf16.msra.mxu0 %v1051
  %1555 = vmatprep.subr.bf16.mxu0 %v1054
  %1556 = vmatpush1.bf16.msra.mxu0 %v1053
  %1557 = vmatprep.mubr.bf16.mxu0 %v597
  %1558 = vmatmul.mubr.bf16.gmra.mrb[0].mxu0 %v565
  %v1559 = vpop.f32.mrb[0].mxu0
  %v1560 = vadd.f32 %v1399, %v1559
  %v1561 = vpop.f32.mrb[0].mxu0
  %v1562 = vadd.f32 %v1401, %v1561
  %v1563 = vpop.f32.mrb[0].mxu0
  %v1564 = vadd.f32 %v1403, %v1563
  %v1565 = vpop.f32.mrb[0].mxu0
  %v1566 = vadd.f32 %v1405, %v1565
  %1567 = vmatprep.mubr.bf16.mxu0 %v598
  %1568 = vmatmul.mubr.bf16.gmra.mrb[0].mxu0 %v566
  %v1569 = vpop.f32.mrb[0].mxu0
  %v1570 = vadd.f32 %v1409, %v1569
  %v1571 = vpop.f32.mrb[0].mxu0
  %v1572 = vadd.f32 %v1411, %v1571
  %v1573 = vpop.f32.mrb[0].mxu0
  %v1574 = vadd.f32 %v1413, %v1573
  %v1575 = vpop.f32.mrb[0].mxu0
  %v1576 = vadd.f32 %v1415, %v1575
  %1577 = vmatprep.mubr.bf16.mxu0 %v599
  %1578 = vmatmul.mubr.bf16.gmra.mrb[0].mxu0 %v567
  %v1579 = vpop.f32.mrb[0].mxu0
  %v1580 = vadd.f32 %v1419, %v1579
  %v1581 = vpop.f32.mrb[0].mxu0
  %v1582 = vadd.f32 %v1421, %v1581
  %v1583 = vpop.f32.mrb[0].mxu0
  %v1584 = vadd.f32 %v1423, %v1583
  %v1585 = vpop.f32.mrb[0].mxu0
  %v1586 = vadd.f32 %v1425, %v1585
  %1587 = vmatprep.mubr.bf16.mxu0 %v600
  %1588 = vmatmul.mubr.bf16.gmra.mrb[0].mxu0 %v568
  %v1589 = vpop.f32.mrb[0].mxu0
  %v1590 = vadd.f32 %v1429, %v1589
  %v1591 = vpop.f32.mrb[0].mxu0
  %v1592 = vadd.f32 %v1431, %v1591
  %v1593 = vpop.f32.mrb[0].mxu0
  %v1594 = vadd.f32 %v1433, %v1593
  %v1595 = vpop.f32.mrb[0].mxu0
  %v1596 = vadd.f32 %v1435, %v1595
  %1597 = vmatprep.mubr.bf16.mxu0 %v601
  %1598 = vmatmul.mubr.bf16.gmra.mrb[0].mxu0 %v569
  %v1599 = vpop.f32.mrb[0].mxu0
  %v1600 = vadd.f32 %v1439, %v1599
  %v1601 = vpop.f32.mrb[0].mxu0
  %v1602 = vadd.f32 %v1441, %v1601
  %v1603 = vpop.f32.mrb[0].mxu0
  %v1604 = vadd.f32 %v1443, %v1603
  %v1605 = vpop.f32.mrb[0].mxu0
  %v1606 = vadd.f32 %v1445, %v1605
  %1607 = vmatprep.mubr.bf16.mxu0 %v602
  %1608 = vmatmul.mubr.bf16.gmra.mrb[0].mxu0 %v570
  %v1609 = vpop.f32.mrb[0].mxu0
  %v1610 = vadd.f32 %v1449, %v1609
  %v1611 = vpop.f32.mrb[0].mxu0
  %v1612 = vadd.f32 %v1451, %v1611
  %v1613 = vpop.f32.mrb[0].mxu0
  %v1614 = vadd.f32 %v1453, %v1613
  %v1615 = vpop.f32.mrb[0].mxu0
  %v1616 = vadd.f32 %v1455, %v1615
  %1617 = vmatprep.mubr.bf16.mxu0 %v603
  %1618 = vmatmul.mubr.bf16.gmra.mrb[0].mxu0 %v571
  %v1619 = vpop.f32.mrb[0].mxu0
  %v1620 = vadd.f32 %v1459, %v1619
  %v1621 = vpop.f32.mrb[0].mxu0
  %v1622 = vadd.f32 %v1461, %v1621
  %v1623 = vpop.f32.mrb[0].mxu0
  %v1624 = vadd.f32 %v1463, %v1623
  %v1625 = vpop.f32.mrb[0].mxu0
  %v1626 = vadd.f32 %v1465, %v1625
  %1627 = vmatprep.mubr.bf16.mxu0 %v604
  %1628 = vmatmul.mubr.bf16.gmra.mrb[0].mxu0 %v572
  %v1629 = vpop.f32.mrb[0].mxu0
  %v1630 = vadd.f32 %v1469, %v1629
  %v1631 = vpop.f32.mrb[0].mxu0
  %v1632 = vadd.f32 %v1471, %v1631
  %v1633 = vpop.f32.mrb[0].mxu0
  %v1634 = vadd.f32 %v1473, %v1633
  %v1635 = vpop.f32.mrb[0].mxu0
  %v1636 = vadd.f32 %v1475, %v1635
  %1637 = vmatprep.mubr.bf16.mxu0 %v613
  %1638 = vmatmul.mubr.bf16.gmra.mrb[0].mxu0 %v581
  %v1639 = vpop.f32.mrb[0].mxu0
  %v1640 = vadd.f32 %v1479, %v1639
  %v1641 = vpop.f32.mrb[0].mxu0
  %v1642 = vadd.f32 %v1481, %v1641
  %v1643 = vpop.f32.mrb[0].mxu0
  %v1644 = vadd.f32 %v1483, %v1643
  %v1645 = vpop.f32.mrb[0].mxu0
  %v1646 = vadd.f32 %v1485, %v1645
  %1647 = vmatprep.mubr.bf16.mxu0 %v614
  %1648 = vmatmul.mubr.bf16.gmra.mrb[0].mxu0 %v582
  %v1649 = vpop.f32.mrb[0].mxu0
  %v1650 = vadd.f32 %v1489, %v1649
  %v1651 = vpop.f32.mrb[0].mxu0
  %v1652 = vadd.f32 %v1491, %v1651
  %v1653 = vpop.f32.mrb[0].mxu0
  %v1654 = vadd.f32 %v1493, %v1653
  %v1655 = vpop.f32.mrb[0].mxu0
  %v1656 = vadd.f32 %v1495, %v1655
  %1657 = vmatprep.mubr.bf16.mxu0 %v615
  %1658 = vmatmul.mubr.bf16.gmra.mrb[0].mxu0 %v583
  %v1659 = vpop.f32.mrb[0].mxu0
  %v1660 = vadd.f32 %v1499, %v1659
  %v1661 = vpop.f32.mrb[0].mxu0
  %v1662 = vadd.f32 %v1501, %v1661
  %v1663 = vpop.f32.mrb[0].mxu0
  %v1664 = vadd.f32 %v1503, %v1663
  %v1665 = vpop.f32.mrb[0].mxu0
  %v1666 = vadd.f32 %v1505, %v1665
  %1667 = vmatprep.mubr.bf16.mxu0 %v616
  %1668 = vmatmul.mubr.bf16.gmra.mrb[0].mxu0 %v584
  %v1669 = vpop.f32.mrb[0].mxu0
  %v1670 = vadd.f32 %v1509, %v1669
  %v1671 = vpop.f32.mrb[0].mxu0
  %v1672 = vadd.f32 %v1511, %v1671
  %v1673 = vpop.f32.mrb[0].mxu0
  %v1674 = vadd.f32 %v1513, %v1673
  %v1675 = vpop.f32.mrb[0].mxu0
  %v1676 = vadd.f32 %v1515, %v1675
  %1677 = vmatprep.mubr.bf16.mxu0 %v617
  %1678 = vmatmul.mubr.bf16.gmra.mrb[0].mxu0 %v585
  %v1679 = vpop.f32.mrb[0].mxu0
  %v1680 = vadd.f32 %v1519, %v1679
  %v1681 = vpop.f32.mrb[0].mxu0
  %v1682 = vadd.f32 %v1521, %v1681
  %v1683 = vpop.f32.mrb[0].mxu0
  %v1684 = vpop.f32.mrb[0].mxu0
  %1685 = vdwg.mxu0
  %1686 = vmatprep.subr.bf16.mxu0 %v1056
  %1687 = vmatpush1.bf16.msra.mxu0 %v1055
  %1688 = vmatprep.subr.bf16.mxu0 %v1058
  %1689 = vmatpush1.bf16.msra.mxu0 %v1057
  %1690 = vmatprep.subr.bf16.mxu0 %v1060
  %1691 = vmatpush1.bf16.msra.mxu0 %v1059
  %1692 = vmatprep.subr.bf16.mxu0 0
  %1693 = vmatpush1.bf16.msra.mxu0 0
  %1694 = vmatprep.subr.bf16.mxu0 0
  %1695 = vmatpush1.bf16.msra.mxu0 0
  %1696 = vmatprep.subr.bf16.mxu0 0
  %1697 = vmatpush1.bf16.msra.mxu0 0
  %1698 = vmatprep.subr.bf16.mxu0 0
  %1699 = vmatpush1.bf16.msra.mxu0 0
  %1700 = vmatprep.subr.bf16.mxu0 0
  %1701 = vmatpush1.bf16.msra.mxu0 0
  %1702 = vmatprep.subr.bf16.mxu0 0
  %1703 = vmatpush1.bf16.msra.mxu0 0
  %1704 = vmatprep.subr.bf16.mxu0 0
  %1705 = vmatpush1.bf16.msra.mxu0 0
  %1706 = vmatprep.subr.bf16.mxu0 0
  %1707 = vmatpush1.bf16.msra.mxu0 0
  %1708 = vmatprep.subr.bf16.mxu0 0
  %1709 = vmatpush1.bf16.msra.mxu0 0
  %1710 = vmatprep.subr.bf16.mxu0 0
  %1711 = vmatpush1.bf16.msra.mxu0 0
  %1712 = vmatprep.subr.bf16.mxu0 0
  %1713 = vmatpush1.bf16.msra.mxu0 0
  %1714 = vmatprep.subr.bf16.mxu0 0
  %1715 = vmatpush1.bf16.msra.mxu0 0
  %1716 = vmatprep.subr.bf16.mxu0 0
  %1717 = vmatpush1.bf16.msra.mxu0 0
  %1718 = vmatprep.mubr.bf16.mxu0 0
  %1719 = vmatmul.mubr.bf16.gmra.mrb[0].mxu0 %v1165
  %v1720 = vpop.f32.mrb[0].mxu0
  %v1721 = vadd.f32 %v1560, %v1720
  %v1722 = vpop.f32.mrb[0].mxu0
  %v1723 = vadd.f32 %v1562, %v1722
  %v1724 = vpop.f32.mrb[0].mxu0
  %v1725 = vadd.f32 %v1564, %v1724
  %v1726 = vpop.f32.mrb[0].mxu0
  %v1727 = vadd.f32 %v1566, %v1726
  %1728 = vmatprep.mubr.bf16.mxu0 0
  %1729 = vmatmul.mubr.bf16.gmra.mrb[0].mxu0 %v1168
  %v1730 = vpop.f32.mrb[0].mxu0
  %v1731 = vadd.f32 %v1570, %v1730
  %v1732 = vpop.f32.mrb[0].mxu0
  %v1733 = vadd.f32 %v1572, %v1732
  %v1734 = vpop.f32.mrb[0].mxu0
  %v1735 = vadd.f32 %v1574, %v1734
  %v1736 = vpop.f32.mrb[0].mxu0
  %v1737 = vadd.f32 %v1576, %v1736
  %1738 = vmatprep.mubr.bf16.mxu0 0
  %1739 = vmatmul.mubr.bf16.gmra.mrb[0].mxu0 %v1171
  %v1740 = vpop.f32.mrb[0].mxu0
  %v1741 = vadd.f32 %v1580, %v1740
  %v1742 = vpop.f32.mrb[0].mxu0
  %v1743 = vadd.f32 %v1582, %v1742
  %v1744 = vpop.f32.mrb[0].mxu0
  %v1745 = vadd.f32 %v1584, %v1744
  %v1746 = vpop.f32.mrb[0].mxu0
  %v1747 = vadd.f32 %v1586, %v1746
  %1748 = vmatprep.mubr.bf16.mxu0 0
  %1749 = vmatmul.mubr.bf16.gmra.mrb[0].mxu0 %v1174
  %v1750 = vpop.f32.mrb[0].mxu0
  %v1751 = vadd.f32 %v1590, %v1750
  %v1752 = vpop.f32.mrb[0].mxu0
  %v1753 = vadd.f32 %v1592, %v1752
  %v1754 = vpop.f32.mrb[0].mxu0
  %v1755 = vadd.f32 %v1594, %v1754
  %v1756 = vpop.f32.mrb[0].mxu0
  %v1757 = vadd.f32 %v1596, %v1756
  %1758 = vmatprep.mubr.bf16.mxu0 0
  %1759 = vmatmul.mubr.bf16.gmra.mrb[0].mxu0 %v1177
  %v1760 = vpop.f32.mrb[0].mxu0
  %v1761 = vadd.f32 %v1600, %v1760
  %v1762 = vpop.f32.mrb[0].mxu0
  %v1763 = vadd.f32 %v1602, %v1762
  %v1764 = vpop.f32.mrb[0].mxu0
  %v1765 = vadd.f32 %v1604, %v1764
  %v1766 = vpop.f32.mrb[0].mxu0
  %v1767 = vadd.f32 %v1606, %v1766
  %1768 = vmatprep.mubr.bf16.mxu0 0
  %1769 = vmatmul.mubr.bf16.gmra.mrb[0].mxu0 %v1180
  %v1770 = vpop.f32.mrb[0].mxu0
  %v1771 = vadd.f32 %v1610, %v1770
  %v1772 = vpop.f32.mrb[0].mxu0
  %v1773 = vadd.f32 %v1612, %v1772
  %v1774 = vpop.f32.mrb[0].mxu0
  %v1775 = vadd.f32 %v1614, %v1774
  %v1776 = vpop.f32.mrb[0].mxu0
  %v1777 = vadd.f32 %v1616, %v1776
  %1778 = vmatprep.mubr.bf16.mxu0 0
  %1779 = vmatmul.mubr.bf16.gmra.mrb[0].mxu0 %v1183
  %v1780 = vpop.f32.mrb[0].mxu0
  %v1781 = vadd.f32 %v1620, %v1780
  %v1782 = vpop.f32.mrb[0].mxu0
  %v1783 = vadd.f32 %v1622, %v1782
  %v1784 = vpop.f32.mrb[0].mxu0
  %v1785 = vadd.f32 %v1624, %v1784
  %v1786 = vpop.f32.mrb[0].mxu0
  %v1787 = vadd.f32 %v1626, %v1786
  %1788 = vmatprep.mubr.bf16.mxu0 0
  %1789 = vmatmul.mubr.bf16.gmra.mrb[0].mxu0 %v1186
  %v1790 = vpop.f32.mrb[0].mxu0
  %v1791 = vadd.f32 %v1630, %v1790
  %v1792 = vpop.f32.mrb[0].mxu0
  %v1793 = vadd.f32 %v1632, %v1792
  %v1794 = vpop.f32.mrb[0].mxu0
  %v1795 = vadd.f32 %v1634, %v1794
  %v1796 = vpop.f32.mrb[0].mxu0
  %v1797 = vadd.f32 %v1636, %v1796
  %1798 = vmatprep.mubr.bf16.mxu0 0
  %1799 = vmatmul.mubr.bf16.gmra.mrb[0].mxu0 %v1189
  %v1800 = vpop.f32.mrb[0].mxu0
  %v1801 = vadd.f32 %v1640, %v1800
  %v1802 = vpop.f32.mrb[0].mxu0
  %v1803 = vadd.f32 %v1642, %v1802
  %v1804 = vpop.f32.mrb[0].mxu0
  %v1805 = vadd.f32 %v1644, %v1804
  %v1806 = vpop.f32.mrb[0].mxu0
  %v1807 = vadd.f32 %v1646, %v1806
  %1808 = vmatprep.mubr.bf16.mxu0 0
  %1809 = vmatmul.mubr.bf16.gmra.mrb[0].mxu0 %v1192
  %v1810 = vpop.f32.mrb[0].mxu0
  %v1811 = vadd.f32 %v1650, %v1810
  %v1812 = vpop.f32.mrb[0].mxu0
  %v1813 = vadd.f32 %v1652, %v1812
  %v1814 = vpop.f32.mrb[0].mxu0
  %v1815 = vadd.f32 %v1654, %v1814
  %v1816 = vpop.f32.mrb[0].mxu0
  %v1817 = vadd.f32 %v1656, %v1816
  %1818 = vmatprep.mubr.bf16.mxu0 0
  %1819 = vmatmul.mubr.bf16.gmra.mrb[0].mxu0 %v1195
  %v1820 = vpop.f32.mrb[0].mxu0
  %v1821 = vadd.f32 %v1660, %v1820
  %v1822 = vpop.f32.mrb[0].mxu0
  %v1823 = vadd.f32 %v1662, %v1822
  %v1824 = vpop.f32.mrb[0].mxu0
  %v1825 = vadd.f32 %v1664, %v1824
  %v1826 = vpop.f32.mrb[0].mxu0
  %v1827 = vadd.f32 %v1666, %v1826
  %1828 = vmatprep.mubr.bf16.mxu0 0
  %1829 = vmatmul.mubr.bf16.gmra.mrb[0].mxu0 %v1198
  %v1830 = vpop.f32.mrb[0].mxu0
  %v1831 = vadd.f32 %v1670, %v1830
  %v1832 = vpop.f32.mrb[0].mxu0
  %v1833 = vadd.f32 %v1672, %v1832
  %v1834 = vpop.f32.mrb[0].mxu0
  %v1835 = vadd.f32 %v1674, %v1834
  %v1836 = vpop.f32.mrb[0].mxu0
  %v1837 = vadd.f32 %v1676, %v1836
  %1838 = vmatprep.mubr.bf16.mxu0 0
  %1839 = vmatmul.mubr.bf16.gmra.mrb[0].mxu0 %v1201
  %v1840 = vpop.f32.mrb[0].mxu0
  %v1841 = vadd.f32 %v1680, %v1840
  %v1842 = vpop.f32.mrb[0].mxu0
  %v1843 = vadd.f32 %v1682, %v1842
  %v1844 = vpop.f32.mrb[0].mxu0
  %v1845 = vpop.f32.mrb[0].mxu0
  %1846 = vdwg.mxu0
  %v1847 = vadd.f32 %v1721, %v1725
  %v1848 = vadd.f32 %v1847, %v1731
  %v1849 = vadd.f32 %v1848, %v1735
  %v1850 = vadd.f32 %v1849, %v1741
  %v1851 = vadd.f32 %v1850, %v1745
  %v1852 = vadd.f32 %v1851, %v1751
  %v1853 = vadd.f32 %v1852, %v1755
  %v1854 = vadd.f32 %v1853, %v1761
  %v1855 = vadd.f32 %v1854, %v1765
  %v1856 = vadd.f32 %v1855, %v1771
  %v1857 = vadd.f32 %v1856, %v1775
  %v1858 = vadd.f32 %v1857, %v1781
  %v1859 = vadd.f32 %v1858, %v1785
  %v1860 = vadd.f32 %v1859, %v1791
  %v1861 = vadd.f32 %v1860, %v1795
  %v1862 = vadd.f32 %v1861, %v1801
  %v1863 = vadd.f32 %v1862, %v1805
  %v1864 = vadd.f32 %v1863, %v1811
  %v1865 = vadd.f32 %v1864, %v1815
  %v1866 = vadd.f32 %v1865, %v1821
  %v1867 = vadd.f32 %v1866, %v1825
  %v1868 = vadd.f32 %v1867, %v1831
  %v1869 = vadd.f32 %v1868, %v1835
  %vm1870 = vcmask 1043456
  %v1871 = vsel %vm1870, %v1841, 0.0
  %v1872 = vadd.f32 %v1869, %v1871
  %v1873 = vrot.slane %v1872, 4
  %v1874 = vadd.f32 %v1872, %v1873
  %v1875 = vrot.slane %v1874, 2
  %v1876 = vadd.f32 %v1874, %v1875
  %v1877 = vrot.slane %v1876, 1
  %v1878 = vadd.f32 %v1876, %v1877
  %vm1879 = vcmask 523264
  %v1880 = vsel %vm1879, %v1723, 0.0
  %v1881 = vsel %vm1879, %v1727, 0.0
  %v1882 = vadd.f32 %v1880, %v1881
  %v1883 = vsel %vm1879, %v1733, 0.0
  %v1884 = vadd.f32 %v1882, %v1883
  %v1885 = vsel %vm1879, %v1737, 0.0
  %v1886 = vadd.f32 %v1884, %v1885
  %v1887 = vsel %vm1879, %v1743, 0.0
  %v1888 = vadd.f32 %v1886, %v1887
  %v1889 = vsel %vm1879, %v1747, 0.0
  %v1890 = vadd.f32 %v1888, %v1889
  %v1891 = vsel %vm1879, %v1753, 0.0
  %v1892 = vadd.f32 %v1890, %v1891
  %v1893 = vsel %vm1879, %v1757, 0.0
  %v1894 = vadd.f32 %v1892, %v1893
  %v1895 = vsel %vm1879, %v1763, 0.0
  %v1896 = vadd.f32 %v1894, %v1895
  %v1897 = vsel %vm1879, %v1767, 0.0
  %v1898 = vadd.f32 %v1896, %v1897
  %v1899 = vsel %vm1879, %v1773, 0.0
  %v1900 = vadd.f32 %v1898, %v1899
  %v1901 = vsel %vm1879, %v1777, 0.0
  %v1902 = vadd.f32 %v1900, %v1901
  %v1903 = vsel %vm1879, %v1783, 0.0
  %v1904 = vadd.f32 %v1902, %v1903
  %v1905 = vsel %vm1879, %v1787, 0.0
  %v1906 = vadd.f32 %v1904, %v1905
  %v1907 = vsel %vm1879, %v1793, 0.0
  %v1908 = vadd.f32 %v1906, %v1907
  %v1909 = vsel %vm1879, %v1797, 0.0
  %v1910 = vadd.f32 %v1908, %v1909
  %v1911 = vsel %vm1879, %v1803, 0.0
  %v1912 = vadd.f32 %v1910, %v1911
  %v1913 = vsel %vm1879, %v1807, 0.0
  %v1914 = vadd.f32 %v1912, %v1913
  %v1915 = vsel %vm1879, %v1813, 0.0
  %v1916 = vadd.f32 %v1914, %v1915
  %v1917 = vsel %vm1879, %v1817, 0.0
  %v1918 = vadd.f32 %v1916, %v1917
  %v1919 = vsel %vm1879, %v1823, 0.0
  %v1920 = vadd.f32 %v1918, %v1919
  %v1921 = vsel %vm1879, %v1827, 0.0
  %v1922 = vadd.f32 %v1920, %v1921
  %v1923 = vsel %vm1879, %v1833, 0.0
  %v1924 = vadd.f32 %v1922, %v1923
  %v1925 = vsel %vm1879, %v1837, 0.0
  %v1926 = vadd.f32 %v1924, %v1925
  %vm1927 = vcmask 519168
  %v1928 = vsel %vm1927, %v1843, 0.0
  %v1929 = vadd.f32 %v1926, %v1928
  %v1930 = vrot.slane %v1929, 4
  %v1931 = vadd.f32 %v1929, %v1930
  %v1932 = vrot.slane %v1931, 2
  %v1933 = vadd.f32 %v1931, %v1932
  %v1934 = vrot.slane %v1933, 1
  %v1935 = vadd.f32 %v1933, %v1934
  %v1936 = vmul.f32 %v1878, 0.0051020407
  %v1937 = vmul.f32 %v1935, 0.0051020407
  %v1938 = vsub.f32 %v1721, %v1936
  %v1939 = vsub.f32 %v1723, %v1937
  %v1940 = vsub.f32 %v1725, %v1936
  %v1941 = vsub.f32 %v1727, %v1937
  %v1942 = vsub.f32 %v1731, %v1936
  %v1943 = vsub.f32 %v1733, %v1937
  %v1944 = vsub.f32 %v1735, %v1936
  %v1945 = vsub.f32 %v1737, %v1937
  %v1946 = vsub.f32 %v1741, %v1936
  %v1947 = vsub.f32 %v1743, %v1937
  %v1948 = vsub.f32 %v1745, %v1936
  %v1949 = vsub.f32 %v1747, %v1937
  %v1950 = vsub.f32 %v1751, %v1936
  %v1951 = vsub.f32 %v1753, %v1937
  %v1952 = vsub.f32 %v1755, %v1936
  %v1953 = vsub.f32 %v1757, %v1937
  %v1954 = vsub.f32 %v1761, %v1936
  %v1955 = vsub.f32 %v1763, %v1937
  %v1956 = vsub.f32 %v1765, %v1936
  %v1957 = vsub.f32 %v1767, %v1937
  %v1958 = vsub.f32 %v1771, %v1936
  %v1959 = vsub.f32 %v1773, %v1937
  %v1960 = vsub.f32 %v1775, %v1936
  %v1961 = vsub.f32 %v1777, %v1937
  %v1962 = vsub.f32 %v1781, %v1936
  %v1963 = vsub.f32 %v1783, %v1937
  %v1964 = vsub.f32 %v1785, %v1936
  %v1965 = vsub.f32 %v1787, %v1937
  %v1966 = vsub.f32 %v1791, %v1936
  %v1967 = vsub.f32 %v1793, %v1937
  %v1968 = vsub.f32 %v1795, %v1936
  %v1969 = vsub.f32 %v1797, %v1937
  %v1970 = vsub.f32 %v1801, %v1936
  %v1971 = vsub.f32 %v1803, %v1937
  %v1972 = vsub.f32 %v1805, %v1936
  %v1973 = vsub.f32 %v1807, %v1937
  %v1974 = vsub.f32 %v1811, %v1936
  %v1975 = vsub.f32 %v1813, %v1937
  %v1976 = vsub.f32 %v1815, %v1936
  %v1977 = vsub.f32 %v1817, %v1937
  %v1978 = vsub.f32 %v1821, %v1936
  %v1979 = vsub.f32 %v1823, %v1937
  %v1980 = vsub.f32 %v1825, %v1936
  %v1981 = vsub.f32 %v1827, %v1937
  %v1982 = vsub.f32 %v1831, %v1936
  %v1983 = vsub.f32 %v1833, %v1937
  %v1984 = vsub.f32 %v1835, %v1936
  %v1985 = vsub.f32 %v1837, %v1937
  %v1986 = vsub.f32 %v1841, %v1936
  %v1987 = vsub.f32 %v1843, %v1937
  %v1988 = vmul.f32 %v1938, %v1938
  %v1989 = vmul.f32 %v1939, %v1939
  %v1990 = vmul.f32 %v1940, %v1940
  %v1991 = vmul.f32 %v1941, %v1941
  %v1992 = vmul.f32 %v1942, %v1942
  %v1993 = vmul.f32 %v1943, %v1943
  %v1994 = vmul.f32 %v1944, %v1944
  %v1995 = vmul.f32 %v1945, %v1945
  %v1996 = vmul.f32 %v1946, %v1946
  %v1997 = vmul.f32 %v1947, %v1947
  %v1998 = vmul.f32 %v1948, %v1948
  %v1999 = vmul.f32 %v1949, %v1949
  %v2000 = vmul.f32 %v1950, %v1950
  %v2001 = vmul.f32 %v1951, %v1951
  %v2002 = vmul.f32 %v1952, %v1952
  %v2003 = vmul.f32 %v1953, %v1953
  %v2004 = vmul.f32 %v1954, %v1954
  %v2005 = vmul.f32 %v1955, %v1955
  %v2006 = vmul.f32 %v1956, %v1956
  %v2007 = vmul.f32 %v1957, %v1957
  %v2008 = vmul.f32 %v1958, %v1958
  %v2009 = vmul.f32 %v1959, %v1959
  %v2010 = vmul.f32 %v1960, %v1960
  %v2011 = vmul.f32 %v1961, %v1961
  %v2012 = vmul.f32 %v1962, %v1962
  %v2013 = vmul.f32 %v1963, %v1963
  %v2014 = vmul.f32 %v1964, %v1964
  %v2015 = vmul.f32 %v1965, %v1965
  %v2016 = vmul.f32 %v1966, %v1966
  %v2017 = vmul.f32 %v1967, %v1967
  %v2018 = vmul.f32 %v1968, %v1968
  %v2019 = vmul.f32 %v1969, %v1969
  %v2020 = vmul.f32 %v1970, %v1970
  %v2021 = vmul.f32 %v1971, %v1971
  %v2022 = vmul.f32 %v1972, %v1972
  %v2023 = vmul.f32 %v1973, %v1973
  %v2024 = vmul.f32 %v1974, %v1974
  %v2025 = vmul.f32 %v1975, %v1975
  %v2026 = vmul.f32 %v1976, %v1976
  %v2027 = vmul.f32 %v1977, %v1977
  %v2028 = vmul.f32 %v1978, %v1978
  %v2029 = vmul.f32 %v1979, %v1979
  %v2030 = vmul.f32 %v1980, %v1980
  %v2031 = vmul.f32 %v1981, %v1981
  %v2032 = vmul.f32 %v1982, %v1982
  %v2033 = vmul.f32 %v1983, %v1983
  %v2034 = vmul.f32 %v1984, %v1984
  %v2035 = vmul.f32 %v1985, %v1985
  %v2036 = vmul.f32 %v1986, %v1986
  %v2037 = vmul.f32 %v1987, %v1987
  %v2038 = vadd.f32 %v1988, %v1990
  %v2039 = vadd.f32 %v2038, %v1992
  %v2040 = vadd.f32 %v2039, %v1994
  %v2041 = vadd.f32 %v2040, %v1996
  %v2042 = vadd.f32 %v2041, %v1998
  %v2043 = vadd.f32 %v2042, %v2000
  %v2044 = vadd.f32 %v2043, %v2002
  %v2045 = vadd.f32 %v2044, %v2004
  %v2046 = vadd.f32 %v2045, %v2006
  %v2047 = vadd.f32 %v2046, %v2008
  %v2048 = vadd.f32 %v2047, %v2010
  %v2049 = vadd.f32 %v2048, %v2012
  %v2050 = vadd.f32 %v2049, %v2014
  %v2051 = vadd.f32 %v2050, %v2016
  %v2052 = vadd.f32 %v2051, %v2018
  %v2053 = vadd.f32 %v2052, %v2020
  %v2054 = vadd.f32 %v2053, %v2022
  %v2055 = vadd.f32 %v2054, %v2024
  %v2056 = vadd.f32 %v2055, %v2026
  %v2057 = vadd.f32 %v2056, %v2028
  %v2058 = vadd.f32 %v2057, %v2030
  %v2059 = vadd.f32 %v2058, %v2032
  %v2060 = vadd.f32 %v2059, %v2034
  %v2061 = vsel %vm1870, %v2036, 0.0
  %v2062 = vadd.f32 %v2060, %v2061
  %v2063 = vrot.slane %v2062, 4
  %v2064 = vadd.f32 %v2062, %v2063
  %v2065 = vrot.slane %v2064, 2
  %v2066 = vadd.f32 %v2064, %v2065
  %v2067 = vrot.slane %v2066, 1
  %v2068 = vadd.f32 %v2066, %v2067
  %v2069 = vsel %vm1879, %v1989, 0.0
  %v2070 = vsel %vm1879, %v1991, 0.0
  %v2071 = vadd.f32 %v2069, %v2070
  %v2072 = vsel %vm1879, %v1993, 0.0
  %v2073 = vadd.f32 %v2071, %v2072
  %v2074 = vsel %vm1879, %v1995, 0.0
  %v2075 = vadd.f32 %v2073, %v2074
  %v2076 = vsel %vm1879, %v1997, 0.0
  %v2077 = vadd.f32 %v2075, %v2076
  %v2078 = vsel %vm1879, %v1999, 0.0
  %v2079 = vadd.f32 %v2077, %v2078
  %v2080 = vsel %vm1879, %v2001, 0.0
  %v2081 = vadd.f32 %v2079, %v2080
  %v2082 = vsel %vm1879, %v2003, 0.0
  %v2083 = vadd.f32 %v2081, %v2082
  %v2084 = vsel %vm1879, %v2005, 0.0
  %v2085 = vadd.f32 %v2083, %v2084
  %v2086 = vsel %vm1879, %v2007, 0.0
  %v2087 = vadd.f32 %v2085, %v2086
  %v2088 = vsel %vm1879, %v2009, 0.0
  %v2089 = vadd.f32 %v2087, %v2088
  %v2090 = vsel %vm1879, %v2011, 0.0
  %v2091 = vadd.f32 %v2089, %v2090
  %v2092 = vsel %vm1879, %v2013, 0.0
  %v2093 = vadd.f32 %v2091, %v2092
  %v2094 = vsel %vm1879, %v2015, 0.0
  %v2095 = vadd.f32 %v2093, %v2094
  %v2096 = vsel %vm1879, %v2017, 0.0
  %v2097 = vadd.f32 %v2095, %v2096
  %v2098 = vsel %vm1879, %v2019, 0.0
  %v2099 = vadd.f32 %v2097, %v2098
  %v2100 = vsel %vm1879, %v2021, 0.0
  %v2101 = vadd.f32 %v2099, %v2100
  %v2102 = vsel %vm1879, %v2023, 0.0
  %v2103 = vadd.f32 %v2101, %v2102
  %v2104 = vsel %vm1879, %v2025, 0.0
  %v2105 = vadd.f32 %v2103, %v2104
  %v2106 = vsel %vm1879, %v2027, 0.0
  %v2107 = vadd.f32 %v2105, %v2106
  %v2108 = vsel %vm1879, %v2029, 0.0
  %v2109 = vadd.f32 %v2107, %v2108
  %v2110 = vsel %vm1879, %v2031, 0.0
  %v2111 = vadd.f32 %v2109, %v2110
  %v2112 = vsel %vm1879, %v2033, 0.0
  %v2113 = vadd.f32 %v2111, %v2112
  %v2114 = vsel %vm1879, %v2035, 0.0
  %v2115 = vadd.f32 %v2113, %v2114
  %v2116 = vsel %vm1927, %v2037, 0.0
  %v2117 = vadd.f32 %v2115, %v2116
  %v2118 = vrot.slane %v2117, 4
  %v2119 = vadd.f32 %v2117, %v2118
  %v2120 = vrot.slane %v2119, 2
  %v2121 = vadd.f32 %v2119, %v2120
  %v2122 = vrot.slane %v2121, 1
  %v2123 = vadd.f32 %v2121, %v2122
  %v2124 = vmul.f32 %v2068, 0.0051020407
  %v2125 = vmul.f32 %v2123, 0.0051020407
  %v2126 = vadd.f32 %v2124, 1e-05
  %v2127 = vadd.f32 %v2125, 1e-05
  %v2128 = vrsqrt.pop %v2126
  %v2129 = vrsqrt.pop %v2127
  %v2130 = vld [vmem:[%s2] sm:$0x3]
  %v2132 = vlaneseq
  %v2133 = vshrl.u32 %v2132, 7
  %v2134 = vsub.s32 0, %v2133
  %v2135 = vrot.slane %v2130, %v2134
  %v2136 = vlaneseq
  %v2137 = vshrl.u32 %v2136, 7
  %v2138 = vsub.s32 1, %v2137
  %v2139 = vrot.slane %v2130, %v2138
  %v2142 = vmul.f32 %v2128, %v2135
  %v2143 = vmul.f32 %v2129, %v2139
  %v2144 = vlaneseq
  %v2145 = vshrl.u32 %v2144, 7
  %v2146 = vsub.s32 0, %v2145
  %v2147 = vrot.slane %v2142, %v2146
  %v2148 = vlaneseq
  %v2149 = vshrl.u32 %v2148, 7
  %v2150 = vsub.s32 0, %v2149
  %v2151 = vrot.slane %v2143, %v2150
  %v2152 = vmul.f32 %v1938, %v2147
  %v2153 = vmul.f32 %v1939, %v2151
  %v2154 = vmul.f32 %v1940, %v2147
  %v2155 = vmul.f32 %v1941, %v2151
  %v2156 = vmul.f32 %v1942, %v2147
  %v2157 = vmul.f32 %v1943, %v2151
  %v2158 = vmul.f32 %v1944, %v2147
  %v2159 = vmul.f32 %v1945, %v2151
  %v2160 = vmul.f32 %v1946, %v2147
  %v2161 = vmul.f32 %v1947, %v2151
  %v2162 = vmul.f32 %v1948, %v2147
  %v2163 = vmul.f32 %v1949, %v2151
  %v2164 = vmul.f32 %v1950, %v2147
  %v2165 = vmul.f32 %v1951, %v2151
  %v2166 = vmul.f32 %v1952, %v2147
  %v2167 = vmul.f32 %v1953, %v2151
  %v2168 = vmul.f32 %v1954, %v2147
  %v2169 = vmul.f32 %v1955, %v2151
  %v2170 = vmul.f32 %v1956, %v2147
  %v2171 = vmul.f32 %v1957, %v2151
  %v2172 = vmul.f32 %v1958, %v2147
  %v2173 = vmul.f32 %v1959, %v2151
  %v2174 = vmul.f32 %v1960, %v2147
  %v2175 = vmul.f32 %v1961, %v2151
  %v2176 = vmul.f32 %v1962, %v2147
  %v2177 = vmul.f32 %v1963, %v2151
  %v2178 = vmul.f32 %v1964, %v2147
  %v2179 = vmul.f32 %v1965, %v2151
  %v2180 = vmul.f32 %v1966, %v2147
  %v2181 = vmul.f32 %v1967, %v2151
  %v2182 = vmul.f32 %v1968, %v2147
  %v2183 = vmul.f32 %v1969, %v2151
  %v2184 = vmul.f32 %v1970, %v2147
  %v2185 = vmul.f32 %v1971, %v2151
  %v2186 = vmul.f32 %v1972, %v2147
  %v2187 = vmul.f32 %v1973, %v2151
  %v2188 = vmul.f32 %v1974, %v2147
  %v2189 = vmul.f32 %v1975, %v2151
  %v2190 = vmul.f32 %v1976, %v2147
  %v2191 = vmul.f32 %v1977, %v2151
  %v2192 = vmul.f32 %v1978, %v2147
  %v2193 = vmul.f32 %v1979, %v2151
  %v2194 = vmul.f32 %v1980, %v2147
  %v2195 = vmul.f32 %v1981, %v2151
  %v2196 = vmul.f32 %v1982, %v2147
  %v2197 = vmul.f32 %v1983, %v2151
  %v2198 = vmul.f32 %v1984, %v2147
  %v2199 = vmul.f32 %v1985, %v2151
  %v2200 = vmul.f32 %v1986, %v2147
  %v2201 = vmul.f32 %v1987, %v2151
  %v2202 = vld [vmem:[%s3] sm:$0x3]
  %v2204 = vlaneseq
  %v2205 = vshrl.u32 %v2204, 7
  %v2206 = vsub.s32 0, %v2205
  %v2207 = vrot.slane %v2202, %v2206
  %v2208 = vlaneseq
  %v2209 = vshrl.u32 %v2208, 7
  %v2210 = vsub.s32 1, %v2209
  %v2211 = vrot.slane %v2202, %v2210
  %v2214 = vadd.f32 %v2152, %v2207
  %v2215 = vadd.f32 %v2153, %v2211
  %v2216 = vadd.f32 %v2154, %v2207
  %v2217 = vadd.f32 %v2155, %v2211
  %v2218 = vadd.f32 %v2156, %v2207
  %v2219 = vadd.f32 %v2157, %v2211
  %v2220 = vadd.f32 %v2158, %v2207
  %v2221 = vadd.f32 %v2159, %v2211
  %v2222 = vadd.f32 %v2160, %v2207
  %v2223 = vadd.f32 %v2161, %v2211
  %v2224 = vadd.f32 %v2162, %v2207
  %v2225 = vadd.f32 %v2163, %v2211
  %v2226 = vadd.f32 %v2164, %v2207
  %v2227 = vadd.f32 %v2165, %v2211
  %v2228 = vadd.f32 %v2166, %v2207
  %v2229 = vadd.f32 %v2167, %v2211
  %v2230 = vadd.f32 %v2168, %v2207
  %v2231 = vadd.f32 %v2169, %v2211
  %v2232 = vadd.f32 %v2170, %v2207
  %v2233 = vadd.f32 %v2171, %v2211
  %v2234 = vadd.f32 %v2172, %v2207
  %v2235 = vadd.f32 %v2173, %v2211
  %v2236 = vadd.f32 %v2174, %v2207
  %v2237 = vadd.f32 %v2175, %v2211
  %v2238 = vadd.f32 %v2176, %v2207
  %v2239 = vadd.f32 %v2177, %v2211
  %v2240 = vadd.f32 %v2178, %v2207
  %v2241 = vadd.f32 %v2179, %v2211
  %v2242 = vadd.f32 %v2180, %v2207
  %v2243 = vadd.f32 %v2181, %v2211
  %v2244 = vadd.f32 %v2182, %v2207
  %v2245 = vadd.f32 %v2183, %v2211
  %v2246 = vadd.f32 %v2184, %v2207
  %v2247 = vadd.f32 %v2185, %v2211
  %v2248 = vadd.f32 %v2186, %v2207
  %v2249 = vadd.f32 %v2187, %v2211
  %v2250 = vadd.f32 %v2188, %v2207
  %v2251 = vadd.f32 %v2189, %v2211
  %v2252 = vadd.f32 %v2190, %v2207
  %v2253 = vadd.f32 %v2191, %v2211
  %v2254 = vadd.f32 %v2192, %v2207
  %v2255 = vadd.f32 %v2193, %v2211
  %v2256 = vadd.f32 %v2194, %v2207
  %v2257 = vadd.f32 %v2195, %v2211
  %v2258 = vadd.f32 %v2196, %v2207
  %v2259 = vadd.f32 %v2197, %v2211
  %v2260 = vadd.f32 %v2198, %v2207
  %v2261 = vadd.f32 %v2199, %v2211
  %v2262 = vadd.f32 %v2200, %v2207
  %v2263 = vadd.f32 %v2201, %v2211
  %v2264 = vmax.f32 %v2214, 0.0
  %v2265 = vmax.f32 %v2215, 0.0
  %v2266 = vmax.f32 %v2216, 0.0
  %v2267 = vmax.f32 %v2217, 0.0
  %v2268 = vmax.f32 %v2218, 0.0
  %v2269 = vmax.f32 %v2219, 0.0
  %v2270 = vmax.f32 %v2220, 0.0
  %v2271 = vmax.f32 %v2221, 0.0
  %v2272 = vmax.f32 %v2222, 0.0
  %v2273 = vmax.f32 %v2223, 0.0
  %v2274 = vmax.f32 %v2224, 0.0
  %v2275 = vmax.f32 %v2225, 0.0
  %v2276 = vmax.f32 %v2226, 0.0
  %v2277 = vmax.f32 %v2227, 0.0
  %v2278 = vmax.f32 %v2228, 0.0
  %v2279 = vmax.f32 %v2229, 0.0
  %v2280 = vmax.f32 %v2230, 0.0
  %v2281 = vmax.f32 %v2231, 0.0
  %v2282 = vmax.f32 %v2232, 0.0
  %v2283 = vmax.f32 %v2233, 0.0
  %v2284 = vmax.f32 %v2234, 0.0
  %v2285 = vmax.f32 %v2235, 0.0
  %v2286 = vmax.f32 %v2236, 0.0
  %v2287 = vmax.f32 %v2237, 0.0
  %v2288 = vmax.f32 %v2238, 0.0
  %v2289 = vmax.f32 %v2239, 0.0
  %v2290 = vmax.f32 %v2240, 0.0
  %v2291 = vmax.f32 %v2241, 0.0
  %v2292 = vmax.f32 %v2242, 0.0
  %v2293 = vmax.f32 %v2243, 0.0
  %v2294 = vmax.f32 %v2244, 0.0
  %v2295 = vmax.f32 %v2245, 0.0
  %v2296 = vmax.f32 %v2246, 0.0
  %v2297 = vmax.f32 %v2247, 0.0
  %v2298 = vmax.f32 %v2248, 0.0
  %v2299 = vmax.f32 %v2249, 0.0
  %v2300 = vmax.f32 %v2250, 0.0
  %v2301 = vmax.f32 %v2251, 0.0
  %v2302 = vmax.f32 %v2252, 0.0
  %v2303 = vmax.f32 %v2253, 0.0
  %v2304 = vmax.f32 %v2254, 0.0
  %v2305 = vmax.f32 %v2255, 0.0
  %v2306 = vmax.f32 %v2256, 0.0
  %v2307 = vmax.f32 %v2257, 0.0
  %v2308 = vmax.f32 %v2258, 0.0
  %v2309 = vmax.f32 %v2259, 0.0
  %v2310 = vmax.f32 %v2260, 0.0
  %v2311 = vmax.f32 %v2261, 0.0
  %v2312 = vmax.f32 %v2262, 0.0
  %v2313 = vmax.f32 %v2263, 0.0
  %v2314 = vpack.c.bf16 %v2266, %v2264
  %v2315 = vpack.c.bf16 %v2267, %v2265
  %v2316 = vpack.c.bf16 %v2270, %v2268
  %v2317 = vpack.c.bf16 %v2271, %v2269
  %v2318 = vpack.c.bf16 %v2274, %v2272
  %v2319 = vpack.c.bf16 %v2275, %v2273
  %v2320 = vpack.c.bf16 %v2278, %v2276
  %v2321 = vpack.c.bf16 %v2279, %v2277
  %v2322 = vpack.c.bf16 %v2282, %v2280
  %v2323 = vpack.c.bf16 %v2283, %v2281
  %v2324 = vpack.c.bf16 %v2286, %v2284
  %v2325 = vpack.c.bf16 %v2287, %v2285
  %v2326 = vpack.c.bf16 %v2290, %v2288
  %v2327 = vpack.c.bf16 %v2291, %v2289
  %v2328 = vpack.c.bf16 %v2294, %v2292
  %v2329 = vpack.c.bf16 %v2295, %v2293
  %v2330 = vpack.c.bf16 %v2298, %v2296
  %v2331 = vpack.c.bf16 %v2299, %v2297
  %v2332 = vpack.c.bf16 %v2302, %v2300
  %v2333 = vpack.c.bf16 %v2303, %v2301
  %v2334 = vpack.c.bf16 %v2306, %v2304
  %v2335 = vpack.c.bf16 %v2307, %v2305
  %v2336 = vpack.c.bf16 %v2310, %v2308
  %v2337 = vpack.c.bf16 %v2311, %v2309
  %v2338 = vpack.c.bf16 %v2312, %v2312
  %v2339 = vpack.c.bf16 %v2313, %v2313
  %2340 = vst [vmem:[#allocation2] sm:$0xff] 0
  %2341 = vst.msk [vmem:[#allocation2 + $0x8] sm:$0xff] %vm1879, 0
  %2342 = vst [vmem:[#allocation2 + $0x10] sm:$0xff] 0
  %2343 = vst.msk [vmem:[#allocation2 + $0x18] sm:$0xff] %vm1879, 0
  %2344 = vst [vmem:[#allocation2 + $0x20] sm:$0xff] 0
  %2345 = vst.msk [vmem:[#allocation2 + $0x28] sm:$0xff] %vm1879, 0
  %2346 = vst [vmem:[#allocation2 + $0x30] sm:$0xff] 0
  %2347 = vst.msk [vmem:[#allocation2 + $0x38] sm:$0xff] %vm1879, 0
  %2348 = vst [vmem:[#allocation2 + $0x40] sm:$0xff] 0
  %2349 = vst.msk [vmem:[#allocation2 + $0x48] sm:$0xff] %vm1879, 0
  %2350 = vst [vmem:[#allocation2 + $0x50] sm:$0xff] 0
  %2351 = vst.msk [vmem:[#allocation2 + $0x58] sm:$0xff] %vm1879, 0
  %2352 = vst [vmem:[#allocation2 + $0x60] sm:$0xff] 0
  %2353 = vst.msk [vmem:[#allocation2 + $0x68] sm:$0xff] %vm1879, 0
  %2354 = vst [vmem:[#allocation2 + $0x70] sm:$0xff] 0
  %2355 = vst.msk [vmem:[#allocation2 + $0x78] sm:$0xff] %vm1879, 0
  %2356 = vst [vmem:[#allocation2 + $0x80] sm:$0xff] 0
  %2357 = vst.msk [vmem:[#allocation2 + $0x88] sm:$0xff] %vm1879, 0
  %2358 = vst [vmem:[#allocation2 + $0x90] sm:$0xff] 0
  %2359 = vst.msk [vmem:[#allocation2 + $0x98] sm:$0xff] %vm1879, 0
  %2360 = vst [vmem:[#allocation2 + $0xa0] sm:$0xff] 0
  %2361 = vst.msk [vmem:[#allocation2 + $0xa8] sm:$0xff] %vm1879, 0
  %2362 = vst [vmem:[#allocation2 + $0xb0] sm:$0xff] 0
  %2363 = vst.msk [vmem:[#allocation2 + $0xb8] sm:$0xff] %vm1879, 0
  %2364 = vst [vmem:[#allocation2 + $0xc0] sm:$0xff] 0
  %2365 = vst.msk [vmem:[#allocation2 + $0xc8] sm:$0xff] %vm1879, 0
  %2366 = vst [vmem:[#allocation2 + $0xd0] sm:$0xff] 0
  %2367 = vst.msk [vmem:[#allocation2 + $0xd8] sm:$0xff] %vm1879, 0
  %2368 = vst [vmem:[#allocation2 + $0xe0] sm:$0xff] 0
  %2369 = vst.msk [vmem:[#allocation2 + $0xe8] sm:$0xff] %vm1879, 0
  %2370 = vst [vmem:[#allocation2 + $0xf0] sm:$0xff] 0
  %2371 = vst.msk [vmem:[#allocation2 + $0xf8] sm:$0xff] %vm1879, 0
  %2372 = vst [vmem:[#allocation2 + $0x100] sm:$0xff] 0
  %2373 = vst.msk [vmem:[#allocation2 + $0x108] sm:$0xff] %vm1879, 0
  %2374 = vst [vmem:[#allocation2 + $0x20] sm:$0x7f] %v2314
  %vm2375 = vcmask 522240
  %2376 = vst.msk [vmem:[#allocation2 + $0x28] sm:$0x7f] %vm2375, %v2315
  %vm2381 = vcmask 1040384
  %v2382 = vrot.slane %v2314, 7
  %v2383 = vrot.slane %v2316, 7
  %v2384 = vsel %vm2381, %v2382, %v2383
  %v2385 = vrot.slane %v2315, 7
  %v2386 = vrot.slane %v2317, 7
  %v2387 = vsel %vm2381, %v2385, %v2386
  %2390 = vst [vmem:[#allocation2 + $0x30] sm:$0x7f] %v2384
  %2391 = vst.msk [vmem:[#allocation2 + $0x38] sm:$0x7f] %vm2375, %v2387
  %vm2394 = vcmask 1041408
  %v2395 = vrot.slane %v2316, 6
  %v2396 = vrot.slane %v2318, 6
  %v2397 = vsel %vm2394, %v2395, %v2396
  %v2398 = vrot.slane %v2317, 6
  %v2399 = vrot.slane %v2319, 6
  %v2400 = vsel %vm2394, %v2398, %v2399
  %2403 = vst [vmem:[#allocation2 + $0x40] sm:$0x7f] %v2397
  %2404 = vst.msk [vmem:[#allocation2 + $0x48] sm:$0x7f] %vm2375, %v2400
  %vm2407 = vcmask 1042432
  %v2408 = vrot.slane %v2318, 5
  %v2409 = vrot.slane %v2320, 5
  %v2410 = vsel %vm2407, %v2408, %v2409
  %v2411 = vrot.slane %v2319, 5
  %v2412 = vrot.slane %v2321, 5
  %v2413 = vsel %vm2407, %v2411, %v2412
  %2416 = vst [vmem:[#allocation2 + $0x50] sm:$0x7f] %v2410
  %2417 = vst.msk [vmem:[#allocation2 + $0x58] sm:$0x7f] %vm2375, %v2413
  %vm2420 = vcmask 1043456
  %v2421 = vrot.slane %v2320, 4
  %v2422 = vrot.slane %v2322, 4
  %v2423 = vsel %vm2420, %v2421, %v2422
  %v2424 = vrot.slane %v2321, 4
  %v2425 = vrot.slane %v2323, 4
  %v2426 = vsel %vm2420, %v2424, %v2425
  %2429 = vst [vmem:[#allocation2 + $0x60] sm:$0x7f] %v2423
  %2430 = vst.msk [vmem:[#allocation2 + $0x68] sm:$0x7f] %vm2375, %v2426
  %vm2433 = vcmask 1044480
  %v2434 = vrot.slane %v2322, 3
  %v2435 = vrot.slane %v2324, 3
  %v2436 = vsel %vm2433, %v2434, %v2435
  %v2437 = vrot.slane %v2323, 3
  %v2438 = vrot.slane %v2325, 3
  %v2439 = vsel %vm2433, %v2437, %v2438
  %2442 = vst [vmem:[#allocation2 + $0x70] sm:$0x7f] %v2436
  %2443 = vst.msk [vmem:[#allocation2 + $0x78] sm:$0x7f] %vm2375, %v2439
  %vm2446 = vcmask 1045504
  %v2447 = vrot.slane %v2324, 2
  %v2448 = vrot.slane %v2326, 2
  %v2449 = vsel %vm2446, %v2447, %v2448
  %v2450 = vrot.slane %v2325, 2
  %v2451 = vrot.slane %v2327, 2
  %v2452 = vsel %vm2446, %v2450, %v2451
  %2455 = vst [vmem:[#allocation2 + $0x80] sm:$0x7f] %v2449
  %2456 = vst.msk [vmem:[#allocation2 + $0x88] sm:$0x7f] %vm2375, %v2452
  %v2457 = vrot.slane %v2326, 1
  %v2458 = vrot.slane %v2327, 1
  %2461 = vst [vmem:[#allocation2 + $0x90] sm:$0x7f] %v2457
  %2462 = vst.msk [vmem:[#allocation2 + $0x98] sm:$0x7f] %vm2375, %v2458
  %2463 = vst [vmem:[#allocation2 + $0xa0] sm:$0x7f] %v2328
  %2464 = vst.msk [vmem:[#allocation2 + $0xa8] sm:$0x7f] %vm2375, %v2329
  %v2469 = vrot.slane %v2328, 7
  %v2470 = vrot.slane %v2330, 7
  %v2471 = vsel %vm2381, %v2469, %v2470
  %v2472 = vrot.slane %v2329, 7
  %v2473 = vrot.slane %v2331, 7
  %v2474 = vsel %vm2381, %v2472, %v2473
  %2477 = vst [vmem:[#allocation2 + $0xb0] sm:$0x7f] %v2471
  %2478 = vst.msk [vmem:[#allocation2 + $0xb8] sm:$0x7f] %vm2375, %v2474
  %v2481 = vrot.slane %v2330, 6
  %v2482 = vrot.slane %v2332, 6
  %v2483 = vsel %vm2394, %v2481, %v2482
  %v2484 = vrot.slane %v2331, 6
  %v2485 = vrot.slane %v2333, 6
  %v2486 = vsel %vm2394, %v2484, %v2485
  %2489 = vst [vmem:[#allocation2 + $0xc0] sm:$0x7f] %v2483
  %2490 = vst.msk [vmem:[#allocation2 + $0xc8] sm:$0x7f] %vm2375, %v2486
  %v2493 = vrot.slane %v2332, 5
  %v2494 = vrot.slane %v2334, 5
  %v2495 = vsel %vm2407, %v2493, %v2494
  %v2496 = vrot.slane %v2333, 5
  %v2497 = vrot.slane %v2335, 5
  %v2498 = vsel %vm2407, %v2496, %v2497
  %2501 = vst [vmem:[#allocation2 + $0xd0] sm:$0x7f] %v2495
  %2502 = vst.msk [vmem:[#allocation2 + $0xd8] sm:$0x7f] %vm2375, %v2498
  %v2505 = vrot.slane %v2334, 4
  %v2506 = vrot.slane %v2336, 4
  %v2507 = vsel %vm2420, %v2505, %v2506
  %v2508 = vrot.slane %v2335, 4
  %v2509 = vrot.slane %v2337, 4
  %v2510 = vsel %vm2420, %v2508, %v2509
  %2513 = vst [vmem:[#allocation2 + $0xe0] sm:$0x7f] %v2507
  %2514 = vst.msk [vmem:[#allocation2 + $0xe8] sm:$0x7f] %vm2375, %v2510
  %v2517 = vrot.slane %v2336, 3
  %v2518 = vrot.slane %v2338, 3
  %v2519 = vsel %vm2433, %v2517, %v2518
  %v2520 = vrot.slane %v2337, 3
  %v2521 = vrot.slane %v2339, 3
  %v2522 = vsel %vm2433, %v2520, %v2521
  %2525 = vst [vmem:[#allocation2 + $0xf0] sm:$0x7f] %v2519
  %2526 = vst.msk [vmem:[#allocation2 + $0xf8] sm:$0x7f] %vm2375, %v2522
  %v2527 = vld [vmem:[#allocation2] sm:$0x80]
  %v2528 = vld [vmem:[#allocation2 + $0x8] sm:$0x80]
  %v2529 = vld [vmem:[#allocation2 + $0x10] sm:$0xff]
  %v2530 = vld [vmem:[#allocation2 + $0x18] sm:$0xff]
  %v2531 = vld [vmem:[#allocation2 + $0x20] sm:$0xff]
  %v2532 = vld [vmem:[#allocation2 + $0x28] sm:$0xff]
  %v2533 = vld [vmem:[#allocation2 + $0x30] sm:$0xff]
  %v2534 = vld [vmem:[#allocation2 + $0x38] sm:$0xff]
  %v2535 = vld [vmem:[#allocation2 + $0x40] sm:$0xff]
  %v2536 = vld [vmem:[#allocation2 + $0x48] sm:$0xff]
  %v2537 = vld [vmem:[#allocation2 + $0x50] sm:$0xff]
  %v2538 = vld [vmem:[#allocation2 + $0x58] sm:$0xff]
  %v2539 = vld [vmem:[#allocation2 + $0x60] sm:$0xff]
  %v2540 = vld [vmem:[#allocation2 + $0x68] sm:$0xff]
  %v2541 = vld [vmem:[#allocation2 + $0x70] sm:$0xff]
  %v2542 = vld [vmem:[#allocation2 + $0x78] sm:$0xff]
  %v2543 = vld [vmem:[#allocation2 + $0x80] sm:$0xff]
  %v2544 = vld [vmem:[#allocation2 + $0x88] sm:$0xff]
  %v2545 = vld [vmem:[#allocation2 + $0x90] sm:$0xff]
  %v2546 = vld [vmem:[#allocation2 + $0x98] sm:$0xff]
  %v2547 = vld [vmem:[#allocation2 + $0xa0] sm:$0xff]
  %v2548 = vld [vmem:[#allocation2 + $0xa8] sm:$0xff]
  %v2549 = vld [vmem:[#allocation2 + $0xb0] sm:$0xff]
  %v2550 = vld [vmem:[#allocation2 + $0xb8] sm:$0xff]
  %v2551 = vld [vmem:[#allocation2 + $0xc0] sm:$0xff]
  %v2552 = vld [vmem:[#allocation2 + $0xc8] sm:$0xff]
  %v2553 = vld [vmem:[#allocation2 + $0xd0] sm:$0xff]
  %v2554 = vld [vmem:[#allocation2 + $0xd8] sm:$0xff]
  %v2555 = vld [vmem:[#allocation2 + $0xe0] sm:$0x7f]
  %v2556 = vld [vmem:[#allocation2 + $0xe8] sm:$0x7f]
  %v2557 = vld [vmem:[%s4] sm:$0xf]
  %v2558 = vld [vmem:[%s4 + $0x4] sm:$0xf]
  %v2559 = vld [vmem:[%s4 + $0x8] sm:$0xf]
  %v2560 = vld [vmem:[%s4 + $0xc] sm:$0xf]
  %v2561 = vld [vmem:[%s4 + $0x10] sm:$0xf]
  %v2562 = vld [vmem:[%s4 + $0x14] sm:$0xf]
  %v2563 = vld [vmem:[%s4 + $0x18] sm:$0xf]
  %v2564 = vld [vmem:[%s4 + $0x1c] sm:$0xf]
  %v2565 = vld [vmem:[%s4 + $0x20] sm:$0xf]
  %v2566 = vld [vmem:[%s4 + $0x24] sm:$0xf]
  %v2567 = vld [vmem:[%s4 + $0x28] sm:$0xf]
  %v2568 = vld [vmem:[%s4 + $0x2c] sm:$0xf]
  %v2569 = vld [vmem:[%s4 + $0x30] sm:$0xf]
  %v2570 = vld [vmem:[%s4 + $0x34] sm:$0xf]
  %v2571 = vld [vmem:[%s4 + $0x38] sm:$0xf]
  %v2572 = vld [vmem:[%s4 + $0x3c] sm:$0xf]
  %v2573 = vld [vmem:[%s4 + $0x40] sm:$0xf]
  %v2574 = vld [vmem:[%s4 + $0x44] sm:$0xf]
  %v2575 = vld [vmem:[%s4 + $0x48] sm:$0xf]
  %v2576 = vld [vmem:[%s4 + $0x4c] sm:$0xf]
  %v2577 = vld [vmem:[%s4 + $0x50] sm:$0xf]
  %v2578 = vld [vmem:[%s4 + $0x54] sm:$0xf]
  %v2579 = vld [vmem:[%s4 + $0x58] sm:$0xf]
  %v2580 = vld [vmem:[%s4 + $0x5c] sm:$0xf]
  %v2611 = vrot.slane %v2527, 7
  %v2612 = vrot.slane %v2529, 7
  %v2613 = vsel %vm2381, %v2611, %v2612
  %v2614 = vrot.slane %v2528, 7
  %v2615 = vrot.slane %v2530, 7
  %v2616 = vsel %vm2381, %v2614, %v2615
  %v2617 = vrot.slane %v2531, 7
  %v2618 = vsel %vm2381, %v2612, %v2617
  %v2619 = vrot.slane %v2532, 7
  %v2620 = vsel %vm2381, %v2615, %v2619
  %v2621 = vrot.slane %v2533, 7
  %v2622 = vsel %vm2381, %v2617, %v2621
  %v2623 = vrot.slane %v2534, 7
  %v2624 = vsel %vm2381, %v2619, %v2623
  %v2625 = vrot.slane %v2535, 7
  %v2626 = vsel %vm2381, %v2621, %v2625
  %v2627 = vrot.slane %v2536, 7
  %v2628 = vsel %vm2381, %v2623, %v2627
  %v2629 = vrot.slane %v2537, 7
  %v2630 = vsel %vm2381, %v2625, %v2629
  %v2631 = vrot.slane %v2538, 7
  %v2632 = vsel %vm2381, %v2627, %v2631
  %v2633 = vrot.slane %v2539, 7
  %v2634 = vsel %vm2381, %v2629, %v2633
  %v2635 = vrot.slane %v2540, 7
  %v2636 = vsel %vm2381, %v2631, %v2635
  %v2637 = vrot.slane %v2541, 7
  %v2638 = vsel %vm2381, %v2633, %v2637
  %v2639 = vrot.slane %v2542, 7
  %v2640 = vsel %vm2381, %v2635, %v2639
  %v2641 = vrot.slane %v2543, 7
  %v2642 = vsel %vm2381, %v2637, %v2641
  %v2643 = vrot.slane %v2544, 7
  %v2644 = vsel %vm2381, %v2639, %v2643
  %v2645 = vrot.slane %v2545, 7
  %v2646 = vsel %vm2381, %v2641, %v2645
  %v2647 = vrot.slane %v2546, 7
  %v2648 = vsel %vm2381, %v2643, %v2647
  %v2649 = vrot.slane %v2547, 7
  %v2650 = vsel %vm2381, %v2645, %v2649
  %v2651 = vrot.slane %v2548, 7
  %v2652 = vsel %vm2381, %v2647, %v2651
  %v2653 = vrot.slane %v2549, 7
  %v2654 = vsel %vm2381, %v2649, %v2653
  %v2655 = vrot.slane %v2550, 7
  %v2656 = vsel %vm2381, %v2651, %v2655
  %v2657 = vrot.slane %v2551, 7
  %v2658 = vsel %vm2381, %v2653, %v2657
  %v2659 = vrot.slane %v2552, 7
  %v2660 = vsel %vm2381, %v2655, %v2659
  %v2661 = vrot.slane %v2553, 7
  %v2662 = vsel %vm2381, %v2657, %v2661
  %v2663 = vrot.slane %v2554, 7
  %v2664 = vsel %vm2381, %v2659, %v2663
  %v2665 = vrot.slane %v2555, 7
  %v2666 = vsel %vm2381, %v2661, %v2665
  %v2667 = vrot.slane %v2556, 7
  %v2668 = vsel %vm2381, %v2663, %v2667
  %v2707 = vunpack.c.l.b16 %v2557
  %v2708 = vunpack.c.l.b16 %v2558
  %v2709 = vunpack.c.l.b16 %v2559
  %v2710 = vunpack.c.l.b16 %v2560
  %v2711 = vunpack.c.l.b16 %v2561
  %v2712 = vunpack.c.l.b16 %v2562
  %v2713 = vunpack.c.l.b16 %v2563
  %v2714 = vunpack.c.l.b16 %v2564
  %v2715 = vunpack.c.l.b16 %v2565
  %v2716 = vunpack.c.l.b16 %v2566
  %v2717 = vunpack.c.l.b16 %v2567
  %v2718 = vunpack.c.l.b16 %v2568
  %v2719 = vunpack.c.l.b16 %v2569
  %v2720 = vunpack.c.l.b16 %v2570
  %v2721 = vunpack.c.l.b16 %v2571
  %v2722 = vunpack.c.l.b16 %v2572
  %v2723 = vunpack.c.l.b16 %v2573
  %v2724 = vunpack.c.l.b16 %v2574
  %v2725 = vunpack.c.l.b16 %v2575
  %v2726 = vunpack.c.l.b16 %v2576
  %v2727 = vunpack.c.l.b16 %v2577
  %v2728 = vunpack.c.l.b16 %v2578
  %v2729 = vunpack.c.l.b16 %v2579
  %v2730 = vunpack.c.l.b16 %v2580
  %v2731 = vpack.c.b16 %v2708, %v2707
  %v2732 = vpack.c.b16 %v2710, %v2709
  %v2733 = vpack.c.b16 %v2712, %v2711
  %v2734 = vpack.c.b16 %v2714, %v2713
  %v2735 = vpack.c.b16 %v2716, %v2715
  %v2736 = vpack.c.b16 %v2718, %v2717
  %v2737 = vpack.c.b16 %v2720, %v2719
  %v2738 = vpack.c.b16 %v2722, %v2721
  %v2739 = vpack.c.b16 %v2724, %v2723
  %v2740 = vpack.c.b16 %v2726, %v2725
  %v2741 = vpack.c.b16 %v2728, %v2727
  %v2742 = vpack.c.b16 %v2730, %v2729
  %v2756 = vsel %vm1879, %v2616, 0
  %v2759 = vsel %vm1879, %v2620, 0
  %v2762 = vsel %vm1879, %v2624, 0
  %v2765 = vsel %vm1879, %v2628, 0
  %v2768 = vsel %vm1879, %v2632, 0
  %v2771 = vsel %vm1879, %v2636, 0
  %v2774 = vsel %vm1879, %v2640, 0
  %v2777 = vsel %vm1879, %v2644, 0
  %v2780 = vsel %vm1879, %v2648, 0
  %v2783 = vsel %vm1879, %v2652, 0
  %v2786 = vsel %vm1879, %v2656, 0
  %v2789 = vsel %vm1879, %v2660, 0
  %v2792 = vsel %vm1879, %v2664, 0
  %v2795 = vsel %vm1879, %v2668, 0
  %2797 = vmatprep.subr.bf16.mxu0 0
  %2798 = vmatpush1.bf16.msra.mxu0 %v2731
  %2799 = vmatprep.subr.bf16.mxu0 0
  %2800 = vmatpush1.bf16.msra.mxu0 %v2732
  %2801 = vmatprep.subr.bf16.mxu0 0
  %2802 = vmatpush1.bf16.msra.mxu0 %v2733
  %2803 = vmatprep.subr.bf16.mxu0 0
  %2804 = vmatpush1.bf16.msra.mxu0 %v2734
  %2805 = vmatprep.subr.bf16.mxu0 0
  %2806 = vmatpush1.bf16.msra.mxu0 %v2735
  %2807 = vmatprep.subr.bf16.mxu0 0
  %2808 = vmatpush1.bf16.msra.mxu0 %v2736
  %2809 = vmatprep.subr.bf16.mxu0 0
  %2810 = vmatpush1.bf16.msra.mxu0 %v2737
  %2811 = vmatprep.subr.bf16.mxu0 0
  %2812 = vmatpush1.bf16.msra.mxu0 %v2738
  %2813 = vmatprep.subr.bf16.mxu0 0
  %2814 = vmatpush1.bf16.msra.mxu0 %v2739
  %2815 = vmatprep.subr.bf16.mxu0 0
  %2816 = vmatpush1.bf16.msra.mxu0 %v2740
  %2817 = vmatprep.subr.bf16.mxu0 0
  %2818 = vmatpush1.bf16.msra.mxu0 %v2741
  %2819 = vmatprep.subr.bf16.mxu0 0
  %2820 = vmatpush1.bf16.msra.mxu0 %v2742
  %2821 = vmatprep.subr.bf16.mxu0 0
  %2822 = vmatpush1.bf16.msra.mxu0 0
  %2823 = vmatprep.subr.bf16.mxu0 0
  %2824 = vmatpush1.bf16.msra.mxu0 0
  %2825 = vmatprep.subr.bf16.mxu0 0
  %2826 = vmatpush1.bf16.msra.mxu0 0
  %2827 = vmatprep.subr.bf16.mxu0 0
  %2828 = vmatpush1.bf16.msra.mxu0 0
  %2829 = vmatprep.mubr.bf16.mxu0 %v2756
  %2830 = vmatmul.mubr.bf16.gmra.mrb[0].mxu0 %v2613
  %v2831 = vpop.f32.mrb[0].mxu0
  %v2832 = vadd.f32 0.0, %v2831
  %v2833 = vpop.f32.mrb[0].mxu0
  %v2834 = vpop.f32.mrb[0].mxu0
  %v2835 = vadd.f32 0.0, %v2834
  %v2836 = vpop.f32.mrb[0].mxu0
  %2837 = vmatprep.mubr.bf16.mxu0 %v2759
  %2838 = vmatmul.mubr.bf16.gmra.mrb[0].mxu0 %v2618
  %v2839 = vpop.f32.mrb[0].mxu0
  %v2840 = vadd.f32 0.0, %v2839
  %v2841 = vpop.f32.mrb[0].mxu0
  %v2842 = vpop.f32.mrb[0].mxu0
  %v2843 = vadd.f32 0.0, %v2842
  %v2844 = vpop.f32.mrb[0].mxu0
  %2845 = vmatprep.mubr.bf16.mxu0 %v2762
  %2846 = vmatmul.mubr.bf16.gmra.mrb[0].mxu0 %v2622
  %v2847 = vpop.f32.mrb[0].mxu0
  %v2848 = vadd.f32 0.0, %v2847
  %v2849 = vpop.f32.mrb[0].mxu0
  %v2850 = vpop.f32.mrb[0].mxu0
  %v2851 = vadd.f32 0.0, %v2850
  %v2852 = vpop.f32.mrb[0].mxu0
  %2853 = vmatprep.mubr.bf16.mxu0 %v2765
  %2854 = vmatmul.mubr.bf16.gmra.mrb[0].mxu0 %v2626
  %v2855 = vpop.f32.mrb[0].mxu0
  %v2856 = vadd.f32 0.0, %v2855
  %v2857 = vpop.f32.mrb[0].mxu0
  %v2858 = vpop.f32.mrb[0].mxu0
  %v2859 = vadd.f32 0.0, %v2858
  %v2860 = vpop.f32.mrb[0].mxu0
  %2861 = vmatprep.mubr.bf16.mxu0 %v2768
  %2862 = vmatmul.mubr.bf16.gmra.mrb[0].mxu0 %v2630
  %v2863 = vpop.f32.mrb[0].mxu0
  %v2864 = vadd.f32 0.0, %v2863
  %v2865 = vpop.f32.mrb[0].mxu0
  %v2866 = vpop.f32.mrb[0].mxu0
  %v2867 = vadd.f32 0.0, %v2866
  %v2868 = vpop.f32.mrb[0].mxu0
  %2869 = vmatprep.mubr.bf16.mxu0 %v2771
  %2870 = vmatmul.mubr.bf16.gmra.mrb[0].mxu0 %v2634
  %v2871 = vpop.f32.mrb[0].mxu0
  %v2872 = vadd.f32 0.0, %v2871
  %v2873 = vpop.f32.mrb[0].mxu0
  %v2874 = vpop.f32.mrb[0].mxu0
  %v2875 = vadd.f32 0.0, %v2874
  %v2876 = vpop.f32.mrb[0].mxu0
  %2877 = vmatprep.mubr.bf16.mxu0 %v2774
  %2878 = vmatmul.mubr.bf16.gmra.mrb[0].mxu0 %v2638
  %v2879 = vpop.f32.mrb[0].mxu0
  %v2880 = vadd.f32 0.0, %v2879
  %v2881 = vpop.f32.mrb[0].mxu0
  %v2882 = vpop.f32.mrb[0].mxu0
  %v2883 = vadd.f32 0.0, %v2882
  %v2884 = vpop.f32.mrb[0].mxu0
  %2885 = vmatprep.mubr.bf16.mxu0 %v2777
  %2886 = vmatmul.mubr.bf16.gmra.mrb[0].mxu0 %v2642
  %v2887 = vpop.f32.mrb[0].mxu0
  %v2888 = vadd.f32 0.0, %v2887
  %v2889 = vpop.f32.mrb[0].mxu0
  %v2890 = vpop.f32.mrb[0].mxu0
  %v2891 = vadd.f32 0.0, %v2890
  %v2892 = vpop.f32.mrb[0].mxu0
  %2893 = vmatprep.mubr.bf16.mxu0 %v2780
  %2894 = vmatmul.mubr.bf16.gmra.mrb[0].mxu0 %v2646
  %v2895 = vpop.f32.mrb[0].mxu0
  %v2896 = vadd.f32 0.0, %v2895
  %v2897 = vpop.f32.mrb[0].mxu0
  %v2898 = vpop.f32.mrb[0].mxu0
  %v2899 = vadd.f32 0.0, %v2898
  %v2900 = vpop.f32.mrb[0].mxu0
  %2901 = vmatprep.mubr.bf16.mxu0 %v2783
  %2902 = vmatmul.mubr.bf16.gmra.mrb[0].mxu0 %v2650
  %v2903 = vpop.f32.mrb[0].mxu0
  %v2904 = vadd.f32 0.0, %v2903
  %v2905 = vpop.f32.mrb[0].mxu0
  %v2906 = vpop.f32.mrb[0].mxu0
  %v2907 = vadd.f32 0.0, %v2906
  %v2908 = vpop.f32.mrb[0].mxu0
  %2909 = vmatprep.mubr.bf16.mxu0 %v2786
  %2910 = vmatmul.mubr.bf16.gmra.mrb[0].mxu0 %v2654
  %v2911 = vpop.f32.mrb[0].mxu0
  %v2912 = vadd.f32 0.0, %v2911
  %v2913 = vpop.f32.mrb[0].mxu0
  %v2914 = vpop.f32.mrb[0].mxu0
  %v2915 = vadd.f32 0.0, %v2914
  %v2916 = vpop.f32.mrb[0].mxu0
  %2917 = vmatprep.mubr.bf16.mxu0 %v2789
  %2918 = vmatmul.mubr.bf16.gmra.mrb[0].mxu0 %v2658
  %v2919 = vpop.f32.mrb[0].mxu0
  %v2920 = vadd.f32 0.0, %v2919
  %v2921 = vpop.f32.mrb[0].mxu0
  %v2922 = vpop.f32.mrb[0].mxu0
  %v2923 = vadd.f32 0.0, %v2922
  %v2924 = vpop.f32.mrb[0].mxu0
  %2925 = vmatprep.mubr.bf16.mxu0 %v2792
  %2926 = vmatmul.mubr.bf16.gmra.mrb[0].mxu0 %v2662
  %v2927 = vpop.f32.mrb[0].mxu0
  %v2928 = vadd.f32 0.0, %v2927
  %v2929 = vpop.f32.mrb[0].mxu0
  %v2930 = vpop.f32.mrb[0].mxu0
  %v2931 = vadd.f32 0.0, %v2930
  %v2932 = vpop.f32.mrb[0].mxu0
  %2933 = vmatprep.mubr.bf16.mxu0 %v2795
  %2934 = vmatmul.mubr.bf16.gmra.mrb[0].mxu0 %v2666
  %v2935 = vpop.f32.mrb[0].mxu0
  %v2936 = vadd.f32 0.0, %v2935
  %v2937 = vpop.f32.mrb[0].mxu0
  %v2938 = vpop.f32.mrb[0].mxu0
  %v2939 = vadd.f32 0.0, %v2938
  %v2940 = vpop.f32.mrb[0].mxu0
  %2941 = vdwg.mxu0
  %2942 = vst.msk [vmem:[%s5] sm:$0xff] %vm1163, %v2832
  %2943 = vst.msk [vmem:[%s5 + $0x8] sm:$0xff] %vm1163, %v2835
  %2944 = vst.msk [vmem:[%s5 + $0x10] sm:$0xff] %vm1163, %v2840
  %2945 = vst.msk [vmem:[%s5 + $0x18] sm:$0xff] %vm1163, %v2843
  %2946 = vst.msk [vmem:[%s5 + $0x20] sm:$0xff] %vm1163, %v2848
  %2947 = vst.msk [vmem:[%s5 + $0x28] sm:$0xff] %vm1163, %v2851
  %2948 = vst.msk [vmem:[%s5 + $0x30] sm:$0xff] %vm1163, %v2856
  %2949 = vst.msk [vmem:[%s5 + $0x38] sm:$0xff] %vm1163, %v2859
  %2950 = vst.msk [vmem:[%s5 + $0x40] sm:$0xff] %vm1163, %v2864
  %2951 = vst.msk [vmem:[%s5 + $0x48] sm:$0xff] %vm1163, %v2867
  %2952 = vst.msk [vmem:[%s5 + $0x50] sm:$0xff] %vm1163, %v2872
  %2953 = vst.msk [vmem:[%s5 + $0x58] sm:$0xff] %vm1163, %v2875
  %2954 = vst.msk [vmem:[%s5 + $0x60] sm:$0xff] %vm1163, %v2880
  %2955 = vst.msk [vmem:[%s5 + $0x68] sm:$0xff] %vm1163, %v2883
  %2956 = vst.msk [vmem:[%s5 + $0x70] sm:$0xff] %vm1163, %v2888
  %2957 = vst.msk [vmem:[%s5 + $0x78] sm:$0xff] %vm1163, %v2891
  %2958 = vst.msk [vmem:[%s5 + $0x80] sm:$0xff] %vm1163, %v2896
  %2959 = vst.msk [vmem:[%s5 + $0x88] sm:$0xff] %vm1163, %v2899
  %2960 = vst.msk [vmem:[%s5 + $0x90] sm:$0xff] %vm1163, %v2904
  %2961 = vst.msk [vmem:[%s5 + $0x98] sm:$0xff] %vm1163, %v2907
  %2962 = vst.msk [vmem:[%s5 + $0xa0] sm:$0xff] %vm1163, %v2912
  %2963 = vst.msk [vmem:[%s5 + $0xa8] sm:$0xff] %vm1163, %v2915
  %2964 = vst.msk [vmem:[%s5 + $0xb0] sm:$0xff] %vm1163, %v2920
  %2965 = vst.msk [vmem:[%s5 + $0xb8] sm:$0xff] %vm1163, %v2923
  %2966 = vst.msk [vmem:[%s5 + $0xc0] sm:$0xff] %vm1163, %v2928
  %2967 = vst.msk [vmem:[%s5 + $0xc8] sm:$0xff] %vm1163, %v2931
  %2968 = vst.msk [vmem:[%s5 + $0xd0] sm:$0xff] %vm1163, %v2936
  %2969 = vst.msk [vmem:[%s5 + $0xd8] sm:$0xff] %vm1163, %v2939
  %v2970 = vld [vmem:[#allocation2] sm:$0x80]
  %v2971 = vld [vmem:[#allocation2 + $0x8] sm:$0x80]
  %v2972 = vld [vmem:[#allocation2 + $0x10] sm:$0xff]
  %v2973 = vld [vmem:[#allocation2 + $0x18] sm:$0xff]
  %v2974 = vld [vmem:[#allocation2 + $0x20] sm:$0xff]
  %v2975 = vld [vmem:[#allocation2 + $0x28] sm:$0xff]
  %v2976 = vld [vmem:[#allocation2 + $0x30] sm:$0xff]
  %v2977 = vld [vmem:[#allocation2 + $0x38] sm:$0xff]
  %v2978 = vld [vmem:[#allocation2 + $0x40] sm:$0xff]
  %v2979 = vld [vmem:[#allocation2 + $0x48] sm:$0xff]
  %v2980 = vld [vmem:[#allocation2 + $0x50] sm:$0xff]
  %v2981 = vld [vmem:[#allocation2 + $0x58] sm:$0xff]
  %v2982 = vld [vmem:[#allocation2 + $0x60] sm:$0xff]
  %v2983 = vld [vmem:[#allocation2 + $0x68] sm:$0xff]
  %v2984 = vld [vmem:[#allocation2 + $0x70] sm:$0xff]
  %v2985 = vld [vmem:[#allocation2 + $0x78] sm:$0xff]
  %v2986 = vld [vmem:[#allocation2 + $0x80] sm:$0xff]
  %v2987 = vld [vmem:[#allocation2 + $0x88] sm:$0xff]
  %v2988 = vld [vmem:[#allocation2 + $0x90] sm:$0xff]
  %v2989 = vld [vmem:[#allocation2 + $0x98] sm:$0xff]
  %v2990 = vld [vmem:[#allocation2 + $0xa0] sm:$0xff]
  %v2991 = vld [vmem:[#allocation2 + $0xa8] sm:$0xff]
  %v2992 = vld [vmem:[#allocation2 + $0xb0] sm:$0xff]
  %v2993 = vld [vmem:[#allocation2 + $0xb8] sm:$0xff]
  %v2994 = vld [vmem:[#allocation2 + $0xc0] sm:$0xff]
  %v2995 = vld [vmem:[#allocation2 + $0xc8] sm:$0xff]
  %v2996 = vld [vmem:[#allocation2 + $0xd0] sm:$0xff]
  %v2997 = vld [vmem:[#allocation2 + $0xd8] sm:$0xff]
  %v2998 = vld [vmem:[#allocation2 + $0xe0] sm:$0xff]
  %v2999 = vld [vmem:[#allocation2 + $0xe8] sm:$0xff]
  %s3000 = scalar_lea.vmem %s4, 96
  %v3001 = vld [vmem:[%s3000] sm:$0xf]
  %v3002 = vld [vmem:[%s3000 + $0x4] sm:$0xf]
  %v3003 = vld [vmem:[%s3000 + $0x8] sm:$0xf]
  %v3004 = vld [vmem:[%s3000 + $0xc] sm:$0xf]
  %v3005 = vld [vmem:[%s3000 + $0x10] sm:$0xf]
  %v3006 = vld [vmem:[%s3000 + $0x14] sm:$0xf]
  %v3007 = vld [vmem:[%s3000 + $0x18] sm:$0xf]
  %v3008 = vld [vmem:[%s3000 + $0x1c] sm:$0xf]
  %v3009 = vld [vmem:[%s3000 + $0x20] sm:$0xf]
  %v3010 = vld [vmem:[%s3000 + $0x24] sm:$0xf]
  %v3011 = vld [vmem:[%s3000 + $0x28] sm:$0xf]
  %v3012 = vld [vmem:[%s3000 + $0x2c] sm:$0xf]
  %v3013 = vld [vmem:[%s3000 + $0x30] sm:$0xf]
  %v3014 = vld [vmem:[%s3000 + $0x34] sm:$0xf]
  %v3015 = vld [vmem:[%s3000 + $0x38] sm:$0xf]
  %v3016 = vld [vmem:[%s3000 + $0x3c] sm:$0xf]
  %v3017 = vld [vmem:[%s3000 + $0x40] sm:$0xf]
  %v3018 = vld [vmem:[%s3000 + $0x44] sm:$0xf]
  %v3019 = vld [vmem:[%s3000 + $0x48] sm:$0xf]
  %v3020 = vld [vmem:[%s3000 + $0x4c] sm:$0xf]
  %v3021 = vld [vmem:[%s3000 + $0x50] sm:$0xf]
  %v3022 = vld [vmem:[%s3000 + $0x54] sm:$0xf]
  %v3023 = vld [vmem:[%s3000 + $0x58] sm:$0xf]
  %v3024 = vld [vmem:[%s3000 + $0x5c] sm:$0xf]
  %vm3025 = vsmask.f32 256
  %v3027 = vshrl.u32 %v2970, 16
  %v3029 = vrot.slane %v3027, 7
  %v3031 = vshrl.u32 %v2972, 16
  %v3033 = vrot.slane %v3031, 7
  %v3034 = vshll.u32 %v2972, 16
  %v3036 = vor.u32 %v3033, %v3034
  %v3037 = vsel %vm3025, %v3029, %v3036
  %v3039 = vshrl.u32 %v2971, 16
  %v3041 = vrot.slane %v3039, 7
  %v3043 = vshrl.u32 %v2973, 16
  %v3045 = vrot.slane %v3043, 7
  %v3046 = vshll.u32 %v2973, 16
  %v3048 = vor.u32 %v3045, %v3046
  %v3049 = vsel %vm3025, %v3041, %v3048
  %v3051 = vshrl.u32 %v2974, 16
  %v3053 = vrot.slane %v3051, 7
  %v3054 = vshll.u32 %v2974, 16
  %v3056 = vor.u32 %v3053, %v3054
  %v3057 = vsel %vm3025, %v3033, %v3056
  %v3059 = vshrl.u32 %v2975, 16
  %v3061 = vrot.slane %v3059, 7
  %v3062 = vshll.u32 %v2975, 16
  %v3064 = vor.u32 %v3061, %v3062
  %v3065 = vsel %vm3025, %v3045, %v3064
  %v3067 = vshrl.u32 %v2976, 16
  %v3069 = vrot.slane %v3067, 7
  %v3070 = vshll.u32 %v2976, 16
  %v3072 = vor.u32 %v3069, %v3070
  %v3073 = vsel %vm3025, %v3053, %v3072
  %v3075 = vshrl.u32 %v2977, 16
  %v3077 = vrot.slane %v3075, 7
  %v3078 = vshll.u32 %v2977, 16
  %v3080 = vor.u32 %v3077, %v3078
  %v3081 = vsel %vm3025, %v3061, %v3080
  %v3083 = vshrl.u32 %v2978, 16
  %v3085 = vrot.slane %v3083, 7
  %v3086 = vshll.u32 %v2978, 16
  %v3088 = vor.u32 %v3085, %v3086
  %v3089 = vsel %vm3025, %v3069, %v3088
  %v3091 = vshrl.u32 %v2979, 16
  %v3093 = vrot.slane %v3091, 7
  %v3094 = vshll.u32 %v2979, 16
  %v3096 = vor.u32 %v3093, %v3094
  %v3097 = vsel %vm3025, %v3077, %v3096
  %v3099 = vshrl.u32 %v2980, 16
  %v3101 = vrot.slane %v3099, 7
  %v3102 = vshll.u32 %v2980, 16
  %v3104 = vor.u32 %v3101, %v3102
  %v3105 = vsel %vm3025, %v3085, %v3104
  %v3107 = vshrl.u32 %v2981, 16
  %v3109 = vrot.slane %v3107, 7
  %v3110 = vshll.u32 %v2981, 16
  %v3112 = vor.u32 %v3109, %v3110
  %v3113 = vsel %vm3025, %v3093, %v3112
  %v3115 = vshrl.u32 %v2982, 16
  %v3117 = vrot.slane %v3115, 7
  %v3118 = vshll.u32 %v2982, 16
  %v3120 = vor.u32 %v3117, %v3118
  %v3121 = vsel %vm3025, %v3101, %v3120
  %v3123 = vshrl.u32 %v2983, 16
  %v3125 = vrot.slane %v3123, 7
  %v3126 = vshll.u32 %v2983, 16
  %v3128 = vor.u32 %v3125, %v3126
  %v3129 = vsel %vm3025, %v3109, %v3128
  %v3131 = vshrl.u32 %v2984, 16
  %v3133 = vrot.slane %v3131, 7
  %v3134 = vshll.u32 %v2984, 16
  %v3136 = vor.u32 %v3133, %v3134
  %v3137 = vsel %vm3025, %v3117, %v3136
  %v3139 = vshrl.u32 %v2985, 16
  %v3141 = vrot.slane %v3139, 7
  %v3142 = vshll.u32 %v2985, 16
  %v3144 = vor.u32 %v3141, %v3142
  %v3145 = vsel %vm3025, %v3125, %v3144
  %v3147 = vshrl.u32 %v2986, 16
  %v3149 = vrot.slane %v3147, 7
  %v3150 = vshll.u32 %v2986, 16
  %v3152 = vor.u32 %v3149, %v3150
  %v3153 = vsel %vm3025, %v3133, %v3152
  %v3155 = vshrl.u32 %v2987, 16
  %v3157 = vrot.slane %v3155, 7
  %v3158 = vshll.u32 %v2987, 16
  %v3160 = vor.u32 %v3157, %v3158
  %v3161 = vsel %vm3025, %v3141, %v3160
  %v3163 = vshrl.u32 %v2988, 16
  %v3165 = vrot.slane %v3163, 7
  %v3166 = vshll.u32 %v2988, 16
  %v3168 = vor.u32 %v3165, %v3166
  %v3169 = vsel %vm3025, %v3149, %v3168
  %v3171 = vshrl.u32 %v2989, 16
  %v3173 = vrot.slane %v3171, 7
  %v3174 = vshll.u32 %v2989, 16
  %v3176 = vor.u32 %v3173, %v3174
  %v3177 = vsel %vm3025, %v3157, %v3176
  %v3179 = vshrl.u32 %v2990, 16
  %v3181 = vrot.slane %v3179, 7
  %v3182 = vshll.u32 %v2990, 16
  %v3184 = vor.u32 %v3181, %v3182
  %v3185 = vsel %vm3025, %v3165, %v3184
  %v3187 = vshrl.u32 %v2991, 16
  %v3189 = vrot.slane %v3187, 7
  %v3190 = vshll.u32 %v2991, 16
  %v3192 = vor.u32 %v3189, %v3190
  %v3193 = vsel %vm3025, %v3173, %v3192
  %v3195 = vshrl.u32 %v2992, 16
  %v3197 = vrot.slane %v3195, 7
  %v3198 = vshll.u32 %v2992, 16
  %v3200 = vor.u32 %v3197, %v3198
  %v3201 = vsel %vm3025, %v3181, %v3200
  %v3203 = vshrl.u32 %v2993, 16
  %v3205 = vrot.slane %v3203, 7
  %v3206 = vshll.u32 %v2993, 16
  %v3208 = vor.u32 %v3205, %v3206
  %v3209 = vsel %vm3025, %v3189, %v3208
  %v3211 = vshrl.u32 %v2994, 16
  %v3213 = vrot.slane %v3211, 7
  %v3214 = vshll.u32 %v2994, 16
  %v3216 = vor.u32 %v3213, %v3214
  %v3217 = vsel %vm3025, %v3197, %v3216
  %v3219 = vshrl.u32 %v2995, 16
  %v3221 = vrot.slane %v3219, 7
  %v3222 = vshll.u32 %v2995, 16
  %v3224 = vor.u32 %v3221, %v3222
  %v3225 = vsel %vm3025, %v3205, %v3224
  %v3227 = vshrl.u32 %v2996, 16
  %v3229 = vrot.slane %v3227, 7
  %v3230 = vshll.u32 %v2996, 16
  %v3232 = vor.u32 %v3229, %v3230
  %v3233 = vsel %vm3025, %v3213, %v3232
  %v3235 = vshrl.u32 %v2997, 16
  %v3237 = vrot.slane %v3235, 7
  %v3238 = vshll.u32 %v2997, 16
  %v3240 = vor.u32 %v3237, %v3238
  %v3241 = vsel %vm3025, %v3221, %v3240
  %v3243 = vshrl.u32 %v2998, 16
  %v3245 = vrot.slane %v3243, 7
  %v3246 = vshll.u32 %v2998, 16
  %v3248 = vor.u32 %v3245, %v3246
  %v3249 = vsel %vm3025, %v3229, %v3248
  %v3251 = vshrl.u32 %v2999, 16
  %v3253 = vrot.slane %v3251, 7
  %v3254 = vshll.u32 %v2999, 16
  %v3256 = vor.u32 %v3253, %v3254
  %v3257 = vsel %vm3025, %v3237, %v3256
  %v3296 = vunpack.c.l.b16 %v3001
  %v3297 = vunpack.c.l.b16 %v3002
  %v3298 = vunpack.c.l.b16 %v3003
  %v3299 = vunpack.c.l.b16 %v3004
  %v3300 = vunpack.c.l.b16 %v3005
  %v3301 = vunpack.c.l.b16 %v3006
  %v3302 = vunpack.c.l.b16 %v3007
  %v3303 = vunpack.c.l.b16 %v3008
  %v3304 = vunpack.c.l.b16 %v3009
  %v3305 = vunpack.c.l.b16 %v3010
  %v3306 = vunpack.c.l.b16 %v3011
  %v3307 = vunpack.c.l.b16 %v3012
  %v3308 = vunpack.c.l.b16 %v3013
  %v3309 = vunpack.c.l.b16 %v3014
  %v3310 = vunpack.c.l.b16 %v3015
  %v3311 = vunpack.c.l.b16 %v3016
  %v3312 = vunpack.c.l.b16 %v3017
  %v3313 = vunpack.c.l.b16 %v3018
  %v3314 = vunpack.c.l.b16 %v3019
  %v3315 = vunpack.c.l.b16 %v3020
  %v3316 = vunpack.c.l.b16 %v3021
  %v3317 = vunpack.c.l.b16 %v3022
  %v3318 = vunpack.c.l.b16 %v3023
  %v3319 = vunpack.c.l.b16 %v3024
  %v3320 = vpack.c.b16 %v3297, %v3296
  %v3321 = vpack.c.b16 %v3299, %v3298
  %v3322 = vpack.c.b16 %v3301, %v3300
  %v3323 = vpack.c.b16 %v3303, %v3302
  %v3324 = vpack.c.b16 %v3305, %v3304
  %v3325 = vpack.c.b16 %v3307, %v3306
  %v3326 = vpack.c.b16 %v3309, %v3308
  %v3327 = vpack.c.b16 %v3311, %v3310
  %v3328 = vpack.c.b16 %v3313, %v3312
  %v3329 = vpack.c.b16 %v3315, %v3314
  %v3330 = vpack.c.b16 %v3317, %v3316
  %v3331 = vpack.c.b16 %v3319, %v3318
  %v3345 = vsel %vm1879, %v3049, 0
  %v3348 = vsel %vm1879, %v3065, 0
  %v3351 = vsel %vm1879, %v3081, 0
  %v3354 = vsel %vm1879, %v3097, 0
  %v3357 = vsel %vm1879, %v3113, 0
  %v3360 = vsel %vm1879, %v3129, 0
  %v3363 = vsel %vm1879, %v3145, 0
  %v3366 = vsel %vm1879, %v3161, 0
  %v3369 = vsel %vm1879, %v3177, 0
  %v3372 = vsel %vm1879, %v3193, 0
  %v3375 = vsel %vm1879, %v3209, 0
  %v3378 = vsel %vm1879, %v3225, 0
  %v3381 = vsel %vm1879, %v3241, 0
  %v3384 = vsel %vm1879, %v3257, 0
  %3386 = vmatprep.subr.bf16.mxu0 0
  %3387 = vmatpush1.bf16.msra.mxu0 %v3320
  %3388 = vmatprep.subr.bf16.mxu0 0
  %3389 = vmatpush1.bf16.msra.mxu0 %v3321
  %3390 = vmatprep.subr.bf16.mxu0 0
  %3391 = vmatpush1.bf16.msra.mxu0 %v3322
  %3392 = vmatprep.subr.bf16.mxu0 0
  %3393 = vmatpush1.bf16.msra.mxu0 %v3323
  %3394 = vmatprep.subr.bf16.mxu0 0
  %3395 = vmatpush1.bf16.msra.mxu0 %v3324
  %3396 = vmatprep.subr.bf16.mxu0 0
  %3397 = vmatpush1.bf16.msra.mxu0 %v3325
  %3398 = vmatprep.subr.bf16.mxu0 0
  %3399 = vmatpush1.bf16.msra.mxu0 %v3326
  %3400 = vmatprep.subr.bf16.mxu0 0
  %3401 = vmatpush1.bf16.msra.mxu0 %v3327
  %3402 = vmatprep.subr.bf16.mxu0 0
  %3403 = vmatpush1.bf16.msra.mxu0 %v3328
  %3404 = vmatprep.subr.bf16.mxu0 0
  %3405 = vmatpush1.bf16.msra.mxu0 %v3329
  %3406 = vmatprep.subr.bf16.mxu0 0
  %3407 = vmatpush1.bf16.msra.mxu0 %v3330
  %3408 = vmatprep.subr.bf16.mxu0 0
  %3409 = vmatpush1.bf16.msra.mxu0 %v3331
  %3410 = vmatprep.subr.bf16.mxu0 0
  %3411 = vmatpush1.bf16.msra.mxu0 0
  %3412 = vmatprep.subr.bf16.mxu0 0
  %3413 = vmatpush1.bf16.msra.mxu0 0
  %3414 = vmatprep.subr.bf16.mxu0 0
  %3415 = vmatpush1.bf16.msra.mxu0 0
  %3416 = vmatprep.subr.bf16.mxu0 0
  %3417 = vmatpush1.bf16.msra.mxu0 0
  %3418 = vmatprep.mubr.bf16.mxu0 %v3345
  %3419 = vmatmul.mubr.bf16.gmra.mrb[0].mxu0 %v3037
  %v3420 = vpop.f32.mrb[0].mxu0
  %v3421 = vadd.f32 0.0, %v3420
  %v3422 = vpop.f32.mrb[0].mxu0
  %v3423 = vpop.f32.mrb[0].mxu0
  %v3424 = vadd.f32 0.0, %v3423
  %v3425 = vpop.f32.mrb[0].mxu0
  %3426 = vmatprep.mubr.bf16.mxu0 %v3348
  %3427 = vmatmul.mubr.bf16.gmra.mrb[0].mxu0 %v3057
  %v3428 = vpop.f32.mrb[0].mxu0
  %v3429 = vadd.f32 0.0, %v3428
  %v3430 = vpop.f32.mrb[0].mxu0
  %v3431 = vpop.f32.mrb[0].mxu0
  %v3432 = vadd.f32 0.0, %v3431
  %v3433 = vpop.f32.mrb[0].mxu0
  %3434 = vmatprep.mubr.bf16.mxu0 %v3351
  %3435 = vmatmul.mubr.bf16.gmra.mrb[0].mxu0 %v3073
  %v3436 = vpop.f32.mrb[0].mxu0
  %v3437 = vadd.f32 0.0, %v3436
  %v3438 = vpop.f32.mrb[0].mxu0
  %v3439 = vpop.f32.mrb[0].mxu0
  %v3440 = vadd.f32 0.0, %v3439
  %v3441 = vpop.f32.mrb[0].mxu0
  %3442 = vmatprep.mubr.bf16.mxu0 %v3354
  %3443 = vmatmul.mubr.bf16.gmra.mrb[0].mxu0 %v3089
  %v3444 = vpop.f32.mrb[0].mxu0
  %v3445 = vadd.f32 0.0, %v3444
  %v3446 = vpop.f32.mrb[0].mxu0
  %v3447 = vpop.f32.mrb[0].mxu0
  %v3448 = vadd.f32 0.0, %v3447
  %v3449 = vpop.f32.mrb[0].mxu0
  %3450 = vmatprep.mubr.bf16.mxu0 %v3357
  %3451 = vmatmul.mubr.bf16.gmra.mrb[0].mxu0 %v3105
  %v3452 = vpop.f32.mrb[0].mxu0
  %v3453 = vadd.f32 0.0, %v3452
  %v3454 = vpop.f32.mrb[0].mxu0
  %v3455 = vpop.f32.mrb[0].mxu0
  %v3456 = vadd.f32 0.0, %v3455
  %v3457 = vpop.f32.mrb[0].mxu0
  %3458 = vmatprep.mubr.bf16.mxu0 %v3360
  %3459 = vmatmul.mubr.bf16.gmra.mrb[0].mxu0 %v3121
  %v3460 = vpop.f32.mrb[0].mxu0
  %v3461 = vadd.f32 0.0, %v3460
  %v3462 = vpop.f32.mrb[0].mxu0
  %v3463 = vpop.f32.mrb[0].mxu0
  %v3464 = vadd.f32 0.0, %v3463
  %v3465 = vpop.f32.mrb[0].mxu0
  %3466 = vmatprep.mubr.bf16.mxu0 %v3363
  %3467 = vmatmul.mubr.bf16.gmra.mrb[0].mxu0 %v3137
  %v3468 = vpop.f32.mrb[0].mxu0
  %v3469 = vadd.f32 0.0, %v3468
  %v3470 = vpop.f32.mrb[0].mxu0
  %v3471 = vpop.f32.mrb[0].mxu0
  %v3472 = vadd.f32 0.0, %v3471
  %v3473 = vpop.f32.mrb[0].mxu0
  %3474 = vmatprep.mubr.bf16.mxu0 %v3366
  %3475 = vmatmul.mubr.bf16.gmra.mrb[0].mxu0 %v3153
  %v3476 = vpop.f32.mrb[0].mxu0
  %v3477 = vadd.f32 0.0, %v3476
  %v3478 = vpop.f32.mrb[0].mxu0
  %v3479 = vpop.f32.mrb[0].mxu0
  %v3480 = vadd.f32 0.0, %v3479
  %v3481 = vpop.f32.mrb[0].mxu0
  %3482 = vmatprep.mubr.bf16.mxu0 %v3369
  %3483 = vmatmul.mubr.bf16.gmra.mrb[0].mxu0 %v3169
  %v3484 = vpop.f32.mrb[0].mxu0
  %v3485 = vadd.f32 0.0, %v3484
  %v3486 = vpop.f32.mrb[0].mxu0
  %v3487 = vpop.f32.mrb[0].mxu0
  %v3488 = vadd.f32 0.0, %v3487
  %v3489 = vpop.f32.mrb[0].mxu0
  %3490 = vmatprep.mubr.bf16.mxu0 %v3372
  %3491 = vmatmul.mubr.bf16.gmra.mrb[0].mxu0 %v3185
  %v3492 = vpop.f32.mrb[0].mxu0
  %v3493 = vadd.f32 0.0, %v3492
  %v3494 = vpop.f32.mrb[0].mxu0
  %v3495 = vpop.f32.mrb[0].mxu0
  %v3496 = vadd.f32 0.0, %v3495
  %v3497 = vpop.f32.mrb[0].mxu0
  %3498 = vmatprep.mubr.bf16.mxu0 %v3375
  %3499 = vmatmul.mubr.bf16.gmra.mrb[0].mxu0 %v3201
  %v3500 = vpop.f32.mrb[0].mxu0
  %v3501 = vadd.f32 0.0, %v3500
  %v3502 = vpop.f32.mrb[0].mxu0
  %v3503 = vpop.f32.mrb[0].mxu0
  %v3504 = vadd.f32 0.0, %v3503
  %v3505 = vpop.f32.mrb[0].mxu0
  %3506 = vmatprep.mubr.bf16.mxu0 %v3378
  %3507 = vmatmul.mubr.bf16.gmra.mrb[0].mxu0 %v3217
  %v3508 = vpop.f32.mrb[0].mxu0
  %v3509 = vadd.f32 0.0, %v3508
  %v3510 = vpop.f32.mrb[0].mxu0
  %v3511 = vpop.f32.mrb[0].mxu0
  %v3512 = vadd.f32 0.0, %v3511
  %v3513 = vpop.f32.mrb[0].mxu0
  %3514 = vmatprep.mubr.bf16.mxu0 %v3381
  %3515 = vmatmul.mubr.bf16.gmra.mrb[0].mxu0 %v3233
  %v3516 = vpop.f32.mrb[0].mxu0
  %v3517 = vadd.f32 0.0, %v3516
  %v3518 = vpop.f32.mrb[0].mxu0
  %v3519 = vpop.f32.mrb[0].mxu0
  %v3520 = vadd.f32 0.0, %v3519
  %v3521 = vpop.f32.mrb[0].mxu0
  %3522 = vmatprep.mubr.bf16.mxu0 %v3384
  %3523 = vmatmul.mubr.bf16.gmra.mrb[0].mxu0 %v3249
  %v3524 = vpop.f32.mrb[0].mxu0
  %v3525 = vadd.f32 0.0, %v3524
  %v3526 = vpop.f32.mrb[0].mxu0
  %v3527 = vpop.f32.mrb[0].mxu0
  %v3528 = vadd.f32 0.0, %v3527
  %v3529 = vpop.f32.mrb[0].mxu0
  %3530 = vdwg.mxu0
  %v3531 = vld [vmem:[%s5] sm:$0xff]
  %v3532 = vld [vmem:[%s5 + $0x8] sm:$0xff]
  %v3533 = vld [vmem:[%s5 + $0x10] sm:$0xff]
  %v3534 = vld [vmem:[%s5 + $0x18] sm:$0xff]
  %v3535 = vld [vmem:[%s5 + $0x20] sm:$0xff]
  %v3536 = vld [vmem:[%s5 + $0x28] sm:$0xff]
  %v3537 = vld [vmem:[%s5 + $0x30] sm:$0xff]
  %v3538 = vld [vmem:[%s5 + $0x38] sm:$0xff]
  %v3539 = vld [vmem:[%s5 + $0x40] sm:$0xff]
  %v3540 = vld [vmem:[%s5 + $0x48] sm:$0xff]
  %v3541 = vld [vmem:[%s5 + $0x50] sm:$0xff]
  %v3542 = vld [vmem:[%s5 + $0x58] sm:$0xff]
  %v3543 = vld [vmem:[%s5 + $0x60] sm:$0xff]
  %v3544 = vld [vmem:[%s5 + $0x68] sm:$0xff]
  %v3545 = vld [vmem:[%s5 + $0x70] sm:$0xff]
  %v3546 = vld [vmem:[%s5 + $0x78] sm:$0xff]
  %v3547 = vld [vmem:[%s5 + $0x80] sm:$0xff]
  %v3548 = vld [vmem:[%s5 + $0x88] sm:$0xff]
  %v3549 = vld [vmem:[%s5 + $0x90] sm:$0xff]
  %v3550 = vld [vmem:[%s5 + $0x98] sm:$0xff]
  %v3551 = vld [vmem:[%s5 + $0xa0] sm:$0xff]
  %v3552 = vld [vmem:[%s5 + $0xa8] sm:$0xff]
  %v3553 = vld [vmem:[%s5 + $0xb0] sm:$0xff]
  %v3554 = vld [vmem:[%s5 + $0xb8] sm:$0xff]
  %v3555 = vld [vmem:[%s5 + $0xc0] sm:$0xff]
  %v3556 = vld [vmem:[%s5 + $0xc8] sm:$0xff]
  %v3557 = vld [vmem:[%s5 + $0xd0] sm:$0xff]
  %v3558 = vld [vmem:[%s5 + $0xd8] sm:$0xff]
  %v3559 = vadd.f32 %v3531, %v3421
  %v3560 = vadd.f32 %v3532, %v3424
  %v3561 = vadd.f32 %v3533, %v3429
  %v3562 = vadd.f32 %v3534, %v3432
  %v3563 = vadd.f32 %v3535, %v3437
  %v3564 = vadd.f32 %v3536, %v3440
  %v3565 = vadd.f32 %v3537, %v3445
  %v3566 = vadd.f32 %v3538, %v3448
  %v3567 = vadd.f32 %v3539, %v3453
  %v3568 = vadd.f32 %v3540, %v3456
  %v3569 = vadd.f32 %v3541, %v3461
  %v3570 = vadd.f32 %v3542, %v3464
  %v3571 = vadd.f32 %v3543, %v3469
  %v3572 = vadd.f32 %v3544, %v3472
  %v3573 = vadd.f32 %v3545, %v3477
  %v3574 = vadd.f32 %v3546, %v3480
  %v3575 = vadd.f32 %v3547, %v3485
  %v3576 = vadd.f32 %v3548, %v3488
  %v3577 = vadd.f32 %v3549, %v3493
  %v3578 = vadd.f32 %v3550, %v3496
  %v3579 = vadd.f32 %v3551, %v3501
  %v3580 = vadd.f32 %v3552, %v3504
  %v3581 = vadd.f32 %v3553, %v3509
  %v3582 = vadd.f32 %v3554, %v3512
  %v3583 = vadd.f32 %v3555, %v3517
  %v3584 = vadd.f32 %v3556, %v3520
  %v3585 = vadd.f32 %v3557, %v3525
  %v3586 = vadd.f32 %v3558, %v3528
  %3587 = vst.msk [vmem:[%s5] sm:$0xff] %vm1163, %v3559
  %3588 = vst.msk [vmem:[%s5 + $0x8] sm:$0xff] %vm1163, %v3560
  %3589 = vst.msk [vmem:[%s5 + $0x10] sm:$0xff] %vm1163, %v3561
  %3590 = vst.msk [vmem:[%s5 + $0x18] sm:$0xff] %vm1163, %v3562
  %3591 = vst.msk [vmem:[%s5 + $0x20] sm:$0xff] %vm1163, %v3563
  %3592 = vst.msk [vmem:[%s5 + $0x28] sm:$0xff] %vm1163, %v3564
  %3593 = vst.msk [vmem:[%s5 + $0x30] sm:$0xff] %vm1163, %v3565
  %3594 = vst.msk [vmem:[%s5 + $0x38] sm:$0xff] %vm1163, %v3566
  %3595 = vst.msk [vmem:[%s5 + $0x40] sm:$0xff] %vm1163, %v3567
  %3596 = vst.msk [vmem:[%s5 + $0x48] sm:$0xff] %vm1163, %v3568
  %3597 = vst.msk [vmem:[%s5 + $0x50] sm:$0xff] %vm1163, %v3569
  %3598 = vst.msk [vmem:[%s5 + $0x58] sm:$0xff] %vm1163, %v3570
  %3599 = vst.msk [vmem:[%s5 + $0x60] sm:$0xff] %vm1163, %v3571
  %3600 = vst.msk [vmem:[%s5 + $0x68] sm:$0xff] %vm1163, %v3572
  %3601 = vst.msk [vmem:[%s5 + $0x70] sm:$0xff] %vm1163, %v3573
  %3602 = vst.msk [vmem:[%s5 + $0x78] sm:$0xff] %vm1163, %v3574
  %3603 = vst.msk [vmem:[%s5 + $0x80] sm:$0xff] %vm1163, %v3575
  %3604 = vst.msk [vmem:[%s5 + $0x88] sm:$0xff] %vm1163, %v3576
  %3605 = vst.msk [vmem:[%s5 + $0x90] sm:$0xff] %vm1163, %v3577
  %3606 = vst.msk [vmem:[%s5 + $0x98] sm:$0xff] %vm1163, %v3578
  %3607 = vst.msk [vmem:[%s5 + $0xa0] sm:$0xff] %vm1163, %v3579
  %3608 = vst.msk [vmem:[%s5 + $0xa8] sm:$0xff] %vm1163, %v3580
  %3609 = vst.msk [vmem:[%s5 + $0xb0] sm:$0xff] %vm1163, %v3581
  %3610 = vst.msk [vmem:[%s5 + $0xb8] sm:$0xff] %vm1163, %v3582
  %3611 = vst.msk [vmem:[%s5 + $0xc0] sm:$0xff] %vm1163, %v3583
  %3612 = vst.msk [vmem:[%s5 + $0xc8] sm:$0xff] %vm1163, %v3584
  %3613 = vst.msk [vmem:[%s5 + $0xd0] sm:$0xff] %vm1163, %v3585
  %3614 = vst.msk [vmem:[%s5 + $0xd8] sm:$0xff] %vm1163, %v3586
  %v3615 = vld [vmem:[#allocation2 + $0x10] sm:$0xff]
  %v3616 = vld [vmem:[#allocation2 + $0x18] sm:$0xff]
  %v3617 = vld [vmem:[#allocation2 + $0x20] sm:$0xff]
  %v3618 = vld [vmem:[#allocation2 + $0x28] sm:$0xff]
  %v3619 = vld [vmem:[#allocation2 + $0x30] sm:$0xff]
  %v3620 = vld [vmem:[#allocation2 + $0x38] sm:$0xff]
  %v3621 = vld [vmem:[#allocation2 + $0x40] sm:$0xff]
  %v3622 = vld [vmem:[#allocation2 + $0x48] sm:$0xff]
  %v3623 = vld [vmem:[#allocation2 + $0x50] sm:$0xff]
  %v3624 = vld [vmem:[#allocation2 + $0x58] sm:$0xff]
  %v3625 = vld [vmem:[#allocation2 + $0x60] sm:$0xff]
  %v3626 = vld [vmem:[#allocation2 + $0x68] sm:$0xff]
  %v3627 = vld [vmem:[#allocation2 + $0x70] sm:$0xff]
  %v3628 = vld [vmem:[#allocation2 + $0x78] sm:$0xff]
  %v3629 = vld [vmem:[#allocation2 + $0x80] sm:$0xff]
  %v3630 = vld [vmem:[#allocation2 + $0x88] sm:$0xff]
  %v3631 = vld [vmem:[#allocation2 + $0x90] sm:$0xff]
  %v3632 = vld [vmem:[#allocation2 + $0x98] sm:$0xff]
  %v3633 = vld [vmem:[#allocation2 + $0xa0] sm:$0xff]
  %v3634 = vld [vmem:[#allocation2 + $0xa8] sm:$0xff]
  %v3635 = vld [vmem:[#allocation2 + $0xb0] sm:$0xff]
  %v3636 = vld [vmem:[#allocation2 + $0xb8] sm:$0xff]
  %v3637 = vld [vmem:[#allocation2 + $0xc0] sm:$0xff]
  %v3638 = vld [vmem:[#allocation2 + $0xc8] sm:$0xff]
  %v3639 = vld [vmem:[#allocation2 + $0xd0] sm:$0xff]
  %v3640 = vld [vmem:[#allocation2 + $0xd8] sm:$0xff]
  %v3641 = vld [vmem:[#allocation2 + $0xe0] sm:$0xff]
  %v3642 = vld [vmem:[#allocation2 + $0xe8] sm:$0xff]
  %s3643 = scalar_lea.vmem %s4, 192
  %v3644 = vld [vmem:[%s3643] sm:$0xf]
  %v3645 = vld [vmem:[%s3643 + $0x4] sm:$0xf]
  %v3646 = vld [vmem:[%s3643 + $0x8] sm:$0xf]
  %v3647 = vld [vmem:[%s3643 + $0xc] sm:$0xf]
  %v3648 = vld [vmem:[%s3643 + $0x10] sm:$0xf]
  %v3649 = vld [vmem:[%s3643 + $0x14] sm:$0xf]
  %v3650 = vld [vmem:[%s3643 + $0x18] sm:$0xf]
  %v3651 = vld [vmem:[%s3643 + $0x1c] sm:$0xf]
  %v3652 = vld [vmem:[%s3643 + $0x20] sm:$0xf]
  %v3653 = vld [vmem:[%s3643 + $0x24] sm:$0xf]
  %v3654 = vld [vmem:[%s3643 + $0x28] sm:$0xf]
  %v3655 = vld [vmem:[%s3643 + $0x2c] sm:$0xf]
  %v3656 = vld [vmem:[%s3643 + $0x30] sm:$0xf]
  %v3657 = vld [vmem:[%s3643 + $0x34] sm:$0xf]
  %v3658 = vld [vmem:[%s3643 + $0x38] sm:$0xf]
  %v3659 = vld [vmem:[%s3643 + $0x3c] sm:$0xf]
  %v3660 = vld [vmem:[%s3643 + $0x40] sm:$0xf]
  %v3661 = vld [vmem:[%s3643 + $0x44] sm:$0xf]
  %v3662 = vld [vmem:[%s3643 + $0x48] sm:$0xf]
  %v3663 = vld [vmem:[%s3643 + $0x4c] sm:$0xf]
  %v3664 = vld [vmem:[%s3643 + $0x50] sm:$0xf]
  %v3665 = vld [vmem:[%s3643 + $0x54] sm:$0xf]
  %v3666 = vld [vmem:[%s3643 + $0x58] sm:$0xf]
  %v3667 = vld [vmem:[%s3643 + $0x5c] sm:$0xf]
  %v3692 = vunpack.c.l.b16 %v3644
  %v3693 = vunpack.c.l.b16 %v3645
  %v3694 = vunpack.c.l.b16 %v3646
  %v3695 = vunpack.c.l.b16 %v3647
  %v3696 = vunpack.c.l.b16 %v3648
  %v3697 = vunpack.c.l.b16 %v3649
  %v3698 = vunpack.c.l.b16 %v3650
  %v3699 = vunpack.c.l.b16 %v3651
  %v3700 = vunpack.c.l.b16 %v3652
  %v3701 = vunpack.c.l.b16 %v3653
  %v3702 = vunpack.c.l.b16 %v3654
  %v3703 = vunpack.c.l.b16 %v3655
  %v3704 = vunpack.c.l.b16 %v3656
  %v3705 = vunpack.c.l.b16 %v3657
  %v3706 = vunpack.c.l.b16 %v3658
  %v3707 = vunpack.c.l.b16 %v3659
  %v3708 = vunpack.c.l.b16 %v3660
  %v3709 = vunpack.c.l.b16 %v3661
  %v3710 = vunpack.c.l.b16 %v3662
  %v3711 = vunpack.c.l.b16 %v3663
  %v3712 = vunpack.c.l.b16 %v3664
  %v3713 = vunpack.c.l.b16 %v3665
  %v3714 = vunpack.c.l.b16 %v3666
  %v3715 = vunpack.c.l.b16 %v3667
  %v3716 = vpack.c.b16 %v3693, %v3692
  %v3717 = vpack.c.b16 %v3695, %v3694
  %v3718 = vpack.c.b16 %v3697, %v3696
  %v3719 = vpack.c.b16 %v3699, %v3698
  %v3720 = vpack.c.b16 %v3701, %v3700
  %v3721 = vpack.c.b16 %v3703, %v3702
  %v3722 = vpack.c.b16 %v3705, %v3704
  %v3723 = vpack.c.b16 %v3707, %v3706
  %v3724 = vpack.c.b16 %v3709, %v3708
  %v3725 = vpack.c.b16 %v3711, %v3710
  %v3726 = vpack.c.b16 %v3713, %v3712
  %v3727 = vpack.c.b16 %v3715, %v3714
  %v3741 = vsel %vm1879, %v3616, 0
  %v3744 = vsel %vm1879, %v3618, 0
  %v3747 = vsel %vm1879, %v3620, 0
  %v3750 = vsel %vm1879, %v3622, 0
  %v3753 = vsel %vm1879, %v3624, 0
  %v3756 = vsel %vm1879, %v3626, 0
  %v3759 = vsel %vm1879, %v3628, 0
  %v3762 = vsel %vm1879, %v3630, 0
  %v3765 = vsel %vm1879, %v3632, 0
  %v3768 = vsel %vm1879, %v3634, 0
  %v3771 = vsel %vm1879, %v3636, 0
  %v3774 = vsel %vm1879, %v3638, 0
  %v3777 = vsel %vm1879, %v3640, 0
  %v3780 = vsel %vm1879, %v3642, 0
  %3782 = vmatprep.subr.bf16.mxu0 0
  %3783 = vmatpush1.bf16.msra.mxu0 %v3716
  %3784 = vmatprep.subr.bf16.mxu0 0
  %3785 = vmatpush1.bf16.msra.mxu0 %v3717
  %3786 = vmatprep.subr.bf16.mxu0 0
  %3787 = vmatpush1.bf16.msra.mxu0 %v3718
  %3788 = vmatprep.subr.bf16.mxu0 0
  %3789 = vmatpush1.bf16.msra.mxu0 %v3719
  %3790 = vmatprep.subr.bf16.mxu0 0
  %3791 = vmatpush1.bf16.msra.mxu0 %v3720
  %3792 = vmatprep.subr.bf16.mxu0 0
  %3793 = vmatpush1.bf16.msra.mxu0 %v3721
  %3794 = vmatprep.subr.bf16.mxu0 0
  %3795 = vmatpush1.bf16.msra.mxu0 %v3722
  %3796 = vmatprep.subr.bf16.mxu0 0
  %3797 = vmatpush1.bf16.msra.mxu0 %v3723
  %3798 = vmatprep.subr.bf16.mxu0 0
  %3799 = vmatpush1.bf16.msra.mxu0 %v3724
  %3800 = vmatprep.subr.bf16.mxu0 0
  %3801 = vmatpush1.bf16.msra.mxu0 %v3725
  %3802 = vmatprep.subr.bf16.mxu0 0
  %3803 = vmatpush1.bf16.msra.mxu0 %v3726
  %3804 = vmatprep.subr.bf16.mxu0 0
  %3805 = vmatpush1.bf16.msra.mxu0 %v3727
  %3806 = vmatprep.subr.bf16.mxu0 0
  %3807 = vmatpush1.bf16.msra.mxu0 0
  %3808 = vmatprep.subr.bf16.mxu0 0
  %3809 = vmatpush1.bf16.msra.mxu0 0
  %3810 = vmatprep.subr.bf16.mxu0 0
  %3811 = vmatpush1.bf16.msra.mxu0 0
  %3812 = vmatprep.subr.bf16.mxu0 0
  %3813 = vmatpush1.bf16.msra.mxu0 0
  %3814 = vmatprep.mubr.bf16.mxu0 %v3741
  %3815 = vmatmul.mubr.bf16.gmra.mrb[0].mxu0 %v3615
  %v3816 = vpop.f32.mrb[0].mxu0
  %v3817 = vadd.f32 0.0, %v3816
  %v3818 = vpop.f32.mrb[0].mxu0
  %v3819 = vpop.f32.mrb[0].mxu0
  %v3820 = vadd.f32 0.0, %v3819
  %v3821 = vpop.f32.mrb[0].mxu0
  %3822 = vmatprep.mubr.bf16.mxu0 %v3744
  %3823 = vmatmul.mubr.bf16.gmra.mrb[0].mxu0 %v3617
  %v3824 = vpop.f32.mrb[0].mxu0
  %v3825 = vadd.f32 0.0, %v3824
  %v3826 = vpop.f32.mrb[0].mxu0
  %v3827 = vpop.f32.mrb[0].mxu0
  %v3828 = vadd.f32 0.0, %v3827
  %v3829 = vpop.f32.mrb[0].mxu0
  %3830 = vmatprep.mubr.bf16.mxu0 %v3747
  %3831 = vmatmul.mubr.bf16.gmra.mrb[0].mxu0 %v3619
  %v3832 = vpop.f32.mrb[0].mxu0
  %v3833 = vadd.f32 0.0, %v3832
  %v3834 = vpop.f32.mrb[0].mxu0
  %v3835 = vpop.f32.mrb[0].mxu0
  %v3836 = vadd.f32 0.0, %v3835
  %v3837 = vpop.f32.mrb[0].mxu0
  %3838 = vmatprep.mubr.bf16.mxu0 %v3750
  %3839 = vmatmul.mubr.bf16.gmra.mrb[0].mxu0 %v3621
  %v3840 = vpop.f32.mrb[0].mxu0
  %v3841 = vadd.f32 0.0, %v3840
  %v3842 = vpop.f32.mrb[0].mxu0
  %v3843 = vpop.f32.mrb[0].mxu0
  %v3844 = vadd.f32 0.0, %v3843
  %v3845 = vpop.f32.mrb[0].mxu0
  %3846 = vmatprep.mubr.bf16.mxu0 %v3753
  %3847 = vmatmul.mubr.bf16.gmra.mrb[0].mxu0 %v3623
  %v3848 = vpop.f32.mrb[0].mxu0
  %v3849 = vadd.f32 0.0, %v3848
  %v3850 = vpop.f32.mrb[0].mxu0
  %v3851 = vpop.f32.mrb[0].mxu0
  %v3852 = vadd.f32 0.0, %v3851
  %v3853 = vpop.f32.mrb[0].mxu0
  %3854 = vmatprep.mubr.bf16.mxu0 %v3756
  %3855 = vmatmul.mubr.bf16.gmra.mrb[0].mxu0 %v3625
  %v3856 = vpop.f32.mrb[0].mxu0
  %v3857 = vadd.f32 0.0, %v3856
  %v3858 = vpop.f32.mrb[0].mxu0
  %v3859 = vpop.f32.mrb[0].mxu0
  %v3860 = vadd.f32 0.0, %v3859
  %v3861 = vpop.f32.mrb[0].mxu0
  %3862 = vmatprep.mubr.bf16.mxu0 %v3759
  %3863 = vmatmul.mubr.bf16.gmra.mrb[0].mxu0 %v3627
  %v3864 = vpop.f32.mrb[0].mxu0
  %v3865 = vadd.f32 0.0, %v3864
  %v3866 = vpop.f32.mrb[0].mxu0
  %v3867 = vpop.f32.mrb[0].mxu0
  %v3868 = vadd.f32 0.0, %v3867
  %v3869 = vpop.f32.mrb[0].mxu0
  %3870 = vmatprep.mubr.bf16.mxu0 %v3762
  %3871 = vmatmul.mubr.bf16.gmra.mrb[0].mxu0 %v3629
  %v3872 = vpop.f32.mrb[0].mxu0
  %v3873 = vadd.f32 0.0, %v3872
  %v3874 = vpop.f32.mrb[0].mxu0
  %v3875 = vpop.f32.mrb[0].mxu0
  %v3876 = vadd.f32 0.0, %v3875
  %v3877 = vpop.f32.mrb[0].mxu0
  %3878 = vmatprep.mubr.bf16.mxu0 %v3765
  %3879 = vmatmul.mubr.bf16.gmra.mrb[0].mxu0 %v3631
  %v3880 = vpop.f32.mrb[0].mxu0
  %v3881 = vadd.f32 0.0, %v3880
  %v3882 = vpop.f32.mrb[0].mxu0
  %v3883 = vpop.f32.mrb[0].mxu0
  %v3884 = vadd.f32 0.0, %v3883
  %v3885 = vpop.f32.mrb[0].mxu0
  %3886 = vmatprep.mubr.bf16.mxu0 %v3768
  %3887 = vmatmul.mubr.bf16.gmra.mrb[0].mxu0 %v3633
  %v3888 = vpop.f32.mrb[0].mxu0
  %v3889 = vadd.f32 0.0, %v3888
  %v3890 = vpop.f32.mrb[0].mxu0
  %v3891 = vpop.f32.mrb[0].mxu0
  %v3892 = vadd.f32 0.0, %v3891
  %v3893 = vpop.f32.mrb[0].mxu0
  %3894 = vmatprep.mubr.bf16.mxu0 %v3771
  %3895 = vmatmul.mubr.bf16.gmra.mrb[0].mxu0 %v3635
  %v3896 = vpop.f32.mrb[0].mxu0
  %v3897 = vadd.f32 0.0, %v3896
  %v3898 = vpop.f32.mrb[0].mxu0
  %v3899 = vpop.f32.mrb[0].mxu0
  %v3900 = vadd.f32 0.0, %v3899
  %v3901 = vpop.f32.mrb[0].mxu0
  %3902 = vmatprep.mubr.bf16.mxu0 %v3774
  %3903 = vmatmul.mubr.bf16.gmra.mrb[0].mxu0 %v3637
  %v3904 = vpop.f32.mrb[0].mxu0
  %v3905 = vadd.f32 0.0, %v3904
  %v3906 = vpop.f32.mrb[0].mxu0
  %v3907 = vpop.f32.mrb[0].mxu0
  %v3908 = vadd.f32 0.0, %v3907
  %v3909 = vpop.f32.mrb[0].mxu0
  %3910 = vmatprep.mubr.bf16.mxu0 %v3777
  %3911 = vmatmul.mubr.bf16.gmra.mrb[0].mxu0 %v3639
  %v3912 = vpop.f32.mrb[0].mxu0
  %v3913 = vadd.f32 0.0, %v3912
  %v3914 = vpop.f32.mrb[0].mxu0
  %v3915 = vpop.f32.mrb[0].mxu0
  %v3916 = vadd.f32 0.0, %v3915
  %v3917 = vpop.f32.mrb[0].mxu0
  %3918 = vmatprep.mubr.bf16.mxu0 %v3780
  %3919 = vmatmul.mubr.bf16.gmra.mrb[0].mxu0 %v3641
  %v3920 = vpop.f32.mrb[0].mxu0
  %v3921 = vadd.f32 0.0, %v3920
  %v3922 = vpop.f32.mrb[0].mxu0
  %v3923 = vpop.f32.mrb[0].mxu0
  %v3924 = vadd.f32 0.0, %v3923
  %v3925 = vpop.f32.mrb[0].mxu0
  %3926 = vdwg.mxu0
  %v3927 = vld [vmem:[%s5] sm:$0xff]
  %v3928 = vld [vmem:[%s5 + $0x8] sm:$0xff]
  %v3929 = vld [vmem:[%s5 + $0x10] sm:$0xff]
  %v3930 = vld [vmem:[%s5 + $0x18] sm:$0xff]
  %v3931 = vld [vmem:[%s5 + $0x20] sm:$0xff]
  %v3932 = vld [vmem:[%s5 + $0x28] sm:$0xff]
  %v3933 = vld [vmem:[%s5 + $0x30] sm:$0xff]
  %v3934 = vld [vmem:[%s5 + $0x38] sm:$0xff]
  %v3935 = vld [vmem:[%s5 + $0x40] sm:$0xff]
  %v3936 = vld [vmem:[%s5 + $0x48] sm:$0xff]
  %v3937 = vld [vmem:[%s5 + $0x50] sm:$0xff]
  %v3938 = vld [vmem:[%s5 + $0x58] sm:$0xff]
  %v3939 = vld [vmem:[%s5 + $0x60] sm:$0xff]
  %v3940 = vld [vmem:[%s5 + $0x68] sm:$0xff]
  %v3941 = vld [vmem:[%s5 + $0x70] sm:$0xff]
  %v3942 = vld [vmem:[%s5 + $0x78] sm:$0xff]
  %v3943 = vld [vmem:[%s5 + $0x80] sm:$0xff]
  %v3944 = vld [vmem:[%s5 + $0x88] sm:$0xff]
  %v3945 = vld [vmem:[%s5 + $0x90] sm:$0xff]
  %v3946 = vld [vmem:[%s5 + $0x98] sm:$0xff]
  %v3947 = vld [vmem:[%s5 + $0xa0] sm:$0xff]
  %v3948 = vld [vmem:[%s5 + $0xa8] sm:$0xff]
  %v3949 = vld [vmem:[%s5 + $0xb0] sm:$0xff]
  %v3950 = vld [vmem:[%s5 + $0xb8] sm:$0xff]
  %v3951 = vld [vmem:[%s5 + $0xc0] sm:$0xff]
  %v3952 = vld [vmem:[%s5 + $0xc8] sm:$0xff]
  %v3953 = vld [vmem:[%s5 + $0xd0] sm:$0xff]
  %v3954 = vld [vmem:[%s5 + $0xd8] sm:$0xff]
  %v3955 = vadd.f32 %v3927, %v3817
  %v3956 = vadd.f32 %v3928, %v3820
  %v3957 = vadd.f32 %v3929, %v3825
  %v3958 = vadd.f32 %v3930, %v3828
  %v3959 = vadd.f32 %v3931, %v3833
  %v3960 = vadd.f32 %v3932, %v3836
  %v3961 = vadd.f32 %v3933, %v3841
  %v3962 = vadd.f32 %v3934, %v3844
  %v3963 = vadd.f32 %v3935, %v3849
  %v3964 = vadd.f32 %v3936, %v3852
  %v3965 = vadd.f32 %v3937, %v3857
  %v3966 = vadd.f32 %v3938, %v3860
  %v3967 = vadd.f32 %v3939, %v3865
  %v3968 = vadd.f32 %v3940, %v3868
  %v3969 = vadd.f32 %v3941, %v3873
  %v3970 = vadd.f32 %v3942, %v3876
  %v3971 = vadd.f32 %v3943, %v3881
  %v3972 = vadd.f32 %v3944, %v3884
  %v3973 = vadd.f32 %v3945, %v3889
  %v3974 = vadd.f32 %v3946, %v3892
  %v3975 = vadd.f32 %v3947, %v3897
  %v3976 = vadd.f32 %v3948, %v3900
  %v3977 = vadd.f32 %v3949, %v3905
  %v3978 = vadd.f32 %v3950, %v3908
  %v3979 = vadd.f32 %v3951, %v3913
  %v3980 = vadd.f32 %v3952, %v3916
  %v3981 = vadd.f32 %v3953, %v3921
  %v3982 = vadd.f32 %v3954, %v3924
  %3983 = vst.msk [vmem:[%s5] sm:$0xff] %vm1163, %v3955
  %3984 = vst.msk [vmem:[%s5 + $0x8] sm:$0xff] %vm1163, %v3956
  %3985 = vst.msk [vmem:[%s5 + $0x10] sm:$0xff] %vm1163, %v3957
  %3986 = vst.msk [vmem:[%s5 + $0x18] sm:$0xff] %vm1163, %v3958
  %3987 = vst.msk [vmem:[%s5 + $0x20] sm:$0xff] %vm1163, %v3959
  %3988 = vst.msk [vmem:[%s5 + $0x28] sm:$0xff] %vm1163, %v3960
  %3989 = vst.msk [vmem:[%s5 + $0x30] sm:$0xff] %vm1163, %v3961
  %3990 = vst.msk [vmem:[%s5 + $0x38] sm:$0xff] %vm1163, %v3962
  %3991 = vst.msk [vmem:[%s5 + $0x40] sm:$0xff] %vm1163, %v3963
  %3992 = vst.msk [vmem:[%s5 + $0x48] sm:$0xff] %vm1163, %v3964
  %3993 = vst.msk [vmem:[%s5 + $0x50] sm:$0xff] %vm1163, %v3965
  %3994 = vst.msk [vmem:[%s5 + $0x58] sm:$0xff] %vm1163, %v3966
  %3995 = vst.msk [vmem:[%s5 + $0x60] sm:$0xff] %vm1163, %v3967
  %3996 = vst.msk [vmem:[%s5 + $0x68] sm:$0xff] %vm1163, %v3968
  %3997 = vst.msk [vmem:[%s5 + $0x70] sm:$0xff] %vm1163, %v3969
  %3998 = vst.msk [vmem:[%s5 + $0x78] sm:$0xff] %vm1163, %v3970
  %3999 = vst.msk [vmem:[%s5 + $0x80] sm:$0xff] %vm1163, %v3971
  %4000 = vst.msk [vmem:[%s5 + $0x88] sm:$0xff] %vm1163, %v3972
  %4001 = vst.msk [vmem:[%s5 + $0x90] sm:$0xff] %vm1163, %v3973
  %4002 = vst.msk [vmem:[%s5 + $0x98] sm:$0xff] %vm1163, %v3974
  %4003 = vst.msk [vmem:[%s5 + $0xa0] sm:$0xff] %vm1163, %v3975
  %4004 = vst.msk [vmem:[%s5 + $0xa8] sm:$0xff] %vm1163, %v3976
  %4005 = vst.msk [vmem:[%s5 + $0xb0] sm:$0xff] %vm1163, %v3977
  %4006 = vst.msk [vmem:[%s5 + $0xb8] sm:$0xff] %vm1163, %v3978
  %4007 = vst.msk [vmem:[%s5 + $0xc0] sm:$0xff] %vm1163, %v3979
  %4008 = vst.msk [vmem:[%s5 + $0xc8] sm:$0xff] %vm1163, %v3980
  %4009 = vst.msk [vmem:[%s5 + $0xd0] sm:$0xff] %vm1163, %v3981
  %4010 = vst.msk [vmem:[%s5 + $0xd8] sm:$0xff] %vm1163, %v3982
  %v4011 = vld [vmem:[#allocation2 + $0x10] sm:$0x80]
  %v4012 = vld [vmem:[#allocation2 + $0x18] sm:$0x80]
  %v4013 = vld [vmem:[#allocation2 + $0x20] sm:$0xff]
  %v4014 = vld [vmem:[#allocation2 + $0x28] sm:$0xff]
  %v4015 = vld [vmem:[#allocation2 + $0x30] sm:$0xff]
  %v4016 = vld [vmem:[#allocation2 + $0x38] sm:$0xff]
  %v4017 = vld [vmem:[#allocation2 + $0x40] sm:$0xff]
  %v4018 = vld [vmem:[#allocation2 + $0x48] sm:$0xff]
  %v4019 = vld [vmem:[#allocation2 + $0x50] sm:$0xff]
  %v4020 = vld [vmem:[#allocation2 + $0x58] sm:$0xff]
  %v4021 = vld [vmem:[#allocation2 + $0x60] sm:$0xff]
  %v4022 = vld [vmem:[#allocation2 + $0x68] sm:$0xff]
  %v4023 = vld [vmem:[#allocation2 + $0x70] sm:$0xff]
  %v4024 = vld [vmem:[#allocation2 + $0x78] sm:$0xff]
  %v4025 = vld [vmem:[#allocation2 + $0x80] sm:$0xff]
  %v4026 = vld [vmem:[#allocation2 + $0x88] sm:$0xff]
  %v4027 = vld [vmem:[#allocation2 + $0x90] sm:$0xff]
  %v4028 = vld [vmem:[#allocation2 + $0x98] sm:$0xff]
  %v4029 = vld [vmem:[#allocation2 + $0xa0] sm:$0xff]
  %v4030 = vld [vmem:[#allocation2 + $0xa8] sm:$0xff]
  %v4031 = vld [vmem:[#allocation2 + $0xb0] sm:$0xff]
  %v4032 = vld [vmem:[#allocation2 + $0xb8] sm:$0xff]
  %v4033 = vld [vmem:[#allocation2 + $0xc0] sm:$0xff]
  %v4034 = vld [vmem:[#allocation2 + $0xc8] sm:$0xff]
  %v4035 = vld [vmem:[#allocation2 + $0xd0] sm:$0xff]
  %v4036 = vld [vmem:[#allocation2 + $0xd8] sm:$0xff]
  %v4037 = vld [vmem:[#allocation2 + $0xe0] sm:$0xff]
  %v4038 = vld [vmem:[#allocation2 + $0xe8] sm:$0xff]
  %v4039 = vld [vmem:[#allocation2 + $0xf0] sm:$0x7f]
  %v4040 = vld [vmem:[#allocation2 + $0xf8] sm:$0x7f]
  %s4041 = scalar_lea.vmem %s4, 288
  %v4042 = vld [vmem:[%s4041] sm:$0xf]
  %v4043 = vld [vmem:[%s4041 + $0x4] sm:$0xf]
  %v4044 = vld [vmem:[%s4041 + $0x8] sm:$0xf]
  %v4045 = vld [vmem:[%s4041 + $0xc] sm:$0xf]
  %v4046 = vld [vmem:[%s4041 + $0x10] sm:$0xf]
  %v4047 = vld [vmem:[%s4041 + $0x14] sm:$0xf]
  %v4048 = vld [vmem:[%s4041 + $0x18] sm:$0xf]
  %v4049 = vld [vmem:[%s4041 + $0x1c] sm:$0xf]
  %v4050 = vld [vmem:[%s4041 + $0x20] sm:$0xf]
  %v4051 = vld [vmem:[%s4041 + $0x24] sm:$0xf]
  %v4052 = vld [vmem:[%s4041 + $0x28] sm:$0xf]
  %v4053 = vld [vmem:[%s4041 + $0x2c] sm:$0xf]
  %v4054 = vld [vmem:[%s4041 + $0x30] sm:$0xf]
  %v4055 = vld [vmem:[%s4041 + $0x34] sm:$0xf]
  %v4056 = vld [vmem:[%s4041 + $0x38] sm:$0xf]
  %v4057 = vld [vmem:[%s4041 + $0x3c] sm:$0xf]
  %v4058 = vld [vmem:[%s4041 + $0x40] sm:$0xf]
  %v4059 = vld [vmem:[%s4041 + $0x44] sm:$0xf]
  %v4060 = vld [vmem:[%s4041 + $0x48] sm:$0xf]
  %v4061 = vld [vmem:[%s4041 + $0x4c] sm:$0xf]
  %v4062 = vld [vmem:[%s4041 + $0x50] sm:$0xf]
  %v4063 = vld [vmem:[%s4041 + $0x54] sm:$0xf]
  %v4064 = vld [vmem:[%s4041 + $0x58] sm:$0xf]
  %v4065 = vld [vmem:[%s4041 + $0x5c] sm:$0xf]
  %v4096 = vrot.slane %v4011, 7
  %v4097 = vrot.slane %v4013, 7
  %v4098 = vsel %vm2381, %v4096, %v4097
  %v4099 = vrot.slane %v4012, 7
  %v4100 = vrot.slane %v4014, 7
  %v4101 = vsel %vm2381, %v4099, %v4100
  %v4102 = vrot.slane %v4015, 7
  %v4103 = vsel %vm2381, %v4097, %v4102
  %v4104 = vrot.slane %v4016, 7
  %v4105 = vsel %vm2381, %v4100, %v4104
  %v4106 = vrot.slane %v4017, 7
  %v4107 = vsel %vm2381, %v4102, %v4106
  %v4108 = vrot.slane %v4018, 7
  %v4109 = vsel %vm2381, %v4104, %v4108
  %v4110 = vrot.slane %v4019, 7
  %v4111 = vsel %vm2381, %v4106, %v4110
  %v4112 = vrot.slane %v4020, 7
  %v4113 = vsel %vm2381, %v4108, %v4112
  %v4114 = vrot.slane %v4021, 7
  %v4115 = vsel %vm2381, %v4110, %v4114
  %v4116 = vrot.slane %v4022, 7
  %v4117 = vsel %vm2381, %v4112, %v4116
  %v4118 = vrot.slane %v4023, 7
  %v4119 = vsel %vm2381, %v4114, %v4118
  %v4120 = vrot.slane %v4024, 7
  %v4121 = vsel %vm2381, %v4116, %v4120
  %v4122 = vrot.slane %v4025, 7
  %v4123 = vsel %vm2381, %v4118, %v4122
  %v4124 = vrot.slane %v4026, 7
  %v4125 = vsel %vm2381, %v4120, %v4124
  %v4126 = vrot.slane %v4027, 7
  %v4127 = vsel %vm2381, %v4122, %v4126
  %v4128 = vrot.slane %v4028, 7
  %v4129 = vsel %vm2381, %v4124, %v4128
  %v4130 = vrot.slane %v4029, 7
  %v4131 = vsel %vm2381, %v4126, %v4130
  %v4132 = vrot.slane %v4030, 7
  %v4133 = vsel %vm2381, %v4128, %v4132
  %v4134 = vrot.slane %v4031, 7
  %v4135 = vsel %vm2381, %v4130, %v4134
  %v4136 = vrot.slane %v4032, 7
  %v4137 = vsel %vm2381, %v4132, %v4136
  %v4138 = vrot.slane %v4033, 7
  %v4139 = vsel %vm2381, %v4134, %v4138
  %v4140 = vrot.slane %v4034, 7
  %v4141 = vsel %vm2381, %v4136, %v4140
  %v4142 = vrot.slane %v4035, 7
  %v4143 = vsel %vm2381, %v4138, %v4142
  %v4144 = vrot.slane %v4036, 7
  %v4145 = vsel %vm2381, %v4140, %v4144
  %v4146 = vrot.slane %v4037, 7
  %v4147 = vsel %vm2381, %v4142, %v4146
  %v4148 = vrot.slane %v4038, 7
  %v4149 = vsel %vm2381, %v4144, %v4148
  %v4150 = vrot.slane %v4039, 7
  %v4151 = vsel %vm2381, %v4146, %v4150
  %v4152 = vrot.slane %v4040, 7
  %v4153 = vsel %vm2381, %v4148, %v4152
  %v4192 = vunpack.c.l.b16 %v4042
  %v4193 = vunpack.c.l.b16 %v4043
  %v4194 = vunpack.c.l.b16 %v4044
  %v4195 = vunpack.c.l.b16 %v4045
  %v4196 = vunpack.c.l.b16 %v4046
  %v4197 = vunpack.c.l.b16 %v4047
  %v4198 = vunpack.c.l.b16 %v4048
  %v4199 = vunpack.c.l.b16 %v4049
  %v4200 = vunpack.c.l.b16 %v4050
  %v4201 = vunpack.c.l.b16 %v4051
  %v4202 = vunpack.c.l.b16 %v4052
  %v4203 = vunpack.c.l.b16 %v4053
  %v4204 = vunpack.c.l.b16 %v4054
  %v4205 = vunpack.c.l.b16 %v4055
  %v4206 = vunpack.c.l.b16 %v4056
  %v4207 = vunpack.c.l.b16 %v4057
  %v4208 = vunpack.c.l.b16 %v4058
  %v4209 = vunpack.c.l.b16 %v4059
  %v4210 = vunpack.c.l.b16 %v4060
  %v4211 = vunpack.c.l.b16 %v4061
  %v4212 = vunpack.c.l.b16 %v4062
  %v4213 = vunpack.c.l.b16 %v4063
  %v4214 = vunpack.c.l.b16 %v4064
  %v4215 = vunpack.c.l.b16 %v4065
  %v4216 = vpack.c.b16 %v4193, %v4192
  %v4217 = vpack.c.b16 %v4195, %v4194
  %v4218 = vpack.c.b16 %v4197, %v4196
  %v4219 = vpack.c.b16 %v4199, %v4198
  %v4220 = vpack.c.b16 %v4201, %v4200
  %v4221 = vpack.c.b16 %v4203, %v4202
  %v4222 = vpack.c.b16 %v4205, %v4204
  %v4223 = vpack.c.b16 %v4207, %v4206
  %v4224 = vpack.c.b16 %v4209, %v4208
  %v4225 = vpack.c.b16 %v4211, %v4210
  %v4226 = vpack.c.b16 %v4213, %v4212
  %v4227 = vpack.c.b16 %v4215, %v4214
  %v4241 = vsel %vm1879, %v4101, 0
  %v4244 = vsel %vm1879, %v4105, 0
  %v4247 = vsel %vm1879, %v4109, 0
  %v4250 = vsel %vm1879, %v4113, 0
  %v4253 = vsel %vm1879, %v4117, 0
  %v4256 = vsel %vm1879, %v4121, 0
  %v4259 = vsel %vm1879, %v4125, 0
  %v4262 = vsel %vm1879, %v4129, 0
  %v4265 = vsel %vm1879, %v4133, 0
  %v4268 = vsel %vm1879, %v4137, 0
  %v4271 = vsel %vm1879, %v4141, 0
  %v4274 = vsel %vm1879, %v4145, 0
  %v4277 = vsel %vm1879, %v4149, 0
  %v4280 = vsel %vm1879, %v4153, 0
  %4282 = vmatprep.subr.bf16.mxu0 0
  %4283 = vmatpush1.bf16.msra.mxu0 %v4216
  %4284 = vmatprep.subr.bf16.mxu0 0
  %4285 = vmatpush1.bf16.msra.mxu0 %v4217
  %4286 = vmatprep.subr.bf16.mxu0 0
  %4287 = vmatpush1.bf16.msra.mxu0 %v4218
  %4288 = vmatprep.subr.bf16.mxu0 0
  %4289 = vmatpush1.bf16.msra.mxu0 %v4219
  %4290 = vmatprep.subr.bf16.mxu0 0
  %4291 = vmatpush1.bf16.msra.mxu0 %v4220
  %4292 = vmatprep.subr.bf16.mxu0 0
  %4293 = vmatpush1.bf16.msra.mxu0 %v4221
  %4294 = vmatprep.subr.bf16.mxu0 0
  %4295 = vmatpush1.bf16.msra.mxu0 %v4222
  %4296 = vmatprep.subr.bf16.mxu0 0
  %4297 = vmatpush1.bf16.msra.mxu0 %v4223
  %4298 = vmatprep.subr.bf16.mxu0 0
  %4299 = vmatpush1.bf16.msra.mxu0 %v4224
  %4300 = vmatprep.subr.bf16.mxu0 0
  %4301 = vmatpush1.bf16.msra.mxu0 %v4225
  %4302 = vmatprep.subr.bf16.mxu0 0
  %4303 = vmatpush1.bf16.msra.mxu0 %v4226
  %4304 = vmatprep.subr.bf16.mxu0 0
  %4305 = vmatpush1.bf16.msra.mxu0 %v4227
  %4306 = vmatprep.subr.bf16.mxu0 0
  %4307 = vmatpush1.bf16.msra.mxu0 0
  %4308 = vmatprep.subr.bf16.mxu0 0
  %4309 = vmatpush1.bf16.msra.mxu0 0
  %4310 = vmatprep.subr.bf16.mxu0 0
  %4311 = vmatpush1.bf16.msra.mxu0 0
  %4312 = vmatprep.subr.bf16.mxu0 0
  %4313 = vmatpush1.bf16.msra.mxu0 0
  %4314 = vmatprep.mubr.bf16.mxu0 %v4241
  %4315 = vmatmul.mubr.bf16.gmra.mrb[0].mxu0 %v4098
  %v4316 = vpop.f32.mrb[0].mxu0
  %v4317 = vadd.f32 0.0, %v4316
  %v4318 = vpop.f32.mrb[0].mxu0
  %v4319 = vpop.f32.mrb[0].mxu0
  %v4320 = vadd.f32 0.0, %v4319
  %v4321 = vpop.f32.mrb[0].mxu0
  %4322 = vmatprep.mubr.bf16.mxu0 %v4244
  %4323 = vmatmul.mubr.bf16.gmra.mrb[0].mxu0 %v4103
  %v4324 = vpop.f32.mrb[0].mxu0
  %v4325 = vadd.f32 0.0, %v4324
  %v4326 = vpop.f32.mrb[0].mxu0
  %v4327 = vpop.f32.mrb[0].mxu0
  %v4328 = vadd.f32 0.0, %v4327
  %v4329 = vpop.f32.mrb[0].mxu0
  %4330 = vmatprep.mubr.bf16.mxu0 %v4247
  %4331 = vmatmul.mubr.bf16.gmra.mrb[0].mxu0 %v4107
  %v4332 = vpop.f32.mrb[0].mxu0
  %v4333 = vadd.f32 0.0, %v4332
  %v4334 = vpop.f32.mrb[0].mxu0
  %v4335 = vpop.f32.mrb[0].mxu0
  %v4336 = vadd.f32 0.0, %v4335
  %v4337 = vpop.f32.mrb[0].mxu0
  %4338 = vmatprep.mubr.bf16.mxu0 %v4250
  %4339 = vmatmul.mubr.bf16.gmra.mrb[0].mxu0 %v4111
  %v4340 = vpop.f32.mrb[0].mxu0
  %v4341 = vadd.f32 0.0, %v4340
  %v4342 = vpop.f32.mrb[0].mxu0
  %v4343 = vpop.f32.mrb[0].mxu0
  %v4344 = vadd.f32 0.0, %v4343
  %v4345 = vpop.f32.mrb[0].mxu0
  %4346 = vmatprep.mubr.bf16.mxu0 %v4253
  %4347 = vmatmul.mubr.bf16.gmra.mrb[0].mxu0 %v4115
  %v4348 = vpop.f32.mrb[0].mxu0
  %v4349 = vadd.f32 0.0, %v4348
  %v4350 = vpop.f32.mrb[0].mxu0
  %v4351 = vpop.f32.mrb[0].mxu0
  %v4352 = vadd.f32 0.0, %v4351
  %v4353 = vpop.f32.mrb[0].mxu0
  %4354 = vmatprep.mubr.bf16.mxu0 %v4256
  %4355 = vmatmul.mubr.bf16.gmra.mrb[0].mxu0 %v4119
  %v4356 = vpop.f32.mrb[0].mxu0
  %v4357 = vadd.f32 0.0, %v4356
  %v4358 = vpop.f32.mrb[0].mxu0
  %v4359 = vpop.f32.mrb[0].mxu0
  %v4360 = vadd.f32 0.0, %v4359
  %v4361 = vpop.f32.mrb[0].mxu0
  %4362 = vmatprep.mubr.bf16.mxu0 %v4259
  %4363 = vmatmul.mubr.bf16.gmra.mrb[0].mxu0 %v4123
  %v4364 = vpop.f32.mrb[0].mxu0
  %v4365 = vadd.f32 0.0, %v4364
  %v4366 = vpop.f32.mrb[0].mxu0
  %v4367 = vpop.f32.mrb[0].mxu0
  %v4368 = vadd.f32 0.0, %v4367
  %v4369 = vpop.f32.mrb[0].mxu0
  %4370 = vmatprep.mubr.bf16.mxu0 %v4262
  %4371 = vmatmul.mubr.bf16.gmra.mrb[0].mxu0 %v4127
  %v4372 = vpop.f32.mrb[0].mxu0
  %v4373 = vadd.f32 0.0, %v4372
  %v4374 = vpop.f32.mrb[0].mxu0
  %v4375 = vpop.f32.mrb[0].mxu0
  %v4376 = vadd.f32 0.0, %v4375
  %v4377 = vpop.f32.mrb[0].mxu0
  %4378 = vmatprep.mubr.bf16.mxu0 %v4265
  %4379 = vmatmul.mubr.bf16.gmra.mrb[0].mxu0 %v4131
  %v4380 = vpop.f32.mrb[0].mxu0
  %v4381 = vadd.f32 0.0, %v4380
  %v4382 = vpop.f32.mrb[0].mxu0
  %v4383 = vpop.f32.mrb[0].mxu0
  %v4384 = vadd.f32 0.0, %v4383
  %v4385 = vpop.f32.mrb[0].mxu0
  %4386 = vmatprep.mubr.bf16.mxu0 %v4268
  %4387 = vmatmul.mubr.bf16.gmra.mrb[0].mxu0 %v4135
  %v4388 = vpop.f32.mrb[0].mxu0
  %v4389 = vadd.f32 0.0, %v4388
  %v4390 = vpop.f32.mrb[0].mxu0
  %v4391 = vpop.f32.mrb[0].mxu0
  %v4392 = vadd.f32 0.0, %v4391
  %v4393 = vpop.f32.mrb[0].mxu0
  %4394 = vmatprep.mubr.bf16.mxu0 %v4271
  %4395 = vmatmul.mubr.bf16.gmra.mrb[0].mxu0 %v4139
  %v4396 = vpop.f32.mrb[0].mxu0
  %v4397 = vadd.f32 0.0, %v4396
  %v4398 = vpop.f32.mrb[0].mxu0
  %v4399 = vpop.f32.mrb[0].mxu0
  %v4400 = vadd.f32 0.0, %v4399
  %v4401 = vpop.f32.mrb[0].mxu0
  %4402 = vmatprep.mubr.bf16.mxu0 %v4274
  %4403 = vmatmul.mubr.bf16.gmra.mrb[0].mxu0 %v4143
  %v4404 = vpop.f32.mrb[0].mxu0
  %v4405 = vadd.f32 0.0, %v4404
  %v4406 = vpop.f32.mrb[0].mxu0
  %v4407 = vpop.f32.mrb[0].mxu0
  %v4408 = vadd.f32 0.0, %v4407
  %v4409 = vpop.f32.mrb[0].mxu0
  %4410 = vmatprep.mubr.bf16.mxu0 %v4277
  %4411 = vmatmul.mubr.bf16.gmra.mrb[0].mxu0 %v4147
  %v4412 = vpop.f32.mrb[0].mxu0
  %v4413 = vadd.f32 0.0, %v4412
  %v4414 = vpop.f32.mrb[0].mxu0
  %v4415 = vpop.f32.mrb[0].mxu0
  %v4416 = vadd.f32 0.0, %v4415
  %v4417 = vpop.f32.mrb[0].mxu0
  %4418 = vmatprep.mubr.bf16.mxu0 %v4280
  %4419 = vmatmul.mubr.bf16.gmra.mrb[0].mxu0 %v4151
  %v4420 = vpop.f32.mrb[0].mxu0
  %v4421 = vadd.f32 0.0, %v4420
  %v4422 = vpop.f32.mrb[0].mxu0
  %v4423 = vpop.f32.mrb[0].mxu0
  %v4424 = vadd.f32 0.0, %v4423
  %v4425 = vpop.f32.mrb[0].mxu0
  %4426 = vdwg.mxu0
  %v4427 = vld [vmem:[%s5] sm:$0xff]
  %v4428 = vld [vmem:[%s5 + $0x8] sm:$0xff]
  %v4429 = vld [vmem:[%s5 + $0x10] sm:$0xff]
  %v4430 = vld [vmem:[%s5 + $0x18] sm:$0xff]
  %v4431 = vld [vmem:[%s5 + $0x20] sm:$0xff]
  %v4432 = vld [vmem:[%s5 + $0x28] sm:$0xff]
  %v4433 = vld [vmem:[%s5 + $0x30] sm:$0xff]
  %v4434 = vld [vmem:[%s5 + $0x38] sm:$0xff]
  %v4435 = vld [vmem:[%s5 + $0x40] sm:$0xff]
  %v4436 = vld [vmem:[%s5 + $0x48] sm:$0xff]
  %v4437 = vld [vmem:[%s5 + $0x50] sm:$0xff]
  %v4438 = vld [vmem:[%s5 + $0x58] sm:$0xff]
  %v4439 = vld [vmem:[%s5 + $0x60] sm:$0xff]
  %v4440 = vld [vmem:[%s5 + $0x68] sm:$0xff]
  %v4441 = vld [vmem:[%s5 + $0x70] sm:$0xff]
  %v4442 = vld [vmem:[%s5 + $0x78] sm:$0xff]
  %v4443 = vld [vmem:[%s5 + $0x80] sm:$0xff]
  %v4444 = vld [vmem:[%s5 + $0x88] sm:$0xff]
  %v4445 = vld [vmem:[%s5 + $0x90] sm:$0xff]
  %v4446 = vld [vmem:[%s5 + $0x98] sm:$0xff]
  %v4447 = vld [vmem:[%s5 + $0xa0] sm:$0xff]
  %v4448 = vld [vmem:[%s5 + $0xa8] sm:$0xff]
  %v4449 = vld [vmem:[%s5 + $0xb0] sm:$0xff]
  %v4450 = vld [vmem:[%s5 + $0xb8] sm:$0xff]
  %v4451 = vld [vmem:[%s5 + $0xc0] sm:$0xff]
  %v4452 = vld [vmem:[%s5 + $0xc8] sm:$0xff]
  %v4453 = vld [vmem:[%s5 + $0xd0] sm:$0xff]
  %v4454 = vld [vmem:[%s5 + $0xd8] sm:$0xff]
  %v4455 = vadd.f32 %v4427, %v4317
  %v4456 = vadd.f32 %v4428, %v4320
  %v4457 = vadd.f32 %v4429, %v4325
  %v4458 = vadd.f32 %v4430, %v4328
  %v4459 = vadd.f32 %v4431, %v4333
  %v4460 = vadd.f32 %v4432, %v4336
  %v4461 = vadd.f32 %v4433, %v4341
  %v4462 = vadd.f32 %v4434, %v4344
  %v4463 = vadd.f32 %v4435, %v4349
  %v4464 = vadd.f32 %v4436, %v4352
  %v4465 = vadd.f32 %v4437, %v4357
  %v4466 = vadd.f32 %v4438, %v4360
  %v4467 = vadd.f32 %v4439, %v4365
  %v4468 = vadd.f32 %v4440, %v4368
  %v4469 = vadd.f32 %v4441, %v4373
  %v4470 = vadd.f32 %v4442, %v4376
  %v4471 = vadd.f32 %v4443, %v4381
  %v4472 = vadd.f32 %v4444, %v4384
  %v4473 = vadd.f32 %v4445, %v4389
  %v4474 = vadd.f32 %v4446, %v4392
  %v4475 = vadd.f32 %v4447, %v4397
  %v4476 = vadd.f32 %v4448, %v4400
  %v4477 = vadd.f32 %v4449, %v4405
  %v4478 = vadd.f32 %v4450, %v4408
  %v4479 = vadd.f32 %v4451, %v4413
  %v4480 = vadd.f32 %v4452, %v4416
  %v4481 = vadd.f32 %v4453, %v4421
  %v4482 = vadd.f32 %v4454, %v4424
  %4483 = vst.msk [vmem:[%s5] sm:$0xff] %vm1163, %v4455
  %4484 = vst.msk [vmem:[%s5 + $0x8] sm:$0xff] %vm1163, %v4456
  %4485 = vst.msk [vmem:[%s5 + $0x10] sm:$0xff] %vm1163, %v4457
  %4486 = vst.msk [vmem:[%s5 + $0x18] sm:$0xff] %vm1163, %v4458
  %4487 = vst.msk [vmem:[%s5 + $0x20] sm:$0xff] %vm1163, %v4459
  %4488 = vst.msk [vmem:[%s5 + $0x28] sm:$0xff] %vm1163, %v4460
  %4489 = vst.msk [vmem:[%s5 + $0x30] sm:$0xff] %vm1163, %v4461
  %4490 = vst.msk [vmem:[%s5 + $0x38] sm:$0xff] %vm1163, %v4462
  %4491 = vst.msk [vmem:[%s5 + $0x40] sm:$0xff] %vm1163, %v4463
  %4492 = vst.msk [vmem:[%s5 + $0x48] sm:$0xff] %vm1163, %v4464
  %4493 = vst.msk [vmem:[%s5 + $0x50] sm:$0xff] %vm1163, %v4465
  %4494 = vst.msk [vmem:[%s5 + $0x58] sm:$0xff] %vm1163, %v4466
  %4495 = vst.msk [vmem:[%s5 + $0x60] sm:$0xff] %vm1163, %v4467
  %4496 = vst.msk [vmem:[%s5 + $0x68] sm:$0xff] %vm1163, %v4468
  %4497 = vst.msk [vmem:[%s5 + $0x70] sm:$0xff] %vm1163, %v4469
  %4498 = vst.msk [vmem:[%s5 + $0x78] sm:$0xff] %vm1163, %v4470
  %4499 = vst.msk [vmem:[%s5 + $0x80] sm:$0xff] %vm1163, %v4471
  %4500 = vst.msk [vmem:[%s5 + $0x88] sm:$0xff] %vm1163, %v4472
  %4501 = vst.msk [vmem:[%s5 + $0x90] sm:$0xff] %vm1163, %v4473
  %4502 = vst.msk [vmem:[%s5 + $0x98] sm:$0xff] %vm1163, %v4474
  %4503 = vst.msk [vmem:[%s5 + $0xa0] sm:$0xff] %vm1163, %v4475
  %4504 = vst.msk [vmem:[%s5 + $0xa8] sm:$0xff] %vm1163, %v4476
  %4505 = vst.msk [vmem:[%s5 + $0xb0] sm:$0xff] %vm1163, %v4477
  %4506 = vst.msk [vmem:[%s5 + $0xb8] sm:$0xff] %vm1163, %v4478
  %4507 = vst.msk [vmem:[%s5 + $0xc0] sm:$0xff] %vm1163, %v4479
  %4508 = vst.msk [vmem:[%s5 + $0xc8] sm:$0xff] %vm1163, %v4480
  %4509 = vst.msk [vmem:[%s5 + $0xd0] sm:$0xff] %vm1163, %v4481
  %4510 = vst.msk [vmem:[%s5 + $0xd8] sm:$0xff] %vm1163, %v4482
  %v4511 = vld [vmem:[#allocation2 + $0x10] sm:$0x80]
  %v4512 = vld [vmem:[#allocation2 + $0x18] sm:$0x80]
  %v4513 = vld [vmem:[#allocation2 + $0x20] sm:$0xff]
  %v4514 = vld [vmem:[#allocation2 + $0x28] sm:$0xff]
  %v4515 = vld [vmem:[#allocation2 + $0x30] sm:$0xff]
  %v4516 = vld [vmem:[#allocation2 + $0x38] sm:$0xff]
  %v4517 = vld [vmem:[#allocation2 + $0x40] sm:$0xff]
  %v4518 = vld [vmem:[#allocation2 + $0x48] sm:$0xff]
  %v4519 = vld [vmem:[#allocation2 + $0x50] sm:$0xff]
  %v4520 = vld [vmem:[#allocation2 + $0x58] sm:$0xff]
  %v4521 = vld [vmem:[#allocation2 + $0x60] sm:$0xff]
  %v4522 = vld [vmem:[#allocation2 + $0x68] sm:$0xff]
  %v4523 = vld [vmem:[#allocation2 + $0x70] sm:$0xff]
  %v4524 = vld [vmem:[#allocation2 + $0x78] sm:$0xff]
  %v4525 = vld [vmem:[#allocation2 + $0x80] sm:$0xff]
  %v4526 = vld [vmem:[#allocation2 + $0x88] sm:$0xff]
  %v4527 = vld [vmem:[#allocation2 + $0x90] sm:$0xff]
  %v4528 = vld [vmem:[#allocation2 + $0x98] sm:$0xff]
  %v4529 = vld [vmem:[#allocation2 + $0xa0] sm:$0xff]
  %v4530 = vld [vmem:[#allocation2 + $0xa8] sm:$0xff]
  %v4531 = vld [vmem:[#allocation2 + $0xb0] sm:$0xff]
  %v4532 = vld [vmem:[#allocation2 + $0xb8] sm:$0xff]
  %v4533 = vld [vmem:[#allocation2 + $0xc0] sm:$0xff]
  %v4534 = vld [vmem:[#allocation2 + $0xc8] sm:$0xff]
  %v4535 = vld [vmem:[#allocation2 + $0xd0] sm:$0xff]
  %v4536 = vld [vmem:[#allocation2 + $0xd8] sm:$0xff]
  %v4537 = vld [vmem:[#allocation2 + $0xe0] sm:$0xff]
  %v4538 = vld [vmem:[#allocation2 + $0xe8] sm:$0xff]
  %v4539 = vld [vmem:[#allocation2 + $0xf0] sm:$0xff]
  %v4540 = vld [vmem:[#allocation2 + $0xf8] sm:$0xff]
  %s4541 = scalar_lea.vmem %s4, 384
  %v4542 = vld [vmem:[%s4541] sm:$0xf]
  %v4543 = vld [vmem:[%s4541 + $0x4] sm:$0xf]
  %v4544 = vld [vmem:[%s4541 + $0x8] sm:$0xf]
  %v4545 = vld [vmem:[%s4541 + $0xc] sm:$0xf]
  %v4546 = vld [vmem:[%s4541 + $0x10] sm:$0xf]
  %v4547 = vld [vmem:[%s4541 + $0x14] sm:$0xf]
  %v4548 = vld [vmem:[%s4541 + $0x18] sm:$0xf]
  %v4549 = vld [vmem:[%s4541 + $0x1c] sm:$0xf]
  %v4550 = vld [vmem:[%s4541 + $0x20] sm:$0xf]
  %v4551 = vld [vmem:[%s4541 + $0x24] sm:$0xf]
  %v4552 = vld [vmem:[%s4541 + $0x28] sm:$0xf]
  %v4553 = vld [vmem:[%s4541 + $0x2c] sm:$0xf]
  %v4554 = vld [vmem:[%s4541 + $0x30] sm:$0xf]
  %v4555 = vld [vmem:[%s4541 + $0x34] sm:$0xf]
  %v4556 = vld [vmem:[%s4541 + $0x38] sm:$0xf]
  %v4557 = vld [vmem:[%s4541 + $0x3c] sm:$0xf]
  %v4558 = vld [vmem:[%s4541 + $0x40] sm:$0xf]
  %v4559 = vld [vmem:[%s4541 + $0x44] sm:$0xf]
  %v4560 = vld [vmem:[%s4541 + $0x48] sm:$0xf]
  %v4561 = vld [vmem:[%s4541 + $0x4c] sm:$0xf]
  %v4562 = vld [vmem:[%s4541 + $0x50] sm:$0xf]
  %v4563 = vld [vmem:[%s4541 + $0x54] sm:$0xf]
  %v4564 = vld [vmem:[%s4541 + $0x58] sm:$0xf]
  %v4565 = vld [vmem:[%s4541 + $0x5c] sm:$0xf]
  %v4567 = vshrl.u32 %v4511, 16
  %v4569 = vrot.slane %v4567, 7
  %v4571 = vshrl.u32 %v4513, 16
  %v4573 = vrot.slane %v4571, 7
  %v4574 = vshll.u32 %v4513, 16
  %v4576 = vor.u32 %v4573, %v4574
  %v4577 = vsel %vm3025, %v4569, %v4576
  %v4579 = vshrl.u32 %v4512, 16
  %v4581 = vrot.slane %v4579, 7
  %v4583 = vshrl.u32 %v4514, 16
  %v4585 = vrot.slane %v4583, 7
  %v4586 = vshll.u32 %v4514, 16
  %v4588 = vor.u32 %v4585, %v4586
  %v4589 = vsel %vm3025, %v4581, %v4588
  %v4591 = vshrl.u32 %v4515, 16
  %v4593 = vrot.slane %v4591, 7
  %v4594 = vshll.u32 %v4515, 16
  %v4596 = vor.u32 %v4593, %v4594
  %v4597 = vsel %vm3025, %v4573, %v4596
  %v4599 = vshrl.u32 %v4516, 16
  %v4601 = vrot.slane %v4599, 7
  %v4602 = vshll.u32 %v4516, 16
  %v4604 = vor.u32 %v4601, %v4602
  %v4605 = vsel %vm3025, %v4585, %v4604
  %v4607 = vshrl.u32 %v4517, 16
  %v4609 = vrot.slane %v4607, 7
  %v4610 = vshll.u32 %v4517, 16
  %v4612 = vor.u32 %v4609, %v4610
  %v4613 = vsel %vm3025, %v4593, %v4612
  %v4615 = vshrl.u32 %v4518, 16
  %v4617 = vrot.slane %v4615, 7
  %v4618 = vshll.u32 %v4518, 16
  %v4620 = vor.u32 %v4617, %v4618
  %v4621 = vsel %vm3025, %v4601, %v4620
  %v4623 = vshrl.u32 %v4519, 16
  %v4625 = vrot.slane %v4623, 7
  %v4626 = vshll.u32 %v4519, 16
  %v4628 = vor.u32 %v4625, %v4626
  %v4629 = vsel %vm3025, %v4609, %v4628
  %v4631 = vshrl.u32 %v4520, 16
  %v4633 = vrot.slane %v4631, 7
  %v4634 = vshll.u32 %v4520, 16
  %v4636 = vor.u32 %v4633, %v4634
  %v4637 = vsel %vm3025, %v4617, %v4636
  %v4639 = vshrl.u32 %v4521, 16
  %v4641 = vrot.slane %v4639, 7
  %v4642 = vshll.u32 %v4521, 16
  %v4644 = vor.u32 %v4641, %v4642
  %v4645 = vsel %vm3025, %v4625, %v4644
  %v4647 = vshrl.u32 %v4522, 16
  %v4649 = vrot.slane %v4647, 7
  %v4650 = vshll.u32 %v4522, 16
  %v4652 = vor.u32 %v4649, %v4650
  %v4653 = vsel %vm3025, %v4633, %v4652
  %v4655 = vshrl.u32 %v4523, 16
  %v4657 = vrot.slane %v4655, 7
  %v4658 = vshll.u32 %v4523, 16
  %v4660 = vor.u32 %v4657, %v4658
  %v4661 = vsel %vm3025, %v4641, %v4660
  %v4663 = vshrl.u32 %v4524, 16
  %v4665 = vrot.slane %v4663, 7
  %v4666 = vshll.u32 %v4524, 16
  %v4668 = vor.u32 %v4665, %v4666
  %v4669 = vsel %vm3025, %v4649, %v4668
  %v4671 = vshrl.u32 %v4525, 16
  %v4673 = vrot.slane %v4671, 7
  %v4674 = vshll.u32 %v4525, 16
  %v4676 = vor.u32 %v4673, %v4674
  %v4677 = vsel %vm3025, %v4657, %v4676
  %v4679 = vshrl.u32 %v4526, 16
  %v4681 = vrot.slane %v4679, 7
  %v4682 = vshll.u32 %v4526, 16
  %v4684 = vor.u32 %v4681, %v4682
  %v4685 = vsel %vm3025, %v4665, %v4684
  %v4687 = vshrl.u32 %v4527, 16
  %v4689 = vrot.slane %v4687, 7
  %v4690 = vshll.u32 %v4527, 16
  %v4692 = vor.u32 %v4689, %v4690
  %v4693 = vsel %vm3025, %v4673, %v4692
  %v4695 = vshrl.u32 %v4528, 16
  %v4697 = vrot.slane %v4695, 7
  %v4698 = vshll.u32 %v4528, 16
  %v4700 = vor.u32 %v4697, %v4698
  %v4701 = vsel %vm3025, %v4681, %v4700
  %v4703 = vshrl.u32 %v4529, 16
  %v4705 = vrot.slane %v4703, 7
  %v4706 = vshll.u32 %v4529, 16
  %v4708 = vor.u32 %v4705, %v4706
  %v4709 = vsel %vm3025, %v4689, %v4708
  %v4711 = vshrl.u32 %v4530, 16
  %v4713 = vrot.slane %v4711, 7
  %v4714 = vshll.u32 %v4530, 16
  %v4716 = vor.u32 %v4713, %v4714
  %v4717 = vsel %vm3025, %v4697, %v4716
  %v4719 = vshrl.u32 %v4531, 16
  %v4721 = vrot.slane %v4719, 7
  %v4722 = vshll.u32 %v4531, 16
  %v4724 = vor.u32 %v4721, %v4722
  %v4725 = vsel %vm3025, %v4705, %v4724
  %v4727 = vshrl.u32 %v4532, 16
  %v4729 = vrot.slane %v4727, 7
  %v4730 = vshll.u32 %v4532, 16
  %v4732 = vor.u32 %v4729, %v4730
  %v4733 = vsel %vm3025, %v4713, %v4732
  %v4735 = vshrl.u32 %v4533, 16
  %v4737 = vrot.slane %v4735, 7
  %v4738 = vshll.u32 %v4533, 16
  %v4740 = vor.u32 %v4737, %v4738
  %v4741 = vsel %vm3025, %v4721, %v4740
  %v4743 = vshrl.u32 %v4534, 16
  %v4745 = vrot.slane %v4743, 7
  %v4746 = vshll.u32 %v4534, 16
  %v4748 = vor.u32 %v4745, %v4746
  %v4749 = vsel %vm3025, %v4729, %v4748
  %v4751 = vshrl.u32 %v4535, 16
  %v4753 = vrot.slane %v4751, 7
  %v4754 = vshll.u32 %v4535, 16
  %v4756 = vor.u32 %v4753, %v4754
  %v4757 = vsel %vm3025, %v4737, %v4756
  %v4759 = vshrl.u32 %v4536, 16
  %v4761 = vrot.slane %v4759, 7
  %v4762 = vshll.u32 %v4536, 16
  %v4764 = vor.u32 %v4761, %v4762
  %v4765 = vsel %vm3025, %v4745, %v4764
  %v4767 = vshrl.u32 %v4537, 16
  %v4769 = vrot.slane %v4767, 7
  %v4770 = vshll.u32 %v4537, 16
  %v4772 = vor.u32 %v4769, %v4770
  %v4773 = vsel %vm3025, %v4753, %v4772
  %v4775 = vshrl.u32 %v4538, 16
  %v4777 = vrot.slane %v4775, 7
  %v4778 = vshll.u32 %v4538, 16
  %v4780 = vor.u32 %v4777, %v4778
  %v4781 = vsel %vm3025, %v4761, %v4780
  %v4783 = vshrl.u32 %v4539, 16
  %v4785 = vrot.slane %v4783, 7
  %v4786 = vshll.u32 %v4539, 16
  %v4788 = vor.u32 %v4785, %v4786
  %v4789 = vsel %vm3025, %v4769, %v4788
  %v4791 = vshrl.u32 %v4540, 16
  %v4793 = vrot.slane %v4791, 7
  %v4794 = vshll.u32 %v4540, 16
  %v4796 = vor.u32 %v4793, %v4794
  %v4797 = vsel %vm3025, %v4777, %v4796
  %v4836 = vunpack.c.l.b16 %v4542
  %v4837 = vunpack.c.l.b16 %v4543
  %v4838 = vunpack.c.l.b16 %v4544
  %v4839 = vunpack.c.l.b16 %v4545
  %v4840 = vunpack.c.l.b16 %v4546
  %v4841 = vunpack.c.l.b16 %v4547
  %v4842 = vunpack.c.l.b16 %v4548
  %v4843 = vunpack.c.l.b16 %v4549
  %v4844 = vunpack.c.l.b16 %v4550
  %v4845 = vunpack.c.l.b16 %v4551
  %v4846 = vunpack.c.l.b16 %v4552
  %v4847 = vunpack.c.l.b16 %v4553
  %v4848 = vunpack.c.l.b16 %v4554
  %v4849 = vunpack.c.l.b16 %v4555
  %v4850 = vunpack.c.l.b16 %v4556
  %v4851 = vunpack.c.l.b16 %v4557
  %v4852 = vunpack.c.l.b16 %v4558
  %v4853 = vunpack.c.l.b16 %v4559
  %v4854 = vunpack.c.l.b16 %v4560
  %v4855 = vunpack.c.l.b16 %v4561
  %v4856 = vunpack.c.l.b16 %v4562
  %v4857 = vunpack.c.l.b16 %v4563
  %v4858 = vunpack.c.l.b16 %v4564
  %v4859 = vunpack.c.l.b16 %v4565
  %v4860 = vpack.c.b16 %v4837, %v4836
  %v4861 = vpack.c.b16 %v4839, %v4838
  %v4862 = vpack.c.b16 %v4841, %v4840
  %v4863 = vpack.c.b16 %v4843, %v4842
  %v4864 = vpack.c.b16 %v4845, %v4844
  %v4865 = vpack.c.b16 %v4847, %v4846
  %v4866 = vpack.c.b16 %v4849, %v4848
  %v4867 = vpack.c.b16 %v4851, %v4850
  %v4868 = vpack.c.b16 %v4853, %v4852
  %v4869 = vpack.c.b16 %v4855, %v4854
  %v4870 = vpack.c.b16 %v4857, %v4856
  %v4871 = vpack.c.b16 %v4859, %v4858
  %v4885 = vsel %vm1879, %v4589, 0
  %v4888 = vsel %vm1879, %v4605, 0
  %v4891 = vsel %vm1879, %v4621, 0
  %v4894 = vsel %vm1879, %v4637, 0
  %v4897 = vsel %vm1879, %v4653, 0
  %v4900 = vsel %vm1879, %v4669, 0
  %v4903 = vsel %vm1879, %v4685, 0
  %v4906 = vsel %vm1879, %v4701, 0
  %v4909 = vsel %vm1879, %v4717, 0
  %v4912 = vsel %vm1879, %v4733, 0
  %v4915 = vsel %vm1879, %v4749, 0
  %v4918 = vsel %vm1879, %v4765, 0
  %v4921 = vsel %vm1879, %v4781, 0
  %v4924 = vsel %vm1879, %v4797, 0
  %4926 = vmatprep.subr.bf16.mxu0 0
  %4927 = vmatpush1.bf16.msra.mxu0 %v4860
  %4928 = vmatprep.subr.bf16.mxu0 0
  %4929 = vmatpush1.bf16.msra.mxu0 %v4861
  %4930 = vmatprep.subr.bf16.mxu0 0
  %4931 = vmatpush1.bf16.msra.mxu0 %v4862
  %4932 = vmatprep.subr.bf16.mxu0 0
  %4933 = vmatpush1.bf16.msra.mxu0 %v4863
  %4934 = vmatprep.subr.bf16.mxu0 0
  %4935 = vmatpush1.bf16.msra.mxu0 %v4864
  %4936 = vmatprep.subr.bf16.mxu0 0
  %4937 = vmatpush1.bf16.msra.mxu0 %v4865
  %4938 = vmatprep.subr.bf16.mxu0 0
  %4939 = vmatpush1.bf16.msra.mxu0 %v4866
  %4940 = vmatprep.subr.bf16.mxu0 0
  %4941 = vmatpush1.bf16.msra.mxu0 %v4867
  %4942 = vmatprep.subr.bf16.mxu0 0
  %4943 = vmatpush1.bf16.msra.mxu0 %v4868
  %4944 = vmatprep.subr.bf16.mxu0 0
  %4945 = vmatpush1.bf16.msra.mxu0 %v4869
  %4946 = vmatprep.subr.bf16.mxu0 0
  %4947 = vmatpush1.bf16.msra.mxu0 %v4870
  %4948 = vmatprep.subr.bf16.mxu0 0
  %4949 = vmatpush1.bf16.msra.mxu0 %v4871
  %4950 = vmatprep.subr.bf16.mxu0 0
  %4951 = vmatpush1.bf16.msra.mxu0 0
  %4952 = vmatprep.subr.bf16.mxu0 0
  %4953 = vmatpush1.bf16.msra.mxu0 0
  %4954 = vmatprep.subr.bf16.mxu0 0
  %4955 = vmatpush1.bf16.msra.mxu0 0
  %4956 = vmatprep.subr.bf16.mxu0 0
  %4957 = vmatpush1.bf16.msra.mxu0 0
  %4958 = vmatprep.mubr.bf16.mxu0 %v4885
  %4959 = vmatmul.mubr.bf16.gmra.mrb[0].mxu0 %v4577
  %v4960 = vpop.f32.mrb[0].mxu0
  %v4961 = vadd.f32 0.0, %v4960
  %v4962 = vpop.f32.mrb[0].mxu0
  %v4963 = vpop.f32.mrb[0].mxu0
  %v4964 = vadd.f32 0.0, %v4963
  %v4965 = vpop.f32.mrb[0].mxu0
  %4966 = vmatprep.mubr.bf16.mxu0 %v4888
  %4967 = vmatmul.mubr.bf16.gmra.mrb[0].mxu0 %v4597
  %v4968 = vpop.f32.mrb[0].mxu0
  %v4969 = vadd.f32 0.0, %v4968
  %v4970 = vpop.f32.mrb[0].mxu0
  %v4971 = vpop.f32.mrb[0].mxu0
  %v4972 = vadd.f32 0.0, %v4971
  %v4973 = vpop.f32.mrb[0].mxu0
  %4974 = vmatprep.mubr.bf16.mxu0 %v4891
  %4975 = vmatmul.mubr.bf16.gmra.mrb[0].mxu0 %v4613
  %v4976 = vpop.f32.mrb[0].mxu0
  %v4977 = vadd.f32 0.0, %v4976
  %v4978 = vpop.f32.mrb[0].mxu0
  %v4979 = vpop.f32.mrb[0].mxu0
  %v4980 = vadd.f32 0.0, %v4979
  %v4981 = vpop.f32.mrb[0].mxu0
  %4982 = vmatprep.mubr.bf16.mxu0 %v4894
  %4983 = vmatmul.mubr.bf16.gmra.mrb[0].mxu0 %v4629
  %v4984 = vpop.f32.mrb[0].mxu0
  %v4985 = vadd.f32 0.0, %v4984
  %v4986 = vpop.f32.mrb[0].mxu0
  %v4987 = vpop.f32.mrb[0].mxu0
  %v4988 = vadd.f32 0.0, %v4987
  %v4989 = vpop.f32.mrb[0].mxu0
  %4990 = vmatprep.mubr.bf16.mxu0 %v4897
  %4991 = vmatmul.mubr.bf16.gmra.mrb[0].mxu0 %v4645
  %v4992 = vpop.f32.mrb[0].mxu0
  %v4993 = vadd.f32 0.0, %v4992
  %v4994 = vpop.f32.mrb[0].mxu0
  %v4995 = vpop.f32.mrb[0].mxu0
  %v4996 = vadd.f32 0.0, %v4995
  %v4997 = vpop.f32.mrb[0].mxu0
  %4998 = vmatprep.mubr.bf16.mxu0 %v4900
  %4999 = vmatmul.mubr.bf16.gmra.mrb[0].mxu0 %v4661
  %v5000 = vpop.f32.mrb[0].mxu0
  %v5001 = vadd.f32 0.0, %v5000
  %v5002 = vpop.f32.mrb[0].mxu0
  %v5003 = vpop.f32.mrb[0].mxu0
  %v5004 = vadd.f32 0.0, %v5003
  %v5005 = vpop.f32.mrb[0].mxu0
  %5006 = vmatprep.mubr.bf16.mxu0 %v4903
  %5007 = vmatmul.mubr.bf16.gmra.mrb[0].mxu0 %v4677
  %v5008 = vpop.f32.mrb[0].mxu0
  %v5009 = vadd.f32 0.0, %v5008
  %v5010 = vpop.f32.mrb[0].mxu0
  %v5011 = vpop.f32.mrb[0].mxu0
  %v5012 = vadd.f32 0.0, %v5011
  %v5013 = vpop.f32.mrb[0].mxu0
  %5014 = vmatprep.mubr.bf16.mxu0 %v4906
  %5015 = vmatmul.mubr.bf16.gmra.mrb[0].mxu0 %v4693
  %v5016 = vpop.f32.mrb[0].mxu0
  %v5017 = vadd.f32 0.0, %v5016
  %v5018 = vpop.f32.mrb[0].mxu0
  %v5019 = vpop.f32.mrb[0].mxu0
  %v5020 = vadd.f32 0.0, %v5019
  %v5021 = vpop.f32.mrb[0].mxu0
  %5022 = vmatprep.mubr.bf16.mxu0 %v4909
  %5023 = vmatmul.mubr.bf16.gmra.mrb[0].mxu0 %v4709
  %v5024 = vpop.f32.mrb[0].mxu0
  %v5025 = vadd.f32 0.0, %v5024
  %v5026 = vpop.f32.mrb[0].mxu0
  %v5027 = vpop.f32.mrb[0].mxu0
  %v5028 = vadd.f32 0.0, %v5027
  %v5029 = vpop.f32.mrb[0].mxu0
  %5030 = vmatprep.mubr.bf16.mxu0 %v4912
  %5031 = vmatmul.mubr.bf16.gmra.mrb[0].mxu0 %v4725
  %v5032 = vpop.f32.mrb[0].mxu0
  %v5033 = vadd.f32 0.0, %v5032
  %v5034 = vpop.f32.mrb[0].mxu0
  %v5035 = vpop.f32.mrb[0].mxu0
  %v5036 = vadd.f32 0.0, %v5035
  %v5037 = vpop.f32.mrb[0].mxu0
  %5038 = vmatprep.mubr.bf16.mxu0 %v4915
  %5039 = vmatmul.mubr.bf16.gmra.mrb[0].mxu0 %v4741
  %v5040 = vpop.f32.mrb[0].mxu0
  %v5041 = vadd.f32 0.0, %v5040
  %v5042 = vpop.f32.mrb[0].mxu0
  %v5043 = vpop.f32.mrb[0].mxu0
  %v5044 = vadd.f32 0.0, %v5043
  %v5045 = vpop.f32.mrb[0].mxu0
  %5046 = vmatprep.mubr.bf16.mxu0 %v4918
  %5047 = vmatmul.mubr.bf16.gmra.mrb[0].mxu0 %v4757
  %v5048 = vpop.f32.mrb[0].mxu0
  %v5049 = vadd.f32 0.0, %v5048
  %v5050 = vpop.f32.mrb[0].mxu0
  %v5051 = vpop.f32.mrb[0].mxu0
  %v5052 = vadd.f32 0.0, %v5051
  %v5053 = vpop.f32.mrb[0].mxu0
  %5054 = vmatprep.mubr.bf16.mxu0 %v4921
  %5055 = vmatmul.mubr.bf16.gmra.mrb[0].mxu0 %v4773
  %v5056 = vpop.f32.mrb[0].mxu0
  %v5057 = vadd.f32 0.0, %v5056
  %v5058 = vpop.f32.mrb[0].mxu0
  %v5059 = vpop.f32.mrb[0].mxu0
  %v5060 = vadd.f32 0.0, %v5059
  %v5061 = vpop.f32.mrb[0].mxu0
  %5062 = vmatprep.mubr.bf16.mxu0 %v4924
  %5063 = vmatmul.mubr.bf16.gmra.mrb[0].mxu0 %v4789
  %v5064 = vpop.f32.mrb[0].mxu0
  %v5065 = vadd.f32 0.0, %v5064
  %v5066 = vpop.f32.mrb[0].mxu0
  %v5067 = vpop.f32.mrb[0].mxu0
  %v5068 = vadd.f32 0.0, %v5067
  %v5069 = vpop.f32.mrb[0].mxu0
  %5070 = vdwg.mxu0
  %v5071 = vld [vmem:[%s5] sm:$0xff]
  %v5072 = vld [vmem:[%s5 + $0x8] sm:$0xff]
  %v5073 = vld [vmem:[%s5 + $0x10] sm:$0xff]
  %v5074 = vld [vmem:[%s5 + $0x18] sm:$0xff]
  %v5075 = vld [vmem:[%s5 + $0x20] sm:$0xff]
  %v5076 = vld [vmem:[%s5 + $0x28] sm:$0xff]
  %v5077 = vld [vmem:[%s5 + $0x30] sm:$0xff]
  %v5078 = vld [vmem:[%s5 + $0x38] sm:$0xff]
  %v5079 = vld [vmem:[%s5 + $0x40] sm:$0xff]
  %v5080 = vld [vmem:[%s5 + $0x48] sm:$0xff]
  %v5081 = vld [vmem:[%s5 + $0x50] sm:$0xff]
  %v5082 = vld [vmem:[%s5 + $0x58] sm:$0xff]
  %v5083 = vld [vmem:[%s5 + $0x60] sm:$0xff]
  %v5084 = vld [vmem:[%s5 + $0x68] sm:$0xff]
  %v5085 = vld [vmem:[%s5 + $0x70] sm:$0xff]
  %v5086 = vld [vmem:[%s5 + $0x78] sm:$0xff]
  %v5087 = vld [vmem:[%s5 + $0x80] sm:$0xff]
  %v5088 = vld [vmem:[%s5 + $0x88] sm:$0xff]
  %v5089 = vld [vmem:[%s5 + $0x90] sm:$0xff]
  %v5090 = vld [vmem:[%s5 + $0x98] sm:$0xff]
  %v5091 = vld [vmem:[%s5 + $0xa0] sm:$0xff]
  %v5092 = vld [vmem:[%s5 + $0xa8] sm:$0xff]
  %v5093 = vld [vmem:[%s5 + $0xb0] sm:$0xff]
  %v5094 = vld [vmem:[%s5 + $0xb8] sm:$0xff]
  %v5095 = vld [vmem:[%s5 + $0xc0] sm:$0xff]
  %v5096 = vld [vmem:[%s5 + $0xc8] sm:$0xff]
  %v5097 = vld [vmem:[%s5 + $0xd0] sm:$0xff]
  %v5098 = vld [vmem:[%s5 + $0xd8] sm:$0xff]
  %v5099 = vadd.f32 %v5071, %v4961
  %v5100 = vadd.f32 %v5072, %v4964
  %v5101 = vadd.f32 %v5073, %v4969
  %v5102 = vadd.f32 %v5074, %v4972
  %v5103 = vadd.f32 %v5075, %v4977
  %v5104 = vadd.f32 %v5076, %v4980
  %v5105 = vadd.f32 %v5077, %v4985
  %v5106 = vadd.f32 %v5078, %v4988
  %v5107 = vadd.f32 %v5079, %v4993
  %v5108 = vadd.f32 %v5080, %v4996
  %v5109 = vadd.f32 %v5081, %v5001
  %v5110 = vadd.f32 %v5082, %v5004
  %v5111 = vadd.f32 %v5083, %v5009
  %v5112 = vadd.f32 %v5084, %v5012
  %v5113 = vadd.f32 %v5085, %v5017
  %v5114 = vadd.f32 %v5086, %v5020
  %v5115 = vadd.f32 %v5087, %v5025
  %v5116 = vadd.f32 %v5088, %v5028
  %v5117 = vadd.f32 %v5089, %v5033
  %v5118 = vadd.f32 %v5090, %v5036
  %v5119 = vadd.f32 %v5091, %v5041
  %v5120 = vadd.f32 %v5092, %v5044
  %v5121 = vadd.f32 %v5093, %v5049
  %v5122 = vadd.f32 %v5094, %v5052
  %v5123 = vadd.f32 %v5095, %v5057
  %v5124 = vadd.f32 %v5096, %v5060
  %v5125 = vadd.f32 %v5097, %v5065
  %v5126 = vadd.f32 %v5098, %v5068
  %5127 = vst.msk [vmem:[%s5] sm:$0xff] %vm1163, %v5099
  %5128 = vst.msk [vmem:[%s5 + $0x8] sm:$0xff] %vm1163, %v5100
  %5129 = vst.msk [vmem:[%s5 + $0x10] sm:$0xff] %vm1163, %v5101
  %5130 = vst.msk [vmem:[%s5 + $0x18] sm:$0xff] %vm1163, %v5102
  %5131 = vst.msk [vmem:[%s5 + $0x20] sm:$0xff] %vm1163, %v5103
  %5132 = vst.msk [vmem:[%s5 + $0x28] sm:$0xff] %vm1163, %v5104
  %5133 = vst.msk [vmem:[%s5 + $0x30] sm:$0xff] %vm1163, %v5105
  %5134 = vst.msk [vmem:[%s5 + $0x38] sm:$0xff] %vm1163, %v5106
  %5135 = vst.msk [vmem:[%s5 + $0x40] sm:$0xff] %vm1163, %v5107
  %5136 = vst.msk [vmem:[%s5 + $0x48] sm:$0xff] %vm1163, %v5108
  %5137 = vst.msk [vmem:[%s5 + $0x50] sm:$0xff] %vm1163, %v5109
  %5138 = vst.msk [vmem:[%s5 + $0x58] sm:$0xff] %vm1163, %v5110
  %5139 = vst.msk [vmem:[%s5 + $0x60] sm:$0xff] %vm1163, %v5111
  %5140 = vst.msk [vmem:[%s5 + $0x68] sm:$0xff] %vm1163, %v5112
  %5141 = vst.msk [vmem:[%s5 + $0x70] sm:$0xff] %vm1163, %v5113
  %5142 = vst.msk [vmem:[%s5 + $0x78] sm:$0xff] %vm1163, %v5114
  %5143 = vst.msk [vmem:[%s5 + $0x80] sm:$0xff] %vm1163, %v5115
  %5144 = vst.msk [vmem:[%s5 + $0x88] sm:$0xff] %vm1163, %v5116
  %5145 = vst.msk [vmem:[%s5 + $0x90] sm:$0xff] %vm1163, %v5117
  %5146 = vst.msk [vmem:[%s5 + $0x98] sm:$0xff] %vm1163, %v5118
  %5147 = vst.msk [vmem:[%s5 + $0xa0] sm:$0xff] %vm1163, %v5119
  %5148 = vst.msk [vmem:[%s5 + $0xa8] sm:$0xff] %vm1163, %v5120
  %5149 = vst.msk [vmem:[%s5 + $0xb0] sm:$0xff] %vm1163, %v5121
  %5150 = vst.msk [vmem:[%s5 + $0xb8] sm:$0xff] %vm1163, %v5122
  %5151 = vst.msk [vmem:[%s5 + $0xc0] sm:$0xff] %vm1163, %v5123
  %5152 = vst.msk [vmem:[%s5 + $0xc8] sm:$0xff] %vm1163, %v5124
  %5153 = vst.msk [vmem:[%s5 + $0xd0] sm:$0xff] %vm1163, %v5125
  %5154 = vst.msk [vmem:[%s5 + $0xd8] sm:$0xff] %vm1163, %v5126
  %v5155 = vld [vmem:[#allocation2 + $0x20] sm:$0xff]
  %v5156 = vld [vmem:[#allocation2 + $0x28] sm:$0xff]
  %v5157 = vld [vmem:[#allocation2 + $0x30] sm:$0xff]
  %v5158 = vld [vmem:[#allocation2 + $0x38] sm:$0xff]
  %v5159 = vld [vmem:[#allocation2 + $0x40] sm:$0xff]
  %v5160 = vld [vmem:[#allocation2 + $0x48] sm:$0xff]
  %v5161 = vld [vmem:[#allocation2 + $0x50] sm:$0xff]
  %v5162 = vld [vmem:[#allocation2 + $0x58] sm:$0xff]
  %v5163 = vld [vmem:[#allocation2 + $0x60] sm:$0xff]
  %v5164 = vld [vmem:[#allocation2 + $0x68] sm:$0xff]
  %v5165 = vld [vmem:[#allocation2 + $0x70] sm:$0xff]
  %v5166 = vld [vmem:[#allocation2 + $0x78] sm:$0xff]
  %v5167 = vld [vmem:[#allocation2 + $0x80] sm:$0xff]
  %v5168 = vld [vmem:[#allocation2 + $0x88] sm:$0xff]
  %v5169 = vld [vmem:[#allocation2 + $0x90] sm:$0xff]
  %v5170 = vld [vmem:[#allocation2 + $0x98] sm:$0xff]
  %v5171 = vld [vmem:[#allocation2 + $0xa0] sm:$0xff]
  %v5172 = vld [vmem:[#allocation2 + $0xa8] sm:$0xff]
  %v5173 = vld [vmem:[#allocation2 + $0xb0] sm:$0xff]
  %v5174 = vld [vmem:[#allocation2 + $0xb8] sm:$0xff]
  %v5175 = vld [vmem:[#allocation2 + $0xc0] sm:$0xff]
  %v5176 = vld [vmem:[#allocation2 + $0xc8] sm:$0xff]
  %v5177 = vld [vmem:[#allocation2 + $0xd0] sm:$0xff]
  %v5178 = vld [vmem:[#allocation2 + $0xd8] sm:$0xff]
  %v5179 = vld [vmem:[#allocation2 + $0xe0] sm:$0xff]
  %v5180 = vld [vmem:[#allocation2 + $0xe8] sm:$0xff]
  %v5181 = vld [vmem:[#allocation2 + $0xf0] sm:$0xff]
  %v5182 = vld [vmem:[#allocation2 + $0xf8] sm:$0xff]
  %s5183 = scalar_lea.vmem %s4, 480
  %v5184 = vld [vmem:[%s5183] sm:$0xf]
  %v5185 = vld [vmem:[%s5183 + $0x4] sm:$0xf]
  %v5186 = vld [vmem:[%s5183 + $0x8] sm:$0xf]
  %v5187 = vld [vmem:[%s5183 + $0xc] sm:$0xf]
  %v5188 = vld [vmem:[%s5183 + $0x10] sm:$0xf]
  %v5189 = vld [vmem:[%s5183 + $0x14] sm:$0xf]
  %v5190 = vld [vmem:[%s5183 + $0x18] sm:$0xf]
  %v5191 = vld [vmem:[%s5183 + $0x1c] sm:$0xf]
  %v5192 = vld [vmem:[%s5183 + $0x20] sm:$0xf]
  %v5193 = vld [vmem:[%s5183 + $0x24] sm:$0xf]
  %v5194 = vld [vmem:[%s5183 + $0x28] sm:$0xf]
  %v5195 = vld [vmem:[%s5183 + $0x2c] sm:$0xf]
  %v5196 = vld [vmem:[%s5183 + $0x30] sm:$0xf]
  %v5197 = vld [vmem:[%s5183 + $0x34] sm:$0xf]
  %v5198 = vld [vmem:[%s5183 + $0x38] sm:$0xf]
  %v5199 = vld [vmem:[%s5183 + $0x3c] sm:$0xf]
  %v5200 = vld [vmem:[%s5183 + $0x40] sm:$0xf]
  %v5201 = vld [vmem:[%s5183 + $0x44] sm:$0xf]
  %v5202 = vld [vmem:[%s5183 + $0x48] sm:$0xf]
  %v5203 = vld [vmem:[%s5183 + $0x4c] sm:$0xf]
  %v5204 = vld [vmem:[%s5183 + $0x50] sm:$0xf]
  %v5205 = vld [vmem:[%s5183 + $0x54] sm:$0xf]
  %v5206 = vld [vmem:[%s5183 + $0x58] sm:$0xf]
  %v5207 = vld [vmem:[%s5183 + $0x5c] sm:$0xf]
  %v5232 = vunpack.c.l.b16 %v5184
  %v5233 = vunpack.c.l.b16 %v5185
  %v5234 = vunpack.c.l.b16 %v5186
  %v5235 = vunpack.c.l.b16 %v5187
  %v5236 = vunpack.c.l.b16 %v5188
  %v5237 = vunpack.c.l.b16 %v5189
  %v5238 = vunpack.c.l.b16 %v5190
  %v5239 = vunpack.c.l.b16 %v5191
  %v5240 = vunpack.c.l.b16 %v5192
  %v5241 = vunpack.c.l.b16 %v5193
  %v5242 = vunpack.c.l.b16 %v5194
  %v5243 = vunpack.c.l.b16 %v5195
  %v5244 = vunpack.c.l.b16 %v5196
  %v5245 = vunpack.c.l.b16 %v5197
  %v5246 = vunpack.c.l.b16 %v5198
  %v5247 = vunpack.c.l.b16 %v5199
  %v5248 = vunpack.c.l.b16 %v5200
  %v5249 = vunpack.c.l.b16 %v5201
  %v5250 = vunpack.c.l.b16 %v5202
  %v5251 = vunpack.c.l.b16 %v5203
  %v5252 = vunpack.c.l.b16 %v5204
  %v5253 = vunpack.c.l.b16 %v5205
  %v5254 = vunpack.c.l.b16 %v5206
  %v5255 = vunpack.c.l.b16 %v5207
  %v5256 = vpack.c.b16 %v5233, %v5232
  %v5257 = vpack.c.b16 %v5235, %v5234
  %v5258 = vpack.c.b16 %v5237, %v5236
  %v5259 = vpack.c.b16 %v5239, %v5238
  %v5260 = vpack.c.b16 %v5241, %v5240
  %v5261 = vpack.c.b16 %v5243, %v5242
  %v5262 = vpack.c.b16 %v5245, %v5244
  %v5263 = vpack.c.b16 %v5247, %v5246
  %v5264 = vpack.c.b16 %v5249, %v5248
  %v5265 = vpack.c.b16 %v5251, %v5250
  %v5266 = vpack.c.b16 %v5253, %v5252
  %v5267 = vpack.c.b16 %v5255, %v5254
  %v5281 = vsel %vm1879, %v5156, 0
  %v5284 = vsel %vm1879, %v5158, 0
  %v5287 = vsel %vm1879, %v5160, 0
  %v5290 = vsel %vm1879, %v5162, 0
  %v5293 = vsel %vm1879, %v5164, 0
  %v5296 = vsel %vm1879, %v5166, 0
  %v5299 = vsel %vm1879, %v5168, 0
  %v5302 = vsel %vm1879, %v5170, 0
  %v5305 = vsel %vm1879, %v5172, 0
  %v5308 = vsel %vm1879, %v5174, 0
  %v5311 = vsel %vm1879, %v5176, 0
  %v5314 = vsel %vm1879, %v5178, 0
  %v5317 = vsel %vm1879, %v5180, 0
  %v5320 = vsel %vm1879, %v5182, 0
  %5322 = vmatprep.subr.bf16.mxu0 0
  %5323 = vmatpush1.bf16.msra.mxu0 %v5256
  %5324 = vmatprep.subr.bf16.mxu0 0
  %5325 = vmatpush1.bf16.msra.mxu0 %v5257
  %5326 = vmatprep.subr.bf16.mxu0 0
  %5327 = vmatpush1.bf16.msra.mxu0 %v5258
  %5328 = vmatprep.subr.bf16.mxu0 0
  %5329 = vmatpush1.bf16.msra.mxu0 %v5259
  %5330 = vmatprep.subr.bf16.mxu0 0
  %5331 = vmatpush1.bf16.msra.mxu0 %v5260
  %5332 = vmatprep.subr.bf16.mxu0 0
  %5333 = vmatpush1.bf16.msra.mxu0 %v5261
  %5334 = vmatprep.subr.bf16.mxu0 0
  %5335 = vmatpush1.bf16.msra.mxu0 %v5262
  %5336 = vmatprep.subr.bf16.mxu0 0
  %5337 = vmatpush1.bf16.msra.mxu0 %v5263
  %5338 = vmatprep.subr.bf16.mxu0 0
  %5339 = vmatpush1.bf16.msra.mxu0 %v5264
  %5340 = vmatprep.subr.bf16.mxu0 0
  %5341 = vmatpush1.bf16.msra.mxu0 %v5265
  %5342 = vmatprep.subr.bf16.mxu0 0
  %5343 = vmatpush1.bf16.msra.mxu0 %v5266
  %5344 = vmatprep.subr.bf16.mxu0 0
  %5345 = vmatpush1.bf16.msra.mxu0 %v5267
  %5346 = vmatprep.subr.bf16.mxu0 0
  %5347 = vmatpush1.bf16.msra.mxu0 0
  %5348 = vmatprep.subr.bf16.mxu0 0
  %5349 = vmatpush1.bf16.msra.mxu0 0
  %5350 = vmatprep.subr.bf16.mxu0 0
  %5351 = vmatpush1.bf16.msra.mxu0 0
  %5352 = vmatprep.subr.bf16.mxu0 0
  %5353 = vmatpush1.bf16.msra.mxu0 0
  %5354 = vmatprep.mubr.bf16.mxu0 %v5281
  %5355 = vmatmul.mubr.bf16.gmra.mrb[0].mxu0 %v5155
  %v5356 = vpop.f32.mrb[0].mxu0
  %v5357 = vadd.f32 0.0, %v5356
  %v5358 = vpop.f32.mrb[0].mxu0
  %v5359 = vpop.f32.mrb[0].mxu0
  %v5360 = vadd.f32 0.0, %v5359
  %v5361 = vpop.f32.mrb[0].mxu0
  %5362 = vmatprep.mubr.bf16.mxu0 %v5284
  %5363 = vmatmul.mubr.bf16.gmra.mrb[0].mxu0 %v5157
  %v5364 = vpop.f32.mrb[0].mxu0
  %v5365 = vadd.f32 0.0, %v5364
  %v5366 = vpop.f32.mrb[0].mxu0
  %v5367 = vpop.f32.mrb[0].mxu0
  %v5368 = vadd.f32 0.0, %v5367
  %v5369 = vpop.f32.mrb[0].mxu0
  %5370 = vmatprep.mubr.bf16.mxu0 %v5287
  %5371 = vmatmul.mubr.bf16.gmra.mrb[0].mxu0 %v5159
  %v5372 = vpop.f32.mrb[0].mxu0
  %v5373 = vadd.f32 0.0, %v5372
  %v5374 = vpop.f32.mrb[0].mxu0
  %v5375 = vpop.f32.mrb[0].mxu0
  %v5376 = vadd.f32 0.0, %v5375
  %v5377 = vpop.f32.mrb[0].mxu0
  %5378 = vmatprep.mubr.bf16.mxu0 %v5290
  %5379 = vmatmul.mubr.bf16.gmra.mrb[0].mxu0 %v5161
  %v5380 = vpop.f32.mrb[0].mxu0
  %v5381 = vadd.f32 0.0, %v5380
  %v5382 = vpop.f32.mrb[0].mxu0
  %v5383 = vpop.f32.mrb[0].mxu0
  %v5384 = vadd.f32 0.0, %v5383
  %v5385 = vpop.f32.mrb[0].mxu0
  %5386 = vmatprep.mubr.bf16.mxu0 %v5293
  %5387 = vmatmul.mubr.bf16.gmra.mrb[0].mxu0 %v5163
  %v5388 = vpop.f32.mrb[0].mxu0
  %v5389 = vadd.f32 0.0, %v5388
  %v5390 = vpop.f32.mrb[0].mxu0
  %v5391 = vpop.f32.mrb[0].mxu0
  %v5392 = vadd.f32 0.0, %v5391
  %v5393 = vpop.f32.mrb[0].mxu0
  %5394 = vmatprep.mubr.bf16.mxu0 %v5296
  %5395 = vmatmul.mubr.bf16.gmra.mrb[0].mxu0 %v5165
  %v5396 = vpop.f32.mrb[0].mxu0
  %v5397 = vadd.f32 0.0, %v5396
  %v5398 = vpop.f32.mrb[0].mxu0
  %v5399 = vpop.f32.mrb[0].mxu0
  %v5400 = vadd.f32 0.0, %v5399
  %v5401 = vpop.f32.mrb[0].mxu0
  %5402 = vmatprep.mubr.bf16.mxu0 %v5299
  %5403 = vmatmul.mubr.bf16.gmra.mrb[0].mxu0 %v5167
  %v5404 = vpop.f32.mrb[0].mxu0
  %v5405 = vadd.f32 0.0, %v5404
  %v5406 = vpop.f32.mrb[0].mxu0
  %v5407 = vpop.f32.mrb[0].mxu0
  %v5408 = vadd.f32 0.0, %v5407
  %v5409 = vpop.f32.mrb[0].mxu0
  %5410 = vmatprep.mubr.bf16.mxu0 %v5302
  %5411 = vmatmul.mubr.bf16.gmra.mrb[0].mxu0 %v5169
  %v5412 = vpop.f32.mrb[0].mxu0
  %v5413 = vadd.f32 0.0, %v5412
  %v5414 = vpop.f32.mrb[0].mxu0
  %v5415 = vpop.f32.mrb[0].mxu0
  %v5416 = vadd.f32 0.0, %v5415
  %v5417 = vpop.f32.mrb[0].mxu0
  %5418 = vmatprep.mubr.bf16.mxu0 %v5305
  %5419 = vmatmul.mubr.bf16.gmra.mrb[0].mxu0 %v5171
  %v5420 = vpop.f32.mrb[0].mxu0
  %v5421 = vadd.f32 0.0, %v5420
  %v5422 = vpop.f32.mrb[0].mxu0
  %v5423 = vpop.f32.mrb[0].mxu0
  %v5424 = vadd.f32 0.0, %v5423
  %v5425 = vpop.f32.mrb[0].mxu0
  %5426 = vmatprep.mubr.bf16.mxu0 %v5308
  %5427 = vmatmul.mubr.bf16.gmra.mrb[0].mxu0 %v5173
  %v5428 = vpop.f32.mrb[0].mxu0
  %v5429 = vadd.f32 0.0, %v5428
  %v5430 = vpop.f32.mrb[0].mxu0
  %v5431 = vpop.f32.mrb[0].mxu0
  %v5432 = vadd.f32 0.0, %v5431
  %v5433 = vpop.f32.mrb[0].mxu0
  %5434 = vmatprep.mubr.bf16.mxu0 %v5311
  %5435 = vmatmul.mubr.bf16.gmra.mrb[0].mxu0 %v5175
  %v5436 = vpop.f32.mrb[0].mxu0
  %v5437 = vadd.f32 0.0, %v5436
  %v5438 = vpop.f32.mrb[0].mxu0
  %v5439 = vpop.f32.mrb[0].mxu0
  %v5440 = vadd.f32 0.0, %v5439
  %v5441 = vpop.f32.mrb[0].mxu0
  %5442 = vmatprep.mubr.bf16.mxu0 %v5314
  %5443 = vmatmul.mubr.bf16.gmra.mrb[0].mxu0 %v5177
  %v5444 = vpop.f32.mrb[0].mxu0
  %v5445 = vadd.f32 0.0, %v5444
  %v5446 = vpop.f32.mrb[0].mxu0
  %v5447 = vpop.f32.mrb[0].mxu0
  %v5448 = vadd.f32 0.0, %v5447
  %v5449 = vpop.f32.mrb[0].mxu0
  %5450 = vmatprep.mubr.bf16.mxu0 %v5317
  %5451 = vmatmul.mubr.bf16.gmra.mrb[0].mxu0 %v5179
  %v5452 = vpop.f32.mrb[0].mxu0
  %v5453 = vadd.f32 0.0, %v5452
  %v5454 = vpop.f32.mrb[0].mxu0
  %v5455 = vpop.f32.mrb[0].mxu0
  %v5456 = vadd.f32 0.0, %v5455
  %v5457 = vpop.f32.mrb[0].mxu0
  %5458 = vmatprep.mubr.bf16.mxu0 %v5320
  %5459 = vmatmul.mubr.bf16.gmra.mrb[0].mxu0 %v5181
  %v5460 = vpop.f32.mrb[0].mxu0
  %v5461 = vadd.f32 0.0, %v5460
  %v5462 = vpop.f32.mrb[0].mxu0
  %v5463 = vpop.f32.mrb[0].mxu0
  %v5464 = vadd.f32 0.0, %v5463
  %v5465 = vpop.f32.mrb[0].mxu0
  %5466 = vdwg.mxu0
  %v5467 = vld [vmem:[%s5] sm:$0xff]
  %v5468 = vld [vmem:[%s5 + $0x8] sm:$0xff]
  %v5469 = vld [vmem:[%s5 + $0x10] sm:$0xff]
  %v5470 = vld [vmem:[%s5 + $0x18] sm:$0xff]
  %v5471 = vld [vmem:[%s5 + $0x20] sm:$0xff]
  %v5472 = vld [vmem:[%s5 + $0x28] sm:$0xff]
  %v5473 = vld [vmem:[%s5 + $0x30] sm:$0xff]
  %v5474 = vld [vmem:[%s5 + $0x38] sm:$0xff]
  %v5475 = vld [vmem:[%s5 + $0x40] sm:$0xff]
  %v5476 = vld [vmem:[%s5 + $0x48] sm:$0xff]
  %v5477 = vld [vmem:[%s5 + $0x50] sm:$0xff]
  %v5478 = vld [vmem:[%s5 + $0x58] sm:$0xff]
  %v5479 = vld [vmem:[%s5 + $0x60] sm:$0xff]
  %v5480 = vld [vmem:[%s5 + $0x68] sm:$0xff]
  %v5481 = vld [vmem:[%s5 + $0x70] sm:$0xff]
  %v5482 = vld [vmem:[%s5 + $0x78] sm:$0xff]
  %v5483 = vld [vmem:[%s5 + $0x80] sm:$0xff]
  %v5484 = vld [vmem:[%s5 + $0x88] sm:$0xff]
  %v5485 = vld [vmem:[%s5 + $0x90] sm:$0xff]
  %v5486 = vld [vmem:[%s5 + $0x98] sm:$0xff]
  %v5487 = vld [vmem:[%s5 + $0xa0] sm:$0xff]
  %v5488 = vld [vmem:[%s5 + $0xa8] sm:$0xff]
  %v5489 = vld [vmem:[%s5 + $0xb0] sm:$0xff]
  %v5490 = vld [vmem:[%s5 + $0xb8] sm:$0xff]
  %v5491 = vld [vmem:[%s5 + $0xc0] sm:$0xff]
  %v5492 = vld [vmem:[%s5 + $0xc8] sm:$0xff]
  %v5493 = vld [vmem:[%s5 + $0xd0] sm:$0xff]
  %v5494 = vld [vmem:[%s5 + $0xd8] sm:$0xff]
  %v5495 = vadd.f32 %v5467, %v5357
  %v5496 = vadd.f32 %v5468, %v5360
  %v5497 = vadd.f32 %v5469, %v5365
  %v5498 = vadd.f32 %v5470, %v5368
  %v5499 = vadd.f32 %v5471, %v5373
  %v5500 = vadd.f32 %v5472, %v5376
  %v5501 = vadd.f32 %v5473, %v5381
  %v5502 = vadd.f32 %v5474, %v5384
  %v5503 = vadd.f32 %v5475, %v5389
  %v5504 = vadd.f32 %v5476, %v5392
  %v5505 = vadd.f32 %v5477, %v5397
  %v5506 = vadd.f32 %v5478, %v5400
  %v5507 = vadd.f32 %v5479, %v5405
  %v5508 = vadd.f32 %v5480, %v5408
  %v5509 = vadd.f32 %v5481, %v5413
  %v5510 = vadd.f32 %v5482, %v5416
  %v5511 = vadd.f32 %v5483, %v5421
  %v5512 = vadd.f32 %v5484, %v5424
  %v5513 = vadd.f32 %v5485, %v5429
  %v5514 = vadd.f32 %v5486, %v5432
  %v5515 = vadd.f32 %v5487, %v5437
  %v5516 = vadd.f32 %v5488, %v5440
  %v5517 = vadd.f32 %v5489, %v5445
  %v5518 = vadd.f32 %v5490, %v5448
  %v5519 = vadd.f32 %v5491, %v5453
  %v5520 = vadd.f32 %v5492, %v5456
  %v5521 = vadd.f32 %v5493, %v5461
  %v5522 = vadd.f32 %v5494, %v5464
  %5523 = vst.msk [vmem:[%s5] sm:$0xff] %vm1163, %v5495
  %5524 = vst.msk [vmem:[%s5 + $0x8] sm:$0xff] %vm1163, %v5496
  %5525 = vst.msk [vmem:[%s5 + $0x10] sm:$0xff] %vm1163, %v5497
  %5526 = vst.msk [vmem:[%s5 + $0x18] sm:$0xff] %vm1163, %v5498
  %5527 = vst.msk [vmem:[%s5 + $0x20] sm:$0xff] %vm1163, %v5499
  %5528 = vst.msk [vmem:[%s5 + $0x28] sm:$0xff] %vm1163, %v5500
  %5529 = vst.msk [vmem:[%s5 + $0x30] sm:$0xff] %vm1163, %v5501
  %5530 = vst.msk [vmem:[%s5 + $0x38] sm:$0xff] %vm1163, %v5502
  %5531 = vst.msk [vmem:[%s5 + $0x40] sm:$0xff] %vm1163, %v5503
  %5532 = vst.msk [vmem:[%s5 + $0x48] sm:$0xff] %vm1163, %v5504
  %5533 = vst.msk [vmem:[%s5 + $0x50] sm:$0xff] %vm1163, %v5505
  %5534 = vst.msk [vmem:[%s5 + $0x58] sm:$0xff] %vm1163, %v5506
  %5535 = vst.msk [vmem:[%s5 + $0x60] sm:$0xff] %vm1163, %v5507
  %5536 = vst.msk [vmem:[%s5 + $0x68] sm:$0xff] %vm1163, %v5508
  %5537 = vst.msk [vmem:[%s5 + $0x70] sm:$0xff] %vm1163, %v5509
  %5538 = vst.msk [vmem:[%s5 + $0x78] sm:$0xff] %vm1163, %v5510
  %5539 = vst.msk [vmem:[%s5 + $0x80] sm:$0xff] %vm1163, %v5511
  %5540 = vst.msk [vmem:[%s5 + $0x88] sm:$0xff] %vm1163, %v5512
  %5541 = vst.msk [vmem:[%s5 + $0x90] sm:$0xff] %vm1163, %v5513
  %5542 = vst.msk [vmem:[%s5 + $0x98] sm:$0xff] %vm1163, %v5514
  %5543 = vst.msk [vmem:[%s5 + $0xa0] sm:$0xff] %vm1163, %v5515
  %5544 = vst.msk [vmem:[%s5 + $0xa8] sm:$0xff] %vm1163, %v5516
  %5545 = vst.msk [vmem:[%s5 + $0xb0] sm:$0xff] %vm1163, %v5517
  %5546 = vst.msk [vmem:[%s5 + $0xb8] sm:$0xff] %vm1163, %v5518
  %5547 = vst.msk [vmem:[%s5 + $0xc0] sm:$0xff] %vm1163, %v5519
  %5548 = vst.msk [vmem:[%s5 + $0xc8] sm:$0xff] %vm1163, %v5520
  %5549 = vst.msk [vmem:[%s5 + $0xd0] sm:$0xff] %vm1163, %v5521
  %5550 = vst.msk [vmem:[%s5 + $0xd8] sm:$0xff] %vm1163, %v5522
  %v5551 = vld [vmem:[#allocation2 + $0x20] sm:$0x80]
  %v5552 = vld [vmem:[#allocation2 + $0x28] sm:$0x80]
  %v5553 = vld [vmem:[#allocation2 + $0x30] sm:$0xff]
  %v5554 = vld [vmem:[#allocation2 + $0x38] sm:$0xff]
  %v5555 = vld [vmem:[#allocation2 + $0x40] sm:$0xff]
  %v5556 = vld [vmem:[#allocation2 + $0x48] sm:$0xff]
  %v5557 = vld [vmem:[#allocation2 + $0x50] sm:$0xff]
  %v5558 = vld [vmem:[#allocation2 + $0x58] sm:$0xff]
  %v5559 = vld [vmem:[#allocation2 + $0x60] sm:$0xff]
  %v5560 = vld [vmem:[#allocation2 + $0x68] sm:$0xff]
  %v5561 = vld [vmem:[#allocation2 + $0x70] sm:$0xff]
  %v5562 = vld [vmem:[#allocation2 + $0x78] sm:$0xff]
  %v5563 = vld [vmem:[#allocation2 + $0x80] sm:$0xff]
  %v5564 = vld [vmem:[#allocation2 + $0x88] sm:$0xff]
  %v5565 = vld [vmem:[#allocation2 + $0x90] sm:$0xff]
  %v5566 = vld [vmem:[#allocation2 + $0x98] sm:$0xff]
  %v5567 = vld [vmem:[#allocation2 + $0xa0] sm:$0xff]
  %v5568 = vld [vmem:[#allocation2 + $0xa8] sm:$0xff]
  %v5569 = vld [vmem:[#allocation2 + $0xb0] sm:$0xff]
  %v5570 = vld [vmem:[#allocation2 + $0xb8] sm:$0xff]
  %v5571 = vld [vmem:[#allocation2 + $0xc0] sm:$0xff]
  %v5572 = vld [vmem:[#allocation2 + $0xc8] sm:$0xff]
  %v5573 = vld [vmem:[#allocation2 + $0xd0] sm:$0xff]
  %v5574 = vld [vmem:[#allocation2 + $0xd8] sm:$0xff]
  %v5575 = vld [vmem:[#allocation2 + $0xe0] sm:$0xff]
  %v5576 = vld [vmem:[#allocation2 + $0xe8] sm:$0xff]
  %v5577 = vld [vmem:[#allocation2 + $0xf0] sm:$0xff]
  %v5578 = vld [vmem:[#allocation2 + $0xf8] sm:$0xff]
  %v5579 = vld [vmem:[#allocation2 + $0x100] sm:$0x7f]
  %v5580 = vld [vmem:[#allocation2 + $0x108] sm:$0x7f]
  %s5581 = scalar_lea.vmem %s4, 576
  %v5582 = vld [vmem:[%s5581] sm:$0xf]
  %v5583 = vld [vmem:[%s5581 + $0x4] sm:$0xf]
  %v5584 = vld [vmem:[%s5581 + $0x8] sm:$0xf]
  %v5585 = vld [vmem:[%s5581 + $0xc] sm:$0xf]
  %v5586 = vld [vmem:[%s5581 + $0x10] sm:$0xf]
  %v5587 = vld [vmem:[%s5581 + $0x14] sm:$0xf]
  %v5588 = vld [vmem:[%s5581 + $0x18] sm:$0xf]
  %v5589 = vld [vmem:[%s5581 + $0x1c] sm:$0xf]
  %v5590 = vld [vmem:[%s5581 + $0x20] sm:$0xf]
  %v5591 = vld [vmem:[%s5581 + $0x24] sm:$0xf]
  %v5592 = vld [vmem:[%s5581 + $0x28] sm:$0xf]
  %v5593 = vld [vmem:[%s5581 + $0x2c] sm:$0xf]
  %v5594 = vld [vmem:[%s5581 + $0x30] sm:$0xf]
  %v5595 = vld [vmem:[%s5581 + $0x34] sm:$0xf]
  %v5596 = vld [vmem:[%s5581 + $0x38] sm:$0xf]
  %v5597 = vld [vmem:[%s5581 + $0x3c] sm:$0xf]
  %v5598 = vld [vmem:[%s5581 + $0x40] sm:$0xf]
  %v5599 = vld [vmem:[%s5581 + $0x44] sm:$0xf]
  %v5600 = vld [vmem:[%s5581 + $0x48] sm:$0xf]
  %v5601 = vld [vmem:[%s5581 + $0x4c] sm:$0xf]
  %v5602 = vld [vmem:[%s5581 + $0x50] sm:$0xf]
  %v5603 = vld [vmem:[%s5581 + $0x54] sm:$0xf]
  %v5604 = vld [vmem:[%s5581 + $0x58] sm:$0xf]
  %v5605 = vld [vmem:[%s5581 + $0x5c] sm:$0xf]
  %v5636 = vrot.slane %v5551, 7
  %v5637 = vrot.slane %v5553, 7
  %v5638 = vsel %vm2381, %v5636, %v5637
  %v5639 = vrot.slane %v5552, 7
  %v5640 = vrot.slane %v5554, 7
  %v5641 = vsel %vm2381, %v5639, %v5640
  %v5642 = vrot.slane %v5555, 7
  %v5643 = vsel %vm2381, %v5637, %v5642
  %v5644 = vrot.slane %v5556, 7
  %v5645 = vsel %vm2381, %v5640, %v5644
  %v5646 = vrot.slane %v5557, 7
  %v5647 = vsel %vm2381, %v5642, %v5646
  %v5648 = vrot.slane %v5558, 7
  %v5649 = vsel %vm2381, %v5644, %v5648
  %v5650 = vrot.slane %v5559, 7
  %v5651 = vsel %vm2381, %v5646, %v5650
  %v5652 = vrot.slane %v5560, 7
  %v5653 = vsel %vm2381, %v5648, %v5652
  %v5654 = vrot.slane %v5561, 7
  %v5655 = vsel %vm2381, %v5650, %v5654
  %v5656 = vrot.slane %v5562, 7
  %v5657 = vsel %vm2381, %v5652, %v5656
  %v5658 = vrot.slane %v5563, 7
  %v5659 = vsel %vm2381, %v5654, %v5658
  %v5660 = vrot.slane %v5564, 7
  %v5661 = vsel %vm2381, %v5656, %v5660
  %v5662 = vrot.slane %v5565, 7
  %v5663 = vsel %vm2381, %v5658, %v5662
  %v5664 = vrot.slane %v5566, 7
  %v5665 = vsel %vm2381, %v5660, %v5664
  %v5666 = vrot.slane %v5567, 7
  %v5667 = vsel %vm2381, %v5662, %v5666
  %v5668 = vrot.slane %v5568, 7
  %v5669 = vsel %vm2381, %v5664, %v5668
  %v5670 = vrot.slane %v5569, 7
  %v5671 = vsel %vm2381, %v5666, %v5670
  %v5672 = vrot.slane %v5570, 7
  %v5673 = vsel %vm2381, %v5668, %v5672
  %v5674 = vrot.slane %v5571, 7
  %v5675 = vsel %vm2381, %v5670, %v5674
  %v5676 = vrot.slane %v5572, 7
  %v5677 = vsel %vm2381, %v5672, %v5676
  %v5678 = vrot.slane %v5573, 7
  %v5679 = vsel %vm2381, %v5674, %v5678
  %v5680 = vrot.slane %v5574, 7
  %v5681 = vsel %vm2381, %v5676, %v5680
  %v5682 = vrot.slane %v5575, 7
  %v5683 = vsel %vm2381, %v5678, %v5682
  %v5684 = vrot.slane %v5576, 7
  %v5685 = vsel %vm2381, %v5680, %v5684
  %v5686 = vrot.slane %v5577, 7
  %v5687 = vsel %vm2381, %v5682, %v5686
  %v5688 = vrot.slane %v5578, 7
  %v5689 = vsel %vm2381, %v5684, %v5688
  %v5690 = vrot.slane %v5579, 7
  %v5691 = vsel %vm2381, %v5686, %v5690
  %v5692 = vrot.slane %v5580, 7
  %v5693 = vsel %vm2381, %v5688, %v5692
  %v5732 = vunpack.c.l.b16 %v5582
  %v5733 = vunpack.c.l.b16 %v5583
  %v5734 = vunpack.c.l.b16 %v5584
  %v5735 = vunpack.c.l.b16 %v5585
  %v5736 = vunpack.c.l.b16 %v5586
  %v5737 = vunpack.c.l.b16 %v5587
  %v5738 = vunpack.c.l.b16 %v5588
  %v5739 = vunpack.c.l.b16 %v5589
  %v5740 = vunpack.c.l.b16 %v5590
  %v5741 = vunpack.c.l.b16 %v5591
  %v5742 = vunpack.c.l.b16 %v5592
  %v5743 = vunpack.c.l.b16 %v5593
  %v5744 = vunpack.c.l.b16 %v5594
  %v5745 = vunpack.c.l.b16 %v5595
  %v5746 = vunpack.c.l.b16 %v5596
  %v5747 = vunpack.c.l.b16 %v5597
  %v5748 = vunpack.c.l.b16 %v5598
  %v5749 = vunpack.c.l.b16 %v5599
  %v5750 = vunpack.c.l.b16 %v5600
  %v5751 = vunpack.c.l.b16 %v5601
  %v5752 = vunpack.c.l.b16 %v5602
  %v5753 = vunpack.c.l.b16 %v5603
  %v5754 = vunpack.c.l.b16 %v5604
  %v5755 = vunpack.c.l.b16 %v5605
  %v5756 = vpack.c.b16 %v5733, %v5732
  %v5757 = vpack.c.b16 %v5735, %v5734
  %v5758 = vpack.c.b16 %v5737, %v5736
  %v5759 = vpack.c.b16 %v5739, %v5738
  %v5760 = vpack.c.b16 %v5741, %v5740
  %v5761 = vpack.c.b16 %v5743, %v5742
  %v5762 = vpack.c.b16 %v5745, %v5744
  %v5763 = vpack.c.b16 %v5747, %v5746
  %v5764 = vpack.c.b16 %v5749, %v5748
  %v5765 = vpack.c.b16 %v5751, %v5750
  %v5766 = vpack.c.b16 %v5753, %v5752
  %v5767 = vpack.c.b16 %v5755, %v5754
  %v5781 = vsel %vm1879, %v5641, 0
  %v5784 = vsel %vm1879, %v5645, 0
  %v5787 = vsel %vm1879, %v5649, 0
  %v5790 = vsel %vm1879, %v5653, 0
  %v5793 = vsel %vm1879, %v5657, 0
  %v5796 = vsel %vm1879, %v5661, 0
  %v5799 = vsel %vm1879, %v5665, 0
  %v5802 = vsel %vm1879, %v5669, 0
  %v5805 = vsel %vm1879, %v5673, 0
  %v5808 = vsel %vm1879, %v5677, 0
  %v5811 = vsel %vm1879, %v5681, 0
  %v5814 = vsel %vm1879, %v5685, 0
  %v5817 = vsel %vm1879, %v5689, 0
  %v5820 = vsel %vm1879, %v5693, 0
  %5822 = vmatprep.subr.bf16.mxu0 0
  %5823 = vmatpush1.bf16.msra.mxu0 %v5756
  %5824 = vmatprep.subr.bf16.mxu0 0
  %5825 = vmatpush1.bf16.msra.mxu0 %v5757
  %5826 = vmatprep.subr.bf16.mxu0 0
  %5827 = vmatpush1.bf16.msra.mxu0 %v5758
  %5828 = vmatprep.subr.bf16.mxu0 0
  %5829 = vmatpush1.bf16.msra.mxu0 %v5759
  %5830 = vmatprep.subr.bf16.mxu0 0
  %5831 = vmatpush1.bf16.msra.mxu0 %v5760
  %5832 = vmatprep.subr.bf16.mxu0 0
  %5833 = vmatpush1.bf16.msra.mxu0 %v5761
  %5834 = vmatprep.subr.bf16.mxu0 0
  %5835 = vmatpush1.bf16.msra.mxu0 %v5762
  %5836 = vmatprep.subr.bf16.mxu0 0
  %5837 = vmatpush1.bf16.msra.mxu0 %v5763
  %5838 = vmatprep.subr.bf16.mxu0 0
  %5839 = vmatpush1.bf16.msra.mxu0 %v5764
  %5840 = vmatprep.subr.bf16.mxu0 0
  %5841 = vmatpush1.bf16.msra.mxu0 %v5765
  %5842 = vmatprep.subr.bf16.mxu0 0
  %5843 = vmatpush1.bf16.msra.mxu0 %v5766
  %5844 = vmatprep.subr.bf16.mxu0 0
  %5845 = vmatpush1.bf16.msra.mxu0 %v5767
  %5846 = vmatprep.subr.bf16.mxu0 0
  %5847 = vmatpush1.bf16.msra.mxu0 0
  %5848 = vmatprep.subr.bf16.mxu0 0
  %5849 = vmatpush1.bf16.msra.mxu0 0
  %5850 = vmatprep.subr.bf16.mxu0 0
  %5851 = vmatpush1.bf16.msra.mxu0 0
  %5852 = vmatprep.subr.bf16.mxu0 0
  %5853 = vmatpush1.bf16.msra.mxu0 0
  %5854 = vmatprep.mubr.bf16.mxu0 %v5781
  %5855 = vmatmul.mubr.bf16.gmra.mrb[0].mxu0 %v5638
  %v5856 = vpop.f32.mrb[0].mxu0
  %v5857 = vadd.f32 0.0, %v5856
  %v5858 = vpop.f32.mrb[0].mxu0
  %v5859 = vpop.f32.mrb[0].mxu0
  %v5860 = vadd.f32 0.0, %v5859
  %v5861 = vpop.f32.mrb[0].mxu0
  %5862 = vmatprep.mubr.bf16.mxu0 %v5784
  %5863 = vmatmul.mubr.bf16.gmra.mrb[0].mxu0 %v5643
  %v5864 = vpop.f32.mrb[0].mxu0
  %v5865 = vadd.f32 0.0, %v5864
  %v5866 = vpop.f32.mrb[0].mxu0
  %v5867 = vpop.f32.mrb[0].mxu0
  %v5868 = vadd.f32 0.0, %v5867
  %v5869 = vpop.f32.mrb[0].mxu0
  %5870 = vmatprep.mubr.bf16.mxu0 %v5787
  %5871 = vmatmul.mubr.bf16.gmra.mrb[0].mxu0 %v5647
  %v5872 = vpop.f32.mrb[0].mxu0
  %v5873 = vadd.f32 0.0, %v5872
  %v5874 = vpop.f32.mrb[0].mxu0
  %v5875 = vpop.f32.mrb[0].mxu0
  %v5876 = vadd.f32 0.0, %v5875
  %v5877 = vpop.f32.mrb[0].mxu0
  %5878 = vmatprep.mubr.bf16.mxu0 %v5790
  %5879 = vmatmul.mubr.bf16.gmra.mrb[0].mxu0 %v5651
  %v5880 = vpop.f32.mrb[0].mxu0
  %v5881 = vadd.f32 0.0, %v5880
  %v5882 = vpop.f32.mrb[0].mxu0
  %v5883 = vpop.f32.mrb[0].mxu0
  %v5884 = vadd.f32 0.0, %v5883
  %v5885 = vpop.f32.mrb[0].mxu0
  %5886 = vmatprep.mubr.bf16.mxu0 %v5793
  %5887 = vmatmul.mubr.bf16.gmra.mrb[0].mxu0 %v5655
  %v5888 = vpop.f32.mrb[0].mxu0
  %v5889 = vadd.f32 0.0, %v5888
  %v5890 = vpop.f32.mrb[0].mxu0
  %v5891 = vpop.f32.mrb[0].mxu0
  %v5892 = vadd.f32 0.0, %v5891
  %v5893 = vpop.f32.mrb[0].mxu0
  %5894 = vmatprep.mubr.bf16.mxu0 %v5796
  %5895 = vmatmul.mubr.bf16.gmra.mrb[0].mxu0 %v5659
  %v5896 = vpop.f32.mrb[0].mxu0
  %v5897 = vadd.f32 0.0, %v5896
  %v5898 = vpop.f32.mrb[0].mxu0
  %v5899 = vpop.f32.mrb[0].mxu0
  %v5900 = vadd.f32 0.0, %v5899
  %v5901 = vpop.f32.mrb[0].mxu0
  %5902 = vmatprep.mubr.bf16.mxu0 %v5799
  %5903 = vmatmul.mubr.bf16.gmra.mrb[0].mxu0 %v5663
  %v5904 = vpop.f32.mrb[0].mxu0
  %v5905 = vadd.f32 0.0, %v5904
  %v5906 = vpop.f32.mrb[0].mxu0
  %v5907 = vpop.f32.mrb[0].mxu0
  %v5908 = vadd.f32 0.0, %v5907
  %v5909 = vpop.f32.mrb[0].mxu0
  %5910 = vmatprep.mubr.bf16.mxu0 %v5802
  %5911 = vmatmul.mubr.bf16.gmra.mrb[0].mxu0 %v5667
  %v5912 = vpop.f32.mrb[0].mxu0
  %v5913 = vadd.f32 0.0, %v5912
  %v5914 = vpop.f32.mrb[0].mxu0
  %v5915 = vpop.f32.mrb[0].mxu0
  %v5916 = vadd.f32 0.0, %v5915
  %v5917 = vpop.f32.mrb[0].mxu0
  %5918 = vmatprep.mubr.bf16.mxu0 %v5805
  %5919 = vmatmul.mubr.bf16.gmra.mrb[0].mxu0 %v5671
  %v5920 = vpop.f32.mrb[0].mxu0
  %v5921 = vadd.f32 0.0, %v5920
  %v5922 = vpop.f32.mrb[0].mxu0
  %v5923 = vpop.f32.mrb[0].mxu0
  %v5924 = vadd.f32 0.0, %v5923
  %v5925 = vpop.f32.mrb[0].mxu0
  %5926 = vmatprep.mubr.bf16.mxu0 %v5808
  %5927 = vmatmul.mubr.bf16.gmra.mrb[0].mxu0 %v5675
  %v5928 = vpop.f32.mrb[0].mxu0
  %v5929 = vadd.f32 0.0, %v5928
  %v5930 = vpop.f32.mrb[0].mxu0
  %v5931 = vpop.f32.mrb[0].mxu0
  %v5932 = vadd.f32 0.0, %v5931
  %v5933 = vpop.f32.mrb[0].mxu0
  %5934 = vmatprep.mubr.bf16.mxu0 %v5811
  %5935 = vmatmul.mubr.bf16.gmra.mrb[0].mxu0 %v5679
  %v5936 = vpop.f32.mrb[0].mxu0
  %v5937 = vadd.f32 0.0, %v5936
  %v5938 = vpop.f32.mrb[0].mxu0
  %v5939 = vpop.f32.mrb[0].mxu0
  %v5940 = vadd.f32 0.0, %v5939
  %v5941 = vpop.f32.mrb[0].mxu0
  %5942 = vmatprep.mubr.bf16.mxu0 %v5814
  %5943 = vmatmul.mubr.bf16.gmra.mrb[0].mxu0 %v5683
  %v5944 = vpop.f32.mrb[0].mxu0
  %v5945 = vadd.f32 0.0, %v5944
  %v5946 = vpop.f32.mrb[0].mxu0
  %v5947 = vpop.f32.mrb[0].mxu0
  %v5948 = vadd.f32 0.0, %v5947
  %v5949 = vpop.f32.mrb[0].mxu0
  %5950 = vmatprep.mubr.bf16.mxu0 %v5817
  %5951 = vmatmul.mubr.bf16.gmra.mrb[0].mxu0 %v5687
  %v5952 = vpop.f32.mrb[0].mxu0
  %v5953 = vadd.f32 0.0, %v5952
  %v5954 = vpop.f32.mrb[0].mxu0
  %v5955 = vpop.f32.mrb[0].mxu0
  %v5956 = vadd.f32 0.0, %v5955
  %v5957 = vpop.f32.mrb[0].mxu0
  %5958 = vmatprep.mubr.bf16.mxu0 %v5820
  %5959 = vmatmul.mubr.bf16.gmra.mrb[0].mxu0 %v5691
  %v5960 = vpop.f32.mrb[0].mxu0
  %v5961 = vadd.f32 0.0, %v5960
  %v5962 = vpop.f32.mrb[0].mxu0
  %v5963 = vpop.f32.mrb[0].mxu0
  %v5964 = vadd.f32 0.0, %v5963
  %v5965 = vpop.f32.mrb[0].mxu0
  %5966 = vdwg.mxu0
  %v5967 = vld [vmem:[%s5] sm:$0xff]
  %v5968 = vld [vmem:[%s5 + $0x8] sm:$0xff]
  %v5969 = vld [vmem:[%s5 + $0x10] sm:$0xff]
  %v5970 = vld [vmem:[%s5 + $0x18] sm:$0xff]
  %v5971 = vld [vmem:[%s5 + $0x20] sm:$0xff]
  %v5972 = vld [vmem:[%s5 + $0x28] sm:$0xff]
  %v5973 = vld [vmem:[%s5 + $0x30] sm:$0xff]
  %v5974 = vld [vmem:[%s5 + $0x38] sm:$0xff]
  %v5975 = vld [vmem:[%s5 + $0x40] sm:$0xff]
  %v5976 = vld [vmem:[%s5 + $0x48] sm:$0xff]
  %v5977 = vld [vmem:[%s5 + $0x50] sm:$0xff]
  %v5978 = vld [vmem:[%s5 + $0x58] sm:$0xff]
  %v5979 = vld [vmem:[%s5 + $0x60] sm:$0xff]
  %v5980 = vld [vmem:[%s5 + $0x68] sm:$0xff]
  %v5981 = vld [vmem:[%s5 + $0x70] sm:$0xff]
  %v5982 = vld [vmem:[%s5 + $0x78] sm:$0xff]
  %v5983 = vld [vmem:[%s5 + $0x80] sm:$0xff]
  %v5984 = vld [vmem:[%s5 + $0x88] sm:$0xff]
  %v5985 = vld [vmem:[%s5 + $0x90] sm:$0xff]
  %v5986 = vld [vmem:[%s5 + $0x98] sm:$0xff]
  %v5987 = vld [vmem:[%s5 + $0xa0] sm:$0xff]
  %v5988 = vld [vmem:[%s5 + $0xa8] sm:$0xff]
  %v5989 = vld [vmem:[%s5 + $0xb0] sm:$0xff]
  %v5990 = vld [vmem:[%s5 + $0xb8] sm:$0xff]
  %v5991 = vld [vmem:[%s5 + $0xc0] sm:$0xff]
  %v5992 = vld [vmem:[%s5 + $0xc8] sm:$0xff]
  %v5993 = vld [vmem:[%s5 + $0xd0] sm:$0xff]
  %v5994 = vld [vmem:[%s5 + $0xd8] sm:$0xff]
  %v5995 = vadd.f32 %v5967, %v5857
  %v5996 = vadd.f32 %v5968, %v5860
  %v5997 = vadd.f32 %v5969, %v5865
  %v5998 = vadd.f32 %v5970, %v5868
  %v5999 = vadd.f32 %v5971, %v5873
  %v6000 = vadd.f32 %v5972, %v5876
  %v6001 = vadd.f32 %v5973, %v5881
  %v6002 = vadd.f32 %v5974, %v5884
  %v6003 = vadd.f32 %v5975, %v5889
  %v6004 = vadd.f32 %v5976, %v5892
  %v6005 = vadd.f32 %v5977, %v5897
  %v6006 = vadd.f32 %v5978, %v5900
  %v6007 = vadd.f32 %v5979, %v5905
  %v6008 = vadd.f32 %v5980, %v5908
  %v6009 = vadd.f32 %v5981, %v5913
  %v6010 = vadd.f32 %v5982, %v5916
  %v6011 = vadd.f32 %v5983, %v5921
  %v6012 = vadd.f32 %v5984, %v5924
  %v6013 = vadd.f32 %v5985, %v5929
  %v6014 = vadd.f32 %v5986, %v5932
  %v6015 = vadd.f32 %v5987, %v5937
  %v6016 = vadd.f32 %v5988, %v5940
  %v6017 = vadd.f32 %v5989, %v5945
  %v6018 = vadd.f32 %v5990, %v5948
  %v6019 = vadd.f32 %v5991, %v5953
  %v6020 = vadd.f32 %v5992, %v5956
  %v6021 = vadd.f32 %v5993, %v5961
  %v6022 = vadd.f32 %v5994, %v5964
  %6023 = vst.msk [vmem:[%s5] sm:$0xff] %vm1163, %v5995
  %6024 = vst.msk [vmem:[%s5 + $0x8] sm:$0xff] %vm1163, %v5996
  %6025 = vst.msk [vmem:[%s5 + $0x10] sm:$0xff] %vm1163, %v5997
  %6026 = vst.msk [vmem:[%s5 + $0x18] sm:$0xff] %vm1163, %v5998
  %6027 = vst.msk [vmem:[%s5 + $0x20] sm:$0xff] %vm1163, %v5999
  %6028 = vst.msk [vmem:[%s5 + $0x28] sm:$0xff] %vm1163, %v6000
  %6029 = vst.msk [vmem:[%s5 + $0x30] sm:$0xff] %vm1163, %v6001
  %6030 = vst.msk [vmem:[%s5 + $0x38] sm:$0xff] %vm1163, %v6002
  %6031 = vst.msk [vmem:[%s5 + $0x40] sm:$0xff] %vm1163, %v6003
  %6032 = vst.msk [vmem:[%s5 + $0x48] sm:$0xff] %vm1163, %v6004
  %6033 = vst.msk [vmem:[%s5 + $0x50] sm:$0xff] %vm1163, %v6005
  %6034 = vst.msk [vmem:[%s5 + $0x58] sm:$0xff] %vm1163, %v6006
  %6035 = vst.msk [vmem:[%s5 + $0x60] sm:$0xff] %vm1163, %v6007
  %6036 = vst.msk [vmem:[%s5 + $0x68] sm:$0xff] %vm1163, %v6008
  %6037 = vst.msk [vmem:[%s5 + $0x70] sm:$0xff] %vm1163, %v6009
  %6038 = vst.msk [vmem:[%s5 + $0x78] sm:$0xff] %vm1163, %v6010
  %6039 = vst.msk [vmem:[%s5 + $0x80] sm:$0xff] %vm1163, %v6011
  %6040 = vst.msk [vmem:[%s5 + $0x88] sm:$0xff] %vm1163, %v6012
  %6041 = vst.msk [vmem:[%s5 + $0x90] sm:$0xff] %vm1163, %v6013
  %6042 = vst.msk [vmem:[%s5 + $0x98] sm:$0xff] %vm1163, %v6014
  %6043 = vst.msk [vmem:[%s5 + $0xa0] sm:$0xff] %vm1163, %v6015
  %6044 = vst.msk [vmem:[%s5 + $0xa8] sm:$0xff] %vm1163, %v6016
  %6045 = vst.msk [vmem:[%s5 + $0xb0] sm:$0xff] %vm1163, %v6017
  %6046 = vst.msk [vmem:[%s5 + $0xb8] sm:$0xff] %vm1163, %v6018
  %6047 = vst.msk [vmem:[%s5 + $0xc0] sm:$0xff] %vm1163, %v6019
  %6048 = vst.msk [vmem:[%s5 + $0xc8] sm:$0xff] %vm1163, %v6020
  %6049 = vst.msk [vmem:[%s5 + $0xd0] sm:$0xff] %vm1163, %v6021
  %6050 = vst.msk [vmem:[%s5 + $0xd8] sm:$0xff] %vm1163, %v6022
  %v6051 = vld [vmem:[#allocation2 + $0x20] sm:$0x80]
  %v6052 = vld [vmem:[#allocation2 + $0x28] sm:$0x80]
  %v6053 = vld [vmem:[#allocation2 + $0x30] sm:$0xff]
  %v6054 = vld [vmem:[#allocation2 + $0x38] sm:$0xff]
  %v6055 = vld [vmem:[#allocation2 + $0x40] sm:$0xff]
  %v6056 = vld [vmem:[#allocation2 + $0x48] sm:$0xff]
  %v6057 = vld [vmem:[#allocation2 + $0x50] sm:$0xff]
  %v6058 = vld [vmem:[#allocation2 + $0x58] sm:$0xff]
  %v6059 = vld [vmem:[#allocation2 + $0x60] sm:$0xff]
  %v6060 = vld [vmem:[#allocation2 + $0x68] sm:$0xff]
  %v6061 = vld [vmem:[#allocation2 + $0x70] sm:$0xff]
  %v6062 = vld [vmem:[#allocation2 + $0x78] sm:$0xff]
  %v6063 = vld [vmem:[#allocation2 + $0x80] sm:$0xff]
  %v6064 = vld [vmem:[#allocation2 + $0x88] sm:$0xff]
  %v6065 = vld [vmem:[#allocation2 + $0x90] sm:$0xff]
  %v6066 = vld [vmem:[#allocation2 + $0x98] sm:$0xff]
  %v6067 = vld [vmem:[#allocation2 + $0xa0] sm:$0xff]
  %v6068 = vld [vmem:[#allocation2 + $0xa8] sm:$0xff]
  %v6069 = vld [vmem:[#allocation2 + $0xb0] sm:$0xff]
  %v6070 = vld [vmem:[#allocation2 + $0xb8] sm:$0xff]
  %v6071 = vld [vmem:[#allocation2 + $0xc0] sm:$0xff]
  %v6072 = vld [vmem:[#allocation2 + $0xc8] sm:$0xff]
  %v6073 = vld [vmem:[#allocation2 + $0xd0] sm:$0xff]
  %v6074 = vld [vmem:[#allocation2 + $0xd8] sm:$0xff]
  %v6075 = vld [vmem:[#allocation2 + $0xe0] sm:$0xff]
  %v6076 = vld [vmem:[#allocation2 + $0xe8] sm:$0xff]
  %v6077 = vld [vmem:[#allocation2 + $0xf0] sm:$0xff]
  %v6078 = vld [vmem:[#allocation2 + $0xf8] sm:$0xff]
  %v6079 = vld [vmem:[#allocation2 + $0x100] sm:$0xff]
  %v6080 = vld [vmem:[#allocation2 + $0x108] sm:$0xff]
  %s6081 = scalar_lea.vmem %s4, 672
  %v6082 = vld [vmem:[%s6081] sm:$0xf]
  %v6083 = vld [vmem:[%s6081 + $0x4] sm:$0xf]
  %v6084 = vld [vmem:[%s6081 + $0x8] sm:$0xf]
  %v6085 = vld [vmem:[%s6081 + $0xc] sm:$0xf]
  %v6086 = vld [vmem:[%s6081 + $0x10] sm:$0xf]
  %v6087 = vld [vmem:[%s6081 + $0x14] sm:$0xf]
  %v6088 = vld [vmem:[%s6081 + $0x18] sm:$0xf]
  %v6089 = vld [vmem:[%s6081 + $0x1c] sm:$0xf]
  %v6090 = vld [vmem:[%s6081 + $0x20] sm:$0xf]
  %v6091 = vld [vmem:[%s6081 + $0x24] sm:$0xf]
  %v6092 = vld [vmem:[%s6081 + $0x28] sm:$0xf]
  %v6093 = vld [vmem:[%s6081 + $0x2c] sm:$0xf]
  %v6094 = vld [vmem:[%s6081 + $0x30] sm:$0xf]
  %v6095 = vld [vmem:[%s6081 + $0x34] sm:$0xf]
  %v6096 = vld [vmem:[%s6081 + $0x38] sm:$0xf]
  %v6097 = vld [vmem:[%s6081 + $0x3c] sm:$0xf]
  %v6098 = vld [vmem:[%s6081 + $0x40] sm:$0xf]
  %v6099 = vld [vmem:[%s6081 + $0x44] sm:$0xf]
  %v6100 = vld [vmem:[%s6081 + $0x48] sm:$0xf]
  %v6101 = vld [vmem:[%s6081 + $0x4c] sm:$0xf]
  %v6102 = vld [vmem:[%s6081 + $0x50] sm:$0xf]
  %v6103 = vld [vmem:[%s6081 + $0x54] sm:$0xf]
  %v6104 = vld [vmem:[%s6081 + $0x58] sm:$0xf]
  %v6105 = vld [vmem:[%s6081 + $0x5c] sm:$0xf]
  %v6107 = vshrl.u32 %v6051, 16
  %v6109 = vrot.slane %v6107, 7
  %v6111 = vshrl.u32 %v6053, 16
  %v6113 = vrot.slane %v6111, 7
  %v6114 = vshll.u32 %v6053, 16
  %v6116 = vor.u32 %v6113, %v6114
  %v6117 = vsel %vm3025, %v6109, %v6116
  %v6119 = vshrl.u32 %v6052, 16
  %v6121 = vrot.slane %v6119, 7
  %v6123 = vshrl.u32 %v6054, 16
  %v6125 = vrot.slane %v6123, 7
  %v6126 = vshll.u32 %v6054, 16
  %v6128 = vor.u32 %v6125, %v6126
  %v6129 = vsel %vm3025, %v6121, %v6128
  %v6131 = vshrl.u32 %v6055, 16
  %v6133 = vrot.slane %v6131, 7
  %v6134 = vshll.u32 %v6055, 16
  %v6136 = vor.u32 %v6133, %v6134
  %v6137 = vsel %vm3025, %v6113, %v6136
  %v6139 = vshrl.u32 %v6056, 16
  %v6141 = vrot.slane %v6139, 7
  %v6142 = vshll.u32 %v6056, 16
  %v6144 = vor.u32 %v6141, %v6142
  %v6145 = vsel %vm3025, %v6125, %v6144
  %v6147 = vshrl.u32 %v6057, 16
  %v6149 = vrot.slane %v6147, 7
  %v6150 = vshll.u32 %v6057, 16
  %v6152 = vor.u32 %v6149, %v6150
  %v6153 = vsel %vm3025, %v6133, %v6152
  %v6155 = vshrl.u32 %v6058, 16
  %v6157 = vrot.slane %v6155, 7
  %v6158 = vshll.u32 %v6058, 16
  %v6160 = vor.u32 %v6157, %v6158
  %v6161 = vsel %vm3025, %v6141, %v6160
  %v6163 = vshrl.u32 %v6059, 16
  %v6165 = vrot.slane %v6163, 7
  %v6166 = vshll.u32 %v6059, 16
  %v6168 = vor.u32 %v6165, %v6166
  %v6169 = vsel %vm3025, %v6149, %v6168
  %v6171 = vshrl.u32 %v6060, 16
  %v6173 = vrot.slane %v6171, 7
  %v6174 = vshll.u32 %v6060, 16
  %v6176 = vor.u32 %v6173, %v6174
  %v6177 = vsel %vm3025, %v6157, %v6176
  %v6179 = vshrl.u32 %v6061, 16
  %v6181 = vrot.slane %v6179, 7
  %v6182 = vshll.u32 %v6061, 16
  %v6184 = vor.u32 %v6181, %v6182
  %v6185 = vsel %vm3025, %v6165, %v6184
  %v6187 = vshrl.u32 %v6062, 16
  %v6189 = vrot.slane %v6187, 7
  %v6190 = vshll.u32 %v6062, 16
  %v6192 = vor.u32 %v6189, %v6190
  %v6193 = vsel %vm3025, %v6173, %v6192
  %v6195 = vshrl.u32 %v6063, 16
  %v6197 = vrot.slane %v6195, 7
  %v6198 = vshll.u32 %v6063, 16
  %v6200 = vor.u32 %v6197, %v6198
  %v6201 = vsel %vm3025, %v6181, %v6200
  %v6203 = vshrl.u32 %v6064, 16
  %v6205 = vrot.slane %v6203, 7
  %v6206 = vshll.u32 %v6064, 16
  %v6208 = vor.u32 %v6205, %v6206
  %v6209 = vsel %vm3025, %v6189, %v6208
  %v6211 = vshrl.u32 %v6065, 16
  %v6213 = vrot.slane %v6211, 7
  %v6214 = vshll.u32 %v6065, 16
  %v6216 = vor.u32 %v6213, %v6214
  %v6217 = vsel %vm3025, %v6197, %v6216
  %v6219 = vshrl.u32 %v6066, 16
  %v6221 = vrot.slane %v6219, 7
  %v6222 = vshll.u32 %v6066, 16
  %v6224 = vor.u32 %v6221, %v6222
  %v6225 = vsel %vm3025, %v6205, %v6224
  %v6227 = vshrl.u32 %v6067, 16
  %v6229 = vrot.slane %v6227, 7
  %v6230 = vshll.u32 %v6067, 16
  %v6232 = vor.u32 %v6229, %v6230
  %v6233 = vsel %vm3025, %v6213, %v6232
  %v6235 = vshrl.u32 %v6068, 16
  %v6237 = vrot.slane %v6235, 7
  %v6238 = vshll.u32 %v6068, 16
  %v6240 = vor.u32 %v6237, %v6238
  %v6241 = vsel %vm3025, %v6221, %v6240
  %v6243 = vshrl.u32 %v6069, 16
  %v6245 = vrot.slane %v6243, 7
  %v6246 = vshll.u32 %v6069, 16
  %v6248 = vor.u32 %v6245, %v6246
  %v6249 = vsel %vm3025, %v6229, %v6248
  %v6251 = vshrl.u32 %v6070, 16
  %v6253 = vrot.slane %v6251, 7
  %v6254 = vshll.u32 %v6070, 16
  %v6256 = vor.u32 %v6253, %v6254
  %v6257 = vsel %vm3025, %v6237, %v6256
  %v6259 = vshrl.u32 %v6071, 16
  %v6261 = vrot.slane %v6259, 7
  %v6262 = vshll.u32 %v6071, 16
  %v6264 = vor.u32 %v6261, %v6262
  %v6265 = vsel %vm3025, %v6245, %v6264
  %v6267 = vshrl.u32 %v6072, 16
  %v6269 = vrot.slane %v6267, 7
  %v6270 = vshll.u32 %v6072, 16
  %v6272 = vor.u32 %v6269, %v6270
  %v6273 = vsel %vm3025, %v6253, %v6272
  %v6275 = vshrl.u32 %v6073, 16
  %v6277 = vrot.slane %v6275, 7
  %v6278 = vshll.u32 %v6073, 16
  %v6280 = vor.u32 %v6277, %v6278
  %v6281 = vsel %vm3025, %v6261, %v6280
  %v6283 = vshrl.u32 %v6074, 16
  %v6285 = vrot.slane %v6283, 7
  %v6286 = vshll.u32 %v6074, 16
  %v6288 = vor.u32 %v6285, %v6286
  %v6289 = vsel %vm3025, %v6269, %v6288
  %v6291 = vshrl.u32 %v6075, 16
  %v6293 = vrot.slane %v6291, 7
  %v6294 = vshll.u32 %v6075, 16
  %v6296 = vor.u32 %v6293, %v6294
  %v6297 = vsel %vm3025, %v6277, %v6296
  %v6299 = vshrl.u32 %v6076, 16
  %v6301 = vrot.slane %v6299, 7
  %v6302 = vshll.u32 %v6076, 16
  %v6304 = vor.u32 %v6301, %v6302
  %v6305 = vsel %vm3025, %v6285, %v6304
  %v6307 = vshrl.u32 %v6077, 16
  %v6309 = vrot.slane %v6307, 7
  %v6310 = vshll.u32 %v6077, 16
  %v6312 = vor.u32 %v6309, %v6310
  %v6313 = vsel %vm3025, %v6293, %v6312
  %v6315 = vshrl.u32 %v6078, 16
  %v6317 = vrot.slane %v6315, 7
  %v6318 = vshll.u32 %v6078, 16
  %v6320 = vor.u32 %v6317, %v6318
  %v6321 = vsel %vm3025, %v6301, %v6320
  %v6323 = vshrl.u32 %v6079, 16
  %v6325 = vrot.slane %v6323, 7
  %v6326 = vshll.u32 %v6079, 16
  %v6328 = vor.u32 %v6325, %v6326
  %v6329 = vsel %vm3025, %v6309, %v6328
  %v6331 = vshrl.u32 %v6080, 16
  %v6333 = vrot.slane %v6331, 7
  %v6334 = vshll.u32 %v6080, 16
  %v6336 = vor.u32 %v6333, %v6334
  %v6337 = vsel %vm3025, %v6317, %v6336
  %v6376 = vunpack.c.l.b16 %v6082
  %v6377 = vunpack.c.l.b16 %v6083
  %v6378 = vunpack.c.l.b16 %v6084
  %v6379 = vunpack.c.l.b16 %v6085
  %v6380 = vunpack.c.l.b16 %v6086
  %v6381 = vunpack.c.l.b16 %v6087
  %v6382 = vunpack.c.l.b16 %v6088
  %v6383 = vunpack.c.l.b16 %v6089
  %v6384 = vunpack.c.l.b16 %v6090
  %v6385 = vunpack.c.l.b16 %v6091
  %v6386 = vunpack.c.l.b16 %v6092
  %v6387 = vunpack.c.l.b16 %v6093
  %v6388 = vunpack.c.l.b16 %v6094
  %v6389 = vunpack.c.l.b16 %v6095
  %v6390 = vunpack.c.l.b16 %v6096
  %v6391 = vunpack.c.l.b16 %v6097
  %v6392 = vunpack.c.l.b16 %v6098
  %v6393 = vunpack.c.l.b16 %v6099
  %v6394 = vunpack.c.l.b16 %v6100
  %v6395 = vunpack.c.l.b16 %v6101
  %v6396 = vunpack.c.l.b16 %v6102
  %v6397 = vunpack.c.l.b16 %v6103
  %v6398 = vunpack.c.l.b16 %v6104
  %v6399 = vunpack.c.l.b16 %v6105
  %v6400 = vpack.c.b16 %v6377, %v6376
  %v6401 = vpack.c.b16 %v6379, %v6378
  %v6402 = vpack.c.b16 %v6381, %v6380
  %v6403 = vpack.c.b16 %v6383, %v6382
  %v6404 = vpack.c.b16 %v6385, %v6384
  %v6405 = vpack.c.b16 %v6387, %v6386
  %v6406 = vpack.c.b16 %v6389, %v6388
  %v6407 = vpack.c.b16 %v6391, %v6390
  %v6408 = vpack.c.b16 %v6393, %v6392
  %v6409 = vpack.c.b16 %v6395, %v6394
  %v6410 = vpack.c.b16 %v6397, %v6396
  %v6411 = vpack.c.b16 %v6399, %v6398
  %v6425 = vsel %vm1879, %v6129, 0
  %v6428 = vsel %vm1879, %v6145, 0
  %v6431 = vsel %vm1879, %v6161, 0
  %v6434 = vsel %vm1879, %v6177, 0
  %v6437 = vsel %vm1879, %v6193, 0
  %v6440 = vsel %vm1879, %v6209, 0
  %v6443 = vsel %vm1879, %v6225, 0
  %v6446 = vsel %vm1879, %v6241, 0
  %v6449 = vsel %vm1879, %v6257, 0
  %v6452 = vsel %vm1879, %v6273, 0
  %v6455 = vsel %vm1879, %v6289, 0
  %v6458 = vsel %vm1879, %v6305, 0
  %v6461 = vsel %vm1879, %v6321, 0
  %v6464 = vsel %vm1879, %v6337, 0
  %6466 = vmatprep.subr.bf16.mxu0 0
  %6467 = vmatpush1.bf16.msra.mxu0 %v6400
  %6468 = vmatprep.subr.bf16.mxu0 0
  %6469 = vmatpush1.bf16.msra.mxu0 %v6401
  %6470 = vmatprep.subr.bf16.mxu0 0
  %6471 = vmatpush1.bf16.msra.mxu0 %v6402
  %6472 = vmatprep.subr.bf16.mxu0 0
  %6473 = vmatpush1.bf16.msra.mxu0 %v6403
  %6474 = vmatprep.subr.bf16.mxu0 0
  %6475 = vmatpush1.bf16.msra.mxu0 %v6404
  %6476 = vmatprep.subr.bf16.mxu0 0
  %6477 = vmatpush1.bf16.msra.mxu0 %v6405
  %6478 = vmatprep.subr.bf16.mxu0 0
  %6479 = vmatpush1.bf16.msra.mxu0 %v6406
  %6480 = vmatprep.subr.bf16.mxu0 0
  %6481 = vmatpush1.bf16.msra.mxu0 %v6407
  %6482 = vmatprep.subr.bf16.mxu0 0
  %6483 = vmatpush1.bf16.msra.mxu0 %v6408
  %6484 = vmatprep.subr.bf16.mxu0 0
  %6485 = vmatpush1.bf16.msra.mxu0 %v6409
  %6486 = vmatprep.subr.bf16.mxu0 0
  %6487 = vmatpush1.bf16.msra.mxu0 %v6410
  %6488 = vmatprep.subr.bf16.mxu0 0
  %6489 = vmatpush1.bf16.msra.mxu0 %v6411
  %6490 = vmatprep.subr.bf16.mxu0 0
  %6491 = vmatpush1.bf16.msra.mxu0 0
  %6492 = vmatprep.subr.bf16.mxu0 0
  %6493 = vmatpush1.bf16.msra.mxu0 0
  %6494 = vmatprep.subr.bf16.mxu0 0
  %6495 = vmatpush1.bf16.msra.mxu0 0
  %6496 = vmatprep.subr.bf16.mxu0 0
  %6497 = vmatpush1.bf16.msra.mxu0 0
  %6498 = vmatprep.mubr.bf16.mxu0 %v6425
  %6499 = vmatmul.mubr.bf16.gmra.mrb[0].mxu0 %v6117
  %v6500 = vpop.f32.mrb[0].mxu0
  %v6501 = vadd.f32 0.0, %v6500
  %v6502 = vpop.f32.mrb[0].mxu0
  %v6503 = vpop.f32.mrb[0].mxu0
  %v6504 = vadd.f32 0.0, %v6503
  %v6505 = vpop.f32.mrb[0].mxu0
  %6506 = vmatprep.mubr.bf16.mxu0 %v6428
  %6507 = vmatmul.mubr.bf16.gmra.mrb[0].mxu0 %v6137
  %v6508 = vpop.f32.mrb[0].mxu0
  %v6509 = vadd.f32 0.0, %v6508
  %v6510 = vpop.f32.mrb[0].mxu0
  %v6511 = vpop.f32.mrb[0].mxu0
  %v6512 = vadd.f32 0.0, %v6511
  %v6513 = vpop.f32.mrb[0].mxu0
  %6514 = vmatprep.mubr.bf16.mxu0 %v6431
  %6515 = vmatmul.mubr.bf16.gmra.mrb[0].mxu0 %v6153
  %v6516 = vpop.f32.mrb[0].mxu0
  %v6517 = vadd.f32 0.0, %v6516
  %v6518 = vpop.f32.mrb[0].mxu0
  %v6519 = vpop.f32.mrb[0].mxu0
  %v6520 = vadd.f32 0.0, %v6519
  %v6521 = vpop.f32.mrb[0].mxu0
  %6522 = vmatprep.mubr.bf16.mxu0 %v6434
  %6523 = vmatmul.mubr.bf16.gmra.mrb[0].mxu0 %v6169
  %v6524 = vpop.f32.mrb[0].mxu0
  %v6525 = vadd.f32 0.0, %v6524
  %v6526 = vpop.f32.mrb[0].mxu0
  %v6527 = vpop.f32.mrb[0].mxu0
  %v6528 = vadd.f32 0.0, %v6527
  %v6529 = vpop.f32.mrb[0].mxu0
  %6530 = vmatprep.mubr.bf16.mxu0 %v6437
  %6531 = vmatmul.mubr.bf16.gmra.mrb[0].mxu0 %v6185
  %v6532 = vpop.f32.mrb[0].mxu0
  %v6533 = vadd.f32 0.0, %v6532
  %v6534 = vpop.f32.mrb[0].mxu0
  %v6535 = vpop.f32.mrb[0].mxu0
  %v6536 = vadd.f32 0.0, %v6535
  %v6537 = vpop.f32.mrb[0].mxu0
  %6538 = vmatprep.mubr.bf16.mxu0 %v6440
  %6539 = vmatmul.mubr.bf16.gmra.mrb[0].mxu0 %v6201
  %v6540 = vpop.f32.mrb[0].mxu0
  %v6541 = vadd.f32 0.0, %v6540
  %v6542 = vpop.f32.mrb[0].mxu0
  %v6543 = vpop.f32.mrb[0].mxu0
  %v6544 = vadd.f32 0.0, %v6543
  %v6545 = vpop.f32.mrb[0].mxu0
  %6546 = vmatprep.mubr.bf16.mxu0 %v6443
  %6547 = vmatmul.mubr.bf16.gmra.mrb[0].mxu0 %v6217
  %v6548 = vpop.f32.mrb[0].mxu0
  %v6549 = vadd.f32 0.0, %v6548
  %v6550 = vpop.f32.mrb[0].mxu0
  %v6551 = vpop.f32.mrb[0].mxu0
  %v6552 = vadd.f32 0.0, %v6551
  %v6553 = vpop.f32.mrb[0].mxu0
  %6554 = vmatprep.mubr.bf16.mxu0 %v6446
  %6555 = vmatmul.mubr.bf16.gmra.mrb[0].mxu0 %v6233
  %v6556 = vpop.f32.mrb[0].mxu0
  %v6557 = vadd.f32 0.0, %v6556
  %v6558 = vpop.f32.mrb[0].mxu0
  %v6559 = vpop.f32.mrb[0].mxu0
  %v6560 = vadd.f32 0.0, %v6559
  %v6561 = vpop.f32.mrb[0].mxu0
  %6562 = vmatprep.mubr.bf16.mxu0 %v6449
  %6563 = vmatmul.mubr.bf16.gmra.mrb[0].mxu0 %v6249
  %v6564 = vpop.f32.mrb[0].mxu0
  %v6565 = vadd.f32 0.0, %v6564
  %v6566 = vpop.f32.mrb[0].mxu0
  %v6567 = vpop.f32.mrb[0].mxu0
  %v6568 = vadd.f32 0.0, %v6567
  %v6569 = vpop.f32.mrb[0].mxu0
  %6570 = vmatprep.mubr.bf16.mxu0 %v6452
  %6571 = vmatmul.mubr.bf16.gmra.mrb[0].mxu0 %v6265
  %v6572 = vpop.f32.mrb[0].mxu0
  %v6573 = vadd.f32 0.0, %v6572
  %v6574 = vpop.f32.mrb[0].mxu0
  %v6575 = vpop.f32.mrb[0].mxu0
  %v6576 = vadd.f32 0.0, %v6575
  %v6577 = vpop.f32.mrb[0].mxu0
  %6578 = vmatprep.mubr.bf16.mxu0 %v6455
  %6579 = vmatmul.mubr.bf16.gmra.mrb[0].mxu0 %v6281
  %v6580 = vpop.f32.mrb[0].mxu0
  %v6581 = vadd.f32 0.0, %v6580
  %v6582 = vpop.f32.mrb[0].mxu0
  %v6583 = vpop.f32.mrb[0].mxu0
  %v6584 = vadd.f32 0.0, %v6583
  %v6585 = vpop.f32.mrb[0].mxu0
  %6586 = vmatprep.mubr.bf16.mxu0 %v6458
  %6587 = vmatmul.mubr.bf16.gmra.mrb[0].mxu0 %v6297
  %v6588 = vpop.f32.mrb[0].mxu0
  %v6589 = vadd.f32 0.0, %v6588
  %v6590 = vpop.f32.mrb[0].mxu0
  %v6591 = vpop.f32.mrb[0].mxu0
  %v6592 = vadd.f32 0.0, %v6591
  %v6593 = vpop.f32.mrb[0].mxu0
  %6594 = vmatprep.mubr.bf16.mxu0 %v6461
  %6595 = vmatmul.mubr.bf16.gmra.mrb[0].mxu0 %v6313
  %v6596 = vpop.f32.mrb[0].mxu0
  %v6597 = vadd.f32 0.0, %v6596
  %v6598 = vpop.f32.mrb[0].mxu0
  %v6599 = vpop.f32.mrb[0].mxu0
  %v6600 = vadd.f32 0.0, %v6599
  %v6601 = vpop.f32.mrb[0].mxu0
  %6602 = vmatprep.mubr.bf16.mxu0 %v6464
  %6603 = vmatmul.mubr.bf16.gmra.mrb[0].mxu0 %v6329
  %v6604 = vpop.f32.mrb[0].mxu0
  %v6605 = vadd.f32 0.0, %v6604
  %v6606 = vpop.f32.mrb[0].mxu0
  %v6607 = vpop.f32.mrb[0].mxu0
  %v6608 = vadd.f32 0.0, %v6607
  %v6609 = vpop.f32.mrb[0].mxu0
  %6610 = vdwg.mxu0
  %v6611 = vld [vmem:[%s5] sm:$0xff]
  %v6612 = vld [vmem:[%s5 + $0x8] sm:$0xff]
  %v6613 = vld [vmem:[%s5 + $0x10] sm:$0xff]
  %v6614 = vld [vmem:[%s5 + $0x18] sm:$0xff]
  %v6615 = vld [vmem:[%s5 + $0x20] sm:$0xff]
  %v6616 = vld [vmem:[%s5 + $0x28] sm:$0xff]
  %v6617 = vld [vmem:[%s5 + $0x30] sm:$0xff]
  %v6618 = vld [vmem:[%s5 + $0x38] sm:$0xff]
  %v6619 = vld [vmem:[%s5 + $0x40] sm:$0xff]
  %v6620 = vld [vmem:[%s5 + $0x48] sm:$0xff]
  %v6621 = vld [vmem:[%s5 + $0x50] sm:$0xff]
  %v6622 = vld [vmem:[%s5 + $0x58] sm:$0xff]
  %v6623 = vld [vmem:[%s5 + $0x60] sm:$0xff]
  %v6624 = vld [vmem:[%s5 + $0x68] sm:$0xff]
  %v6625 = vld [vmem:[%s5 + $0x70] sm:$0xff]
  %v6626 = vld [vmem:[%s5 + $0x78] sm:$0xff]
  %v6627 = vld [vmem:[%s5 + $0x80] sm:$0xff]
  %v6628 = vld [vmem:[%s5 + $0x88] sm:$0xff]
  %v6629 = vld [vmem:[%s5 + $0x90] sm:$0xff]
  %v6630 = vld [vmem:[%s5 + $0x98] sm:$0xff]
  %v6631 = vld [vmem:[%s5 + $0xa0] sm:$0xff]
  %v6632 = vld [vmem:[%s5 + $0xa8] sm:$0xff]
  %v6633 = vld [vmem:[%s5 + $0xb0] sm:$0xff]
  %v6634 = vld [vmem:[%s5 + $0xb8] sm:$0xff]
  %v6635 = vld [vmem:[%s5 + $0xc0] sm:$0xff]
  %v6636 = vld [vmem:[%s5 + $0xc8] sm:$0xff]
  %v6637 = vld [vmem:[%s5 + $0xd0] sm:$0xff]
  %v6638 = vld [vmem:[%s5 + $0xd8] sm:$0xff]
  %v6639 = vadd.f32 %v6611, %v6501
  %v6640 = vadd.f32 %v6612, %v6504
  %v6641 = vadd.f32 %v6613, %v6509
  %v6642 = vadd.f32 %v6614, %v6512
  %v6643 = vadd.f32 %v6615, %v6517
  %v6644 = vadd.f32 %v6616, %v6520
  %v6645 = vadd.f32 %v6617, %v6525
  %v6646 = vadd.f32 %v6618, %v6528
  %v6647 = vadd.f32 %v6619, %v6533
  %v6648 = vadd.f32 %v6620, %v6536
  %v6649 = vadd.f32 %v6621, %v6541
  %v6650 = vadd.f32 %v6622, %v6544
  %v6651 = vadd.f32 %v6623, %v6549
  %v6652 = vadd.f32 %v6624, %v6552
  %v6653 = vadd.f32 %v6625, %v6557
  %v6654 = vadd.f32 %v6626, %v6560
  %v6655 = vadd.f32 %v6627, %v6565
  %v6656 = vadd.f32 %v6628, %v6568
  %v6657 = vadd.f32 %v6629, %v6573
  %v6658 = vadd.f32 %v6630, %v6576
  %v6659 = vadd.f32 %v6631, %v6581
  %v6660 = vadd.f32 %v6632, %v6584
  %v6661 = vadd.f32 %v6633, %v6589
  %v6662 = vadd.f32 %v6634, %v6592
  %v6663 = vadd.f32 %v6635, %v6597
  %v6664 = vadd.f32 %v6636, %v6600
  %v6665 = vadd.f32 %v6637, %v6605
  %v6666 = vadd.f32 %v6638, %v6608
  %6667 = vst.msk [vmem:[%s5] sm:$0xff] %vm1163, %v6639
  %6668 = vst.msk [vmem:[%s5 + $0x8] sm:$0xff] %vm1163, %v6640
  %6669 = vst.msk [vmem:[%s5 + $0x10] sm:$0xff] %vm1163, %v6641
  %6670 = vst.msk [vmem:[%s5 + $0x18] sm:$0xff] %vm1163, %v6642
  %6671 = vst.msk [vmem:[%s5 + $0x20] sm:$0xff] %vm1163, %v6643
  %6672 = vst.msk [vmem:[%s5 + $0x28] sm:$0xff] %vm1163, %v6644
  %6673 = vst.msk [vmem:[%s5 + $0x30] sm:$0xff] %vm1163, %v6645
  %6674 = vst.msk [vmem:[%s5 + $0x38] sm:$0xff] %vm1163, %v6646
  %6675 = vst.msk [vmem:[%s5 + $0x40] sm:$0xff] %vm1163, %v6647
  %6676 = vst.msk [vmem:[%s5 + $0x48] sm:$0xff] %vm1163, %v6648
  %6677 = vst.msk [vmem:[%s5 + $0x50] sm:$0xff] %vm1163, %v6649
  %6678 = vst.msk [vmem:[%s5 + $0x58] sm:$0xff] %vm1163, %v6650
  %6679 = vst.msk [vmem:[%s5 + $0x60] sm:$0xff] %vm1163, %v6651
  %6680 = vst.msk [vmem:[%s5 + $0x68] sm:$0xff] %vm1163, %v6652
  %6681 = vst.msk [vmem:[%s5 + $0x70] sm:$0xff] %vm1163, %v6653
  %6682 = vst.msk [vmem:[%s5 + $0x78] sm:$0xff] %vm1163, %v6654
  %6683 = vst.msk [vmem:[%s5 + $0x80] sm:$0xff] %vm1163, %v6655
  %6684 = vst.msk [vmem:[%s5 + $0x88] sm:$0xff] %vm1163, %v6656
  %6685 = vst.msk [vmem:[%s5 + $0x90] sm:$0xff] %vm1163, %v6657
  %6686 = vst.msk [vmem:[%s5 + $0x98] sm:$0xff] %vm1163, %v6658
  %6687 = vst.msk [vmem:[%s5 + $0xa0] sm:$0xff] %vm1163, %v6659
  %6688 = vst.msk [vmem:[%s5 + $0xa8] sm:$0xff] %vm1163, %v6660
  %6689 = vst.msk [vmem:[%s5 + $0xb0] sm:$0xff] %vm1163, %v6661
  %6690 = vst.msk [vmem:[%s5 + $0xb8] sm:$0xff] %vm1163, %v6662
  %6691 = vst.msk [vmem:[%s5 + $0xc0] sm:$0xff] %vm1163, %v6663
  %6692 = vst.msk [vmem:[%s5 + $0xc8] sm:$0xff] %vm1163, %v6664
  %6693 = vst.msk [vmem:[%s5 + $0xd0] sm:$0xff] %vm1163, %v6665
  %6694 = vst.msk [vmem:[%s5 + $0xd8] sm:$0xff] %vm1163, %v6666
  %v6695 = vld [vmem:[#allocation2 + $0x30] sm:$0xff]
  %v6696 = vld [vmem:[#allocation2 + $0x38] sm:$0xff]
  %v6697 = vld [vmem:[#allocation2 + $0x40] sm:$0xff]
  %v6698 = vld [vmem:[#allocation2 + $0x48] sm:$0xff]
  %v6699 = vld [vmem:[#allocation2 + $0x50] sm:$0xff]
  %v6700 = vld [vmem:[#allocation2 + $0x58] sm:$0xff]
  %v6701 = vld [vmem:[#allocation2 + $0x60] sm:$0xff]
  %v6702 = vld [vmem:[#allocation2 + $0x68] sm:$0xff]
  %v6703 = vld [vmem:[#allocation2 + $0x70] sm:$0xff]
  %v6704 = vld [vmem:[#allocation2 + $0x78] sm:$0xff]
  %v6705 = vld [vmem:[#allocation2 + $0x80] sm:$0xff]
  %v6706 = vld [vmem:[#allocation2 + $0x88] sm:$0xff]
  %v6707 = vld [vmem:[#allocation2 + $0x90] sm:$0xff]
  %v6708 = vld [vmem:[#allocation2 + $0x98] sm:$0xff]
  %v6709 = vld [vmem:[#allocation2 + $0xa0] sm:$0xff]
  %v6710 = vld [vmem:[#allocation2 + $0xa8] sm:$0xff]
  %v6711 = vld [vmem:[#allocation2 + $0xb0] sm:$0xff]
  %v6712 = vld [vmem:[#allocation2 + $0xb8] sm:$0xff]
  %v6713 = vld [vmem:[#allocation2 + $0xc0] sm:$0xff]
  %v6714 = vld [vmem:[#allocation2 + $0xc8] sm:$0xff]
  %v6715 = vld [vmem:[#allocation2 + $0xd0] sm:$0xff]
  %v6716 = vld [vmem:[#allocation2 + $0xd8] sm:$0xff]
  %v6717 = vld [vmem:[#allocation2 + $0xe0] sm:$0xff]
  %v6718 = vld [vmem:[#allocation2 + $0xe8] sm:$0xff]
  %v6719 = vld [vmem:[#allocation2 + $0xf0] sm:$0xff]
  %v6720 = vld [vmem:[#allocation2 + $0xf8] sm:$0xff]
  %v6721 = vld [vmem:[#allocation2 + $0x100] sm:$0xff]
  %v6722 = vld [vmem:[#allocation2 + $0x108] sm:$0xff]
  %s6723 = scalar_lea.vmem %s4, 768
  %v6724 = vld [vmem:[%s6723] sm:$0xf]
  %v6725 = vld [vmem:[%s6723 + $0x4] sm:$0xf]
  %v6726 = vld [vmem:[%s6723 + $0x8] sm:$0xf]
  %v6727 = vld [vmem:[%s6723 + $0xc] sm:$0xf]
  %v6728 = vld [vmem:[%s6723 + $0x10] sm:$0xf]
  %v6729 = vld [vmem:[%s6723 + $0x14] sm:$0xf]
  %v6730 = vld [vmem:[%s6723 + $0x18] sm:$0xf]
  %v6731 = vld [vmem:[%s6723 + $0x1c] sm:$0xf]
  %v6732 = vld [vmem:[%s6723 + $0x20] sm:$0xf]
  %v6733 = vld [vmem:[%s6723 + $0x24] sm:$0xf]
  %v6734 = vld [vmem:[%s6723 + $0x28] sm:$0xf]
  %v6735 = vld [vmem:[%s6723 + $0x2c] sm:$0xf]
  %v6736 = vld [vmem:[%s6723 + $0x30] sm:$0xf]
  %v6737 = vld [vmem:[%s6723 + $0x34] sm:$0xf]
  %v6738 = vld [vmem:[%s6723 + $0x38] sm:$0xf]
  %v6739 = vld [vmem:[%s6723 + $0x3c] sm:$0xf]
  %v6740 = vld [vmem:[%s6723 + $0x40] sm:$0xf]
  %v6741 = vld [vmem:[%s6723 + $0x44] sm:$0xf]
  %v6742 = vld [vmem:[%s6723 + $0x48] sm:$0xf]
  %v6743 = vld [vmem:[%s6723 + $0x4c] sm:$0xf]
  %v6744 = vld [vmem:[%s6723 + $0x50] sm:$0xf]
  %v6745 = vld [vmem:[%s6723 + $0x54] sm:$0xf]
  %v6746 = vld [vmem:[%s6723 + $0x58] sm:$0xf]
  %v6747 = vld [vmem:[%s6723 + $0x5c] sm:$0xf]
  %v6772 = vunpack.c.l.b16 %v6724
  %v6773 = vunpack.c.l.b16 %v6725
  %v6774 = vunpack.c.l.b16 %v6726
  %v6775 = vunpack.c.l.b16 %v6727
  %v6776 = vunpack.c.l.b16 %v6728
  %v6777 = vunpack.c.l.b16 %v6729
  %v6778 = vunpack.c.l.b16 %v6730
  %v6779 = vunpack.c.l.b16 %v6731
  %v6780 = vunpack.c.l.b16 %v6732
  %v6781 = vunpack.c.l.b16 %v6733
  %v6782 = vunpack.c.l.b16 %v6734
  %v6783 = vunpack.c.l.b16 %v6735
  %v6784 = vunpack.c.l.b16 %v6736
  %v6785 = vunpack.c.l.b16 %v6737
  %v6786 = vunpack.c.l.b16 %v6738
  %v6787 = vunpack.c.l.b16 %v6739
  %v6788 = vunpack.c.l.b16 %v6740
  %v6789 = vunpack.c.l.b16 %v6741
  %v6790 = vunpack.c.l.b16 %v6742
  %v6791 = vunpack.c.l.b16 %v6743
  %v6792 = vunpack.c.l.b16 %v6744
  %v6793 = vunpack.c.l.b16 %v6745
  %v6794 = vunpack.c.l.b16 %v6746
  %v6795 = vunpack.c.l.b16 %v6747
  %v6796 = vpack.c.b16 %v6773, %v6772
  %v6797 = vpack.c.b16 %v6775, %v6774
  %v6798 = vpack.c.b16 %v6777, %v6776
  %v6799 = vpack.c.b16 %v6779, %v6778
  %v6800 = vpack.c.b16 %v6781, %v6780
  %v6801 = vpack.c.b16 %v6783, %v6782
  %v6802 = vpack.c.b16 %v6785, %v6784
  %v6803 = vpack.c.b16 %v6787, %v6786
  %v6804 = vpack.c.b16 %v6789, %v6788
  %v6805 = vpack.c.b16 %v6791, %v6790
  %v6806 = vpack.c.b16 %v6793, %v6792
  %v6807 = vpack.c.b16 %v6795, %v6794
  %v6821 = vsel %vm1879, %v6696, 0
  %v6824 = vsel %vm1879, %v6698, 0
  %v6827 = vsel %vm1879, %v6700, 0
  %v6830 = vsel %vm1879, %v6702, 0
  %v6833 = vsel %vm1879, %v6704, 0
  %v6836 = vsel %vm1879, %v6706, 0
  %v6839 = vsel %vm1879, %v6708, 0
  %v6842 = vsel %vm1879, %v6710, 0
  %v6845 = vsel %vm1879, %v6712, 0
  %v6848 = vsel %vm1879, %v6714, 0
  %v6851 = vsel %vm1879, %v6716, 0
  %v6854 = vsel %vm1879, %v6718, 0
  %v6857 = vsel %vm1879, %v6720, 0
  %v6860 = vsel %vm1879, %v6722, 0
  %6862 = vmatprep.subr.bf16.mxu0 0
  %6863 = vmatpush1.bf16.msra.mxu0 %v6796
  %6864 = vmatprep.subr.bf16.mxu0 0
  %6865 = vmatpush1.bf16.msra.mxu0 %v6797
  %6866 = vmatprep.subr.bf16.mxu0 0
  %6867 = vmatpush1.bf16.msra.mxu0 %v6798
  %6868 = vmatprep.subr.bf16.mxu0 0
  %6869 = vmatpush1.bf16.msra.mxu0 %v6799
  %6870 = vmatprep.subr.bf16.mxu0 0
  %6871 = vmatpush1.bf16.msra.mxu0 %v6800
  %6872 = vmatprep.subr.bf16.mxu0 0
  %6873 = vmatpush1.bf16.msra.mxu0 %v6801
  %6874 = vmatprep.subr.bf16.mxu0 0
  %6875 = vmatpush1.bf16.msra.mxu0 %v6802
  %6876 = vmatprep.subr.bf16.mxu0 0
  %6877 = vmatpush1.bf16.msra.mxu0 %v6803
  %6878 = vmatprep.subr.bf16.mxu0 0
  %6879 = vmatpush1.bf16.msra.mxu0 %v6804
  %6880 = vmatprep.subr.bf16.mxu0 0
  %6881 = vmatpush1.bf16.msra.mxu0 %v6805
  %6882 = vmatprep.subr.bf16.mxu0 0
  %6883 = vmatpush1.bf16.msra.mxu0 %v6806
  %6884 = vmatprep.subr.bf16.mxu0 0
  %6885 = vmatpush1.bf16.msra.mxu0 %v6807
  %6886 = vmatprep.subr.bf16.mxu0 0
  %6887 = vmatpush1.bf16.msra.mxu0 0
  %6888 = vmatprep.subr.bf16.mxu0 0
  %6889 = vmatpush1.bf16.msra.mxu0 0
  %6890 = vmatprep.subr.bf16.mxu0 0
  %6891 = vmatpush1.bf16.msra.mxu0 0
  %6892 = vmatprep.subr.bf16.mxu0 0
  %6893 = vmatpush1.bf16.msra.mxu0 0
  %6894 = vmatprep.mubr.bf16.mxu0 %v6821
  %6895 = vmatmul.mubr.bf16.gmra.mrb[0].mxu0 %v6695
  %v6896 = vpop.f32.mrb[0].mxu0
  %v6897 = vadd.f32 0.0, %v6896
  %v6898 = vpop.f32.mrb[0].mxu0
  %v6899 = vpop.f32.mrb[0].mxu0
  %v6900 = vadd.f32 0.0, %v6899
  %v6901 = vpop.f32.mrb[0].mxu0
  %6902 = vmatprep.mubr.bf16.mxu0 %v6824
  %6903 = vmatmul.mubr.bf16.gmra.mrb[0].mxu0 %v6697
  %v6904 = vpop.f32.mrb[0].mxu0
  %v6905 = vadd.f32 0.0, %v6904
  %v6906 = vpop.f32.mrb[0].mxu0
  %v6907 = vpop.f32.mrb[0].mxu0
  %v6908 = vadd.f32 0.0, %v6907
  %v6909 = vpop.f32.mrb[0].mxu0
  %6910 = vmatprep.mubr.bf16.mxu0 %v6827
  %6911 = vmatmul.mubr.bf16.gmra.mrb[0].mxu0 %v6699
  %v6912 = vpop.f32.mrb[0].mxu0
  %v6913 = vadd.f32 0.0, %v6912
  %v6914 = vpop.f32.mrb[0].mxu0
  %v6915 = vpop.f32.mrb[0].mxu0
  %v6916 = vadd.f32 0.0, %v6915
  %v6917 = vpop.f32.mrb[0].mxu0
  %6918 = vmatprep.mubr.bf16.mxu0 %v6830
  %6919 = vmatmul.mubr.bf16.gmra.mrb[0].mxu0 %v6701
  %v6920 = vpop.f32.mrb[0].mxu0
  %v6921 = vadd.f32 0.0, %v6920
  %v6922 = vpop.f32.mrb[0].mxu0
  %v6923 = vpop.f32.mrb[0].mxu0
  %v6924 = vadd.f32 0.0, %v6923
  %v6925 = vpop.f32.mrb[0].mxu0
  %6926 = vmatprep.mubr.bf16.mxu0 %v6833
  %6927 = vmatmul.mubr.bf16.gmra.mrb[0].mxu0 %v6703
  %v6928 = vpop.f32.mrb[0].mxu0
  %v6929 = vadd.f32 0.0, %v6928
  %v6930 = vpop.f32.mrb[0].mxu0
  %v6931 = vpop.f32.mrb[0].mxu0
  %v6932 = vadd.f32 0.0, %v6931
  %v6933 = vpop.f32.mrb[0].mxu0
  %6934 = vmatprep.mubr.bf16.mxu0 %v6836
  %6935 = vmatmul.mubr.bf16.gmra.mrb[0].mxu0 %v6705
  %v6936 = vpop.f32.mrb[0].mxu0
  %v6937 = vadd.f32 0.0, %v6936
  %v6938 = vpop.f32.mrb[0].mxu0
  %v6939 = vpop.f32.mrb[0].mxu0
  %v6940 = vadd.f32 0.0, %v6939
  %v6941 = vpop.f32.mrb[0].mxu0
  %6942 = vmatprep.mubr.bf16.mxu0 %v6839
  %6943 = vmatmul.mubr.bf16.gmra.mrb[0].mxu0 %v6707
  %v6944 = vpop.f32.mrb[0].mxu0
  %v6945 = vadd.f32 0.0, %v6944
  %v6946 = vpop.f32.mrb[0].mxu0
  %v6947 = vpop.f32.mrb[0].mxu0
  %v6948 = vadd.f32 0.0, %v6947
  %v6949 = vpop.f32.mrb[0].mxu0
  %6950 = vmatprep.mubr.bf16.mxu0 %v6842
  %6951 = vmatmul.mubr.bf16.gmra.mrb[0].mxu0 %v6709
  %v6952 = vpop.f32.mrb[0].mxu0
  %v6953 = vadd.f32 0.0, %v6952
  %v6954 = vpop.f32.mrb[0].mxu0
  %v6955 = vpop.f32.mrb[0].mxu0
  %v6956 = vadd.f32 0.0, %v6955
  %v6957 = vpop.f32.mrb[0].mxu0
  %6958 = vmatprep.mubr.bf16.mxu0 %v6845
  %6959 = vmatmul.mubr.bf16.gmra.mrb[0].mxu0 %v6711
  %v6960 = vpop.f32.mrb[0].mxu0
  %v6961 = vadd.f32 0.0, %v6960
  %v6962 = vpop.f32.mrb[0].mxu0
  %v6963 = vpop.f32.mrb[0].mxu0
  %v6964 = vadd.f32 0.0, %v6963
  %v6965 = vpop.f32.mrb[0].mxu0
  %6966 = vmatprep.mubr.bf16.mxu0 %v6848
  %6967 = vmatmul.mubr.bf16.gmra.mrb[0].mxu0 %v6713
  %v6968 = vpop.f32.mrb[0].mxu0
  %v6969 = vadd.f32 0.0, %v6968
  %v6970 = vpop.f32.mrb[0].mxu0
  %v6971 = vpop.f32.mrb[0].mxu0
  %v6972 = vadd.f32 0.0, %v6971
  %v6973 = vpop.f32.mrb[0].mxu0
  %6974 = vmatprep.mubr.bf16.mxu0 %v6851
  %6975 = vmatmul.mubr.bf16.gmra.mrb[0].mxu0 %v6715
  %v6976 = vpop.f32.mrb[0].mxu0
  %v6977 = vadd.f32 0.0, %v6976
  %v6978 = vpop.f32.mrb[0].mxu0
  %v6979 = vpop.f32.mrb[0].mxu0
  %v6980 = vadd.f32 0.0, %v6979
  %v6981 = vpop.f32.mrb[0].mxu0
  %6982 = vmatprep.mubr.bf16.mxu0 %v6854
  %6983 = vmatmul.mubr.bf16.gmra.mrb[0].mxu0 %v6717
  %v6984 = vpop.f32.mrb[0].mxu0
  %v6985 = vadd.f32 0.0, %v6984
  %v6986 = vpop.f32.mrb[0].mxu0
  %v6987 = vpop.f32.mrb[0].mxu0
  %v6988 = vadd.f32 0.0, %v6987
  %v6989 = vpop.f32.mrb[0].mxu0
  %6990 = vmatprep.mubr.bf16.mxu0 %v6857
  %6991 = vmatmul.mubr.bf16.gmra.mrb[0].mxu0 %v6719
  %v6992 = vpop.f32.mrb[0].mxu0
  %v6993 = vadd.f32 0.0, %v6992
  %v6994 = vpop.f32.mrb[0].mxu0
  %v6995 = vpop.f32.mrb[0].mxu0
  %v6996 = vadd.f32 0.0, %v6995
  %v6997 = vpop.f32.mrb[0].mxu0
  %6998 = vmatprep.mubr.bf16.mxu0 %v6860
  %6999 = vmatmul.mubr.bf16.gmra.mrb[0].mxu0 %v6721
  %v7000 = vpop.f32.mrb[0].mxu0
  %v7001 = vadd.f32 0.0, %v7000
  %v7002 = vpop.f32.mrb[0].mxu0
  %v7003 = vpop.f32.mrb[0].mxu0
  %v7004 = vadd.f32 0.0, %v7003
  %v7005 = vpop.f32.mrb[0].mxu0
  %7006 = vdwg.mxu0
  %v7007 = vld [vmem:[%s5] sm:$0xff]
  %v7008 = vld [vmem:[%s5 + $0x8] sm:$0xff]
  %v7009 = vld [vmem:[%s5 + $0x10] sm:$0xff]
  %v7010 = vld [vmem:[%s5 + $0x18] sm:$0xff]
  %v7011 = vld [vmem:[%s5 + $0x20] sm:$0xff]
  %v7012 = vld [vmem:[%s5 + $0x28] sm:$0xff]
  %v7013 = vld [vmem:[%s5 + $0x30] sm:$0xff]
  %v7014 = vld [vmem:[%s5 + $0x38] sm:$0xff]
  %v7015 = vld [vmem:[%s5 + $0x40] sm:$0xff]
  %v7016 = vld [vmem:[%s5 + $0x48] sm:$0xff]
  %v7017 = vld [vmem:[%s5 + $0x50] sm:$0xff]
  %v7018 = vld [vmem:[%s5 + $0x58] sm:$0xff]
  %v7019 = vld [vmem:[%s5 + $0x60] sm:$0xff]
  %v7020 = vld [vmem:[%s5 + $0x68] sm:$0xff]
  %v7021 = vld [vmem:[%s5 + $0x70] sm:$0xff]
  %v7022 = vld [vmem:[%s5 + $0x78] sm:$0xff]
  %v7023 = vld [vmem:[%s5 + $0x80] sm:$0xff]
  %v7024 = vld [vmem:[%s5 + $0x88] sm:$0xff]
  %v7025 = vld [vmem:[%s5 + $0x90] sm:$0xff]
  %v7026 = vld [vmem:[%s5 + $0x98] sm:$0xff]
  %v7027 = vld [vmem:[%s5 + $0xa0] sm:$0xff]
  %v7028 = vld [vmem:[%s5 + $0xa8] sm:$0xff]
  %v7029 = vld [vmem:[%s5 + $0xb0] sm:$0xff]
  %v7030 = vld [vmem:[%s5 + $0xb8] sm:$0xff]
  %v7031 = vld [vmem:[%s5 + $0xc0] sm:$0xff]
  %v7032 = vld [vmem:[%s5 + $0xc8] sm:$0xff]
  %v7033 = vld [vmem:[%s5 + $0xd0] sm:$0xff]
  %v7034 = vld [vmem:[%s5 + $0xd8] sm:$0xff]
  %v7035 = vadd.f32 %v7007, %v6897
  %v7036 = vadd.f32 %v7008, %v6900
  %v7037 = vadd.f32 %v7009, %v6905
  %v7038 = vadd.f32 %v7010, %v6908
  %v7039 = vadd.f32 %v7011, %v6913
  %v7040 = vadd.f32 %v7012, %v6916
  %v7041 = vadd.f32 %v7013, %v6921
  %v7042 = vadd.f32 %v7014, %v6924
  %v7043 = vadd.f32 %v7015, %v6929
  %v7044 = vadd.f32 %v7016, %v6932
  %v7045 = vadd.f32 %v7017, %v6937
  %v7046 = vadd.f32 %v7018, %v6940
  %v7047 = vadd.f32 %v7019, %v6945
  %v7048 = vadd.f32 %v7020, %v6948
  %v7049 = vadd.f32 %v7021, %v6953
  %v7050 = vadd.f32 %v7022, %v6956
  %v7051 = vadd.f32 %v7023, %v6961
  %v7052 = vadd.f32 %v7024, %v6964
  %v7053 = vadd.f32 %v7025, %v6969
  %v7054 = vadd.f32 %v7026, %v6972
  %v7055 = vadd.f32 %v7027, %v6977
  %v7056 = vadd.f32 %v7028, %v6980
  %v7057 = vadd.f32 %v7029, %v6985
  %v7058 = vadd.f32 %v7030, %v6988
  %v7059 = vadd.f32 %v7031, %v6993
  %v7060 = vadd.f32 %v7032, %v6996
  %v7061 = vadd.f32 %v7033, %v7001
  %v7062 = vadd.f32 %v7034, %v7004
  %7063 = vst.msk [vmem:[%s5] sm:$0xff] %vm1163, %v7035
  %7064 = vst.msk [vmem:[%s5 + $0x8] sm:$0xff] %vm1163, %v7036
  %7065 = vst.msk [vmem:[%s5 + $0x10] sm:$0xff] %vm1163, %v7037
  %7066 = vst.msk [vmem:[%s5 + $0x18] sm:$0xff] %vm1163, %v7038
  %7067 = vst.msk [vmem:[%s5 + $0x20] sm:$0xff] %vm1163, %v7039
  %7068 = vst.msk [vmem:[%s5 + $0x28] sm:$0xff] %vm1163, %v7040
  %7069 = vst.msk [vmem:[%s5 + $0x30] sm:$0xff] %vm1163, %v7041
  %7070 = vst.msk [vmem:[%s5 + $0x38] sm:$0xff] %vm1163, %v7042
  %7071 = vst.msk [vmem:[%s5 + $0x40] sm:$0xff] %vm1163, %v7043
  %7072 = vst.msk [vmem:[%s5 + $0x48] sm:$0xff] %vm1163, %v7044
  %7073 = vst.msk [vmem:[%s5 + $0x50] sm:$0xff] %vm1163, %v7045
  %7074 = vst.msk [vmem:[%s5 + $0x58] sm:$0xff] %vm1163, %v7046
  %7075 = vst.msk [vmem:[%s5 + $0x60] sm:$0xff] %vm1163, %v7047
  %7076 = vst.msk [vmem:[%s5 + $0x68] sm:$0xff] %vm1163, %v7048
  %7077 = vst.msk [vmem:[%s5 + $0x70] sm:$0xff] %vm1163, %v7049
  %7078 = vst.msk [vmem:[%s5 + $0x78] sm:$0xff] %vm1163, %v7050
  %7079 = vst.msk [vmem:[%s5 + $0x80] sm:$0xff] %vm1163, %v7051
  %7080 = vst.msk [vmem:[%s5 + $0x88] sm:$0xff] %vm1163, %v7052
  %7081 = vst.msk [vmem:[%s5 + $0x90] sm:$0xff] %vm1163, %v7053
  %7082 = vst.msk [vmem:[%s5 + $0x98] sm:$0xff] %vm1163, %v7054
  %7083 = vst.msk [vmem:[%s5 + $0xa0] sm:$0xff] %vm1163, %v7055
  %7084 = vst.msk [vmem:[%s5 + $0xa8] sm:$0xff] %vm1163, %v7056
  %7085 = vst.msk [vmem:[%s5 + $0xb0] sm:$0xff] %vm1163, %v7057
  %7086 = vst.msk [vmem:[%s5 + $0xb8] sm:$0xff] %vm1163, %v7058
  %7087 = vst.msk [vmem:[%s5 + $0xc0] sm:$0xff] %vm1163, %v7059
  %7088 = vst.msk [vmem:[%s5 + $0xc8] sm:$0xff] %vm1163, %v7060
  %7089 = vst.msk [vmem:[%s5 + $0xd0] sm:$0xff] %vm1163, %v7061
  %7090 = vst.msk [vmem:[%s5 + $0xd8] sm:$0xff] %vm1163, %v7062
  // Predicated region
  $region22: #{forward.1} parent=0 // pred_check
    _
  $region23: #{forward.1} parent=0 // pred_check_branch
    %7092 = sbr.rel (0) target = $region25
  $region24: #{forward.1} parent=0 // pred_region
    _
  $region25: #{forward.1} parent=0 // pred_fallthru
    _
  // Predicated region
  $region26: #{forward.1} parent=0 // pred_check
    _
  $region27: #{forward.1} parent=0 // pred_check_branch
    %7094 = sbr.rel (0) target = $region29
  $region28: #{forward.1} parent=0 // pred_region
    _
  $region29: #{forward.1} parent=0 // pred_fallthru
    _

</llo_original>
